<compile_context>
chip_gen: v7x
topology: tpu7x:2x2x1
jax: 0.10.0
libtpu: 0.0.40
codegen_flags: <defaults>
</compile_context>

<pallas_src>
from functools import partial

import numpy as np
import jax
import jax.numpy as jnp
from jax import lax
from jax.experimental import pallas as pl
from jax.experimental.pallas import tpu as pltpu

LANE = 128  # TPU lane width; embed dim is padded to this for lane-dense stores.


# ------------------------- Pallas kernel -------------------------

def _make_conv_kernel(*, OH, OW, K, stride, Ep):
    """Conv2d(k=K, stride, pad already applied) as K*K accumulated GEMMs.

    Refs (per grid step = one batch element):
      x_ref: (1, Hp, Wp, Cin)  bf16  padded NHWC image
      w_ref: (K*K, Cin, Ep)    bf16  tap (ky,kx) lives at row ky*K+kx
      b_ref: (1, Ep)           f32   bias (Ep = 128-padded embed dim)
      o_ref: (1, OH*OW, Ep)    f32   output tokens (row-major over (oy, ox))
    """

    def kernel(x_ref, w_ref, b_ref, o_ref):
        # Hoisted once (avoid re-broadcasting inside the loop).
        bias = jnp.broadcast_to(b_ref[...], (OW, Ep)).astype(jnp.float32)
        for oy in range(OH):                       # static, fully unrolled
            acc = bias                             # f32 accumulator, starts at bias
            for ky in range(K):
                row = x_ref[0, oy * stride + ky, :, :]          # (Wp, Cin) bf16
                for kx in range(K):
                    if stride == 1:
                        win = row[kx:kx + OW, :]                 # (OW, Cin)
                    else:
                        # TODO(synk): strided-width path untested (module default
                        # stride=1); uses a strided lax.slice on the value.
                        win = lax.slice(row, (kx, 0),
                                        (kx + (OW - 1) * stride + 1, row.shape[1]),
                                        (stride, 1))
                    acc = acc + jnp.dot(win, w_ref[ky * K + kx, :, :],
                                        preferred_element_type=jnp.float32)
            o_ref[0, oy * OW:(oy + 1) * OW, :] = acc

    return kernel


# ------------------------- conv wrapper -------------------------

def conv2d_proj(x_nchw, proj_w, proj_b, *, kernel_size, stride, padding):
    """nn.Conv2d(in_chans, E, K, stride, padding) + .flatten(2).transpose(1, 2).

    Returns (tokens, (OH, OW)) where tokens is (B, OH*OW, Ep) with the embed
    dim zero-padded to a multiple of 128; the caller slices back to E (or, for
    a fused consumer, keeps the padded width).
    """
    B, Cin, H, W = x_nchw.shape
    E = proj_w.shape[0]
    K = kernel_size
    OH = (H + 2 * padding - K) // stride + 1
    OW = (W + 2 * padding - K) // stride + 1
    Hp, Wp = H + 2 * padding, W + 2 * padding
    Ep = ((E + LANE - 1) // LANE) * LANE

    # Padded NHWC image, bf16 operands (f32 accumulation happens in-kernel).
    x_nhwc = jnp.transpose(x_nchw, (0, 2, 3, 1))
    xpad = jnp.pad(x_nhwc,
                   ((0, 0), (padding, padding), (padding, padding), (0, 0)))
    xpad = xpad.astype(jnp.bfloat16)

    # (K*K, Cin, Ep): wmat[ky*K+kx, c, e] = proj_w[e, c, ky, kx].
    wmat = jnp.transpose(proj_w, (2, 3, 1, 0)).reshape(K * K, Cin, E)
    wmat = jnp.pad(wmat, ((0, 0), (0, 0), (0, Ep - E))).astype(jnp.bfloat16)
    bmat = jnp.pad(proj_b.reshape(1, E), ((0, 0), (0, Ep - E))).astype(jnp.float32)

    kernel = _make_conv_kernel(OH=OH, OW=OW, K=K, stride=stride, Ep=Ep)

    flops = 2 * B * OH * OW * (Cin * K * K) * Ep
    bytes_accessed = (xpad.size * 2 + wmat.size * 2 + bmat.size * 4
                      + B * OH * OW * Ep * 4)

    tokens = pl.pallas_call(
        kernel,
        out_shape=jax.ShapeDtypeStruct((B, OH * OW, Ep), jnp.float32),
        grid=(B,),                                   # one batch image per step
        in_specs=[
            pl.BlockSpec((1, Hp, Wp, Cin), lambda b: (b, 0, 0, 0)),
            pl.BlockSpec((K * K, Cin, Ep), lambda b: (0, 0, 0)),
            pl.BlockSpec((1, Ep), lambda b: (0, 0)),
        ],
        out_specs=pl.BlockSpec((1, OH * OW, Ep), lambda b: (b, 0, 0)),
        compiler_params=pltpu.CompilerParams(dimension_semantics=("parallel",)),
        cost_estimate=pl.CostEstimate(flops=flops, transcendentals=0,
                                      bytes_accessed=bytes_accessed),
    )(xpad, wmat, bmat)

    return tokens, (OH, OW)


# ------------------------- full forward -------------------------

@partial(jax.jit,
         static_argnames=("in_chans", "kernel_size", "stride", "padding", "flatten"))
def patch_embed_event_forward(x, params, *, in_chans, kernel_size, stride,
                              padding=1, flatten=True):
    """Forward pass of PatchEmbed_event (norm_layer=False -> Identity)."""
    x = x.astype(jnp.float32)                  # x.type(torch.cuda.FloatTensor)
    xs = jnp.squeeze(x, axis=1)                # (B, N0, L)

    # pos-embedding: Conv1d(3 -> 16, k=1) + ReLU.  Deliberately NOT a Pallas/MXU
    # kernel (3 broadcast FMAs of work); XLA fuses it with the surrounding glue
    # under this jit, as sanctioned by the earlier review.
    xyz = (jnp.einsum("oc,bcl->bol", params["pos_w"][:, :, 0], xs[:, :3, :])
           + params["pos_b"][None, :, None])
    xyz = jnp.maximum(xyz, 0.0)
    xcat = jnp.concatenate([xyz, xs[:, 3:, :]], axis=1)        # (B, N, C)

    B, N, C = xcat.shape
    hw2 = (N * C) // in_chans
    HW = int(round(np.sqrt(hw2)))
    assert HW * HW == hw2 and HW * HW * in_chans == N * C, (
        "PatchEmbed_event: N*C must equal in_chans * (perfect square); got "
        f"N={N}, C={C}, in_chans={in_chans}")
    ximg = xcat.reshape(B, in_chans, HW, HW)                   # (B, Cin, H, W)

    E = params["proj_w"].shape[0]
    tokens, (OH, OW) = conv2d_proj(ximg, params["proj_w"], params["proj_b"],
                                   kernel_size=kernel_size, stride=stride,
                                   padding=padding)

    if flatten:
        # Single lane slice Ep -> E; the kernel already emitted token layout so
        # there is no extra reshape pass.  A consumer that immediately matmuls
        # could instead keep the 128-padded embed dim.
        out = tokens[:, :, :E]                                  # (B, OH*OW, E)
    else:
        # OH/OW from the conv arithmetic (not sqrt), so non-square is correct.
        out = jnp.transpose(tokens[:, :, :E].reshape(B, OH, OW, E), (0, 3, 1, 2))
    # norm_layer=False -> nn.Identity().
    # TODO(synk): LayerNorm branch (norm_layer=True) not implemented (unused default).
    return out


# ------------------------- pure-JAX reference -------------------------

def reference_forward(x, params, *, in_chans, kernel_size, stride, padding=1):
    x = x.astype(jnp.float32)
    xs = jnp.squeeze(x, axis=1)
    xyz = (jnp.einsum("oc,bcl->bol", params["pos_w"][:, :, 0], xs[:, :3, :])
           + params["pos_b"][None, :, None])
    xyz = jnp.maximum(xyz, 0.0)
    xcat = jnp.concatenate([xyz, xs[:, 3:, :]], axis=1)
    B, N, C = xcat.shape
    HW = int(round(np.sqrt(N * C // in_chans)))
    ximg = xcat.reshape(B, in_chans, HW, HW)
    out = lax.conv_general_dilated(
        ximg, params["proj_w"], window_strides=(stride, stride),
        padding=((padding, padding), (padding, padding)),
        dimension_numbers=("NCHW", "OIHW", "NCHW"))
    out = out + params["proj_b"][None, :, None, None]
    E = params["proj_w"].shape[0]
    return jnp.transpose(out.reshape(B, E, -1), (0, 2, 1))


# ------------------------- main -------------------------

if __name__ == "__main__":
    # Small, consistent shapes:
    #   input x: (B=2, 1, N0=19, L=64); first 3 "channels" are xyz coords.
    #   After pos-embed concat: N = 16 + (19 - 3) = 32, C = 64
    #   -> H = W = sqrt(32*64 / in_chans=32) = 8 -> conv2d(k=5, p=1) -> 6x6 tokens.
    B, N0, L = 2, 19, 64
    in_chans, embed_dim, kernel_size, stride = 32, 32, 5, 1

    key = jax.random.PRNGKey(0)
    k1, k2, k3, k4, k5 = jax.random.split(key, 5)
    params = {
        "pos_w":  jax.random.normal(k1, (16, 3, 1), jnp.float32) * 0.1,
        "pos_b":  jax.random.normal(k2, (16,), jnp.float32) * 0.1,
        "proj_w": jax.random.normal(k3, (embed_dim, in_chans, kernel_size, kernel_size),
                                    jnp.float32) * 0.02,
        "proj_b": jax.random.normal(k4, (embed_dim,), jnp.float32) * 0.02,
    }
    x = jax.random.normal(k5, (B, 1, N0, L), jnp.float32)

    out = patch_embed_event_forward(
        x, params, in_chans=in_chans, kernel_size=kernel_size, stride=stride)
    out = jax.block_until_ready(out)

    ref = jax.block_until_ready(reference_forward(
        x, params, in_chans=in_chans, kernel_size=kernel_size, stride=stride))

    assert out.shape == (B, 36, embed_dim), out.shape
    # bf16 operands / f32 accumulation vs. f32 reference: 1e-2 tolerance covers it.
    np.testing.assert_allclose(np.asarray(out), np.asarray(ref), rtol=1e-2, atol=1e-2)
    print("KERNEL_OK")
</pallas_src>

<mosaic_0001>
module attributes {stable_mosaic.version = 11 : i64} {
  func.func @kernel(%arg0: i32, %arg1: memref<1x10x10x32xbf16, #tpu.memory_space<vmem>>, %arg2: memref<25x32x128xbf16, #tpu.memory_space<vmem>>, %arg3: memref<1x128xf32, #tpu.memory_space<vmem>>, %arg4: memref<1x36x128xf32, #tpu.memory_space<vmem>>) attributes {dimension_semantics = [#tpu.dimension_semantics<parallel>], iteration_bounds = array<i64: 2>, scalar_prefetch = 0 : i64, scratch_operands = 0 : i64, tpu.core_type = #tpu.core_type<tc>, window_params = [{transform_indices = @transform_0, window_bounds = array<i64: 1, 10, 10, 32>}, {pipeline_mode = #tpu.pipeline_mode<synchronous>, transform_indices = @transform_1, window_bounds = array<i64: 25, 32, 128>}, {pipeline_mode = #tpu.pipeline_mode<synchronous>, transform_indices = @transform_2, window_bounds = array<i64: 1, 128>}, {transform_indices = @transform_3, window_bounds = array<i64: 1, 36, 128>}]} {
    %c0 = arith.constant 0 : index
    %c0_0 = arith.constant 0 : index
    %0 = vector.load %arg3[%c0, %c0_0] : memref<1x128xf32, #tpu.memory_space<vmem>>, vector<1x128xf32>
    %1 = vector.shape_cast %0 : vector<1x128xf32> to vector<1x128xf32>
    %2 = vector.broadcast %1 : vector<1x128xf32> to vector<6x128xf32>
    %c0_1 = arith.constant 0 : index
    %c0_2 = arith.constant 0 : index
    %c0_3 = arith.constant 0 : index
    %c0_4 = arith.constant 0 : index
    %3 = vector.load %arg1[%c0_1, %c0_2, %c0_3, %c0_4] : memref<1x10x10x32xbf16, #tpu.memory_space<vmem>>, vector<1x1x10x32xbf16>
    %4 = vector.shape_cast %3 : vector<1x1x10x32xbf16> to vector<10x32xbf16>
    %5 = vector.extract_strided_slice %4 {offsets = [0, 0], sizes = [6, 32], strides = [1, 1]} : vector<10x32xbf16> to vector<6x32xbf16>
    %c0_5 = arith.constant 0 : index
    %c0_6 = arith.constant 0 : index
    %c0_7 = arith.constant 0 : index
    %6 = vector.load %arg2[%c0_5, %c0_6, %c0_7] : memref<25x32x128xbf16, #tpu.memory_space<vmem>>, vector<1x32x128xbf16>
    %7 = vector.shape_cast %6 : vector<1x32x128xbf16> to vector<32x128xbf16>
    %cst = arith.constant dense<0.000000e+00> : vector<6x128xf32>
    %8 = tpu.matmul %5, %7, %cst {dimension_numbers = #tpu.dot_dimension_numbers<[1], [0], [0], [1], [0, 0, 1, 1], [], []>} : vector<6x32xbf16>, vector<32x128xbf16>, vector<6x128xf32> -> vector<6x128xf32>
    %9 = arith.addf %2, %8 : vector<6x128xf32>
    %10 = vector.extract_strided_slice %4 {offsets = [1, 0], sizes = [6, 32], strides = [1, 1]} : vector<10x32xbf16> to vector<6x32xbf16>
    %c1 = arith.constant 1 : index
    %c0_8 = arith.constant 0 : index
    %c0_9 = arith.constant 0 : index
    %11 = vector.load %arg2[%c1, %c0_8, %c0_9] : memref<25x32x128xbf16, #tpu.memory_space<vmem>>, vector<1x32x128xbf16>
    %12 = vector.shape_cast %11 : vector<1x32x128xbf16> to vector<32x128xbf16>
    %cst_10 = arith.constant dense<0.000000e+00> : vector<6x128xf32>
    %13 = tpu.matmul %10, %12, %cst_10 {dimension_numbers = #tpu.dot_dimension_numbers<[1], [0], [0], [1], [0, 0, 1, 1], [], []>} : vector<6x32xbf16>, vector<32x128xbf16>, vector<6x128xf32> -> vector<6x128xf32>
    %14 = arith.addf %9, %13 : vector<6x128xf32>
    %15 = vector.extract_strided_slice %4 {offsets = [2, 0], sizes = [6, 32], strides = [1, 1]} : vector<10x32xbf16> to vector<6x32xbf16>
    %c2 = arith.constant 2 : index
    %c0_11 = arith.constant 0 : index
    %c0_12 = arith.constant 0 : index
    %16 = vector.load %arg2[%c2, %c0_11, %c0_12] : memref<25x32x128xbf16, #tpu.memory_space<vmem>>, vector<1x32x128xbf16>
    %17 = vector.shape_cast %16 : vector<1x32x128xbf16> to vector<32x128xbf16>
    %cst_13 = arith.constant dense<0.000000e+00> : vector<6x128xf32>
    %18 = tpu.matmul %15, %17, %cst_13 {dimension_numbers = #tpu.dot_dimension_numbers<[1], [0], [0], [1], [0, 0, 1, 1], [], []>} : vector<6x32xbf16>, vector<32x128xbf16>, vector<6x128xf32> -> vector<6x128xf32>
    %19 = arith.addf %14, %18 : vector<6x128xf32>
    %20 = vector.extract_strided_slice %4 {offsets = [3, 0], sizes = [6, 32], strides = [1, 1]} : vector<10x32xbf16> to vector<6x32xbf16>
    %c3 = arith.constant 3 : index
    %c0_14 = arith.constant 0 : index
    %c0_15 = arith.constant 0 : index
    %21 = vector.load %arg2[%c3, %c0_14, %c0_15] : memref<25x32x128xbf16, #tpu.memory_space<vmem>>, vector<1x32x128xbf16>
    %22 = vector.shape_cast %21 : vector<1x32x128xbf16> to vector<32x128xbf16>
    %cst_16 = arith.constant dense<0.000000e+00> : vector<6x128xf32>
    %23 = tpu.matmul %20, %22, %cst_16 {dimension_numbers = #tpu.dot_dimension_numbers<[1], [0], [0], [1], [0, 0, 1, 1], [], []>} : vector<6x32xbf16>, vector<32x128xbf16>, vector<6x128xf32> -> vector<6x128xf32>
    %24 = arith.addf %19, %23 : vector<6x128xf32>
    %25 = vector.extract_strided_slice %4 {offsets = [4, 0], sizes = [6, 32], strides = [1, 1]} : vector<10x32xbf16> to vector<6x32xbf16>
    %c4 = arith.constant 4 : index
    %c0_17 = arith.constant 0 : index
    %c0_18 = arith.constant 0 : index
    %26 = vector.load %arg2[%c4, %c0_17, %c0_18] : memref<25x32x128xbf16, #tpu.memory_space<vmem>>, vector<1x32x128xbf16>
    %27 = vector.shape_cast %26 : vector<1x32x128xbf16> to vector<32x128xbf16>
    %cst_19 = arith.constant dense<0.000000e+00> : vector<6x128xf32>
    %28 = tpu.matmul %25, %27, %cst_19 {dimension_numbers = #tpu.dot_dimension_numbers<[1], [0], [0], [1], [0, 0, 1, 1], [], []>} : vector<6x32xbf16>, vector<32x128xbf16>, vector<6x128xf32> -> vector<6x128xf32>
    %29 = arith.addf %24, %28 : vector<6x128xf32>
    %c0_20 = arith.constant 0 : index
    %c1_21 = arith.constant 1 : index
    %c0_22 = arith.constant 0 : index
    %c0_23 = arith.constant 0 : index
    %30 = vector.load %arg1[%c0_20, %c1_21, %c0_22, %c0_23] : memref<1x10x10x32xbf16, #tpu.memory_space<vmem>>, vector<1x1x10x32xbf16>
    %31 = vector.shape_cast %30 : vector<1x1x10x32xbf16> to vector<10x32xbf16>
    %32 = vector.extract_strided_slice %31 {offsets = [0, 0], sizes = [6, 32], strides = [1, 1]} : vector<10x32xbf16> to vector<6x32xbf16>
    %c5 = arith.constant 5 : index
    %c0_24 = arith.constant 0 : index
    %c0_25 = arith.constant 0 : index
    %33 = vector.load %arg2[%c5, %c0_24, %c0_25] : memref<25x32x128xbf16, #tpu.memory_space<vmem>>, vector<1x32x128xbf16>
    %34 = vector.shape_cast %33 : vector<1x32x128xbf16> to vector<32x128xbf16>
    %cst_26 = arith.constant dense<0.000000e+00> : vector<6x128xf32>
    %35 = tpu.matmul %32, %34, %cst_26 {dimension_numbers = #tpu.dot_dimension_numbers<[1], [0], [0], [1], [0, 0, 1, 1], [], []>} : vector<6x32xbf16>, vector<32x128xbf16>, vector<6x128xf32> -> vector<6x128xf32>
    %36 = arith.addf %29, %35 : vector<6x128xf32>
    %37 = vector.extract_strided_slice %31 {offsets = [1, 0], sizes = [6, 32], strides = [1, 1]} : vector<10x32xbf16> to vector<6x32xbf16>
    %c6 = arith.constant 6 : index
    %c0_27 = arith.constant 0 : index
    %c0_28 = arith.constant 0 : index
    %38 = vector.load %arg2[%c6, %c0_27, %c0_28] : memref<25x32x128xbf16, #tpu.memory_space<vmem>>, vector<1x32x128xbf16>
    %39 = vector.shape_cast %38 : vector<1x32x128xbf16> to vector<32x128xbf16>
    %cst_29 = arith.constant dense<0.000000e+00> : vector<6x128xf32>
    %40 = tpu.matmul %37, %39, %cst_29 {dimension_numbers = #tpu.dot_dimension_numbers<[1], [0], [0], [1], [0, 0, 1, 1], [], []>} : vector<6x32xbf16>, vector<32x128xbf16>, vector<6x128xf32> -> vector<6x128xf32>
    %41 = arith.addf %36, %40 : vector<6x128xf32>
    %42 = vector.extract_strided_slice %31 {offsets = [2, 0], sizes = [6, 32], strides = [1, 1]} : vector<10x32xbf16> to vector<6x32xbf16>
    %c7 = arith.constant 7 : index
    %c0_30 = arith.constant 0 : index
    %c0_31 = arith.constant 0 : index
    %43 = vector.load %arg2[%c7, %c0_30, %c0_31] : memref<25x32x128xbf16, #tpu.memory_space<vmem>>, vector<1x32x128xbf16>
    %44 = vector.shape_cast %43 : vector<1x32x128xbf16> to vector<32x128xbf16>
    %cst_32 = arith.constant dense<0.000000e+00> : vector<6x128xf32>
    %45 = tpu.matmul %42, %44, %cst_32 {dimension_numbers = #tpu.dot_dimension_numbers<[1], [0], [0], [1], [0, 0, 1, 1], [], []>} : vector<6x32xbf16>, vector<32x128xbf16>, vector<6x128xf32> -> vector<6x128xf32>
    %46 = arith.addf %41, %45 : vector<6x128xf32>
    %47 = vector.extract_strided_slice %31 {offsets = [3, 0], sizes = [6, 32], strides = [1, 1]} : vector<10x32xbf16> to vector<6x32xbf16>
    %c8 = arith.constant 8 : index
    %c0_33 = arith.constant 0 : index
    %c0_34 = arith.constant 0 : index
    %48 = vector.load %arg2[%c8, %c0_33, %c0_34] : memref<25x32x128xbf16, #tpu.memory_space<vmem>>, vector<1x32x128xbf16>
    %49 = vector.shape_cast %48 : vector<1x32x128xbf16> to vector<32x128xbf16>
    %cst_35 = arith.constant dense<0.000000e+00> : vector<6x128xf32>
    %50 = tpu.matmul %47, %49, %cst_35 {dimension_numbers = #tpu.dot_dimension_numbers<[1], [0], [0], [1], [0, 0, 1, 1], [], []>} : vector<6x32xbf16>, vector<32x128xbf16>, vector<6x128xf32> -> vector<6x128xf32>
    %51 = arith.addf %46, %50 : vector<6x128xf32>
    %52 = vector.extract_strided_slice %31 {offsets = [4, 0], sizes = [6, 32], strides = [1, 1]} : vector<10x32xbf16> to vector<6x32xbf16>
    %c9 = arith.constant 9 : index
    %c0_36 = arith.constant 0 : index
    %c0_37 = arith.constant 0 : index
    %53 = vector.load %arg2[%c9, %c0_36, %c0_37] : memref<25x32x128xbf16, #tpu.memory_space<vmem>>, vector<1x32x128xbf16>
    %54 = vector.shape_cast %53 : vector<1x32x128xbf16> to vector<32x128xbf16>
    %cst_38 = arith.constant dense<0.000000e+00> : vector<6x128xf32>
    %55 = tpu.matmul %52, %54, %cst_38 {dimension_numbers = #tpu.dot_dimension_numbers<[1], [0], [0], [1], [0, 0, 1, 1], [], []>} : vector<6x32xbf16>, vector<32x128xbf16>, vector<6x128xf32> -> vector<6x128xf32>
    %56 = arith.addf %51, %55 : vector<6x128xf32>
    %c0_39 = arith.constant 0 : index
    %c2_40 = arith.constant 2 : index
    %c0_41 = arith.constant 0 : index
    %c0_42 = arith.constant 0 : index
    %57 = vector.load %arg1[%c0_39, %c2_40, %c0_41, %c0_42] : memref<1x10x10x32xbf16, #tpu.memory_space<vmem>>, vector<1x1x10x32xbf16>
    %58 = vector.shape_cast %57 : vector<1x1x10x32xbf16> to vector<10x32xbf16>
    %59 = vector.extract_strided_slice %58 {offsets = [0, 0], sizes = [6, 32], strides = [1, 1]} : vector<10x32xbf16> to vector<6x32xbf16>
    %c10 = arith.constant 10 : index
    %c0_43 = arith.constant 0 : index
    %c0_44 = arith.constant 0 : index
    %60 = vector.load %arg2[%c10, %c0_43, %c0_44] : memref<25x32x128xbf16, #tpu.memory_space<vmem>>, vector<1x32x128xbf16>
    %61 = vector.shape_cast %60 : vector<1x32x128xbf16> to vector<32x128xbf16>
    %cst_45 = arith.constant dense<0.000000e+00> : vector<6x128xf32>
    %62 = tpu.matmul %59, %61, %cst_45 {dimension_numbers = #tpu.dot_dimension_numbers<[1], [0], [0], [1], [0, 0, 1, 1], [], []>} : vector<6x32xbf16>, vector<32x128xbf16>, vector<6x128xf32> -> vector<6x128xf32>
    %63 = arith.addf %56, %62 : vector<6x128xf32>
    %64 = vector.extract_strided_slice %58 {offsets = [1, 0], sizes = [6, 32], strides = [1, 1]} : vector<10x32xbf16> to vector<6x32xbf16>
    %c11 = arith.constant 11 : index
    %c0_46 = arith.constant 0 : index
    %c0_47 = arith.constant 0 : index
    %65 = vector.load %arg2[%c11, %c0_46, %c0_47] : memref<25x32x128xbf16, #tpu.memory_space<vmem>>, vector<1x32x128xbf16>
    %66 = vector.shape_cast %65 : vector<1x32x128xbf16> to vector<32x128xbf16>
    %cst_48 = arith.constant dense<0.000000e+00> : vector<6x128xf32>
    %67 = tpu.matmul %64, %66, %cst_48 {dimension_numbers = #tpu.dot_dimension_numbers<[1], [0], [0], [1], [0, 0, 1, 1], [], []>} : vector<6x32xbf16>, vector<32x128xbf16>, vector<6x128xf32> -> vector<6x128xf32>
    %68 = arith.addf %63, %67 : vector<6x128xf32>
    %69 = vector.extract_strided_slice %58 {offsets = [2, 0], sizes = [6, 32], strides = [1, 1]} : vector<10x32xbf16> to vector<6x32xbf16>
    %c12 = arith.constant 12 : index
    %c0_49 = arith.constant 0 : index
    %c0_50 = arith.constant 0 : index
    %70 = vector.load %arg2[%c12, %c0_49, %c0_50] : memref<25x32x128xbf16, #tpu.memory_space<vmem>>, vector<1x32x128xbf16>
    %71 = vector.shape_cast %70 : vector<1x32x128xbf16> to vector<32x128xbf16>
    %cst_51 = arith.constant dense<0.000000e+00> : vector<6x128xf32>
    %72 = tpu.matmul %69, %71, %cst_51 {dimension_numbers = #tpu.dot_dimension_numbers<[1], [0], [0], [1], [0, 0, 1, 1], [], []>} : vector<6x32xbf16>, vector<32x128xbf16>, vector<6x128xf32> -> vector<6x128xf32>
    %73 = arith.addf %68, %72 : vector<6x128xf32>
    %74 = vector.extract_strided_slice %58 {offsets = [3, 0], sizes = [6, 32], strides = [1, 1]} : vector<10x32xbf16> to vector<6x32xbf16>
    %c13 = arith.constant 13 : index
    %c0_52 = arith.constant 0 : index
    %c0_53 = arith.constant 0 : index
    %75 = vector.load %arg2[%c13, %c0_52, %c0_53] : memref<25x32x128xbf16, #tpu.memory_space<vmem>>, vector<1x32x128xbf16>
    %76 = vector.shape_cast %75 : vector<1x32x128xbf16> to vector<32x128xbf16>
    %cst_54 = arith.constant dense<0.000000e+00> : vector<6x128xf32>
    %77 = tpu.matmul %74, %76, %cst_54 {dimension_numbers = #tpu.dot_dimension_numbers<[1], [0], [0], [1], [0, 0, 1, 1], [], []>} : vector<6x32xbf16>, vector<32x128xbf16>, vector<6x128xf32> -> vector<6x128xf32>
    %78 = arith.addf %73, %77 : vector<6x128xf32>
    %79 = vector.extract_strided_slice %58 {offsets = [4, 0], sizes = [6, 32], strides = [1, 1]} : vector<10x32xbf16> to vector<6x32xbf16>
    %c14 = arith.constant 14 : index
    %c0_55 = arith.constant 0 : index
    %c0_56 = arith.constant 0 : index
    %80 = vector.load %arg2[%c14, %c0_55, %c0_56] : memref<25x32x128xbf16, #tpu.memory_space<vmem>>, vector<1x32x128xbf16>
    %81 = vector.shape_cast %80 : vector<1x32x128xbf16> to vector<32x128xbf16>
    %cst_57 = arith.constant dense<0.000000e+00> : vector<6x128xf32>
    %82 = tpu.matmul %79, %81, %cst_57 {dimension_numbers = #tpu.dot_dimension_numbers<[1], [0], [0], [1], [0, 0, 1, 1], [], []>} : vector<6x32xbf16>, vector<32x128xbf16>, vector<6x128xf32> -> vector<6x128xf32>
    %83 = arith.addf %78, %82 : vector<6x128xf32>
    %c0_58 = arith.constant 0 : index
    %c3_59 = arith.constant 3 : index
    %c0_60 = arith.constant 0 : index
    %c0_61 = arith.constant 0 : index
    %84 = vector.load %arg1[%c0_58, %c3_59, %c0_60, %c0_61] : memref<1x10x10x32xbf16, #tpu.memory_space<vmem>>, vector<1x1x10x32xbf16>
    %85 = vector.shape_cast %84 : vector<1x1x10x32xbf16> to vector<10x32xbf16>
    %86 = vector.extract_strided_slice %85 {offsets = [0, 0], sizes = [6, 32], strides = [1, 1]} : vector<10x32xbf16> to vector<6x32xbf16>
    %c15 = arith.constant 15 : index
    %c0_62 = arith.constant 0 : index
    %c0_63 = arith.constant 0 : index
    %87 = vector.load %arg2[%c15, %c0_62, %c0_63] : memref<25x32x128xbf16, #tpu.memory_space<vmem>>, vector<1x32x128xbf16>
    %88 = vector.shape_cast %87 : vector<1x32x128xbf16> to vector<32x128xbf16>
    %cst_64 = arith.constant dense<0.000000e+00> : vector<6x128xf32>
    %89 = tpu.matmul %86, %88, %cst_64 {dimension_numbers = #tpu.dot_dimension_numbers<[1], [0], [0], [1], [0, 0, 1, 1], [], []>} : vector<6x32xbf16>, vector<32x128xbf16>, vector<6x128xf32> -> vector<6x128xf32>
    %90 = arith.addf %83, %89 : vector<6x128xf32>
    %91 = vector.extract_strided_slice %85 {offsets = [1, 0], sizes = [6, 32], strides = [1, 1]} : vector<10x32xbf16> to vector<6x32xbf16>
    %c16 = arith.constant 16 : index
    %c0_65 = arith.constant 0 : index
    %c0_66 = arith.constant 0 : index
    %92 = vector.load %arg2[%c16, %c0_65, %c0_66] : memref<25x32x128xbf16, #tpu.memory_space<vmem>>, vector<1x32x128xbf16>
    %93 = vector.shape_cast %92 : vector<1x32x128xbf16> to vector<32x128xbf16>
    %cst_67 = arith.constant dense<0.000000e+00> : vector<6x128xf32>
    %94 = tpu.matmul %91, %93, %cst_67 {dimension_numbers = #tpu.dot_dimension_numbers<[1], [0], [0], [1], [0, 0, 1, 1], [], []>} : vector<6x32xbf16>, vector<32x128xbf16>, vector<6x128xf32> -> vector<6x128xf32>
    %95 = arith.addf %90, %94 : vector<6x128xf32>
    %96 = vector.extract_strided_slice %85 {offsets = [2, 0], sizes = [6, 32], strides = [1, 1]} : vector<10x32xbf16> to vector<6x32xbf16>
    %c17 = arith.constant 17 : index
    %c0_68 = arith.constant 0 : index
    %c0_69 = arith.constant 0 : index
    %97 = vector.load %arg2[%c17, %c0_68, %c0_69] : memref<25x32x128xbf16, #tpu.memory_space<vmem>>, vector<1x32x128xbf16>
    %98 = vector.shape_cast %97 : vector<1x32x128xbf16> to vector<32x128xbf16>
    %cst_70 = arith.constant dense<0.000000e+00> : vector<6x128xf32>
    %99 = tpu.matmul %96, %98, %cst_70 {dimension_numbers = #tpu.dot_dimension_numbers<[1], [0], [0], [1], [0, 0, 1, 1], [], []>} : vector<6x32xbf16>, vector<32x128xbf16>, vector<6x128xf32> -> vector<6x128xf32>
    %100 = arith.addf %95, %99 : vector<6x128xf32>
    %101 = vector.extract_strided_slice %85 {offsets = [3, 0], sizes = [6, 32], strides = [1, 1]} : vector<10x32xbf16> to vector<6x32xbf16>
    %c18 = arith.constant 18 : index
    %c0_71 = arith.constant 0 : index
    %c0_72 = arith.constant 0 : index
    %102 = vector.load %arg2[%c18, %c0_71, %c0_72] : memref<25x32x128xbf16, #tpu.memory_space<vmem>>, vector<1x32x128xbf16>
    %103 = vector.shape_cast %102 : vector<1x32x128xbf16> to vector<32x128xbf16>
    %cst_73 = arith.constant dense<0.000000e+00> : vector<6x128xf32>
    %104 = tpu.matmul %101, %103, %cst_73 {dimension_numbers = #tpu.dot_dimension_numbers<[1], [0], [0], [1], [0, 0, 1, 1], [], []>} : vector<6x32xbf16>, vector<32x128xbf16>, vector<6x128xf32> -> vector<6x128xf32>
    %105 = arith.addf %100, %104 : vector<6x128xf32>
    %106 = vector.extract_strided_slice %85 {offsets = [4, 0], sizes = [6, 32], strides = [1, 1]} : vector<10x32xbf16> to vector<6x32xbf16>
    %c19 = arith.constant 19 : index
    %c0_74 = arith.constant 0 : index
    %c0_75 = arith.constant 0 : index
    %107 = vector.load %arg2[%c19, %c0_74, %c0_75] : memref<25x32x128xbf16, #tpu.memory_space<vmem>>, vector<1x32x128xbf16>
    %108 = vector.shape_cast %107 : vector<1x32x128xbf16> to vector<32x128xbf16>
    %cst_76 = arith.constant dense<0.000000e+00> : vector<6x128xf32>
    %109 = tpu.matmul %106, %108, %cst_76 {dimension_numbers = #tpu.dot_dimension_numbers<[1], [0], [0], [1], [0, 0, 1, 1], [], []>} : vector<6x32xbf16>, vector<32x128xbf16>, vector<6x128xf32> -> vector<6x128xf32>
    %110 = arith.addf %105, %109 : vector<6x128xf32>
    %c0_77 = arith.constant 0 : index
    %c4_78 = arith.constant 4 : index
    %c0_79 = arith.constant 0 : index
    %c0_80 = arith.constant 0 : index
    %111 = vector.load %arg1[%c0_77, %c4_78, %c0_79, %c0_80] : memref<1x10x10x32xbf16, #tpu.memory_space<vmem>>, vector<1x1x10x32xbf16>
    %112 = vector.shape_cast %111 : vector<1x1x10x32xbf16> to vector<10x32xbf16>
    %113 = vector.extract_strided_slice %112 {offsets = [0, 0], sizes = [6, 32], strides = [1, 1]} : vector<10x32xbf16> to vector<6x32xbf16>
    %c20 = arith.constant 20 : index
    %c0_81 = arith.constant 0 : index
    %c0_82 = arith.constant 0 : index
    %114 = vector.load %arg2[%c20, %c0_81, %c0_82] : memref<25x32x128xbf16, #tpu.memory_space<vmem>>, vector<1x32x128xbf16>
    %115 = vector.shape_cast %114 : vector<1x32x128xbf16> to vector<32x128xbf16>
    %cst_83 = arith.constant dense<0.000000e+00> : vector<6x128xf32>
    %116 = tpu.matmul %113, %115, %cst_83 {dimension_numbers = #tpu.dot_dimension_numbers<[1], [0], [0], [1], [0, 0, 1, 1], [], []>} : vector<6x32xbf16>, vector<32x128xbf16>, vector<6x128xf32> -> vector<6x128xf32>
    %117 = arith.addf %110, %116 : vector<6x128xf32>
    %118 = vector.extract_strided_slice %112 {offsets = [1, 0], sizes = [6, 32], strides = [1, 1]} : vector<10x32xbf16> to vector<6x32xbf16>
    %c21 = arith.constant 21 : index
    %c0_84 = arith.constant 0 : index
    %c0_85 = arith.constant 0 : index
    %119 = vector.load %arg2[%c21, %c0_84, %c0_85] : memref<25x32x128xbf16, #tpu.memory_space<vmem>>, vector<1x32x128xbf16>
    %120 = vector.shape_cast %119 : vector<1x32x128xbf16> to vector<32x128xbf16>
    %cst_86 = arith.constant dense<0.000000e+00> : vector<6x128xf32>
    %121 = tpu.matmul %118, %120, %cst_86 {dimension_numbers = #tpu.dot_dimension_numbers<[1], [0], [0], [1], [0, 0, 1, 1], [], []>} : vector<6x32xbf16>, vector<32x128xbf16>, vector<6x128xf32> -> vector<6x128xf32>
    %122 = arith.addf %117, %121 : vector<6x128xf32>
    %123 = vector.extract_strided_slice %112 {offsets = [2, 0], sizes = [6, 32], strides = [1, 1]} : vector<10x32xbf16> to vector<6x32xbf16>
    %c22 = arith.constant 22 : index
    %c0_87 = arith.constant 0 : index
    %c0_88 = arith.constant 0 : index
    %124 = vector.load %arg2[%c22, %c0_87, %c0_88] : memref<25x32x128xbf16, #tpu.memory_space<vmem>>, vector<1x32x128xbf16>
    %125 = vector.shape_cast %124 : vector<1x32x128xbf16> to vector<32x128xbf16>
    %cst_89 = arith.constant dense<0.000000e+00> : vector<6x128xf32>
    %126 = tpu.matmul %123, %125, %cst_89 {dimension_numbers = #tpu.dot_dimension_numbers<[1], [0], [0], [1], [0, 0, 1, 1], [], []>} : vector<6x32xbf16>, vector<32x128xbf16>, vector<6x128xf32> -> vector<6x128xf32>
    %127 = arith.addf %122, %126 : vector<6x128xf32>
    %128 = vector.extract_strided_slice %112 {offsets = [3, 0], sizes = [6, 32], strides = [1, 1]} : vector<10x32xbf16> to vector<6x32xbf16>
    %c23 = arith.constant 23 : index
    %c0_90 = arith.constant 0 : index
    %c0_91 = arith.constant 0 : index
    %129 = vector.load %arg2[%c23, %c0_90, %c0_91] : memref<25x32x128xbf16, #tpu.memory_space<vmem>>, vector<1x32x128xbf16>
    %130 = vector.shape_cast %129 : vector<1x32x128xbf16> to vector<32x128xbf16>
    %cst_92 = arith.constant dense<0.000000e+00> : vector<6x128xf32>
    %131 = tpu.matmul %128, %130, %cst_92 {dimension_numbers = #tpu.dot_dimension_numbers<[1], [0], [0], [1], [0, 0, 1, 1], [], []>} : vector<6x32xbf16>, vector<32x128xbf16>, vector<6x128xf32> -> vector<6x128xf32>
    %132 = arith.addf %127, %131 : vector<6x128xf32>
    %133 = vector.extract_strided_slice %112 {offsets = [4, 0], sizes = [6, 32], strides = [1, 1]} : vector<10x32xbf16> to vector<6x32xbf16>
    %c24 = arith.constant 24 : index
    %c0_93 = arith.constant 0 : index
    %c0_94 = arith.constant 0 : index
    %134 = vector.load %arg2[%c24, %c0_93, %c0_94] : memref<25x32x128xbf16, #tpu.memory_space<vmem>>, vector<1x32x128xbf16>
    %135 = vector.shape_cast %134 : vector<1x32x128xbf16> to vector<32x128xbf16>
    %cst_95 = arith.constant dense<0.000000e+00> : vector<6x128xf32>
    %136 = tpu.matmul %133, %135, %cst_95 {dimension_numbers = #tpu.dot_dimension_numbers<[1], [0], [0], [1], [0, 0, 1, 1], [], []>} : vector<6x32xbf16>, vector<32x128xbf16>, vector<6x128xf32> -> vector<6x128xf32>
    %137 = arith.addf %132, %136 : vector<6x128xf32>
    %c0_96 = arith.constant 0 : index
    %c0_97 = arith.constant 0 : index
    %c0_98 = arith.constant 0 : index
    %138 = vector.load %arg4[%c0_96, %c0_97, %c0_98] : memref<1x36x128xf32, #tpu.memory_space<vmem>>, vector<1x6x128xf32>
    %139 = vector.shape_cast %138 : vector<1x6x128xf32> to vector<6x128xf32>
    %140 = vector.shape_cast %137 : vector<6x128xf32> to vector<1x6x128xf32>
    tpu.vector_store %arg4[%c0_96, %c0_97, %c0_98], %140 {strides = array<i32>} : memref<1x36x128xf32, #tpu.memory_space<vmem>>, vector<1x6x128xf32>,
    %c0_99 = arith.constant 0 : index
    %c1_100 = arith.constant 1 : index
    %c0_101 = arith.constant 0 : index
    %c0_102 = arith.constant 0 : index
    %141 = vector.load %arg1[%c0_99, %c1_100, %c0_101, %c0_102] : memref<1x10x10x32xbf16, #tpu.memory_space<vmem>>, vector<1x1x10x32xbf16>
    %142 = vector.shape_cast %141 : vector<1x1x10x32xbf16> to vector<10x32xbf16>
    %143 = vector.extract_strided_slice %142 {offsets = [0, 0], sizes = [6, 32], strides = [1, 1]} : vector<10x32xbf16> to vector<6x32xbf16>
    %c0_103 = arith.constant 0 : index
    %c0_104 = arith.constant 0 : index
    %c0_105 = arith.constant 0 : index
    %144 = vector.load %arg2[%c0_103, %c0_104, %c0_105] : memref<25x32x128xbf16, #tpu.memory_space<vmem>>, vector<1x32x128xbf16>
    %145 = vector.shape_cast %144 : vector<1x32x128xbf16> to vector<32x128xbf16>
    %cst_106 = arith.constant dense<0.000000e+00> : vector<6x128xf32>
    %146 = tpu.matmul %143, %145, %cst_106 {dimension_numbers = #tpu.dot_dimension_numbers<[1], [0], [0], [1], [0, 0, 1, 1], [], []>} : vector<6x32xbf16>, vector<32x128xbf16>, vector<6x128xf32> -> vector<6x128xf32>
    %147 = arith.addf %2, %146 : vector<6x128xf32>
    %148 = vector.extract_strided_slice %142 {offsets = [1, 0], sizes = [6, 32], strides = [1, 1]} : vector<10x32xbf16> to vector<6x32xbf16>
    %c1_107 = arith.constant 1 : index
    %c0_108 = arith.constant 0 : index
    %c0_109 = arith.constant 0 : index
    %149 = vector.load %arg2[%c1_107, %c0_108, %c0_109] : memref<25x32x128xbf16, #tpu.memory_space<vmem>>, vector<1x32x128xbf16>
    %150 = vector.shape_cast %149 : vector<1x32x128xbf16> to vector<32x128xbf16>
    %cst_110 = arith.constant dense<0.000000e+00> : vector<6x128xf32>
    %151 = tpu.matmul %148, %150, %cst_110 {dimension_numbers = #tpu.dot_dimension_numbers<[1], [0], [0], [1], [0, 0, 1, 1], [], []>} : vector<6x32xbf16>, vector<32x128xbf16>, vector<6x128xf32> -> vector<6x128xf32>
    %152 = arith.addf %147, %151 : vector<6x128xf32>
    %153 = vector.extract_strided_slice %142 {offsets = [2, 0], sizes = [6, 32], strides = [1, 1]} : vector<10x32xbf16> to vector<6x32xbf16>
    %c2_111 = arith.constant 2 : index
    %c0_112 = arith.constant 0 : index
    %c0_113 = arith.constant 0 : index
    %154 = vector.load %arg2[%c2_111, %c0_112, %c0_113] : memref<25x32x128xbf16, #tpu.memory_space<vmem>>, vector<1x32x128xbf16>
    %155 = vector.shape_cast %154 : vector<1x32x128xbf16> to vector<32x128xbf16>
    %cst_114 = arith.constant dense<0.000000e+00> : vector<6x128xf32>
    %156 = tpu.matmul %153, %155, %cst_114 {dimension_numbers = #tpu.dot_dimension_numbers<[1], [0], [0], [1], [0, 0, 1, 1], [], []>} : vector<6x32xbf16>, vector<32x128xbf16>, vector<6x128xf32> -> vector<6x128xf32>
    %157 = arith.addf %152, %156 : vector<6x128xf32>
    %158 = vector.extract_strided_slice %142 {offsets = [3, 0], sizes = [6, 32], strides = [1, 1]} : vector<10x32xbf16> to vector<6x32xbf16>
    %c3_115 = arith.constant 3 : index
    %c0_116 = arith.constant 0 : index
    %c0_117 = arith.constant 0 : index
    %159 = vector.load %arg2[%c3_115, %c0_116, %c0_117] : memref<25x32x128xbf16, #tpu.memory_space<vmem>>, vector<1x32x128xbf16>
    %160 = vector.shape_cast %159 : vector<1x32x128xbf16> to vector<32x128xbf16>
    %cst_118 = arith.constant dense<0.000000e+00> : vector<6x128xf32>
    %161 = tpu.matmul %158, %160, %cst_118 {dimension_numbers = #tpu.dot_dimension_numbers<[1], [0], [0], [1], [0, 0, 1, 1], [], []>} : vector<6x32xbf16>, vector<32x128xbf16>, vector<6x128xf32> -> vector<6x128xf32>
    %162 = arith.addf %157, %161 : vector<6x128xf32>
    %163 = vector.extract_strided_slice %142 {offsets = [4, 0], sizes = [6, 32], strides = [1, 1]} : vector<10x32xbf16> to vector<6x32xbf16>
    %c4_119 = arith.constant 4 : index
    %c0_120 = arith.constant 0 : index
    %c0_121 = arith.constant 0 : index
    %164 = vector.load %arg2[%c4_119, %c0_120, %c0_121] : memref<25x32x128xbf16, #tpu.memory_space<vmem>>, vector<1x32x128xbf16>
    %165 = vector.shape_cast %164 : vector<1x32x128xbf16> to vector<32x128xbf16>
    %cst_122 = arith.constant dense<0.000000e+00> : vector<6x128xf32>
    %166 = tpu.matmul %163, %165, %cst_122 {dimension_numbers = #tpu.dot_dimension_numbers<[1], [0], [0], [1], [0, 0, 1, 1], [], []>} : vector<6x32xbf16>, vector<32x128xbf16>, vector<6x128xf32> -> vector<6x128xf32>
    %167 = arith.addf %162, %166 : vector<6x128xf32>
    %c0_123 = arith.constant 0 : index
    %c2_124 = arith.constant 2 : index
    %c0_125 = arith.constant 0 : index
    %c0_126 = arith.constant 0 : index
    %168 = vector.load %arg1[%c0_123, %c2_124, %c0_125, %c0_126] : memref<1x10x10x32xbf16, #tpu.memory_space<vmem>>, vector<1x1x10x32xbf16>
    %169 = vector.shape_cast %168 : vector<1x1x10x32xbf16> to vector<10x32xbf16>
    %170 = vector.extract_strided_slice %169 {offsets = [0, 0], sizes = [6, 32], strides = [1, 1]} : vector<10x32xbf16> to vector<6x32xbf16>
    %c5_127 = arith.constant 5 : index
    %c0_128 = arith.constant 0 : index
    %c0_129 = arith.constant 0 : index
    %171 = vector.load %arg2[%c5_127, %c0_128, %c0_129] : memref<25x32x128xbf16, #tpu.memory_space<vmem>>, vector<1x32x128xbf16>
    %172 = vector.shape_cast %171 : vector<1x32x128xbf16> to vector<32x128xbf16>
    %cst_130 = arith.constant dense<0.000000e+00> : vector<6x128xf32>
    %173 = tpu.matmul %170, %172, %cst_130 {dimension_numbers = #tpu.dot_dimension_numbers<[1], [0], [0], [1], [0, 0, 1, 1], [], []>} : vector<6x32xbf16>, vector<32x128xbf16>, vector<6x128xf32> -> vector<6x128xf32>
    %174 = arith.addf %167, %173 : vector<6x128xf32>
    %175 = vector.extract_strided_slice %169 {offsets = [1, 0], sizes = [6, 32], strides = [1, 1]} : vector<10x32xbf16> to vector<6x32xbf16>
    %c6_131 = arith.constant 6 : index
    %c0_132 = arith.constant 0 : index
    %c0_133 = arith.constant 0 : index
    %176 = vector.load %arg2[%c6_131, %c0_132, %c0_133] : memref<25x32x128xbf16, #tpu.memory_space<vmem>>, vector<1x32x128xbf16>
    %177 = vector.shape_cast %176 : vector<1x32x128xbf16> to vector<32x128xbf16>
    %cst_134 = arith.constant dense<0.000000e+00> : vector<6x128xf32>
    %178 = tpu.matmul %175, %177, %cst_134 {dimension_numbers = #tpu.dot_dimension_numbers<[1], [0], [0], [1], [0, 0, 1, 1], [], []>} : vector<6x32xbf16>, vector<32x128xbf16>, vector<6x128xf32> -> vector<6x128xf32>
    %179 = arith.addf %174, %178 : vector<6x128xf32>
    %180 = vector.extract_strided_slice %169 {offsets = [2, 0], sizes = [6, 32], strides = [1, 1]} : vector<10x32xbf16> to vector<6x32xbf16>
    %c7_135 = arith.constant 7 : index
    %c0_136 = arith.constant 0 : index
    %c0_137 = arith.constant 0 : index
    %181 = vector.load %arg2[%c7_135, %c0_136, %c0_137] : memref<25x32x128xbf16, #tpu.memory_space<vmem>>, vector<1x32x128xbf16>
    %182 = vector.shape_cast %181 : vector<1x32x128xbf16> to vector<32x128xbf16>
    %cst_138 = arith.constant dense<0.000000e+00> : vector<6x128xf32>
    %183 = tpu.matmul %180, %182, %cst_138 {dimension_numbers = #tpu.dot_dimension_numbers<[1], [0], [0], [1], [0, 0, 1, 1], [], []>} : vector<6x32xbf16>, vector<32x128xbf16>, vector<6x128xf32> -> vector<6x128xf32>
    %184 = arith.addf %179, %183 : vector<6x128xf32>
    %185 = vector.extract_strided_slice %169 {offsets = [3, 0], sizes = [6, 32], strides = [1, 1]} : vector<10x32xbf16> to vector<6x32xbf16>
    %c8_139 = arith.constant 8 : index
    %c0_140 = arith.constant 0 : index
    %c0_141 = arith.constant 0 : index
    %186 = vector.load %arg2[%c8_139, %c0_140, %c0_141] : memref<25x32x128xbf16, #tpu.memory_space<vmem>>, vector<1x32x128xbf16>
    %187 = vector.shape_cast %186 : vector<1x32x128xbf16> to vector<32x128xbf16>
    %cst_142 = arith.constant dense<0.000000e+00> : vector<6x128xf32>
    %188 = tpu.matmul %185, %187, %cst_142 {dimension_numbers = #tpu.dot_dimension_numbers<[1], [0], [0], [1], [0, 0, 1, 1], [], []>} : vector<6x32xbf16>, vector<32x128xbf16>, vector<6x128xf32> -> vector<6x128xf32>
    %189 = arith.addf %184, %188 : vector<6x128xf32>
    %190 = vector.extract_strided_slice %169 {offsets = [4, 0], sizes = [6, 32], strides = [1, 1]} : vector<10x32xbf16> to vector<6x32xbf16>
    %c9_143 = arith.constant 9 : index
    %c0_144 = arith.constant 0 : index
    %c0_145 = arith.constant 0 : index
    %191 = vector.load %arg2[%c9_143, %c0_144, %c0_145] : memref<25x32x128xbf16, #tpu.memory_space<vmem>>, vector<1x32x128xbf16>
    %192 = vector.shape_cast %191 : vector<1x32x128xbf16> to vector<32x128xbf16>
    %cst_146 = arith.constant dense<0.000000e+00> : vector<6x128xf32>
    %193 = tpu.matmul %190, %192, %cst_146 {dimension_numbers = #tpu.dot_dimension_numbers<[1], [0], [0], [1], [0, 0, 1, 1], [], []>} : vector<6x32xbf16>, vector<32x128xbf16>, vector<6x128xf32> -> vector<6x128xf32>
    %194 = arith.addf %189, %193 : vector<6x128xf32>
    %c0_147 = arith.constant 0 : index
    %c3_148 = arith.constant 3 : index
    %c0_149 = arith.constant 0 : index
    %c0_150 = arith.constant 0 : index
    %195 = vector.load %arg1[%c0_147, %c3_148, %c0_149, %c0_150] : memref<1x10x10x32xbf16, #tpu.memory_space<vmem>>, vector<1x1x10x32xbf16>
    %196 = vector.shape_cast %195 : vector<1x1x10x32xbf16> to vector<10x32xbf16>
    %197 = vector.extract_strided_slice %196 {offsets = [0, 0], sizes = [6, 32], strides = [1, 1]} : vector<10x32xbf16> to vector<6x32xbf16>
    %c10_151 = arith.constant 10 : index
    %c0_152 = arith.constant 0 : index
    %c0_153 = arith.constant 0 : index
    %198 = vector.load %arg2[%c10_151, %c0_152, %c0_153] : memref<25x32x128xbf16, #tpu.memory_space<vmem>>, vector<1x32x128xbf16>
    %199 = vector.shape_cast %198 : vector<1x32x128xbf16> to vector<32x128xbf16>
    %cst_154 = arith.constant dense<0.000000e+00> : vector<6x128xf32>
    %200 = tpu.matmul %197, %199, %cst_154 {dimension_numbers = #tpu.dot_dimension_numbers<[1], [0], [0], [1], [0, 0, 1, 1], [], []>} : vector<6x32xbf16>, vector<32x128xbf16>, vector<6x128xf32> -> vector<6x128xf32>
    %201 = arith.addf %194, %200 : vector<6x128xf32>
    %202 = vector.extract_strided_slice %196 {offsets = [1, 0], sizes = [6, 32], strides = [1, 1]} : vector<10x32xbf16> to vector<6x32xbf16>
    %c11_155 = arith.constant 11 : index
    %c0_156 = arith.constant 0 : index
    %c0_157 = arith.constant 0 : index
    %203 = vector.load %arg2[%c11_155, %c0_156, %c0_157] : memref<25x32x128xbf16, #tpu.memory_space<vmem>>, vector<1x32x128xbf16>
    %204 = vector.shape_cast %203 : vector<1x32x128xbf16> to vector<32x128xbf16>
    %cst_158 = arith.constant dense<0.000000e+00> : vector<6x128xf32>
    %205 = tpu.matmul %202, %204, %cst_158 {dimension_numbers = #tpu.dot_dimension_numbers<[1], [0], [0], [1], [0, 0, 1, 1], [], []>} : vector<6x32xbf16>, vector<32x128xbf16>, vector<6x128xf32> -> vector<6x128xf32>
    %206 = arith.addf %201, %205 : vector<6x128xf32>
    %207 = vector.extract_strided_slice %196 {offsets = [2, 0], sizes = [6, 32], strides = [1, 1]} : vector<10x32xbf16> to vector<6x32xbf16>
    %c12_159 = arith.constant 12 : index
    %c0_160 = arith.constant 0 : index
    %c0_161 = arith.constant 0 : index
    %208 = vector.load %arg2[%c12_159, %c0_160, %c0_161] : memref<25x32x128xbf16, #tpu.memory_space<vmem>>, vector<1x32x128xbf16>
    %209 = vector.shape_cast %208 : vector<1x32x128xbf16> to vector<32x128xbf16>
    %cst_162 = arith.constant dense<0.000000e+00> : vector<6x128xf32>
    %210 = tpu.matmul %207, %209, %cst_162 {dimension_numbers = #tpu.dot_dimension_numbers<[1], [0], [0], [1], [0, 0, 1, 1], [], []>} : vector<6x32xbf16>, vector<32x128xbf16>, vector<6x128xf32> -> vector<6x128xf32>
    %211 = arith.addf %206, %210 : vector<6x128xf32>
    %212 = vector.extract_strided_slice %196 {offsets = [3, 0], sizes = [6, 32], strides = [1, 1]} : vector<10x32xbf16> to vector<6x32xbf16>
    %c13_163 = arith.constant 13 : index
    %c0_164 = arith.constant 0 : index
    %c0_165 = arith.constant 0 : index
    %213 = vector.load %arg2[%c13_163, %c0_164, %c0_165] : memref<25x32x128xbf16, #tpu.memory_space<vmem>>, vector<1x32x128xbf16>
    %214 = vector.shape_cast %213 : vector<1x32x128xbf16> to vector<32x128xbf16>
    %cst_166 = arith.constant dense<0.000000e+00> : vector<6x128xf32>
    %215 = tpu.matmul %212, %214, %cst_166 {dimension_numbers = #tpu.dot_dimension_numbers<[1], [0], [0], [1], [0, 0, 1, 1], [], []>} : vector<6x32xbf16>, vector<32x128xbf16>, vector<6x128xf32> -> vector<6x128xf32>
    %216 = arith.addf %211, %215 : vector<6x128xf32>
    %217 = vector.extract_strided_slice %196 {offsets = [4, 0], sizes = [6, 32], strides = [1, 1]} : vector<10x32xbf16> to vector<6x32xbf16>
    %c14_167 = arith.constant 14 : index
    %c0_168 = arith.constant 0 : index
    %c0_169 = arith.constant 0 : index
    %218 = vector.load %arg2[%c14_167, %c0_168, %c0_169] : memref<25x32x128xbf16, #tpu.memory_space<vmem>>, vector<1x32x128xbf16>
    %219 = vector.shape_cast %218 : vector<1x32x128xbf16> to vector<32x128xbf16>
    %cst_170 = arith.constant dense<0.000000e+00> : vector<6x128xf32>
    %220 = tpu.matmul %217, %219, %cst_170 {dimension_numbers = #tpu.dot_dimension_numbers<[1], [0], [0], [1], [0, 0, 1, 1], [], []>} : vector<6x32xbf16>, vector<32x128xbf16>, vector<6x128xf32> -> vector<6x128xf32>
    %221 = arith.addf %216, %220 : vector<6x128xf32>
    %c0_171 = arith.constant 0 : index
    %c4_172 = arith.constant 4 : index
    %c0_173 = arith.constant 0 : index
    %c0_174 = arith.constant 0 : index
    %222 = vector.load %arg1[%c0_171, %c4_172, %c0_173, %c0_174] : memref<1x10x10x32xbf16, #tpu.memory_space<vmem>>, vector<1x1x10x32xbf16>
    %223 = vector.shape_cast %222 : vector<1x1x10x32xbf16> to vector<10x32xbf16>
    %224 = vector.extract_strided_slice %223 {offsets = [0, 0], sizes = [6, 32], strides = [1, 1]} : vector<10x32xbf16> to vector<6x32xbf16>
    %c15_175 = arith.constant 15 : index
    %c0_176 = arith.constant 0 : index
    %c0_177 = arith.constant 0 : index
    %225 = vector.load %arg2[%c15_175, %c0_176, %c0_177] : memref<25x32x128xbf16, #tpu.memory_space<vmem>>, vector<1x32x128xbf16>
    %226 = vector.shape_cast %225 : vector<1x32x128xbf16> to vector<32x128xbf16>
    %cst_178 = arith.constant dense<0.000000e+00> : vector<6x128xf32>
    %227 = tpu.matmul %224, %226, %cst_178 {dimension_numbers = #tpu.dot_dimension_numbers<[1], [0], [0], [1], [0, 0, 1, 1], [], []>} : vector<6x32xbf16>, vector<32x128xbf16>, vector<6x128xf32> -> vector<6x128xf32>
    %228 = arith.addf %221, %227 : vector<6x128xf32>
    %229 = vector.extract_strided_slice %223 {offsets = [1, 0], sizes = [6, 32], strides = [1, 1]} : vector<10x32xbf16> to vector<6x32xbf16>
    %c16_179 = arith.constant 16 : index
    %c0_180 = arith.constant 0 : index
    %c0_181 = arith.constant 0 : index
    %230 = vector.load %arg2[%c16_179, %c0_180, %c0_181] : memref<25x32x128xbf16, #tpu.memory_space<vmem>>, vector<1x32x128xbf16>
    %231 = vector.shape_cast %230 : vector<1x32x128xbf16> to vector<32x128xbf16>
    %cst_182 = arith.constant dense<0.000000e+00> : vector<6x128xf32>
    %232 = tpu.matmul %229, %231, %cst_182 {dimension_numbers = #tpu.dot_dimension_numbers<[1], [0], [0], [1], [0, 0, 1, 1], [], []>} : vector<6x32xbf16>, vector<32x128xbf16>, vector<6x128xf32> -> vector<6x128xf32>
    %233 = arith.addf %228, %232 : vector<6x128xf32>
    %234 = vector.extract_strided_slice %223 {offsets = [2, 0], sizes = [6, 32], strides = [1, 1]} : vector<10x32xbf16> to vector<6x32xbf16>
    %c17_183 = arith.constant 17 : index
    %c0_184 = arith.constant 0 : index
    %c0_185 = arith.constant 0 : index
    %235 = vector.load %arg2[%c17_183, %c0_184, %c0_185] : memref<25x32x128xbf16, #tpu.memory_space<vmem>>, vector<1x32x128xbf16>
    %236 = vector.shape_cast %235 : vector<1x32x128xbf16> to vector<32x128xbf16>
    %cst_186 = arith.constant dense<0.000000e+00> : vector<6x128xf32>
    %237 = tpu.matmul %234, %236, %cst_186 {dimension_numbers = #tpu.dot_dimension_numbers<[1], [0], [0], [1], [0, 0, 1, 1], [], []>} : vector<6x32xbf16>, vector<32x128xbf16>, vector<6x128xf32> -> vector<6x128xf32>
    %238 = arith.addf %233, %237 : vector<6x128xf32>
    %239 = vector.extract_strided_slice %223 {offsets = [3, 0], sizes = [6, 32], strides = [1, 1]} : vector<10x32xbf16> to vector<6x32xbf16>
    %c18_187 = arith.constant 18 : index
    %c0_188 = arith.constant 0 : index
    %c0_189 = arith.constant 0 : index
    %240 = vector.load %arg2[%c18_187, %c0_188, %c0_189] : memref<25x32x128xbf16, #tpu.memory_space<vmem>>, vector<1x32x128xbf16>
    %241 = vector.shape_cast %240 : vector<1x32x128xbf16> to vector<32x128xbf16>
    %cst_190 = arith.constant dense<0.000000e+00> : vector<6x128xf32>
    %242 = tpu.matmul %239, %241, %cst_190 {dimension_numbers = #tpu.dot_dimension_numbers<[1], [0], [0], [1], [0, 0, 1, 1], [], []>} : vector<6x32xbf16>, vector<32x128xbf16>, vector<6x128xf32> -> vector<6x128xf32>
    %243 = arith.addf %238, %242 : vector<6x128xf32>
    %244 = vector.extract_strided_slice %223 {offsets = [4, 0], sizes = [6, 32], strides = [1, 1]} : vector<10x32xbf16> to vector<6x32xbf16>
    %c19_191 = arith.constant 19 : index
    %c0_192 = arith.constant 0 : index
    %c0_193 = arith.constant 0 : index
    %245 = vector.load %arg2[%c19_191, %c0_192, %c0_193] : memref<25x32x128xbf16, #tpu.memory_space<vmem>>, vector<1x32x128xbf16>
    %246 = vector.shape_cast %245 : vector<1x32x128xbf16> to vector<32x128xbf16>
    %cst_194 = arith.constant dense<0.000000e+00> : vector<6x128xf32>
    %247 = tpu.matmul %244, %246, %cst_194 {dimension_numbers = #tpu.dot_dimension_numbers<[1], [0], [0], [1], [0, 0, 1, 1], [], []>} : vector<6x32xbf16>, vector<32x128xbf16>, vector<6x128xf32> -> vector<6x128xf32>
    %248 = arith.addf %243, %247 : vector<6x128xf32>
    %c0_195 = arith.constant 0 : index
    %c5_196 = arith.constant 5 : index
    %c0_197 = arith.constant 0 : index
    %c0_198 = arith.constant 0 : index
    %249 = vector.load %arg1[%c0_195, %c5_196, %c0_197, %c0_198] : memref<1x10x10x32xbf16, #tpu.memory_space<vmem>>, vector<1x1x10x32xbf16>
    %250 = vector.shape_cast %249 : vector<1x1x10x32xbf16> to vector<10x32xbf16>
    %251 = vector.extract_strided_slice %250 {offsets = [0, 0], sizes = [6, 32], strides = [1, 1]} : vector<10x32xbf16> to vector<6x32xbf16>
    %c20_199 = arith.constant 20 : index
    %c0_200 = arith.constant 0 : index
    %c0_201 = arith.constant 0 : index
    %252 = vector.load %arg2[%c20_199, %c0_200, %c0_201] : memref<25x32x128xbf16, #tpu.memory_space<vmem>>, vector<1x32x128xbf16>
    %253 = vector.shape_cast %252 : vector<1x32x128xbf16> to vector<32x128xbf16>
    %cst_202 = arith.constant dense<0.000000e+00> : vector<6x128xf32>
    %254 = tpu.matmul %251, %253, %cst_202 {dimension_numbers = #tpu.dot_dimension_numbers<[1], [0], [0], [1], [0, 0, 1, 1], [], []>} : vector<6x32xbf16>, vector<32x128xbf16>, vector<6x128xf32> -> vector<6x128xf32>
    %255 = arith.addf %248, %254 : vector<6x128xf32>
    %256 = vector.extract_strided_slice %250 {offsets = [1, 0], sizes = [6, 32], strides = [1, 1]} : vector<10x32xbf16> to vector<6x32xbf16>
    %c21_203 = arith.constant 21 : index
    %c0_204 = arith.constant 0 : index
    %c0_205 = arith.constant 0 : index
    %257 = vector.load %arg2[%c21_203, %c0_204, %c0_205] : memref<25x32x128xbf16, #tpu.memory_space<vmem>>, vector<1x32x128xbf16>
    %258 = vector.shape_cast %257 : vector<1x32x128xbf16> to vector<32x128xbf16>
    %cst_206 = arith.constant dense<0.000000e+00> : vector<6x128xf32>
    %259 = tpu.matmul %256, %258, %cst_206 {dimension_numbers = #tpu.dot_dimension_numbers<[1], [0], [0], [1], [0, 0, 1, 1], [], []>} : vector<6x32xbf16>, vector<32x128xbf16>, vector<6x128xf32> -> vector<6x128xf32>
    %260 = arith.addf %255, %259 : vector<6x128xf32>
    %261 = vector.extract_strided_slice %250 {offsets = [2, 0], sizes = [6, 32], strides = [1, 1]} : vector<10x32xbf16> to vector<6x32xbf16>
    %c22_207 = arith.constant 22 : index
    %c0_208 = arith.constant 0 : index
    %c0_209 = arith.constant 0 : index
    %262 = vector.load %arg2[%c22_207, %c0_208, %c0_209] : memref<25x32x128xbf16, #tpu.memory_space<vmem>>, vector<1x32x128xbf16>
    %263 = vector.shape_cast %262 : vector<1x32x128xbf16> to vector<32x128xbf16>
    %cst_210 = arith.constant dense<0.000000e+00> : vector<6x128xf32>
    %264 = tpu.matmul %261, %263, %cst_210 {dimension_numbers = #tpu.dot_dimension_numbers<[1], [0], [0], [1], [0, 0, 1, 1], [], []>} : vector<6x32xbf16>, vector<32x128xbf16>, vector<6x128xf32> -> vector<6x128xf32>
    %265 = arith.addf %260, %264 : vector<6x128xf32>
    %266 = vector.extract_strided_slice %250 {offsets = [3, 0], sizes = [6, 32], strides = [1, 1]} : vector<10x32xbf16> to vector<6x32xbf16>
    %c23_211 = arith.constant 23 : index
    %c0_212 = arith.constant 0 : index
    %c0_213 = arith.constant 0 : index
    %267 = vector.load %arg2[%c23_211, %c0_212, %c0_213] : memref<25x32x128xbf16, #tpu.memory_space<vmem>>, vector<1x32x128xbf16>
    %268 = vector.shape_cast %267 : vector<1x32x128xbf16> to vector<32x128xbf16>
    %cst_214 = arith.constant dense<0.000000e+00> : vector<6x128xf32>
    %269 = tpu.matmul %266, %268, %cst_214 {dimension_numbers = #tpu.dot_dimension_numbers<[1], [0], [0], [1], [0, 0, 1, 1], [], []>} : vector<6x32xbf16>, vector<32x128xbf16>, vector<6x128xf32> -> vector<6x128xf32>
    %270 = arith.addf %265, %269 : vector<6x128xf32>
    %271 = vector.extract_strided_slice %250 {offsets = [4, 0], sizes = [6, 32], strides = [1, 1]} : vector<10x32xbf16> to vector<6x32xbf16>
    %c24_215 = arith.constant 24 : index
    %c0_216 = arith.constant 0 : index
    %c0_217 = arith.constant 0 : index
    %272 = vector.load %arg2[%c24_215, %c0_216, %c0_217] : memref<25x32x128xbf16, #tpu.memory_space<vmem>>, vector<1x32x128xbf16>
    %273 = vector.shape_cast %272 : vector<1x32x128xbf16> to vector<32x128xbf16>
    %cst_218 = arith.constant dense<0.000000e+00> : vector<6x128xf32>
    %274 = tpu.matmul %271, %273, %cst_218 {dimension_numbers = #tpu.dot_dimension_numbers<[1], [0], [0], [1], [0, 0, 1, 1], [], []>} : vector<6x32xbf16>, vector<32x128xbf16>, vector<6x128xf32> -> vector<6x128xf32>
    %275 = arith.addf %270, %274 : vector<6x128xf32>
    %c0_219 = arith.constant 0 : index
    %c6_220 = arith.constant 6 : index
    %c0_221 = arith.constant 0 : index
    %276 = vector.load %arg4[%c0_219, %c6_220, %c0_221] : memref<1x36x128xf32, #tpu.memory_space<vmem>>, vector<1x6x128xf32>
    %277 = vector.shape_cast %276 : vector<1x6x128xf32> to vector<6x128xf32>
    %278 = vector.shape_cast %275 : vector<6x128xf32> to vector<1x6x128xf32>
    tpu.vector_store %arg4[%c0_219, %c6_220, %c0_221], %278 {strides = array<i32>} : memref<1x36x128xf32, #tpu.memory_space<vmem>>, vector<1x6x128xf32>,
    %c0_222 = arith.constant 0 : index
    %c2_223 = arith.constant 2 : index
    %c0_224 = arith.constant 0 : index
    %c0_225 = arith.constant 0 : index
    %279 = vector.load %arg1[%c0_222, %c2_223, %c0_224, %c0_225] : memref<1x10x10x32xbf16, #tpu.memory_space<vmem>>, vector<1x1x10x32xbf16>
    %280 = vector.shape_cast %279 : vector<1x1x10x32xbf16> to vector<10x32xbf16>
    %281 = vector.extract_strided_slice %280 {offsets = [0, 0], sizes = [6, 32], strides = [1, 1]} : vector<10x32xbf16> to vector<6x32xbf16>
    %c0_226 = arith.constant 0 : index
    %c0_227 = arith.constant 0 : index
    %c0_228 = arith.constant 0 : index
    %282 = vector.load %arg2[%c0_226, %c0_227, %c0_228] : memref<25x32x128xbf16, #tpu.memory_space<vmem>>, vector<1x32x128xbf16>
    %283 = vector.shape_cast %282 : vector<1x32x128xbf16> to vector<32x128xbf16>
    %cst_229 = arith.constant dense<0.000000e+00> : vector<6x128xf32>
    %284 = tpu.matmul %281, %283, %cst_229 {dimension_numbers = #tpu.dot_dimension_numbers<[1], [0], [0], [1], [0, 0, 1, 1], [], []>} : vector<6x32xbf16>, vector<32x128xbf16>, vector<6x128xf32> -> vector<6x128xf32>
    %285 = arith.addf %2, %284 : vector<6x128xf32>
    %286 = vector.extract_strided_slice %280 {offsets = [1, 0], sizes = [6, 32], strides = [1, 1]} : vector<10x32xbf16> to vector<6x32xbf16>
    %c1_230 = arith.constant 1 : index
    %c0_231 = arith.constant 0 : index
    %c0_232 = arith.constant 0 : index
    %287 = vector.load %arg2[%c1_230, %c0_231, %c0_232] : memref<25x32x128xbf16, #tpu.memory_space<vmem>>, vector<1x32x128xbf16>
    %288 = vector.shape_cast %287 : vector<1x32x128xbf16> to vector<32x128xbf16>
    %cst_233 = arith.constant dense<0.000000e+00> : vector<6x128xf32>
    %289 = tpu.matmul %286, %288, %cst_233 {dimension_numbers = #tpu.dot_dimension_numbers<[1], [0], [0], [1], [0, 0, 1, 1], [], []>} : vector<6x32xbf16>, vector<32x128xbf16>, vector<6x128xf32> -> vector<6x128xf32>
    %290 = arith.addf %285, %289 : vector<6x128xf32>
    %291 = vector.extract_strided_slice %280 {offsets = [2, 0], sizes = [6, 32], strides = [1, 1]} : vector<10x32xbf16> to vector<6x32xbf16>
    %c2_234 = arith.constant 2 : index
    %c0_235 = arith.constant 0 : index
    %c0_236 = arith.constant 0 : index
    %292 = vector.load %arg2[%c2_234, %c0_235, %c0_236] : memref<25x32x128xbf16, #tpu.memory_space<vmem>>, vector<1x32x128xbf16>
    %293 = vector.shape_cast %292 : vector<1x32x128xbf16> to vector<32x128xbf16>
    %cst_237 = arith.constant dense<0.000000e+00> : vector<6x128xf32>
    %294 = tpu.matmul %291, %293, %cst_237 {dimension_numbers = #tpu.dot_dimension_numbers<[1], [0], [0], [1], [0, 0, 1, 1], [], []>} : vector<6x32xbf16>, vector<32x128xbf16>, vector<6x128xf32> -> vector<6x128xf32>
    %295 = arith.addf %290, %294 : vector<6x128xf32>
    %296 = vector.extract_strided_slice %280 {offsets = [3, 0], sizes = [6, 32], strides = [1, 1]} : vector<10x32xbf16> to vector<6x32xbf16>
    %c3_238 = arith.constant 3 : index
    %c0_239 = arith.constant 0 : index
    %c0_240 = arith.constant 0 : index
    %297 = vector.load %arg2[%c3_238, %c0_239, %c0_240] : memref<25x32x128xbf16, #tpu.memory_space<vmem>>, vector<1x32x128xbf16>
    %298 = vector.shape_cast %297 : vector<1x32x128xbf16> to vector<32x128xbf16>
    %cst_241 = arith.constant dense<0.000000e+00> : vector<6x128xf32>
    %299 = tpu.matmul %296, %298, %cst_241 {dimension_numbers = #tpu.dot_dimension_numbers<[1], [0], [0], [1], [0, 0, 1, 1], [], []>} : vector<6x32xbf16>, vector<32x128xbf16>, vector<6x128xf32> -> vector<6x128xf32>
    %300 = arith.addf %295, %299 : vector<6x128xf32>
    %301 = vector.extract_strided_slice %280 {offsets = [4, 0], sizes = [6, 32], strides = [1, 1]} : vector<10x32xbf16> to vector<6x32xbf16>
    %c4_242 = arith.constant 4 : index
    %c0_243 = arith.constant 0 : index
    %c0_244 = arith.constant 0 : index
    %302 = vector.load %arg2[%c4_242, %c0_243, %c0_244] : memref<25x32x128xbf16, #tpu.memory_space<vmem>>, vector<1x32x128xbf16>
    %303 = vector.shape_cast %302 : vector<1x32x128xbf16> to vector<32x128xbf16>
    %cst_245 = arith.constant dense<0.000000e+00> : vector<6x128xf32>
    %304 = tpu.matmul %301, %303, %cst_245 {dimension_numbers = #tpu.dot_dimension_numbers<[1], [0], [0], [1], [0, 0, 1, 1], [], []>} : vector<6x32xbf16>, vector<32x128xbf16>, vector<6x128xf32> -> vector<6x128xf32>
    %305 = arith.addf %300, %304 : vector<6x128xf32>
    %c0_246 = arith.constant 0 : index
    %c3_247 = arith.constant 3 : index
    %c0_248 = arith.constant 0 : index
    %c0_249 = arith.constant 0 : index
    %306 = vector.load %arg1[%c0_246, %c3_247, %c0_248, %c0_249] : memref<1x10x10x32xbf16, #tpu.memory_space<vmem>>, vector<1x1x10x32xbf16>
    %307 = vector.shape_cast %306 : vector<1x1x10x32xbf16> to vector<10x32xbf16>
    %308 = vector.extract_strided_slice %307 {offsets = [0, 0], sizes = [6, 32], strides = [1, 1]} : vector<10x32xbf16> to vector<6x32xbf16>
    %c5_250 = arith.constant 5 : index
    %c0_251 = arith.constant 0 : index
    %c0_252 = arith.constant 0 : index
    %309 = vector.load %arg2[%c5_250, %c0_251, %c0_252] : memref<25x32x128xbf16, #tpu.memory_space<vmem>>, vector<1x32x128xbf16>
    %310 = vector.shape_cast %309 : vector<1x32x128xbf16> to vector<32x128xbf16>
    %cst_253 = arith.constant dense<0.000000e+00> : vector<6x128xf32>
    %311 = tpu.matmul %308, %310, %cst_253 {dimension_numbers = #tpu.dot_dimension_numbers<[1], [0], [0], [1], [0, 0, 1, 1], [], []>} : vector<6x32xbf16>, vector<32x128xbf16>, vector<6x128xf32> -> vector<6x128xf32>
    %312 = arith.addf %305, %311 : vector<6x128xf32>
    %313 = vector.extract_strided_slice %307 {offsets = [1, 0], sizes = [6, 32], strides = [1, 1]} : vector<10x32xbf16> to vector<6x32xbf16>
    %c6_254 = arith.constant 6 : index
    %c0_255 = arith.constant 0 : index
    %c0_256 = arith.constant 0 : index
    %314 = vector.load %arg2[%c6_254, %c0_255, %c0_256] : memref<25x32x128xbf16, #tpu.memory_space<vmem>>, vector<1x32x128xbf16>
    %315 = vector.shape_cast %314 : vector<1x32x128xbf16> to vector<32x128xbf16>
    %cst_257 = arith.constant dense<0.000000e+00> : vector<6x128xf32>
    %316 = tpu.matmul %313, %315, %cst_257 {dimension_numbers = #tpu.dot_dimension_numbers<[1], [0], [0], [1], [0, 0, 1, 1], [], []>} : vector<6x32xbf16>, vector<32x128xbf16>, vector<6x128xf32> -> vector<6x128xf32>
    %317 = arith.addf %312, %316 : vector<6x128xf32>
    %318 = vector.extract_strided_slice %307 {offsets = [2, 0], sizes = [6, 32], strides = [1, 1]} : vector<10x32xbf16> to vector<6x32xbf16>
    %c7_258 = arith.constant 7 : index
    %c0_259 = arith.constant 0 : index
    %c0_260 = arith.constant 0 : index
    %319 = vector.load %arg2[%c7_258, %c0_259, %c0_260] : memref<25x32x128xbf16, #tpu.memory_space<vmem>>, vector<1x32x128xbf16>
    %320 = vector.shape_cast %319 : vector<1x32x128xbf16> to vector<32x128xbf16>
    %cst_261 = arith.constant dense<0.000000e+00> : vector<6x128xf32>
    %321 = tpu.matmul %318, %320, %cst_261 {dimension_numbers = #tpu.dot_dimension_numbers<[1], [0], [0], [1], [0, 0, 1, 1], [], []>} : vector<6x32xbf16>, vector<32x128xbf16>, vector<6x128xf32> -> vector<6x128xf32>
    %322 = arith.addf %317, %321 : vector<6x128xf32>
    %323 = vector.extract_strided_slice %307 {offsets = [3, 0], sizes = [6, 32], strides = [1, 1]} : vector<10x32xbf16> to vector<6x32xbf16>
    %c8_262 = arith.constant 8 : index
    %c0_263 = arith.constant 0 : index
    %c0_264 = arith.constant 0 : index
    %324 = vector.load %arg2[%c8_262, %c0_263, %c0_264] : memref<25x32x128xbf16, #tpu.memory_space<vmem>>, vector<1x32x128xbf16>
    %325 = vector.shape_cast %324 : vector<1x32x128xbf16> to vector<32x128xbf16>
    %cst_265 = arith.constant dense<0.000000e+00> : vector<6x128xf32>
    %326 = tpu.matmul %323, %325, %cst_265 {dimension_numbers = #tpu.dot_dimension_numbers<[1], [0], [0], [1], [0, 0, 1, 1], [], []>} : vector<6x32xbf16>, vector<32x128xbf16>, vector<6x128xf32> -> vector<6x128xf32>
    %327 = arith.addf %322, %326 : vector<6x128xf32>
    %328 = vector.extract_strided_slice %307 {offsets = [4, 0], sizes = [6, 32], strides = [1, 1]} : vector<10x32xbf16> to vector<6x32xbf16>
    %c9_266 = arith.constant 9 : index
    %c0_267 = arith.constant 0 : index
    %c0_268 = arith.constant 0 : index
    %329 = vector.load %arg2[%c9_266, %c0_267, %c0_268] : memref<25x32x128xbf16, #tpu.memory_space<vmem>>, vector<1x32x128xbf16>
    %330 = vector.shape_cast %329 : vector<1x32x128xbf16> to vector<32x128xbf16>
    %cst_269 = arith.constant dense<0.000000e+00> : vector<6x128xf32>
    %331 = tpu.matmul %328, %330, %cst_269 {dimension_numbers = #tpu.dot_dimension_numbers<[1], [0], [0], [1], [0, 0, 1, 1], [], []>} : vector<6x32xbf16>, vector<32x128xbf16>, vector<6x128xf32> -> vector<6x128xf32>
    %332 = arith.addf %327, %331 : vector<6x128xf32>
    %c0_270 = arith.constant 0 : index
    %c4_271 = arith.constant 4 : index
    %c0_272 = arith.constant 0 : index
    %c0_273 = arith.constant 0 : index
    %333 = vector.load %arg1[%c0_270, %c4_271, %c0_272, %c0_273] : memref<1x10x10x32xbf16, #tpu.memory_space<vmem>>, vector<1x1x10x32xbf16>
    %334 = vector.shape_cast %333 : vector<1x1x10x32xbf16> to vector<10x32xbf16>
    %335 = vector.extract_strided_slice %334 {offsets = [0, 0], sizes = [6, 32], strides = [1, 1]} : vector<10x32xbf16> to vector<6x32xbf16>
    %c10_274 = arith.constant 10 : index
    %c0_275 = arith.constant 0 : index
    %c0_276 = arith.constant 0 : index
    %336 = vector.load %arg2[%c10_274, %c0_275, %c0_276] : memref<25x32x128xbf16, #tpu.memory_space<vmem>>, vector<1x32x128xbf16>
    %337 = vector.shape_cast %336 : vector<1x32x128xbf16> to vector<32x128xbf16>
    %cst_277 = arith.constant dense<0.000000e+00> : vector<6x128xf32>
    %338 = tpu.matmul %335, %337, %cst_277 {dimension_numbers = #tpu.dot_dimension_numbers<[1], [0], [0], [1], [0, 0, 1, 1], [], []>} : vector<6x32xbf16>, vector<32x128xbf16>, vector<6x128xf32> -> vector<6x128xf32>
    %339 = arith.addf %332, %338 : vector<6x128xf32>
    %340 = vector.extract_strided_slice %334 {offsets = [1, 0], sizes = [6, 32], strides = [1, 1]} : vector<10x32xbf16> to vector<6x32xbf16>
    %c11_278 = arith.constant 11 : index
    %c0_279 = arith.constant 0 : index
    %c0_280 = arith.constant 0 : index
    %341 = vector.load %arg2[%c11_278, %c0_279, %c0_280] : memref<25x32x128xbf16, #tpu.memory_space<vmem>>, vector<1x32x128xbf16>
    %342 = vector.shape_cast %341 : vector<1x32x128xbf16> to vector<32x128xbf16>
    %cst_281 = arith.constant dense<0.000000e+00> : vector<6x128xf32>
    %343 = tpu.matmul %340, %342, %cst_281 {dimension_numbers = #tpu.dot_dimension_numbers<[1], [0], [0], [1], [0, 0, 1, 1], [], []>} : vector<6x32xbf16>, vector<32x128xbf16>, vector<6x128xf32> -> vector<6x128xf32>
    %344 = arith.addf %339, %343 : vector<6x128xf32>
    %345 = vector.extract_strided_slice %334 {offsets = [2, 0], sizes = [6, 32], strides = [1, 1]} : vector<10x32xbf16> to vector<6x32xbf16>
    %c12_282 = arith.constant 12 : index
    %c0_283 = arith.constant 0 : index
    %c0_284 = arith.constant 0 : index
    %346 = vector.load %arg2[%c12_282, %c0_283, %c0_284] : memref<25x32x128xbf16, #tpu.memory_space<vmem>>, vector<1x32x128xbf16>
    %347 = vector.shape_cast %346 : vector<1x32x128xbf16> to vector<32x128xbf16>
    %cst_285 = arith.constant dense<0.000000e+00> : vector<6x128xf32>
    %348 = tpu.matmul %345, %347, %cst_285 {dimension_numbers = #tpu.dot_dimension_numbers<[1], [0], [0], [1], [0, 0, 1, 1], [], []>} : vector<6x32xbf16>, vector<32x128xbf16>, vector<6x128xf32> -> vector<6x128xf32>
    %349 = arith.addf %344, %348 : vector<6x128xf32>
    %350 = vector.extract_strided_slice %334 {offsets = [3, 0], sizes = [6, 32], strides = [1, 1]} : vector<10x32xbf16> to vector<6x32xbf16>
    %c13_286 = arith.constant 13 : index
    %c0_287 = arith.constant 0 : index
    %c0_288 = arith.constant 0 : index
    %351 = vector.load %arg2[%c13_286, %c0_287, %c0_288] : memref<25x32x128xbf16, #tpu.memory_space<vmem>>, vector<1x32x128xbf16>
    %352 = vector.shape_cast %351 : vector<1x32x128xbf16> to vector<32x128xbf16>
    %cst_289 = arith.constant dense<0.000000e+00> : vector<6x128xf32>
    %353 = tpu.matmul %350, %352, %cst_289 {dimension_numbers = #tpu.dot_dimension_numbers<[1], [0], [0], [1], [0, 0, 1, 1], [], []>} : vector<6x32xbf16>, vector<32x128xbf16>, vector<6x128xf32> -> vector<6x128xf32>
    %354 = arith.addf %349, %353 : vector<6x128xf32>
    %355 = vector.extract_strided_slice %334 {offsets = [4, 0], sizes = [6, 32], strides = [1, 1]} : vector<10x32xbf16> to vector<6x32xbf16>
    %c14_290 = arith.constant 14 : index
    %c0_291 = arith.constant 0 : index
    %c0_292 = arith.constant 0 : index
    %356 = vector.load %arg2[%c14_290, %c0_291, %c0_292] : memref<25x32x128xbf16, #tpu.memory_space<vmem>>, vector<1x32x128xbf16>
    %357 = vector.shape_cast %356 : vector<1x32x128xbf16> to vector<32x128xbf16>
    %cst_293 = arith.constant dense<0.000000e+00> : vector<6x128xf32>
    %358 = tpu.matmul %355, %357, %cst_293 {dimension_numbers = #tpu.dot_dimension_numbers<[1], [0], [0], [1], [0, 0, 1, 1], [], []>} : vector<6x32xbf16>, vector<32x128xbf16>, vector<6x128xf32> -> vector<6x128xf32>
    %359 = arith.addf %354, %358 : vector<6x128xf32>
    %c0_294 = arith.constant 0 : index
    %c5_295 = arith.constant 5 : index
    %c0_296 = arith.constant 0 : index
    %c0_297 = arith.constant 0 : index
    %360 = vector.load %arg1[%c0_294, %c5_295, %c0_296, %c0_297] : memref<1x10x10x32xbf16, #tpu.memory_space<vmem>>, vector<1x1x10x32xbf16>
    %361 = vector.shape_cast %360 : vector<1x1x10x32xbf16> to vector<10x32xbf16>
    %362 = vector.extract_strided_slice %361 {offsets = [0, 0], sizes = [6, 32], strides = [1, 1]} : vector<10x32xbf16> to vector<6x32xbf16>
    %c15_298 = arith.constant 15 : index
    %c0_299 = arith.constant 0 : index
    %c0_300 = arith.constant 0 : index
    %363 = vector.load %arg2[%c15_298, %c0_299, %c0_300] : memref<25x32x128xbf16, #tpu.memory_space<vmem>>, vector<1x32x128xbf16>
    %364 = vector.shape_cast %363 : vector<1x32x128xbf16> to vector<32x128xbf16>
    %cst_301 = arith.constant dense<0.000000e+00> : vector<6x128xf32>
    %365 = tpu.matmul %362, %364, %cst_301 {dimension_numbers = #tpu.dot_dimension_numbers<[1], [0], [0], [1], [0, 0, 1, 1], [], []>} : vector<6x32xbf16>, vector<32x128xbf16>, vector<6x128xf32> -> vector<6x128xf32>
    %366 = arith.addf %359, %365 : vector<6x128xf32>
    %367 = vector.extract_strided_slice %361 {offsets = [1, 0], sizes = [6, 32], strides = [1, 1]} : vector<10x32xbf16> to vector<6x32xbf16>
    %c16_302 = arith.constant 16 : index
    %c0_303 = arith.constant 0 : index
    %c0_304 = arith.constant 0 : index
    %368 = vector.load %arg2[%c16_302, %c0_303, %c0_304] : memref<25x32x128xbf16, #tpu.memory_space<vmem>>, vector<1x32x128xbf16>
    %369 = vector.shape_cast %368 : vector<1x32x128xbf16> to vector<32x128xbf16>
    %cst_305 = arith.constant dense<0.000000e+00> : vector<6x128xf32>
    %370 = tpu.matmul %367, %369, %cst_305 {dimension_numbers = #tpu.dot_dimension_numbers<[1], [0], [0], [1], [0, 0, 1, 1], [], []>} : vector<6x32xbf16>, vector<32x128xbf16>, vector<6x128xf32> -> vector<6x128xf32>
    %371 = arith.addf %366, %370 : vector<6x128xf32>
    %372 = vector.extract_strided_slice %361 {offsets = [2, 0], sizes = [6, 32], strides = [1, 1]} : vector<10x32xbf16> to vector<6x32xbf16>
    %c17_306 = arith.constant 17 : index
    %c0_307 = arith.constant 0 : index
    %c0_308 = arith.constant 0 : index
    %373 = vector.load %arg2[%c17_306, %c0_307, %c0_308] : memref<25x32x128xbf16, #tpu.memory_space<vmem>>, vector<1x32x128xbf16>
    %374 = vector.shape_cast %373 : vector<1x32x128xbf16> to vector<32x128xbf16>
    %cst_309 = arith.constant dense<0.000000e+00> : vector<6x128xf32>
    %375 = tpu.matmul %372, %374, %cst_309 {dimension_numbers = #tpu.dot_dimension_numbers<[1], [0], [0], [1], [0, 0, 1, 1], [], []>} : vector<6x32xbf16>, vector<32x128xbf16>, vector<6x128xf32> -> vector<6x128xf32>
    %376 = arith.addf %371, %375 : vector<6x128xf32>
    %377 = vector.extract_strided_slice %361 {offsets = [3, 0], sizes = [6, 32], strides = [1, 1]} : vector<10x32xbf16> to vector<6x32xbf16>
    %c18_310 = arith.constant 18 : index
    %c0_311 = arith.constant 0 : index
    %c0_312 = arith.constant 0 : index
    %378 = vector.load %arg2[%c18_310, %c0_311, %c0_312] : memref<25x32x128xbf16, #tpu.memory_space<vmem>>, vector<1x32x128xbf16>
    %379 = vector.shape_cast %378 : vector<1x32x128xbf16> to vector<32x128xbf16>
    %cst_313 = arith.constant dense<0.000000e+00> : vector<6x128xf32>
    %380 = tpu.matmul %377, %379, %cst_313 {dimension_numbers = #tpu.dot_dimension_numbers<[1], [0], [0], [1], [0, 0, 1, 1], [], []>} : vector<6x32xbf16>, vector<32x128xbf16>, vector<6x128xf32> -> vector<6x128xf32>
    %381 = arith.addf %376, %380 : vector<6x128xf32>
    %382 = vector.extract_strided_slice %361 {offsets = [4, 0], sizes = [6, 32], strides = [1, 1]} : vector<10x32xbf16> to vector<6x32xbf16>
    %c19_314 = arith.constant 19 : index
    %c0_315 = arith.constant 0 : index
    %c0_316 = arith.constant 0 : index
    %383 = vector.load %arg2[%c19_314, %c0_315, %c0_316] : memref<25x32x128xbf16, #tpu.memory_space<vmem>>, vector<1x32x128xbf16>
    %384 = vector.shape_cast %383 : vector<1x32x128xbf16> to vector<32x128xbf16>
    %cst_317 = arith.constant dense<0.000000e+00> : vector<6x128xf32>
    %385 = tpu.matmul %382, %384, %cst_317 {dimension_numbers = #tpu.dot_dimension_numbers<[1], [0], [0], [1], [0, 0, 1, 1], [], []>} : vector<6x32xbf16>, vector<32x128xbf16>, vector<6x128xf32> -> vector<6x128xf32>
    %386 = arith.addf %381, %385 : vector<6x128xf32>
    %c0_318 = arith.constant 0 : index
    %c6_319 = arith.constant 6 : index
    %c0_320 = arith.constant 0 : index
    %c0_321 = arith.constant 0 : index
    %387 = vector.load %arg1[%c0_318, %c6_319, %c0_320, %c0_321] : memref<1x10x10x32xbf16, #tpu.memory_space<vmem>>, vector<1x1x10x32xbf16>
    %388 = vector.shape_cast %387 : vector<1x1x10x32xbf16> to vector<10x32xbf16>
    %389 = vector.extract_strided_slice %388 {offsets = [0, 0], sizes = [6, 32], strides = [1, 1]} : vector<10x32xbf16> to vector<6x32xbf16>
    %c20_322 = arith.constant 20 : index
    %c0_323 = arith.constant 0 : index
    %c0_324 = arith.constant 0 : index
    %390 = vector.load %arg2[%c20_322, %c0_323, %c0_324] : memref<25x32x128xbf16, #tpu.memory_space<vmem>>, vector<1x32x128xbf16>
    %391 = vector.shape_cast %390 : vector<1x32x128xbf16> to vector<32x128xbf16>
    %cst_325 = arith.constant dense<0.000000e+00> : vector<6x128xf32>
    %392 = tpu.matmul %389, %391, %cst_325 {dimension_numbers = #tpu.dot_dimension_numbers<[1], [0], [0], [1], [0, 0, 1, 1], [], []>} : vector<6x32xbf16>, vector<32x128xbf16>, vector<6x128xf32> -> vector<6x128xf32>
    %393 = arith.addf %386, %392 : vector<6x128xf32>
    %394 = vector.extract_strided_slice %388 {offsets = [1, 0], sizes = [6, 32], strides = [1, 1]} : vector<10x32xbf16> to vector<6x32xbf16>
    %c21_326 = arith.constant 21 : index
    %c0_327 = arith.constant 0 : index
    %c0_328 = arith.constant 0 : index
    %395 = vector.load %arg2[%c21_326, %c0_327, %c0_328] : memref<25x32x128xbf16, #tpu.memory_space<vmem>>, vector<1x32x128xbf16>
    %396 = vector.shape_cast %395 : vector<1x32x128xbf16> to vector<32x128xbf16>
    %cst_329 = arith.constant dense<0.000000e+00> : vector<6x128xf32>
    %397 = tpu.matmul %394, %396, %cst_329 {dimension_numbers = #tpu.dot_dimension_numbers<[1], [0], [0], [1], [0, 0, 1, 1], [], []>} : vector<6x32xbf16>, vector<32x128xbf16>, vector<6x128xf32> -> vector<6x128xf32>
    %398 = arith.addf %393, %397 : vector<6x128xf32>
    %399 = vector.extract_strided_slice %388 {offsets = [2, 0], sizes = [6, 32], strides = [1, 1]} : vector<10x32xbf16> to vector<6x32xbf16>
    %c22_330 = arith.constant 22 : index
    %c0_331 = arith.constant 0 : index
    %c0_332 = arith.constant 0 : index
    %400 = vector.load %arg2[%c22_330, %c0_331, %c0_332] : memref<25x32x128xbf16, #tpu.memory_space<vmem>>, vector<1x32x128xbf16>
    %401 = vector.shape_cast %400 : vector<1x32x128xbf16> to vector<32x128xbf16>
    %cst_333 = arith.constant dense<0.000000e+00> : vector<6x128xf32>
    %402 = tpu.matmul %399, %401, %cst_333 {dimension_numbers = #tpu.dot_dimension_numbers<[1], [0], [0], [1], [0, 0, 1, 1], [], []>} : vector<6x32xbf16>, vector<32x128xbf16>, vector<6x128xf32> -> vector<6x128xf32>
    %403 = arith.addf %398, %402 : vector<6x128xf32>
    %404 = vector.extract_strided_slice %388 {offsets = [3, 0], sizes = [6, 32], strides = [1, 1]} : vector<10x32xbf16> to vector<6x32xbf16>
    %c23_334 = arith.constant 23 : index
    %c0_335 = arith.constant 0 : index
    %c0_336 = arith.constant 0 : index
    %405 = vector.load %arg2[%c23_334, %c0_335, %c0_336] : memref<25x32x128xbf16, #tpu.memory_space<vmem>>, vector<1x32x128xbf16>
    %406 = vector.shape_cast %405 : vector<1x32x128xbf16> to vector<32x128xbf16>
    %cst_337 = arith.constant dense<0.000000e+00> : vector<6x128xf32>
    %407 = tpu.matmul %404, %406, %cst_337 {dimension_numbers = #tpu.dot_dimension_numbers<[1], [0], [0], [1], [0, 0, 1, 1], [], []>} : vector<6x32xbf16>, vector<32x128xbf16>, vector<6x128xf32> -> vector<6x128xf32>
    %408 = arith.addf %403, %407 : vector<6x128xf32>
    %409 = vector.extract_strided_slice %388 {offsets = [4, 0], sizes = [6, 32], strides = [1, 1]} : vector<10x32xbf16> to vector<6x32xbf16>
    %c24_338 = arith.constant 24 : index
    %c0_339 = arith.constant 0 : index
    %c0_340 = arith.constant 0 : index
    %410 = vector.load %arg2[%c24_338, %c0_339, %c0_340] : memref<25x32x128xbf16, #tpu.memory_space<vmem>>, vector<1x32x128xbf16>
    %411 = vector.shape_cast %410 : vector<1x32x128xbf16> to vector<32x128xbf16>
    %cst_341 = arith.constant dense<0.000000e+00> : vector<6x128xf32>
    %412 = tpu.matmul %409, %411, %cst_341 {dimension_numbers = #tpu.dot_dimension_numbers<[1], [0], [0], [1], [0, 0, 1, 1], [], []>} : vector<6x32xbf16>, vector<32x128xbf16>, vector<6x128xf32> -> vector<6x128xf32>
    %413 = arith.addf %408, %412 : vector<6x128xf32>
    %c0_342 = arith.constant 0 : index
    %c12_343 = arith.constant 12 : index
    %c0_344 = arith.constant 0 : index
    %414 = vector.load %arg4[%c0_342, %c12_343, %c0_344] : memref<1x36x128xf32, #tpu.memory_space<vmem>>, vector<1x6x128xf32>
    %415 = vector.shape_cast %414 : vector<1x6x128xf32> to vector<6x128xf32>
    %416 = vector.shape_cast %413 : vector<6x128xf32> to vector<1x6x128xf32>
    tpu.vector_store %arg4[%c0_342, %c12_343, %c0_344], %416 {strides = array<i32>} : memref<1x36x128xf32, #tpu.memory_space<vmem>>, vector<1x6x128xf32>,
    %c0_345 = arith.constant 0 : index
    %c3_346 = arith.constant 3 : index
    %c0_347 = arith.constant 0 : index
    %c0_348 = arith.constant 0 : index
    %417 = vector.load %arg1[%c0_345, %c3_346, %c0_347, %c0_348] : memref<1x10x10x32xbf16, #tpu.memory_space<vmem>>, vector<1x1x10x32xbf16>
    %418 = vector.shape_cast %417 : vector<1x1x10x32xbf16> to vector<10x32xbf16>
    %419 = vector.extract_strided_slice %418 {offsets = [0, 0], sizes = [6, 32], strides = [1, 1]} : vector<10x32xbf16> to vector<6x32xbf16>
    %c0_349 = arith.constant 0 : index
    %c0_350 = arith.constant 0 : index
    %c0_351 = arith.constant 0 : index
    %420 = vector.load %arg2[%c0_349, %c0_350, %c0_351] : memref<25x32x128xbf16, #tpu.memory_space<vmem>>, vector<1x32x128xbf16>
    %421 = vector.shape_cast %420 : vector<1x32x128xbf16> to vector<32x128xbf16>
    %cst_352 = arith.constant dense<0.000000e+00> : vector<6x128xf32>
    %422 = tpu.matmul %419, %421, %cst_352 {dimension_numbers = #tpu.dot_dimension_numbers<[1], [0], [0], [1], [0, 0, 1, 1], [], []>} : vector<6x32xbf16>, vector<32x128xbf16>, vector<6x128xf32> -> vector<6x128xf32>
    %423 = arith.addf %2, %422 : vector<6x128xf32>
    %424 = vector.extract_strided_slice %418 {offsets = [1, 0], sizes = [6, 32], strides = [1, 1]} : vector<10x32xbf16> to vector<6x32xbf16>
    %c1_353 = arith.constant 1 : index
    %c0_354 = arith.constant 0 : index
    %c0_355 = arith.constant 0 : index
    %425 = vector.load %arg2[%c1_353, %c0_354, %c0_355] : memref<25x32x128xbf16, #tpu.memory_space<vmem>>, vector<1x32x128xbf16>
    %426 = vector.shape_cast %425 : vector<1x32x128xbf16> to vector<32x128xbf16>
    %cst_356 = arith.constant dense<0.000000e+00> : vector<6x128xf32>
    %427 = tpu.matmul %424, %426, %cst_356 {dimension_numbers = #tpu.dot_dimension_numbers<[1], [0], [0], [1], [0, 0, 1, 1], [], []>} : vector<6x32xbf16>, vector<32x128xbf16>, vector<6x128xf32> -> vector<6x128xf32>
    %428 = arith.addf %423, %427 : vector<6x128xf32>
    %429 = vector.extract_strided_slice %418 {offsets = [2, 0], sizes = [6, 32], strides = [1, 1]} : vector<10x32xbf16> to vector<6x32xbf16>
    %c2_357 = arith.constant 2 : index
    %c0_358 = arith.constant 0 : index
    %c0_359 = arith.constant 0 : index
    %430 = vector.load %arg2[%c2_357, %c0_358, %c0_359] : memref<25x32x128xbf16, #tpu.memory_space<vmem>>, vector<1x32x128xbf16>
    %431 = vector.shape_cast %430 : vector<1x32x128xbf16> to vector<32x128xbf16>
    %cst_360 = arith.constant dense<0.000000e+00> : vector<6x128xf32>
    %432 = tpu.matmul %429, %431, %cst_360 {dimension_numbers = #tpu.dot_dimension_numbers<[1], [0], [0], [1], [0, 0, 1, 1], [], []>} : vector<6x32xbf16>, vector<32x128xbf16>, vector<6x128xf32> -> vector<6x128xf32>
    %433 = arith.addf %428, %432 : vector<6x128xf32>
    %434 = vector.extract_strided_slice %418 {offsets = [3, 0], sizes = [6, 32], strides = [1, 1]} : vector<10x32xbf16> to vector<6x32xbf16>
    %c3_361 = arith.constant 3 : index
    %c0_362 = arith.constant 0 : index
    %c0_363 = arith.constant 0 : index
    %435 = vector.load %arg2[%c3_361, %c0_362, %c0_363] : memref<25x32x128xbf16, #tpu.memory_space<vmem>>, vector<1x32x128xbf16>
    %436 = vector.shape_cast %435 : vector<1x32x128xbf16> to vector<32x128xbf16>
    %cst_364 = arith.constant dense<0.000000e+00> : vector<6x128xf32>
    %437 = tpu.matmul %434, %436, %cst_364 {dimension_numbers = #tpu.dot_dimension_numbers<[1], [0], [0], [1], [0, 0, 1, 1], [], []>} : vector<6x32xbf16>, vector<32x128xbf16>, vector<6x128xf32> -> vector<6x128xf32>
    %438 = arith.addf %433, %437 : vector<6x128xf32>
    %439 = vector.extract_strided_slice %418 {offsets = [4, 0], sizes = [6, 32], strides = [1, 1]} : vector<10x32xbf16> to vector<6x32xbf16>
    %c4_365 = arith.constant 4 : index
    %c0_366 = arith.constant 0 : index
    %c0_367 = arith.constant 0 : index
    %440 = vector.load %arg2[%c4_365, %c0_366, %c0_367] : memref<25x32x128xbf16, #tpu.memory_space<vmem>>, vector<1x32x128xbf16>
    %441 = vector.shape_cast %440 : vector<1x32x128xbf16> to vector<32x128xbf16>
    %cst_368 = arith.constant dense<0.000000e+00> : vector<6x128xf32>
    %442 = tpu.matmul %439, %441, %cst_368 {dimension_numbers = #tpu.dot_dimension_numbers<[1], [0], [0], [1], [0, 0, 1, 1], [], []>} : vector<6x32xbf16>, vector<32x128xbf16>, vector<6x128xf32> -> vector<6x128xf32>
    %443 = arith.addf %438, %442 : vector<6x128xf32>
    %c0_369 = arith.constant 0 : index
    %c4_370 = arith.constant 4 : index
    %c0_371 = arith.constant 0 : index
    %c0_372 = arith.constant 0 : index
    %444 = vector.load %arg1[%c0_369, %c4_370, %c0_371, %c0_372] : memref<1x10x10x32xbf16, #tpu.memory_space<vmem>>, vector<1x1x10x32xbf16>
    %445 = vector.shape_cast %444 : vector<1x1x10x32xbf16> to vector<10x32xbf16>
    %446 = vector.extract_strided_slice %445 {offsets = [0, 0], sizes = [6, 32], strides = [1, 1]} : vector<10x32xbf16> to vector<6x32xbf16>
    %c5_373 = arith.constant 5 : index
    %c0_374 = arith.constant 0 : index
    %c0_375 = arith.constant 0 : index
    %447 = vector.load %arg2[%c5_373, %c0_374, %c0_375] : memref<25x32x128xbf16, #tpu.memory_space<vmem>>, vector<1x32x128xbf16>
    %448 = vector.shape_cast %447 : vector<1x32x128xbf16> to vector<32x128xbf16>
    %cst_376 = arith.constant dense<0.000000e+00> : vector<6x128xf32>
    %449 = tpu.matmul %446, %448, %cst_376 {dimension_numbers = #tpu.dot_dimension_numbers<[1], [0], [0], [1], [0, 0, 1, 1], [], []>} : vector<6x32xbf16>, vector<32x128xbf16>, vector<6x128xf32> -> vector<6x128xf32>
    %450 = arith.addf %443, %449 : vector<6x128xf32>
    %451 = vector.extract_strided_slice %445 {offsets = [1, 0], sizes = [6, 32], strides = [1, 1]} : vector<10x32xbf16> to vector<6x32xbf16>
    %c6_377 = arith.constant 6 : index
    %c0_378 = arith.constant 0 : index
    %c0_379 = arith.constant 0 : index
    %452 = vector.load %arg2[%c6_377, %c0_378, %c0_379] : memref<25x32x128xbf16, #tpu.memory_space<vmem>>, vector<1x32x128xbf16>
    %453 = vector.shape_cast %452 : vector<1x32x128xbf16> to vector<32x128xbf16>
    %cst_380 = arith.constant dense<0.000000e+00> : vector<6x128xf32>
    %454 = tpu.matmul %451, %453, %cst_380 {dimension_numbers = #tpu.dot_dimension_numbers<[1], [0], [0], [1], [0, 0, 1, 1], [], []>} : vector<6x32xbf16>, vector<32x128xbf16>, vector<6x128xf32> -> vector<6x128xf32>
    %455 = arith.addf %450, %454 : vector<6x128xf32>
    %456 = vector.extract_strided_slice %445 {offsets = [2, 0], sizes = [6, 32], strides = [1, 1]} : vector<10x32xbf16> to vector<6x32xbf16>
    %c7_381 = arith.constant 7 : index
    %c0_382 = arith.constant 0 : index
    %c0_383 = arith.constant 0 : index
    %457 = vector.load %arg2[%c7_381, %c0_382, %c0_383] : memref<25x32x128xbf16, #tpu.memory_space<vmem>>, vector<1x32x128xbf16>
    %458 = vector.shape_cast %457 : vector<1x32x128xbf16> to vector<32x128xbf16>
    %cst_384 = arith.constant dense<0.000000e+00> : vector<6x128xf32>
    %459 = tpu.matmul %456, %458, %cst_384 {dimension_numbers = #tpu.dot_dimension_numbers<[1], [0], [0], [1], [0, 0, 1, 1], [], []>} : vector<6x32xbf16>, vector<32x128xbf16>, vector<6x128xf32> -> vector<6x128xf32>
    %460 = arith.addf %455, %459 : vector<6x128xf32>
    %461 = vector.extract_strided_slice %445 {offsets = [3, 0], sizes = [6, 32], strides = [1, 1]} : vector<10x32xbf16> to vector<6x32xbf16>
    %c8_385 = arith.constant 8 : index
    %c0_386 = arith.constant 0 : index
    %c0_387 = arith.constant 0 : index
    %462 = vector.load %arg2[%c8_385, %c0_386, %c0_387] : memref<25x32x128xbf16, #tpu.memory_space<vmem>>, vector<1x32x128xbf16>
    %463 = vector.shape_cast %462 : vector<1x32x128xbf16> to vector<32x128xbf16>
    %cst_388 = arith.constant dense<0.000000e+00> : vector<6x128xf32>
    %464 = tpu.matmul %461, %463, %cst_388 {dimension_numbers = #tpu.dot_dimension_numbers<[1], [0], [0], [1], [0, 0, 1, 1], [], []>} : vector<6x32xbf16>, vector<32x128xbf16>, vector<6x128xf32> -> vector<6x128xf32>
    %465 = arith.addf %460, %464 : vector<6x128xf32>
    %466 = vector.extract_strided_slice %445 {offsets = [4, 0], sizes = [6, 32], strides = [1, 1]} : vector<10x32xbf16> to vector<6x32xbf16>
    %c9_389 = arith.constant 9 : index
    %c0_390 = arith.constant 0 : index
    %c0_391 = arith.constant 0 : index
    %467 = vector.load %arg2[%c9_389, %c0_390, %c0_391] : memref<25x32x128xbf16, #tpu.memory_space<vmem>>, vector<1x32x128xbf16>
    %468 = vector.shape_cast %467 : vector<1x32x128xbf16> to vector<32x128xbf16>
    %cst_392 = arith.constant dense<0.000000e+00> : vector<6x128xf32>
    %469 = tpu.matmul %466, %468, %cst_392 {dimension_numbers = #tpu.dot_dimension_numbers<[1], [0], [0], [1], [0, 0, 1, 1], [], []>} : vector<6x32xbf16>, vector<32x128xbf16>, vector<6x128xf32> -> vector<6x128xf32>
    %470 = arith.addf %465, %469 : vector<6x128xf32>
    %c0_393 = arith.constant 0 : index
    %c5_394 = arith.constant 5 : index
    %c0_395 = arith.constant 0 : index
    %c0_396 = arith.constant 0 : index
    %471 = vector.load %arg1[%c0_393, %c5_394, %c0_395, %c0_396] : memref<1x10x10x32xbf16, #tpu.memory_space<vmem>>, vector<1x1x10x32xbf16>
    %472 = vector.shape_cast %471 : vector<1x1x10x32xbf16> to vector<10x32xbf16>
    %473 = vector.extract_strided_slice %472 {offsets = [0, 0], sizes = [6, 32], strides = [1, 1]} : vector<10x32xbf16> to vector<6x32xbf16>
    %c10_397 = arith.constant 10 : index
    %c0_398 = arith.constant 0 : index
    %c0_399 = arith.constant 0 : index
    %474 = vector.load %arg2[%c10_397, %c0_398, %c0_399] : memref<25x32x128xbf16, #tpu.memory_space<vmem>>, vector<1x32x128xbf16>
    %475 = vector.shape_cast %474 : vector<1x32x128xbf16> to vector<32x128xbf16>
    %cst_400 = arith.constant dense<0.000000e+00> : vector<6x128xf32>
    %476 = tpu.matmul %473, %475, %cst_400 {dimension_numbers = #tpu.dot_dimension_numbers<[1], [0], [0], [1], [0, 0, 1, 1], [], []>} : vector<6x32xbf16>, vector<32x128xbf16>, vector<6x128xf32> -> vector<6x128xf32>
    %477 = arith.addf %470, %476 : vector<6x128xf32>
    %478 = vector.extract_strided_slice %472 {offsets = [1, 0], sizes = [6, 32], strides = [1, 1]} : vector<10x32xbf16> to vector<6x32xbf16>
    %c11_401 = arith.constant 11 : index
    %c0_402 = arith.constant 0 : index
    %c0_403 = arith.constant 0 : index
    %479 = vector.load %arg2[%c11_401, %c0_402, %c0_403] : memref<25x32x128xbf16, #tpu.memory_space<vmem>>, vector<1x32x128xbf16>
    %480 = vector.shape_cast %479 : vector<1x32x128xbf16> to vector<32x128xbf16>
    %cst_404 = arith.constant dense<0.000000e+00> : vector<6x128xf32>
    %481 = tpu.matmul %478, %480, %cst_404 {dimension_numbers = #tpu.dot_dimension_numbers<[1], [0], [0], [1], [0, 0, 1, 1], [], []>} : vector<6x32xbf16>, vector<32x128xbf16>, vector<6x128xf32> -> vector<6x128xf32>
    %482 = arith.addf %477, %481 : vector<6x128xf32>
    %483 = vector.extract_strided_slice %472 {offsets = [2, 0], sizes = [6, 32], strides = [1, 1]} : vector<10x32xbf16> to vector<6x32xbf16>
    %c12_405 = arith.constant 12 : index
    %c0_406 = arith.constant 0 : index
    %c0_407 = arith.constant 0 : index
    %484 = vector.load %arg2[%c12_405, %c0_406, %c0_407] : memref<25x32x128xbf16, #tpu.memory_space<vmem>>, vector<1x32x128xbf16>
    %485 = vector.shape_cast %484 : vector<1x32x128xbf16> to vector<32x128xbf16>
    %cst_408 = arith.constant dense<0.000000e+00> : vector<6x128xf32>
    %486 = tpu.matmul %483, %485, %cst_408 {dimension_numbers = #tpu.dot_dimension_numbers<[1], [0], [0], [1], [0, 0, 1, 1], [], []>} : vector<6x32xbf16>, vector<32x128xbf16>, vector<6x128xf32> -> vector<6x128xf32>
    %487 = arith.addf %482, %486 : vector<6x128xf32>
    %488 = vector.extract_strided_slice %472 {offsets = [3, 0], sizes = [6, 32], strides = [1, 1]} : vector<10x32xbf16> to vector<6x32xbf16>
    %c13_409 = arith.constant 13 : index
    %c0_410 = arith.constant 0 : index
    %c0_411 = arith.constant 0 : index
    %489 = vector.load %arg2[%c13_409, %c0_410, %c0_411] : memref<25x32x128xbf16, #tpu.memory_space<vmem>>, vector<1x32x128xbf16>
    %490 = vector.shape_cast %489 : vector<1x32x128xbf16> to vector<32x128xbf16>
    %cst_412 = arith.constant dense<0.000000e+00> : vector<6x128xf32>
    %491 = tpu.matmul %488, %490, %cst_412 {dimension_numbers = #tpu.dot_dimension_numbers<[1], [0], [0], [1], [0, 0, 1, 1], [], []>} : vector<6x32xbf16>, vector<32x128xbf16>, vector<6x128xf32> -> vector<6x128xf32>
    %492 = arith.addf %487, %491 : vector<6x128xf32>
    %493 = vector.extract_strided_slice %472 {offsets = [4, 0], sizes = [6, 32], strides = [1, 1]} : vector<10x32xbf16> to vector<6x32xbf16>
    %c14_413 = arith.constant 14 : index
    %c0_414 = arith.constant 0 : index
    %c0_415 = arith.constant 0 : index
    %494 = vector.load %arg2[%c14_413, %c0_414, %c0_415] : memref<25x32x128xbf16, #tpu.memory_space<vmem>>, vector<1x32x128xbf16>
    %495 = vector.shape_cast %494 : vector<1x32x128xbf16> to vector<32x128xbf16>
    %cst_416 = arith.constant dense<0.000000e+00> : vector<6x128xf32>
    %496 = tpu.matmul %493, %495, %cst_416 {dimension_numbers = #tpu.dot_dimension_numbers<[1], [0], [0], [1], [0, 0, 1, 1], [], []>} : vector<6x32xbf16>, vector<32x128xbf16>, vector<6x128xf32> -> vector<6x128xf32>
    %497 = arith.addf %492, %496 : vector<6x128xf32>
    %c0_417 = arith.constant 0 : index
    %c6_418 = arith.constant 6 : index
    %c0_419 = arith.constant 0 : index
    %c0_420 = arith.constant 0 : index
    %498 = vector.load %arg1[%c0_417, %c6_418, %c0_419, %c0_420] : memref<1x10x10x32xbf16, #tpu.memory_space<vmem>>, vector<1x1x10x32xbf16>
    %499 = vector.shape_cast %498 : vector<1x1x10x32xbf16> to vector<10x32xbf16>
    %500 = vector.extract_strided_slice %499 {offsets = [0, 0], sizes = [6, 32], strides = [1, 1]} : vector<10x32xbf16> to vector<6x32xbf16>
    %c15_421 = arith.constant 15 : index
    %c0_422 = arith.constant 0 : index
    %c0_423 = arith.constant 0 : index
    %501 = vector.load %arg2[%c15_421, %c0_422, %c0_423] : memref<25x32x128xbf16, #tpu.memory_space<vmem>>, vector<1x32x128xbf16>
    %502 = vector.shape_cast %501 : vector<1x32x128xbf16> to vector<32x128xbf16>
    %cst_424 = arith.constant dense<0.000000e+00> : vector<6x128xf32>
    %503 = tpu.matmul %500, %502, %cst_424 {dimension_numbers = #tpu.dot_dimension_numbers<[1], [0], [0], [1], [0, 0, 1, 1], [], []>} : vector<6x32xbf16>, vector<32x128xbf16>, vector<6x128xf32> -> vector<6x128xf32>
    %504 = arith.addf %497, %503 : vector<6x128xf32>
    %505 = vector.extract_strided_slice %499 {offsets = [1, 0], sizes = [6, 32], strides = [1, 1]} : vector<10x32xbf16> to vector<6x32xbf16>
    %c16_425 = arith.constant 16 : index
    %c0_426 = arith.constant 0 : index
    %c0_427 = arith.constant 0 : index
    %506 = vector.load %arg2[%c16_425, %c0_426, %c0_427] : memref<25x32x128xbf16, #tpu.memory_space<vmem>>, vector<1x32x128xbf16>
    %507 = vector.shape_cast %506 : vector<1x32x128xbf16> to vector<32x128xbf16>
    %cst_428 = arith.constant dense<0.000000e+00> : vector<6x128xf32>
    %508 = tpu.matmul %505, %507, %cst_428 {dimension_numbers = #tpu.dot_dimension_numbers<[1], [0], [0], [1], [0, 0, 1, 1], [], []>} : vector<6x32xbf16>, vector<32x128xbf16>, vector<6x128xf32> -> vector<6x128xf32>
    %509 = arith.addf %504, %508 : vector<6x128xf32>
    %510 = vector.extract_strided_slice %499 {offsets = [2, 0], sizes = [6, 32], strides = [1, 1]} : vector<10x32xbf16> to vector<6x32xbf16>
    %c17_429 = arith.constant 17 : index
    %c0_430 = arith.constant 0 : index
    %c0_431 = arith.constant 0 : index
    %511 = vector.load %arg2[%c17_429, %c0_430, %c0_431] : memref<25x32x128xbf16, #tpu.memory_space<vmem>>, vector<1x32x128xbf16>
    %512 = vector.shape_cast %511 : vector<1x32x128xbf16> to vector<32x128xbf16>
    %cst_432 = arith.constant dense<0.000000e+00> : vector<6x128xf32>
    %513 = tpu.matmul %510, %512, %cst_432 {dimension_numbers = #tpu.dot_dimension_numbers<[1], [0], [0], [1], [0, 0, 1, 1], [], []>} : vector<6x32xbf16>, vector<32x128xbf16>, vector<6x128xf32> -> vector<6x128xf32>
    %514 = arith.addf %509, %513 : vector<6x128xf32>
    %515 = vector.extract_strided_slice %499 {offsets = [3, 0], sizes = [6, 32], strides = [1, 1]} : vector<10x32xbf16> to vector<6x32xbf16>
    %c18_433 = arith.constant 18 : index
    %c0_434 = arith.constant 0 : index
    %c0_435 = arith.constant 0 : index
    %516 = vector.load %arg2[%c18_433, %c0_434, %c0_435] : memref<25x32x128xbf16, #tpu.memory_space<vmem>>, vector<1x32x128xbf16>
    %517 = vector.shape_cast %516 : vector<1x32x128xbf16> to vector<32x128xbf16>
    %cst_436 = arith.constant dense<0.000000e+00> : vector<6x128xf32>
    %518 = tpu.matmul %515, %517, %cst_436 {dimension_numbers = #tpu.dot_dimension_numbers<[1], [0], [0], [1], [0, 0, 1, 1], [], []>} : vector<6x32xbf16>, vector<32x128xbf16>, vector<6x128xf32> -> vector<6x128xf32>
    %519 = arith.addf %514, %518 : vector<6x128xf32>
    %520 = vector.extract_strided_slice %499 {offsets = [4, 0], sizes = [6, 32], strides = [1, 1]} : vector<10x32xbf16> to vector<6x32xbf16>
    %c19_437 = arith.constant 19 : index
    %c0_438 = arith.constant 0 : index
    %c0_439 = arith.constant 0 : index
    %521 = vector.load %arg2[%c19_437, %c0_438, %c0_439] : memref<25x32x128xbf16, #tpu.memory_space<vmem>>, vector<1x32x128xbf16>
    %522 = vector.shape_cast %521 : vector<1x32x128xbf16> to vector<32x128xbf16>
    %cst_440 = arith.constant dense<0.000000e+00> : vector<6x128xf32>
    %523 = tpu.matmul %520, %522, %cst_440 {dimension_numbers = #tpu.dot_dimension_numbers<[1], [0], [0], [1], [0, 0, 1, 1], [], []>} : vector<6x32xbf16>, vector<32x128xbf16>, vector<6x128xf32> -> vector<6x128xf32>
    %524 = arith.addf %519, %523 : vector<6x128xf32>
    %c0_441 = arith.constant 0 : index
    %c7_442 = arith.constant 7 : index
    %c0_443 = arith.constant 0 : index
    %c0_444 = arith.constant 0 : index
    %525 = vector.load %arg1[%c0_441, %c7_442, %c0_443, %c0_444] : memref<1x10x10x32xbf16, #tpu.memory_space<vmem>>, vector<1x1x10x32xbf16>
    %526 = vector.shape_cast %525 : vector<1x1x10x32xbf16> to vector<10x32xbf16>
    %527 = vector.extract_strided_slice %526 {offsets = [0, 0], sizes = [6, 32], strides = [1, 1]} : vector<10x32xbf16> to vector<6x32xbf16>
    %c20_445 = arith.constant 20 : index
    %c0_446 = arith.constant 0 : index
    %c0_447 = arith.constant 0 : index
    %528 = vector.load %arg2[%c20_445, %c0_446, %c0_447] : memref<25x32x128xbf16, #tpu.memory_space<vmem>>, vector<1x32x128xbf16>
    %529 = vector.shape_cast %528 : vector<1x32x128xbf16> to vector<32x128xbf16>
    %cst_448 = arith.constant dense<0.000000e+00> : vector<6x128xf32>
    %530 = tpu.matmul %527, %529, %cst_448 {dimension_numbers = #tpu.dot_dimension_numbers<[1], [0], [0], [1], [0, 0, 1, 1], [], []>} : vector<6x32xbf16>, vector<32x128xbf16>, vector<6x128xf32> -> vector<6x128xf32>
    %531 = arith.addf %524, %530 : vector<6x128xf32>
    %532 = vector.extract_strided_slice %526 {offsets = [1, 0], sizes = [6, 32], strides = [1, 1]} : vector<10x32xbf16> to vector<6x32xbf16>
    %c21_449 = arith.constant 21 : index
    %c0_450 = arith.constant 0 : index
    %c0_451 = arith.constant 0 : index
    %533 = vector.load %arg2[%c21_449, %c0_450, %c0_451] : memref<25x32x128xbf16, #tpu.memory_space<vmem>>, vector<1x32x128xbf16>
    %534 = vector.shape_cast %533 : vector<1x32x128xbf16> to vector<32x128xbf16>
    %cst_452 = arith.constant dense<0.000000e+00> : vector<6x128xf32>
    %535 = tpu.matmul %532, %534, %cst_452 {dimension_numbers = #tpu.dot_dimension_numbers<[1], [0], [0], [1], [0, 0, 1, 1], [], []>} : vector<6x32xbf16>, vector<32x128xbf16>, vector<6x128xf32> -> vector<6x128xf32>
    %536 = arith.addf %531, %535 : vector<6x128xf32>
    %537 = vector.extract_strided_slice %526 {offsets = [2, 0], sizes = [6, 32], strides = [1, 1]} : vector<10x32xbf16> to vector<6x32xbf16>
    %c22_453 = arith.constant 22 : index
    %c0_454 = arith.constant 0 : index
    %c0_455 = arith.constant 0 : index
    %538 = vector.load %arg2[%c22_453, %c0_454, %c0_455] : memref<25x32x128xbf16, #tpu.memory_space<vmem>>, vector<1x32x128xbf16>
    %539 = vector.shape_cast %538 : vector<1x32x128xbf16> to vector<32x128xbf16>
    %cst_456 = arith.constant dense<0.000000e+00> : vector<6x128xf32>
    %540 = tpu.matmul %537, %539, %cst_456 {dimension_numbers = #tpu.dot_dimension_numbers<[1], [0], [0], [1], [0, 0, 1, 1], [], []>} : vector<6x32xbf16>, vector<32x128xbf16>, vector<6x128xf32> -> vector<6x128xf32>
    %541 = arith.addf %536, %540 : vector<6x128xf32>
    %542 = vector.extract_strided_slice %526 {offsets = [3, 0], sizes = [6, 32], strides = [1, 1]} : vector<10x32xbf16> to vector<6x32xbf16>
    %c23_457 = arith.constant 23 : index
    %c0_458 = arith.constant 0 : index
    %c0_459 = arith.constant 0 : index
    %543 = vector.load %arg2[%c23_457, %c0_458, %c0_459] : memref<25x32x128xbf16, #tpu.memory_space<vmem>>, vector<1x32x128xbf16>
    %544 = vector.shape_cast %543 : vector<1x32x128xbf16> to vector<32x128xbf16>
    %cst_460 = arith.constant dense<0.000000e+00> : vector<6x128xf32>
    %545 = tpu.matmul %542, %544, %cst_460 {dimension_numbers = #tpu.dot_dimension_numbers<[1], [0], [0], [1], [0, 0, 1, 1], [], []>} : vector<6x32xbf16>, vector<32x128xbf16>, vector<6x128xf32> -> vector<6x128xf32>
    %546 = arith.addf %541, %545 : vector<6x128xf32>
    %547 = vector.extract_strided_slice %526 {offsets = [4, 0], sizes = [6, 32], strides = [1, 1]} : vector<10x32xbf16> to vector<6x32xbf16>
    %c24_461 = arith.constant 24 : index
    %c0_462 = arith.constant 0 : index
    %c0_463 = arith.constant 0 : index
    %548 = vector.load %arg2[%c24_461, %c0_462, %c0_463] : memref<25x32x128xbf16, #tpu.memory_space<vmem>>, vector<1x32x128xbf16>
    %549 = vector.shape_cast %548 : vector<1x32x128xbf16> to vector<32x128xbf16>
    %cst_464 = arith.constant dense<0.000000e+00> : vector<6x128xf32>
    %550 = tpu.matmul %547, %549, %cst_464 {dimension_numbers = #tpu.dot_dimension_numbers<[1], [0], [0], [1], [0, 0, 1, 1], [], []>} : vector<6x32xbf16>, vector<32x128xbf16>, vector<6x128xf32> -> vector<6x128xf32>
    %551 = arith.addf %546, %550 : vector<6x128xf32>
    %c0_465 = arith.constant 0 : index
    %c18_466 = arith.constant 18 : index
    %c0_467 = arith.constant 0 : index
    %552 = vector.load %arg4[%c0_465, %c18_466, %c0_467] : memref<1x36x128xf32, #tpu.memory_space<vmem>>, vector<1x6x128xf32>
    %553 = vector.shape_cast %552 : vector<1x6x128xf32> to vector<6x128xf32>
    %554 = vector.shape_cast %551 : vector<6x128xf32> to vector<1x6x128xf32>
    tpu.vector_store %arg4[%c0_465, %c18_466, %c0_467], %554 {strides = array<i32>} : memref<1x36x128xf32, #tpu.memory_space<vmem>>, vector<1x6x128xf32>,
    %c0_468 = arith.constant 0 : index
    %c4_469 = arith.constant 4 : index
    %c0_470 = arith.constant 0 : index
    %c0_471 = arith.constant 0 : index
    %555 = vector.load %arg1[%c0_468, %c4_469, %c0_470, %c0_471] : memref<1x10x10x32xbf16, #tpu.memory_space<vmem>>, vector<1x1x10x32xbf16>
    %556 = vector.shape_cast %555 : vector<1x1x10x32xbf16> to vector<10x32xbf16>
    %557 = vector.extract_strided_slice %556 {offsets = [0, 0], sizes = [6, 32], strides = [1, 1]} : vector<10x32xbf16> to vector<6x32xbf16>
    %c0_472 = arith.constant 0 : index
    %c0_473 = arith.constant 0 : index
    %c0_474 = arith.constant 0 : index
    %558 = vector.load %arg2[%c0_472, %c0_473, %c0_474] : memref<25x32x128xbf16, #tpu.memory_space<vmem>>, vector<1x32x128xbf16>
    %559 = vector.shape_cast %558 : vector<1x32x128xbf16> to vector<32x128xbf16>
    %cst_475 = arith.constant dense<0.000000e+00> : vector<6x128xf32>
    %560 = tpu.matmul %557, %559, %cst_475 {dimension_numbers = #tpu.dot_dimension_numbers<[1], [0], [0], [1], [0, 0, 1, 1], [], []>} : vector<6x32xbf16>, vector<32x128xbf16>, vector<6x128xf32> -> vector<6x128xf32>
    %561 = arith.addf %2, %560 : vector<6x128xf32>
    %562 = vector.extract_strided_slice %556 {offsets = [1, 0], sizes = [6, 32], strides = [1, 1]} : vector<10x32xbf16> to vector<6x32xbf16>
    %c1_476 = arith.constant 1 : index
    %c0_477 = arith.constant 0 : index
    %c0_478 = arith.constant 0 : index
    %563 = vector.load %arg2[%c1_476, %c0_477, %c0_478] : memref<25x32x128xbf16, #tpu.memory_space<vmem>>, vector<1x32x128xbf16>
    %564 = vector.shape_cast %563 : vector<1x32x128xbf16> to vector<32x128xbf16>
    %cst_479 = arith.constant dense<0.000000e+00> : vector<6x128xf32>
    %565 = tpu.matmul %562, %564, %cst_479 {dimension_numbers = #tpu.dot_dimension_numbers<[1], [0], [0], [1], [0, 0, 1, 1], [], []>} : vector<6x32xbf16>, vector<32x128xbf16>, vector<6x128xf32> -> vector<6x128xf32>
    %566 = arith.addf %561, %565 : vector<6x128xf32>
    %567 = vector.extract_strided_slice %556 {offsets = [2, 0], sizes = [6, 32], strides = [1, 1]} : vector<10x32xbf16> to vector<6x32xbf16>
    %c2_480 = arith.constant 2 : index
    %c0_481 = arith.constant 0 : index
    %c0_482 = arith.constant 0 : index
    %568 = vector.load %arg2[%c2_480, %c0_481, %c0_482] : memref<25x32x128xbf16, #tpu.memory_space<vmem>>, vector<1x32x128xbf16>
    %569 = vector.shape_cast %568 : vector<1x32x128xbf16> to vector<32x128xbf16>
    %cst_483 = arith.constant dense<0.000000e+00> : vector<6x128xf32>
    %570 = tpu.matmul %567, %569, %cst_483 {dimension_numbers = #tpu.dot_dimension_numbers<[1], [0], [0], [1], [0, 0, 1, 1], [], []>} : vector<6x32xbf16>, vector<32x128xbf16>, vector<6x128xf32> -> vector<6x128xf32>
    %571 = arith.addf %566, %570 : vector<6x128xf32>
    %572 = vector.extract_strided_slice %556 {offsets = [3, 0], sizes = [6, 32], strides = [1, 1]} : vector<10x32xbf16> to vector<6x32xbf16>
    %c3_484 = arith.constant 3 : index
    %c0_485 = arith.constant 0 : index
    %c0_486 = arith.constant 0 : index
    %573 = vector.load %arg2[%c3_484, %c0_485, %c0_486] : memref<25x32x128xbf16, #tpu.memory_space<vmem>>, vector<1x32x128xbf16>
    %574 = vector.shape_cast %573 : vector<1x32x128xbf16> to vector<32x128xbf16>
    %cst_487 = arith.constant dense<0.000000e+00> : vector<6x128xf32>
    %575 = tpu.matmul %572, %574, %cst_487 {dimension_numbers = #tpu.dot_dimension_numbers<[1], [0], [0], [1], [0, 0, 1, 1], [], []>} : vector<6x32xbf16>, vector<32x128xbf16>, vector<6x128xf32> -> vector<6x128xf32>
    %576 = arith.addf %571, %575 : vector<6x128xf32>
    %577 = vector.extract_strided_slice %556 {offsets = [4, 0], sizes = [6, 32], strides = [1, 1]} : vector<10x32xbf16> to vector<6x32xbf16>
    %c4_488 = arith.constant 4 : index
    %c0_489 = arith.constant 0 : index
    %c0_490 = arith.constant 0 : index
    %578 = vector.load %arg2[%c4_488, %c0_489, %c0_490] : memref<25x32x128xbf16, #tpu.memory_space<vmem>>, vector<1x32x128xbf16>
    %579 = vector.shape_cast %578 : vector<1x32x128xbf16> to vector<32x128xbf16>
    %cst_491 = arith.constant dense<0.000000e+00> : vector<6x128xf32>
    %580 = tpu.matmul %577, %579, %cst_491 {dimension_numbers = #tpu.dot_dimension_numbers<[1], [0], [0], [1], [0, 0, 1, 1], [], []>} : vector<6x32xbf16>, vector<32x128xbf16>, vector<6x128xf32> -> vector<6x128xf32>
    %581 = arith.addf %576, %580 : vector<6x128xf32>
    %c0_492 = arith.constant 0 : index
    %c5_493 = arith.constant 5 : index
    %c0_494 = arith.constant 0 : index
    %c0_495 = arith.constant 0 : index
    %582 = vector.load %arg1[%c0_492, %c5_493, %c0_494, %c0_495] : memref<1x10x10x32xbf16, #tpu.memory_space<vmem>>, vector<1x1x10x32xbf16>
    %583 = vector.shape_cast %582 : vector<1x1x10x32xbf16> to vector<10x32xbf16>
    %584 = vector.extract_strided_slice %583 {offsets = [0, 0], sizes = [6, 32], strides = [1, 1]} : vector<10x32xbf16> to vector<6x32xbf16>
    %c5_496 = arith.constant 5 : index
    %c0_497 = arith.constant 0 : index
    %c0_498 = arith.constant 0 : index
    %585 = vector.load %arg2[%c5_496, %c0_497, %c0_498] : memref<25x32x128xbf16, #tpu.memory_space<vmem>>, vector<1x32x128xbf16>
    %586 = vector.shape_cast %585 : vector<1x32x128xbf16> to vector<32x128xbf16>
    %cst_499 = arith.constant dense<0.000000e+00> : vector<6x128xf32>
    %587 = tpu.matmul %584, %586, %cst_499 {dimension_numbers = #tpu.dot_dimension_numbers<[1], [0], [0], [1], [0, 0, 1, 1], [], []>} : vector<6x32xbf16>, vector<32x128xbf16>, vector<6x128xf32> -> vector<6x128xf32>
    %588 = arith.addf %581, %587 : vector<6x128xf32>
    %589 = vector.extract_strided_slice %583 {offsets = [1, 0], sizes = [6, 32], strides = [1, 1]} : vector<10x32xbf16> to vector<6x32xbf16>
    %c6_500 = arith.constant 6 : index
    %c0_501 = arith.constant 0 : index
    %c0_502 = arith.constant 0 : index
    %590 = vector.load %arg2[%c6_500, %c0_501, %c0_502] : memref<25x32x128xbf16, #tpu.memory_space<vmem>>, vector<1x32x128xbf16>
    %591 = vector.shape_cast %590 : vector<1x32x128xbf16> to vector<32x128xbf16>
    %cst_503 = arith.constant dense<0.000000e+00> : vector<6x128xf32>
    %592 = tpu.matmul %589, %591, %cst_503 {dimension_numbers = #tpu.dot_dimension_numbers<[1], [0], [0], [1], [0, 0, 1, 1], [], []>} : vector<6x32xbf16>, vector<32x128xbf16>, vector<6x128xf32> -> vector<6x128xf32>
    %593 = arith.addf %588, %592 : vector<6x128xf32>
    %594 = vector.extract_strided_slice %583 {offsets = [2, 0], sizes = [6, 32], strides = [1, 1]} : vector<10x32xbf16> to vector<6x32xbf16>
    %c7_504 = arith.constant 7 : index
    %c0_505 = arith.constant 0 : index
    %c0_506 = arith.constant 0 : index
    %595 = vector.load %arg2[%c7_504, %c0_505, %c0_506] : memref<25x32x128xbf16, #tpu.memory_space<vmem>>, vector<1x32x128xbf16>
    %596 = vector.shape_cast %595 : vector<1x32x128xbf16> to vector<32x128xbf16>
    %cst_507 = arith.constant dense<0.000000e+00> : vector<6x128xf32>
    %597 = tpu.matmul %594, %596, %cst_507 {dimension_numbers = #tpu.dot_dimension_numbers<[1], [0], [0], [1], [0, 0, 1, 1], [], []>} : vector<6x32xbf16>, vector<32x128xbf16>, vector<6x128xf32> -> vector<6x128xf32>
    %598 = arith.addf %593, %597 : vector<6x128xf32>
    %599 = vector.extract_strided_slice %583 {offsets = [3, 0], sizes = [6, 32], strides = [1, 1]} : vector<10x32xbf16> to vector<6x32xbf16>
    %c8_508 = arith.constant 8 : index
    %c0_509 = arith.constant 0 : index
    %c0_510 = arith.constant 0 : index
    %600 = vector.load %arg2[%c8_508, %c0_509, %c0_510] : memref<25x32x128xbf16, #tpu.memory_space<vmem>>, vector<1x32x128xbf16>
    %601 = vector.shape_cast %600 : vector<1x32x128xbf16> to vector<32x128xbf16>
    %cst_511 = arith.constant dense<0.000000e+00> : vector<6x128xf32>
    %602 = tpu.matmul %599, %601, %cst_511 {dimension_numbers = #tpu.dot_dimension_numbers<[1], [0], [0], [1], [0, 0, 1, 1], [], []>} : vector<6x32xbf16>, vector<32x128xbf16>, vector<6x128xf32> -> vector<6x128xf32>
    %603 = arith.addf %598, %602 : vector<6x128xf32>
    %604 = vector.extract_strided_slice %583 {offsets = [4, 0], sizes = [6, 32], strides = [1, 1]} : vector<10x32xbf16> to vector<6x32xbf16>
    %c9_512 = arith.constant 9 : index
    %c0_513 = arith.constant 0 : index
    %c0_514 = arith.constant 0 : index
    %605 = vector.load %arg2[%c9_512, %c0_513, %c0_514] : memref<25x32x128xbf16, #tpu.memory_space<vmem>>, vector<1x32x128xbf16>
    %606 = vector.shape_cast %605 : vector<1x32x128xbf16> to vector<32x128xbf16>
    %cst_515 = arith.constant dense<0.000000e+00> : vector<6x128xf32>
    %607 = tpu.matmul %604, %606, %cst_515 {dimension_numbers = #tpu.dot_dimension_numbers<[1], [0], [0], [1], [0, 0, 1, 1], [], []>} : vector<6x32xbf16>, vector<32x128xbf16>, vector<6x128xf32> -> vector<6x128xf32>
    %608 = arith.addf %603, %607 : vector<6x128xf32>
    %c0_516 = arith.constant 0 : index
    %c6_517 = arith.constant 6 : index
    %c0_518 = arith.constant 0 : index
    %c0_519 = arith.constant 0 : index
    %609 = vector.load %arg1[%c0_516, %c6_517, %c0_518, %c0_519] : memref<1x10x10x32xbf16, #tpu.memory_space<vmem>>, vector<1x1x10x32xbf16>
    %610 = vector.shape_cast %609 : vector<1x1x10x32xbf16> to vector<10x32xbf16>
    %611 = vector.extract_strided_slice %610 {offsets = [0, 0], sizes = [6, 32], strides = [1, 1]} : vector<10x32xbf16> to vector<6x32xbf16>
    %c10_520 = arith.constant 10 : index
    %c0_521 = arith.constant 0 : index
    %c0_522 = arith.constant 0 : index
    %612 = vector.load %arg2[%c10_520, %c0_521, %c0_522] : memref<25x32x128xbf16, #tpu.memory_space<vmem>>, vector<1x32x128xbf16>
    %613 = vector.shape_cast %612 : vector<1x32x128xbf16> to vector<32x128xbf16>
    %cst_523 = arith.constant dense<0.000000e+00> : vector<6x128xf32>
    %614 = tpu.matmul %611, %613, %cst_523 {dimension_numbers = #tpu.dot_dimension_numbers<[1], [0], [0], [1], [0, 0, 1, 1], [], []>} : vector<6x32xbf16>, vector<32x128xbf16>, vector<6x128xf32> -> vector<6x128xf32>
    %615 = arith.addf %608, %614 : vector<6x128xf32>
    %616 = vector.extract_strided_slice %610 {offsets = [1, 0], sizes = [6, 32], strides = [1, 1]} : vector<10x32xbf16> to vector<6x32xbf16>
    %c11_524 = arith.constant 11 : index
    %c0_525 = arith.constant 0 : index
    %c0_526 = arith.constant 0 : index
    %617 = vector.load %arg2[%c11_524, %c0_525, %c0_526] : memref<25x32x128xbf16, #tpu.memory_space<vmem>>, vector<1x32x128xbf16>
    %618 = vector.shape_cast %617 : vector<1x32x128xbf16> to vector<32x128xbf16>
    %cst_527 = arith.constant dense<0.000000e+00> : vector<6x128xf32>
    %619 = tpu.matmul %616, %618, %cst_527 {dimension_numbers = #tpu.dot_dimension_numbers<[1], [0], [0], [1], [0, 0, 1, 1], [], []>} : vector<6x32xbf16>, vector<32x128xbf16>, vector<6x128xf32> -> vector<6x128xf32>
    %620 = arith.addf %615, %619 : vector<6x128xf32>
    %621 = vector.extract_strided_slice %610 {offsets = [2, 0], sizes = [6, 32], strides = [1, 1]} : vector<10x32xbf16> to vector<6x32xbf16>
    %c12_528 = arith.constant 12 : index
    %c0_529 = arith.constant 0 : index
    %c0_530 = arith.constant 0 : index
    %622 = vector.load %arg2[%c12_528, %c0_529, %c0_530] : memref<25x32x128xbf16, #tpu.memory_space<vmem>>, vector<1x32x128xbf16>
    %623 = vector.shape_cast %622 : vector<1x32x128xbf16> to vector<32x128xbf16>
    %cst_531 = arith.constant dense<0.000000e+00> : vector<6x128xf32>
    %624 = tpu.matmul %621, %623, %cst_531 {dimension_numbers = #tpu.dot_dimension_numbers<[1], [0], [0], [1], [0, 0, 1, 1], [], []>} : vector<6x32xbf16>, vector<32x128xbf16>, vector<6x128xf32> -> vector<6x128xf32>
    %625 = arith.addf %620, %624 : vector<6x128xf32>
    %626 = vector.extract_strided_slice %610 {offsets = [3, 0], sizes = [6, 32], strides = [1, 1]} : vector<10x32xbf16> to vector<6x32xbf16>
    %c13_532 = arith.constant 13 : index
    %c0_533 = arith.constant 0 : index
    %c0_534 = arith.constant 0 : index
    %627 = vector.load %arg2[%c13_532, %c0_533, %c0_534] : memref<25x32x128xbf16, #tpu.memory_space<vmem>>, vector<1x32x128xbf16>
    %628 = vector.shape_cast %627 : vector<1x32x128xbf16> to vector<32x128xbf16>
    %cst_535 = arith.constant dense<0.000000e+00> : vector<6x128xf32>
    %629 = tpu.matmul %626, %628, %cst_535 {dimension_numbers = #tpu.dot_dimension_numbers<[1], [0], [0], [1], [0, 0, 1, 1], [], []>} : vector<6x32xbf16>, vector<32x128xbf16>, vector<6x128xf32> -> vector<6x128xf32>
    %630 = arith.addf %625, %629 : vector<6x128xf32>
    %631 = vector.extract_strided_slice %610 {offsets = [4, 0], sizes = [6, 32], strides = [1, 1]} : vector<10x32xbf16> to vector<6x32xbf16>
    %c14_536 = arith.constant 14 : index
    %c0_537 = arith.constant 0 : index
    %c0_538 = arith.constant 0 : index
    %632 = vector.load %arg2[%c14_536, %c0_537, %c0_538] : memref<25x32x128xbf16, #tpu.memory_space<vmem>>, vector<1x32x128xbf16>
    %633 = vector.shape_cast %632 : vector<1x32x128xbf16> to vector<32x128xbf16>
    %cst_539 = arith.constant dense<0.000000e+00> : vector<6x128xf32>
    %634 = tpu.matmul %631, %633, %cst_539 {dimension_numbers = #tpu.dot_dimension_numbers<[1], [0], [0], [1], [0, 0, 1, 1], [], []>} : vector<6x32xbf16>, vector<32x128xbf16>, vector<6x128xf32> -> vector<6x128xf32>
    %635 = arith.addf %630, %634 : vector<6x128xf32>
    %c0_540 = arith.constant 0 : index
    %c7_541 = arith.constant 7 : index
    %c0_542 = arith.constant 0 : index
    %c0_543 = arith.constant 0 : index
    %636 = vector.load %arg1[%c0_540, %c7_541, %c0_542, %c0_543] : memref<1x10x10x32xbf16, #tpu.memory_space<vmem>>, vector<1x1x10x32xbf16>
    %637 = vector.shape_cast %636 : vector<1x1x10x32xbf16> to vector<10x32xbf16>
    %638 = vector.extract_strided_slice %637 {offsets = [0, 0], sizes = [6, 32], strides = [1, 1]} : vector<10x32xbf16> to vector<6x32xbf16>
    %c15_544 = arith.constant 15 : index
    %c0_545 = arith.constant 0 : index
    %c0_546 = arith.constant 0 : index
    %639 = vector.load %arg2[%c15_544, %c0_545, %c0_546] : memref<25x32x128xbf16, #tpu.memory_space<vmem>>, vector<1x32x128xbf16>
    %640 = vector.shape_cast %639 : vector<1x32x128xbf16> to vector<32x128xbf16>
    %cst_547 = arith.constant dense<0.000000e+00> : vector<6x128xf32>
    %641 = tpu.matmul %638, %640, %cst_547 {dimension_numbers = #tpu.dot_dimension_numbers<[1], [0], [0], [1], [0, 0, 1, 1], [], []>} : vector<6x32xbf16>, vector<32x128xbf16>, vector<6x128xf32> -> vector<6x128xf32>
    %642 = arith.addf %635, %641 : vector<6x128xf32>
    %643 = vector.extract_strided_slice %637 {offsets = [1, 0], sizes = [6, 32], strides = [1, 1]} : vector<10x32xbf16> to vector<6x32xbf16>
    %c16_548 = arith.constant 16 : index
    %c0_549 = arith.constant 0 : index
    %c0_550 = arith.constant 0 : index
    %644 = vector.load %arg2[%c16_548, %c0_549, %c0_550] : memref<25x32x128xbf16, #tpu.memory_space<vmem>>, vector<1x32x128xbf16>
    %645 = vector.shape_cast %644 : vector<1x32x128xbf16> to vector<32x128xbf16>
    %cst_551 = arith.constant dense<0.000000e+00> : vector<6x128xf32>
    %646 = tpu.matmul %643, %645, %cst_551 {dimension_numbers = #tpu.dot_dimension_numbers<[1], [0], [0], [1], [0, 0, 1, 1], [], []>} : vector<6x32xbf16>, vector<32x128xbf16>, vector<6x128xf32> -> vector<6x128xf32>
    %647 = arith.addf %642, %646 : vector<6x128xf32>
    %648 = vector.extract_strided_slice %637 {offsets = [2, 0], sizes = [6, 32], strides = [1, 1]} : vector<10x32xbf16> to vector<6x32xbf16>
    %c17_552 = arith.constant 17 : index
    %c0_553 = arith.constant 0 : index
    %c0_554 = arith.constant 0 : index
    %649 = vector.load %arg2[%c17_552, %c0_553, %c0_554] : memref<25x32x128xbf16, #tpu.memory_space<vmem>>, vector<1x32x128xbf16>
    %650 = vector.shape_cast %649 : vector<1x32x128xbf16> to vector<32x128xbf16>
    %cst_555 = arith.constant dense<0.000000e+00> : vector<6x128xf32>
    %651 = tpu.matmul %648, %650, %cst_555 {dimension_numbers = #tpu.dot_dimension_numbers<[1], [0], [0], [1], [0, 0, 1, 1], [], []>} : vector<6x32xbf16>, vector<32x128xbf16>, vector<6x128xf32> -> vector<6x128xf32>
    %652 = arith.addf %647, %651 : vector<6x128xf32>
    %653 = vector.extract_strided_slice %637 {offsets = [3, 0], sizes = [6, 32], strides = [1, 1]} : vector<10x32xbf16> to vector<6x32xbf16>
    %c18_556 = arith.constant 18 : index
    %c0_557 = arith.constant 0 : index
    %c0_558 = arith.constant 0 : index
    %654 = vector.load %arg2[%c18_556, %c0_557, %c0_558] : memref<25x32x128xbf16, #tpu.memory_space<vmem>>, vector<1x32x128xbf16>
    %655 = vector.shape_cast %654 : vector<1x32x128xbf16> to vector<32x128xbf16>
    %cst_559 = arith.constant dense<0.000000e+00> : vector<6x128xf32>
    %656 = tpu.matmul %653, %655, %cst_559 {dimension_numbers = #tpu.dot_dimension_numbers<[1], [0], [0], [1], [0, 0, 1, 1], [], []>} : vector<6x32xbf16>, vector<32x128xbf16>, vector<6x128xf32> -> vector<6x128xf32>
    %657 = arith.addf %652, %656 : vector<6x128xf32>
    %658 = vector.extract_strided_slice %637 {offsets = [4, 0], sizes = [6, 32], strides = [1, 1]} : vector<10x32xbf16> to vector<6x32xbf16>
    %c19_560 = arith.constant 19 : index
    %c0_561 = arith.constant 0 : index
    %c0_562 = arith.constant 0 : index
    %659 = vector.load %arg2[%c19_560, %c0_561, %c0_562] : memref<25x32x128xbf16, #tpu.memory_space<vmem>>, vector<1x32x128xbf16>
    %660 = vector.shape_cast %659 : vector<1x32x128xbf16> to vector<32x128xbf16>
    %cst_563 = arith.constant dense<0.000000e+00> : vector<6x128xf32>
    %661 = tpu.matmul %658, %660, %cst_563 {dimension_numbers = #tpu.dot_dimension_numbers<[1], [0], [0], [1], [0, 0, 1, 1], [], []>} : vector<6x32xbf16>, vector<32x128xbf16>, vector<6x128xf32> -> vector<6x128xf32>
    %662 = arith.addf %657, %661 : vector<6x128xf32>
    %c0_564 = arith.constant 0 : index
    %c8_565 = arith.constant 8 : index
    %c0_566 = arith.constant 0 : index
    %c0_567 = arith.constant 0 : index
    %663 = vector.load %arg1[%c0_564, %c8_565, %c0_566, %c0_567] : memref<1x10x10x32xbf16, #tpu.memory_space<vmem>>, vector<1x1x10x32xbf16>
    %664 = vector.shape_cast %663 : vector<1x1x10x32xbf16> to vector<10x32xbf16>
    %665 = vector.extract_strided_slice %664 {offsets = [0, 0], sizes = [6, 32], strides = [1, 1]} : vector<10x32xbf16> to vector<6x32xbf16>
    %c20_568 = arith.constant 20 : index
    %c0_569 = arith.constant 0 : index
    %c0_570 = arith.constant 0 : index
    %666 = vector.load %arg2[%c20_568, %c0_569, %c0_570] : memref<25x32x128xbf16, #tpu.memory_space<vmem>>, vector<1x32x128xbf16>
    %667 = vector.shape_cast %666 : vector<1x32x128xbf16> to vector<32x128xbf16>
    %cst_571 = arith.constant dense<0.000000e+00> : vector<6x128xf32>
    %668 = tpu.matmul %665, %667, %cst_571 {dimension_numbers = #tpu.dot_dimension_numbers<[1], [0], [0], [1], [0, 0, 1, 1], [], []>} : vector<6x32xbf16>, vector<32x128xbf16>, vector<6x128xf32> -> vector<6x128xf32>
    %669 = arith.addf %662, %668 : vector<6x128xf32>
    %670 = vector.extract_strided_slice %664 {offsets = [1, 0], sizes = [6, 32], strides = [1, 1]} : vector<10x32xbf16> to vector<6x32xbf16>
    %c21_572 = arith.constant 21 : index
    %c0_573 = arith.constant 0 : index
    %c0_574 = arith.constant 0 : index
    %671 = vector.load %arg2[%c21_572, %c0_573, %c0_574] : memref<25x32x128xbf16, #tpu.memory_space<vmem>>, vector<1x32x128xbf16>
    %672 = vector.shape_cast %671 : vector<1x32x128xbf16> to vector<32x128xbf16>
    %cst_575 = arith.constant dense<0.000000e+00> : vector<6x128xf32>
    %673 = tpu.matmul %670, %672, %cst_575 {dimension_numbers = #tpu.dot_dimension_numbers<[1], [0], [0], [1], [0, 0, 1, 1], [], []>} : vector<6x32xbf16>, vector<32x128xbf16>, vector<6x128xf32> -> vector<6x128xf32>
    %674 = arith.addf %669, %673 : vector<6x128xf32>
    %675 = vector.extract_strided_slice %664 {offsets = [2, 0], sizes = [6, 32], strides = [1, 1]} : vector<10x32xbf16> to vector<6x32xbf16>
    %c22_576 = arith.constant 22 : index
    %c0_577 = arith.constant 0 : index
    %c0_578 = arith.constant 0 : index
    %676 = vector.load %arg2[%c22_576, %c0_577, %c0_578] : memref<25x32x128xbf16, #tpu.memory_space<vmem>>, vector<1x32x128xbf16>
    %677 = vector.shape_cast %676 : vector<1x32x128xbf16> to vector<32x128xbf16>
    %cst_579 = arith.constant dense<0.000000e+00> : vector<6x128xf32>
    %678 = tpu.matmul %675, %677, %cst_579 {dimension_numbers = #tpu.dot_dimension_numbers<[1], [0], [0], [1], [0, 0, 1, 1], [], []>} : vector<6x32xbf16>, vector<32x128xbf16>, vector<6x128xf32> -> vector<6x128xf32>
    %679 = arith.addf %674, %678 : vector<6x128xf32>
    %680 = vector.extract_strided_slice %664 {offsets = [3, 0], sizes = [6, 32], strides = [1, 1]} : vector<10x32xbf16> to vector<6x32xbf16>
    %c23_580 = arith.constant 23 : index
    %c0_581 = arith.constant 0 : index
    %c0_582 = arith.constant 0 : index
    %681 = vector.load %arg2[%c23_580, %c0_581, %c0_582] : memref<25x32x128xbf16, #tpu.memory_space<vmem>>, vector<1x32x128xbf16>
    %682 = vector.shape_cast %681 : vector<1x32x128xbf16> to vector<32x128xbf16>
    %cst_583 = arith.constant dense<0.000000e+00> : vector<6x128xf32>
    %683 = tpu.matmul %680, %682, %cst_583 {dimension_numbers = #tpu.dot_dimension_numbers<[1], [0], [0], [1], [0, 0, 1, 1], [], []>} : vector<6x32xbf16>, vector<32x128xbf16>, vector<6x128xf32> -> vector<6x128xf32>
    %684 = arith.addf %679, %683 : vector<6x128xf32>
    %685 = vector.extract_strided_slice %664 {offsets = [4, 0], sizes = [6, 32], strides = [1, 1]} : vector<10x32xbf16> to vector<6x32xbf16>
    %c24_584 = arith.constant 24 : index
    %c0_585 = arith.constant 0 : index
    %c0_586 = arith.constant 0 : index
    %686 = vector.load %arg2[%c24_584, %c0_585, %c0_586] : memref<25x32x128xbf16, #tpu.memory_space<vmem>>, vector<1x32x128xbf16>
    %687 = vector.shape_cast %686 : vector<1x32x128xbf16> to vector<32x128xbf16>
    %cst_587 = arith.constant dense<0.000000e+00> : vector<6x128xf32>
    %688 = tpu.matmul %685, %687, %cst_587 {dimension_numbers = #tpu.dot_dimension_numbers<[1], [0], [0], [1], [0, 0, 1, 1], [], []>} : vector<6x32xbf16>, vector<32x128xbf16>, vector<6x128xf32> -> vector<6x128xf32>
    %689 = arith.addf %684, %688 : vector<6x128xf32>
    %c0_588 = arith.constant 0 : index
    %c24_589 = arith.constant 24 : index
    %c0_590 = arith.constant 0 : index
    %690 = vector.load %arg4[%c0_588, %c24_589, %c0_590] : memref<1x36x128xf32, #tpu.memory_space<vmem>>, vector<1x6x128xf32>
    %691 = vector.shape_cast %690 : vector<1x6x128xf32> to vector<6x128xf32>
    %692 = vector.shape_cast %689 : vector<6x128xf32> to vector<1x6x128xf32>
    tpu.vector_store %arg4[%c0_588, %c24_589, %c0_590], %692 {strides = array<i32>} : memref<1x36x128xf32, #tpu.memory_space<vmem>>, vector<1x6x128xf32>,
    %c0_591 = arith.constant 0 : index
    %c5_592 = arith.constant 5 : index
    %c0_593 = arith.constant 0 : index
    %c0_594 = arith.constant 0 : index
    %693 = vector.load %arg1[%c0_591, %c5_592, %c0_593, %c0_594] : memref<1x10x10x32xbf16, #tpu.memory_space<vmem>>, vector<1x1x10x32xbf16>
    %694 = vector.shape_cast %693 : vector<1x1x10x32xbf16> to vector<10x32xbf16>
    %695 = vector.extract_strided_slice %694 {offsets = [0, 0], sizes = [6, 32], strides = [1, 1]} : vector<10x32xbf16> to vector<6x32xbf16>
    %c0_595 = arith.constant 0 : index
    %c0_596 = arith.constant 0 : index
    %c0_597 = arith.constant 0 : index
    %696 = vector.load %arg2[%c0_595, %c0_596, %c0_597] : memref<25x32x128xbf16, #tpu.memory_space<vmem>>, vector<1x32x128xbf16>
    %697 = vector.shape_cast %696 : vector<1x32x128xbf16> to vector<32x128xbf16>
    %cst_598 = arith.constant dense<0.000000e+00> : vector<6x128xf32>
    %698 = tpu.matmul %695, %697, %cst_598 {dimension_numbers = #tpu.dot_dimension_numbers<[1], [0], [0], [1], [0, 0, 1, 1], [], []>} : vector<6x32xbf16>, vector<32x128xbf16>, vector<6x128xf32> -> vector<6x128xf32>
    %699 = arith.addf %2, %698 : vector<6x128xf32>
    %700 = vector.extract_strided_slice %694 {offsets = [1, 0], sizes = [6, 32], strides = [1, 1]} : vector<10x32xbf16> to vector<6x32xbf16>
    %c1_599 = arith.constant 1 : index
    %c0_600 = arith.constant 0 : index
    %c0_601 = arith.constant 0 : index
    %701 = vector.load %arg2[%c1_599, %c0_600, %c0_601] : memref<25x32x128xbf16, #tpu.memory_space<vmem>>, vector<1x32x128xbf16>
    %702 = vector.shape_cast %701 : vector<1x32x128xbf16> to vector<32x128xbf16>
    %cst_602 = arith.constant dense<0.000000e+00> : vector<6x128xf32>
    %703 = tpu.matmul %700, %702, %cst_602 {dimension_numbers = #tpu.dot_dimension_numbers<[1], [0], [0], [1], [0, 0, 1, 1], [], []>} : vector<6x32xbf16>, vector<32x128xbf16>, vector<6x128xf32> -> vector<6x128xf32>
    %704 = arith.addf %699, %703 : vector<6x128xf32>
    %705 = vector.extract_strided_slice %694 {offsets = [2, 0], sizes = [6, 32], strides = [1, 1]} : vector<10x32xbf16> to vector<6x32xbf16>
    %c2_603 = arith.constant 2 : index
    %c0_604 = arith.constant 0 : index
    %c0_605 = arith.constant 0 : index
    %706 = vector.load %arg2[%c2_603, %c0_604, %c0_605] : memref<25x32x128xbf16, #tpu.memory_space<vmem>>, vector<1x32x128xbf16>
    %707 = vector.shape_cast %706 : vector<1x32x128xbf16> to vector<32x128xbf16>
    %cst_606 = arith.constant dense<0.000000e+00> : vector<6x128xf32>
    %708 = tpu.matmul %705, %707, %cst_606 {dimension_numbers = #tpu.dot_dimension_numbers<[1], [0], [0], [1], [0, 0, 1, 1], [], []>} : vector<6x32xbf16>, vector<32x128xbf16>, vector<6x128xf32> -> vector<6x128xf32>
    %709 = arith.addf %704, %708 : vector<6x128xf32>
    %710 = vector.extract_strided_slice %694 {offsets = [3, 0], sizes = [6, 32], strides = [1, 1]} : vector<10x32xbf16> to vector<6x32xbf16>
    %c3_607 = arith.constant 3 : index
    %c0_608 = arith.constant 0 : index
    %c0_609 = arith.constant 0 : index
    %711 = vector.load %arg2[%c3_607, %c0_608, %c0_609] : memref<25x32x128xbf16, #tpu.memory_space<vmem>>, vector<1x32x128xbf16>
    %712 = vector.shape_cast %711 : vector<1x32x128xbf16> to vector<32x128xbf16>
    %cst_610 = arith.constant dense<0.000000e+00> : vector<6x128xf32>
    %713 = tpu.matmul %710, %712, %cst_610 {dimension_numbers = #tpu.dot_dimension_numbers<[1], [0], [0], [1], [0, 0, 1, 1], [], []>} : vector<6x32xbf16>, vector<32x128xbf16>, vector<6x128xf32> -> vector<6x128xf32>
    %714 = arith.addf %709, %713 : vector<6x128xf32>
    %715 = vector.extract_strided_slice %694 {offsets = [4, 0], sizes = [6, 32], strides = [1, 1]} : vector<10x32xbf16> to vector<6x32xbf16>
    %c4_611 = arith.constant 4 : index
    %c0_612 = arith.constant 0 : index
    %c0_613 = arith.constant 0 : index
    %716 = vector.load %arg2[%c4_611, %c0_612, %c0_613] : memref<25x32x128xbf16, #tpu.memory_space<vmem>>, vector<1x32x128xbf16>
    %717 = vector.shape_cast %716 : vector<1x32x128xbf16> to vector<32x128xbf16>
    %cst_614 = arith.constant dense<0.000000e+00> : vector<6x128xf32>
    %718 = tpu.matmul %715, %717, %cst_614 {dimension_numbers = #tpu.dot_dimension_numbers<[1], [0], [0], [1], [0, 0, 1, 1], [], []>} : vector<6x32xbf16>, vector<32x128xbf16>, vector<6x128xf32> -> vector<6x128xf32>
    %719 = arith.addf %714, %718 : vector<6x128xf32>
    %c0_615 = arith.constant 0 : index
    %c6_616 = arith.constant 6 : index
    %c0_617 = arith.constant 0 : index
    %c0_618 = arith.constant 0 : index
    %720 = vector.load %arg1[%c0_615, %c6_616, %c0_617, %c0_618] : memref<1x10x10x32xbf16, #tpu.memory_space<vmem>>, vector<1x1x10x32xbf16>
    %721 = vector.shape_cast %720 : vector<1x1x10x32xbf16> to vector<10x32xbf16>
    %722 = vector.extract_strided_slice %721 {offsets = [0, 0], sizes = [6, 32], strides = [1, 1]} : vector<10x32xbf16> to vector<6x32xbf16>
    %c5_619 = arith.constant 5 : index
    %c0_620 = arith.constant 0 : index
    %c0_621 = arith.constant 0 : index
    %723 = vector.load %arg2[%c5_619, %c0_620, %c0_621] : memref<25x32x128xbf16, #tpu.memory_space<vmem>>, vector<1x32x128xbf16>
    %724 = vector.shape_cast %723 : vector<1x32x128xbf16> to vector<32x128xbf16>
    %cst_622 = arith.constant dense<0.000000e+00> : vector<6x128xf32>
    %725 = tpu.matmul %722, %724, %cst_622 {dimension_numbers = #tpu.dot_dimension_numbers<[1], [0], [0], [1], [0, 0, 1, 1], [], []>} : vector<6x32xbf16>, vector<32x128xbf16>, vector<6x128xf32> -> vector<6x128xf32>
    %726 = arith.addf %719, %725 : vector<6x128xf32>
    %727 = vector.extract_strided_slice %721 {offsets = [1, 0], sizes = [6, 32], strides = [1, 1]} : vector<10x32xbf16> to vector<6x32xbf16>
    %c6_623 = arith.constant 6 : index
    %c0_624 = arith.constant 0 : index
    %c0_625 = arith.constant 0 : index
    %728 = vector.load %arg2[%c6_623, %c0_624, %c0_625] : memref<25x32x128xbf16, #tpu.memory_space<vmem>>, vector<1x32x128xbf16>
    %729 = vector.shape_cast %728 : vector<1x32x128xbf16> to vector<32x128xbf16>
    %cst_626 = arith.constant dense<0.000000e+00> : vector<6x128xf32>
    %730 = tpu.matmul %727, %729, %cst_626 {dimension_numbers = #tpu.dot_dimension_numbers<[1], [0], [0], [1], [0, 0, 1, 1], [], []>} : vector<6x32xbf16>, vector<32x128xbf16>, vector<6x128xf32> -> vector<6x128xf32>
    %731 = arith.addf %726, %730 : vector<6x128xf32>
    %732 = vector.extract_strided_slice %721 {offsets = [2, 0], sizes = [6, 32], strides = [1, 1]} : vector<10x32xbf16> to vector<6x32xbf16>
    %c7_627 = arith.constant 7 : index
    %c0_628 = arith.constant 0 : index
    %c0_629 = arith.constant 0 : index
    %733 = vector.load %arg2[%c7_627, %c0_628, %c0_629] : memref<25x32x128xbf16, #tpu.memory_space<vmem>>, vector<1x32x128xbf16>
    %734 = vector.shape_cast %733 : vector<1x32x128xbf16> to vector<32x128xbf16>
    %cst_630 = arith.constant dense<0.000000e+00> : vector<6x128xf32>
    %735 = tpu.matmul %732, %734, %cst_630 {dimension_numbers = #tpu.dot_dimension_numbers<[1], [0], [0], [1], [0, 0, 1, 1], [], []>} : vector<6x32xbf16>, vector<32x128xbf16>, vector<6x128xf32> -> vector<6x128xf32>
    %736 = arith.addf %731, %735 : vector<6x128xf32>
    %737 = vector.extract_strided_slice %721 {offsets = [3, 0], sizes = [6, 32], strides = [1, 1]} : vector<10x32xbf16> to vector<6x32xbf16>
    %c8_631 = arith.constant 8 : index
    %c0_632 = arith.constant 0 : index
    %c0_633 = arith.constant 0 : index
    %738 = vector.load %arg2[%c8_631, %c0_632, %c0_633] : memref<25x32x128xbf16, #tpu.memory_space<vmem>>, vector<1x32x128xbf16>
    %739 = vector.shape_cast %738 : vector<1x32x128xbf16> to vector<32x128xbf16>
    %cst_634 = arith.constant dense<0.000000e+00> : vector<6x128xf32>
    %740 = tpu.matmul %737, %739, %cst_634 {dimension_numbers = #tpu.dot_dimension_numbers<[1], [0], [0], [1], [0, 0, 1, 1], [], []>} : vector<6x32xbf16>, vector<32x128xbf16>, vector<6x128xf32> -> vector<6x128xf32>
    %741 = arith.addf %736, %740 : vector<6x128xf32>
    %742 = vector.extract_strided_slice %721 {offsets = [4, 0], sizes = [6, 32], strides = [1, 1]} : vector<10x32xbf16> to vector<6x32xbf16>
    %c9_635 = arith.constant 9 : index
    %c0_636 = arith.constant 0 : index
    %c0_637 = arith.constant 0 : index
    %743 = vector.load %arg2[%c9_635, %c0_636, %c0_637] : memref<25x32x128xbf16, #tpu.memory_space<vmem>>, vector<1x32x128xbf16>
    %744 = vector.shape_cast %743 : vector<1x32x128xbf16> to vector<32x128xbf16>
    %cst_638 = arith.constant dense<0.000000e+00> : vector<6x128xf32>
    %745 = tpu.matmul %742, %744, %cst_638 {dimension_numbers = #tpu.dot_dimension_numbers<[1], [0], [0], [1], [0, 0, 1, 1], [], []>} : vector<6x32xbf16>, vector<32x128xbf16>, vector<6x128xf32> -> vector<6x128xf32>
    %746 = arith.addf %741, %745 : vector<6x128xf32>
    %c0_639 = arith.constant 0 : index
    %c7_640 = arith.constant 7 : index
    %c0_641 = arith.constant 0 : index
    %c0_642 = arith.constant 0 : index
    %747 = vector.load %arg1[%c0_639, %c7_640, %c0_641, %c0_642] : memref<1x10x10x32xbf16, #tpu.memory_space<vmem>>, vector<1x1x10x32xbf16>
    %748 = vector.shape_cast %747 : vector<1x1x10x32xbf16> to vector<10x32xbf16>
    %749 = vector.extract_strided_slice %748 {offsets = [0, 0], sizes = [6, 32], strides = [1, 1]} : vector<10x32xbf16> to vector<6x32xbf16>
    %c10_643 = arith.constant 10 : index
    %c0_644 = arith.constant 0 : index
    %c0_645 = arith.constant 0 : index
    %750 = vector.load %arg2[%c10_643, %c0_644, %c0_645] : memref<25x32x128xbf16, #tpu.memory_space<vmem>>, vector<1x32x128xbf16>
    %751 = vector.shape_cast %750 : vector<1x32x128xbf16> to vector<32x128xbf16>
    %cst_646 = arith.constant dense<0.000000e+00> : vector<6x128xf32>
    %752 = tpu.matmul %749, %751, %cst_646 {dimension_numbers = #tpu.dot_dimension_numbers<[1], [0], [0], [1], [0, 0, 1, 1], [], []>} : vector<6x32xbf16>, vector<32x128xbf16>, vector<6x128xf32> -> vector<6x128xf32>
    %753 = arith.addf %746, %752 : vector<6x128xf32>
    %754 = vector.extract_strided_slice %748 {offsets = [1, 0], sizes = [6, 32], strides = [1, 1]} : vector<10x32xbf16> to vector<6x32xbf16>
    %c11_647 = arith.constant 11 : index
    %c0_648 = arith.constant 0 : index
    %c0_649 = arith.constant 0 : index
    %755 = vector.load %arg2[%c11_647, %c0_648, %c0_649] : memref<25x32x128xbf16, #tpu.memory_space<vmem>>, vector<1x32x128xbf16>
    %756 = vector.shape_cast %755 : vector<1x32x128xbf16> to vector<32x128xbf16>
    %cst_650 = arith.constant dense<0.000000e+00> : vector<6x128xf32>
    %757 = tpu.matmul %754, %756, %cst_650 {dimension_numbers = #tpu.dot_dimension_numbers<[1], [0], [0], [1], [0, 0, 1, 1], [], []>} : vector<6x32xbf16>, vector<32x128xbf16>, vector<6x128xf32> -> vector<6x128xf32>
    %758 = arith.addf %753, %757 : vector<6x128xf32>
    %759 = vector.extract_strided_slice %748 {offsets = [2, 0], sizes = [6, 32], strides = [1, 1]} : vector<10x32xbf16> to vector<6x32xbf16>
    %c12_651 = arith.constant 12 : index
    %c0_652 = arith.constant 0 : index
    %c0_653 = arith.constant 0 : index
    %760 = vector.load %arg2[%c12_651, %c0_652, %c0_653] : memref<25x32x128xbf16, #tpu.memory_space<vmem>>, vector<1x32x128xbf16>
    %761 = vector.shape_cast %760 : vector<1x32x128xbf16> to vector<32x128xbf16>
    %cst_654 = arith.constant dense<0.000000e+00> : vector<6x128xf32>
    %762 = tpu.matmul %759, %761, %cst_654 {dimension_numbers = #tpu.dot_dimension_numbers<[1], [0], [0], [1], [0, 0, 1, 1], [], []>} : vector<6x32xbf16>, vector<32x128xbf16>, vector<6x128xf32> -> vector<6x128xf32>
    %763 = arith.addf %758, %762 : vector<6x128xf32>
    %764 = vector.extract_strided_slice %748 {offsets = [3, 0], sizes = [6, 32], strides = [1, 1]} : vector<10x32xbf16> to vector<6x32xbf16>
    %c13_655 = arith.constant 13 : index
    %c0_656 = arith.constant 0 : index
    %c0_657 = arith.constant 0 : index
    %765 = vector.load %arg2[%c13_655, %c0_656, %c0_657] : memref<25x32x128xbf16, #tpu.memory_space<vmem>>, vector<1x32x128xbf16>
    %766 = vector.shape_cast %765 : vector<1x32x128xbf16> to vector<32x128xbf16>
    %cst_658 = arith.constant dense<0.000000e+00> : vector<6x128xf32>
    %767 = tpu.matmul %764, %766, %cst_658 {dimension_numbers = #tpu.dot_dimension_numbers<[1], [0], [0], [1], [0, 0, 1, 1], [], []>} : vector<6x32xbf16>, vector<32x128xbf16>, vector<6x128xf32> -> vector<6x128xf32>
    %768 = arith.addf %763, %767 : vector<6x128xf32>
    %769 = vector.extract_strided_slice %748 {offsets = [4, 0], sizes = [6, 32], strides = [1, 1]} : vector<10x32xbf16> to vector<6x32xbf16>
    %c14_659 = arith.constant 14 : index
    %c0_660 = arith.constant 0 : index
    %c0_661 = arith.constant 0 : index
    %770 = vector.load %arg2[%c14_659, %c0_660, %c0_661] : memref<25x32x128xbf16, #tpu.memory_space<vmem>>, vector<1x32x128xbf16>
    %771 = vector.shape_cast %770 : vector<1x32x128xbf16> to vector<32x128xbf16>
    %cst_662 = arith.constant dense<0.000000e+00> : vector<6x128xf32>
    %772 = tpu.matmul %769, %771, %cst_662 {dimension_numbers = #tpu.dot_dimension_numbers<[1], [0], [0], [1], [0, 0, 1, 1], [], []>} : vector<6x32xbf16>, vector<32x128xbf16>, vector<6x128xf32> -> vector<6x128xf32>
    %773 = arith.addf %768, %772 : vector<6x128xf32>
    %c0_663 = arith.constant 0 : index
    %c8_664 = arith.constant 8 : index
    %c0_665 = arith.constant 0 : index
    %c0_666 = arith.constant 0 : index
    %774 = vector.load %arg1[%c0_663, %c8_664, %c0_665, %c0_666] : memref<1x10x10x32xbf16, #tpu.memory_space<vmem>>, vector<1x1x10x32xbf16>
    %775 = vector.shape_cast %774 : vector<1x1x10x32xbf16> to vector<10x32xbf16>
    %776 = vector.extract_strided_slice %775 {offsets = [0, 0], sizes = [6, 32], strides = [1, 1]} : vector<10x32xbf16> to vector<6x32xbf16>
    %c15_667 = arith.constant 15 : index
    %c0_668 = arith.constant 0 : index
    %c0_669 = arith.constant 0 : index
    %777 = vector.load %arg2[%c15_667, %c0_668, %c0_669] : memref<25x32x128xbf16, #tpu.memory_space<vmem>>, vector<1x32x128xbf16>
    %778 = vector.shape_cast %777 : vector<1x32x128xbf16> to vector<32x128xbf16>
    %cst_670 = arith.constant dense<0.000000e+00> : vector<6x128xf32>
    %779 = tpu.matmul %776, %778, %cst_670 {dimension_numbers = #tpu.dot_dimension_numbers<[1], [0], [0], [1], [0, 0, 1, 1], [], []>} : vector<6x32xbf16>, vector<32x128xbf16>, vector<6x128xf32> -> vector<6x128xf32>
    %780 = arith.addf %773, %779 : vector<6x128xf32>
    %781 = vector.extract_strided_slice %775 {offsets = [1, 0], sizes = [6, 32], strides = [1, 1]} : vector<10x32xbf16> to vector<6x32xbf16>
    %c16_671 = arith.constant 16 : index
    %c0_672 = arith.constant 0 : index
    %c0_673 = arith.constant 0 : index
    %782 = vector.load %arg2[%c16_671, %c0_672, %c0_673] : memref<25x32x128xbf16, #tpu.memory_space<vmem>>, vector<1x32x128xbf16>
    %783 = vector.shape_cast %782 : vector<1x32x128xbf16> to vector<32x128xbf16>
    %cst_674 = arith.constant dense<0.000000e+00> : vector<6x128xf32>
    %784 = tpu.matmul %781, %783, %cst_674 {dimension_numbers = #tpu.dot_dimension_numbers<[1], [0], [0], [1], [0, 0, 1, 1], [], []>} : vector<6x32xbf16>, vector<32x128xbf16>, vector<6x128xf32> -> vector<6x128xf32>
    %785 = arith.addf %780, %784 : vector<6x128xf32>
    %786 = vector.extract_strided_slice %775 {offsets = [2, 0], sizes = [6, 32], strides = [1, 1]} : vector<10x32xbf16> to vector<6x32xbf16>
    %c17_675 = arith.constant 17 : index
    %c0_676 = arith.constant 0 : index
    %c0_677 = arith.constant 0 : index
    %787 = vector.load %arg2[%c17_675, %c0_676, %c0_677] : memref<25x32x128xbf16, #tpu.memory_space<vmem>>, vector<1x32x128xbf16>
    %788 = vector.shape_cast %787 : vector<1x32x128xbf16> to vector<32x128xbf16>
    %cst_678 = arith.constant dense<0.000000e+00> : vector<6x128xf32>
    %789 = tpu.matmul %786, %788, %cst_678 {dimension_numbers = #tpu.dot_dimension_numbers<[1], [0], [0], [1], [0, 0, 1, 1], [], []>} : vector<6x32xbf16>, vector<32x128xbf16>, vector<6x128xf32> -> vector<6x128xf32>
    %790 = arith.addf %785, %789 : vector<6x128xf32>
    %791 = vector.extract_strided_slice %775 {offsets = [3, 0], sizes = [6, 32], strides = [1, 1]} : vector<10x32xbf16> to vector<6x32xbf16>
    %c18_679 = arith.constant 18 : index
    %c0_680 = arith.constant 0 : index
    %c0_681 = arith.constant 0 : index
    %792 = vector.load %arg2[%c18_679, %c0_680, %c0_681] : memref<25x32x128xbf16, #tpu.memory_space<vmem>>, vector<1x32x128xbf16>
    %793 = vector.shape_cast %792 : vector<1x32x128xbf16> to vector<32x128xbf16>
    %cst_682 = arith.constant dense<0.000000e+00> : vector<6x128xf32>
    %794 = tpu.matmul %791, %793, %cst_682 {dimension_numbers = #tpu.dot_dimension_numbers<[1], [0], [0], [1], [0, 0, 1, 1], [], []>} : vector<6x32xbf16>, vector<32x128xbf16>, vector<6x128xf32> -> vector<6x128xf32>
    %795 = arith.addf %790, %794 : vector<6x128xf32>
    %796 = vector.extract_strided_slice %775 {offsets = [4, 0], sizes = [6, 32], strides = [1, 1]} : vector<10x32xbf16> to vector<6x32xbf16>
    %c19_683 = arith.constant 19 : index
    %c0_684 = arith.constant 0 : index
    %c0_685 = arith.constant 0 : index
    %797 = vector.load %arg2[%c19_683, %c0_684, %c0_685] : memref<25x32x128xbf16, #tpu.memory_space<vmem>>, vector<1x32x128xbf16>
    %798 = vector.shape_cast %797 : vector<1x32x128xbf16> to vector<32x128xbf16>
    %cst_686 = arith.constant dense<0.000000e+00> : vector<6x128xf32>
    %799 = tpu.matmul %796, %798, %cst_686 {dimension_numbers = #tpu.dot_dimension_numbers<[1], [0], [0], [1], [0, 0, 1, 1], [], []>} : vector<6x32xbf16>, vector<32x128xbf16>, vector<6x128xf32> -> vector<6x128xf32>
    %800 = arith.addf %795, %799 : vector<6x128xf32>
    %c0_687 = arith.constant 0 : index
    %c9_688 = arith.constant 9 : index
    %c0_689 = arith.constant 0 : index
    %c0_690 = arith.constant 0 : index
    %801 = vector.load %arg1[%c0_687, %c9_688, %c0_689, %c0_690] : memref<1x10x10x32xbf16, #tpu.memory_space<vmem>>, vector<1x1x10x32xbf16>
    %802 = vector.shape_cast %801 : vector<1x1x10x32xbf16> to vector<10x32xbf16>
    %803 = vector.extract_strided_slice %802 {offsets = [0, 0], sizes = [6, 32], strides = [1, 1]} : vector<10x32xbf16> to vector<6x32xbf16>
    %c20_691 = arith.constant 20 : index
    %c0_692 = arith.constant 0 : index
    %c0_693 = arith.constant 0 : index
    %804 = vector.load %arg2[%c20_691, %c0_692, %c0_693] : memref<25x32x128xbf16, #tpu.memory_space<vmem>>, vector<1x32x128xbf16>
    %805 = vector.shape_cast %804 : vector<1x32x128xbf16> to vector<32x128xbf16>
    %cst_694 = arith.constant dense<0.000000e+00> : vector<6x128xf32>
    %806 = tpu.matmul %803, %805, %cst_694 {dimension_numbers = #tpu.dot_dimension_numbers<[1], [0], [0], [1], [0, 0, 1, 1], [], []>} : vector<6x32xbf16>, vector<32x128xbf16>, vector<6x128xf32> -> vector<6x128xf32>
    %807 = arith.addf %800, %806 : vector<6x128xf32>
    %808 = vector.extract_strided_slice %802 {offsets = [1, 0], sizes = [6, 32], strides = [1, 1]} : vector<10x32xbf16> to vector<6x32xbf16>
    %c21_695 = arith.constant 21 : index
    %c0_696 = arith.constant 0 : index
    %c0_697 = arith.constant 0 : index
    %809 = vector.load %arg2[%c21_695, %c0_696, %c0_697] : memref<25x32x128xbf16, #tpu.memory_space<vmem>>, vector<1x32x128xbf16>
    %810 = vector.shape_cast %809 : vector<1x32x128xbf16> to vector<32x128xbf16>
    %cst_698 = arith.constant dense<0.000000e+00> : vector<6x128xf32>
    %811 = tpu.matmul %808, %810, %cst_698 {dimension_numbers = #tpu.dot_dimension_numbers<[1], [0], [0], [1], [0, 0, 1, 1], [], []>} : vector<6x32xbf16>, vector<32x128xbf16>, vector<6x128xf32> -> vector<6x128xf32>
    %812 = arith.addf %807, %811 : vector<6x128xf32>
    %813 = vector.extract_strided_slice %802 {offsets = [2, 0], sizes = [6, 32], strides = [1, 1]} : vector<10x32xbf16> to vector<6x32xbf16>
    %c22_699 = arith.constant 22 : index
    %c0_700 = arith.constant 0 : index
    %c0_701 = arith.constant 0 : index
    %814 = vector.load %arg2[%c22_699, %c0_700, %c0_701] : memref<25x32x128xbf16, #tpu.memory_space<vmem>>, vector<1x32x128xbf16>
    %815 = vector.shape_cast %814 : vector<1x32x128xbf16> to vector<32x128xbf16>
    %cst_702 = arith.constant dense<0.000000e+00> : vector<6x128xf32>
    %816 = tpu.matmul %813, %815, %cst_702 {dimension_numbers = #tpu.dot_dimension_numbers<[1], [0], [0], [1], [0, 0, 1, 1], [], []>} : vector<6x32xbf16>, vector<32x128xbf16>, vector<6x128xf32> -> vector<6x128xf32>
    %817 = arith.addf %812, %816 : vector<6x128xf32>
    %818 = vector.extract_strided_slice %802 {offsets = [3, 0], sizes = [6, 32], strides = [1, 1]} : vector<10x32xbf16> to vector<6x32xbf16>
    %c23_703 = arith.constant 23 : index
    %c0_704 = arith.constant 0 : index
    %c0_705 = arith.constant 0 : index
    %819 = vector.load %arg2[%c23_703, %c0_704, %c0_705] : memref<25x32x128xbf16, #tpu.memory_space<vmem>>, vector<1x32x128xbf16>
    %820 = vector.shape_cast %819 : vector<1x32x128xbf16> to vector<32x128xbf16>
    %cst_706 = arith.constant dense<0.000000e+00> : vector<6x128xf32>
    %821 = tpu.matmul %818, %820, %cst_706 {dimension_numbers = #tpu.dot_dimension_numbers<[1], [0], [0], [1], [0, 0, 1, 1], [], []>} : vector<6x32xbf16>, vector<32x128xbf16>, vector<6x128xf32> -> vector<6x128xf32>
    %822 = arith.addf %817, %821 : vector<6x128xf32>
    %823 = vector.extract_strided_slice %802 {offsets = [4, 0], sizes = [6, 32], strides = [1, 1]} : vector<10x32xbf16> to vector<6x32xbf16>
    %c24_707 = arith.constant 24 : index
    %c0_708 = arith.constant 0 : index
    %c0_709 = arith.constant 0 : index
    %824 = vector.load %arg2[%c24_707, %c0_708, %c0_709] : memref<25x32x128xbf16, #tpu.memory_space<vmem>>, vector<1x32x128xbf16>
    %825 = vector.shape_cast %824 : vector<1x32x128xbf16> to vector<32x128xbf16>
    %cst_710 = arith.constant dense<0.000000e+00> : vector<6x128xf32>
    %826 = tpu.matmul %823, %825, %cst_710 {dimension_numbers = #tpu.dot_dimension_numbers<[1], [0], [0], [1], [0, 0, 1, 1], [], []>} : vector<6x32xbf16>, vector<32x128xbf16>, vector<6x128xf32> -> vector<6x128xf32>
    %827 = arith.addf %822, %826 : vector<6x128xf32>
    %c0_711 = arith.constant 0 : index
    %c30 = arith.constant 30 : index
    %c0_712 = arith.constant 0 : index
    %828 = vector.load %arg4[%c0_711, %c30, %c0_712] : memref<1x36x128xf32, #tpu.memory_space<vmem>>, vector<1x6x128xf32>
    %829 = vector.shape_cast %828 : vector<1x6x128xf32> to vector<6x128xf32>
    %830 = vector.shape_cast %827 : vector<6x128xf32> to vector<1x6x128xf32>
    tpu.vector_store %arg4[%c0_711, %c30, %c0_712], %830 {strides = array<i32>} : memref<1x36x128xf32, #tpu.memory_space<vmem>>, vector<1x6x128xf32>,
    return
  }
  func.func @transform_0(%arg0: i32) -> (i32, i32, i32, i32) {
    %c0_i32 = arith.constant 0 : i32
    %c0_i32_0 = arith.constant 0 : i32
    %c0_i32_1 = arith.constant 0 : i32
    %c0_i32_2 = arith.constant 0 : i32
    return %arg0, %c0_i32, %c0_i32_0, %c0_i32_1 : i32, i32, i32, i32
  }
  func.func @transform_1(%arg0: i32) -> (i32, i32, i32) {
    %c0_i32 = arith.constant 0 : i32
    %c0_i32_0 = arith.constant 0 : i32
    %c0_i32_1 = arith.constant 0 : i32
    %c0_i32_2 = arith.constant 0 : i32
    return %c0_i32, %c0_i32_0, %c0_i32_1 : i32, i32, i32
  }
  func.func @transform_2(%arg0: i32) -> (i32, i32) {
    %c0_i32 = arith.constant 0 : i32
    %c0_i32_0 = arith.constant 0 : i32
    %c0_i32_1 = arith.constant 0 : i32
    return %c0_i32, %c0_i32_0 : i32, i32
  }
  func.func @transform_3(%arg0: i32) -> (i32, i32, i32) {
    %c0_i32 = arith.constant 0 : i32
    %c0_i32_0 = arith.constant 0 : i32
    %c0_i32_1 = arith.constant 0 : i32
    return %arg0, %c0_i32, %c0_i32_0 : i32, i32, i32
  }
}

</mosaic_0001>

<llo_original>
// kernel: patch_embed_event_forward.1
$region0: #{patch_embed_event_forward.1}
  #allocation0 [shape = 'u32[]', space=smem, size = 0x4, offset = 0x4, fixed_abs, tag = 'smem constant byte address 0x4 - core index']
  #allocation1 [shape = 'u32[144,128]{1,0:T(1,128)}', space=vmem, size = 0x12000, scoped, tag = 'internal scratch']
  %s0 = inlined_call_operand.vmem [shape: bf16[2,10,10,32], index: 0, kind: input, shape index: {}]
  %s1 = inlined_call_operand.vmem [shape: bf16[25,32,128], index: 1, kind: input, shape index: {}]
  %s2 = inlined_call_operand.vmem [shape: f32[1,128], index: 2, kind: input, shape index: {}]
  %s3 = inlined_call_operand.vmem [shape: f32[2,36,128], index: 3, kind: output, shape index: {}]
  %s4 = sld [smem:[#allocation0]]
  $region45: #{patch_embed_event_forward.1} parent=0
    _
  %s6 = ssub.s32 1, %s4
  %s7 = scalar_select 0, %s6, %s4
  loop: start=0, step=1, limit=4
  $region2: #{patch_embed_event_forward.1} parent=0 // loop_pre_header
    _
  $region3: #{patch_embed_event_forward.1} parent=0 // loop_header
    %s9 = sphi 0, %s13
    %p10 = scmp.ge.s32.totalorder %s9, 4
    %s19 = sphi 0, %s21
    %s22 = sphi 0, %s19
    %s23 = sphi 0, %s22
    %s39 = sphi 0, %s23
    %s43 = sphi 0, %s43
    %s45 = sphi 0, %s43
    %s46 = sphi 0, %s45
    %s60 = sphi 0, %s46
    %s64 = sphi 0, %s64
    %s66 = sphi 0, %s64
    %s67 = sphi 0, %s66
    %s81 = sphi 0, %s67
    %s87 = sphi 0, %s89
    %s90 = sphi 0, %s87
    %s91 = sphi 0, %s90
    %s107 = sphi 0, %s91
  $region4: #{patch_embed_event_forward.1} parent=0 // loop_header_branch
    %12 = sbr.rel (%p10) target = $region8
  $region5: #{patch_embed_event_forward.1} parent=0 // loop_body
    %s14 = ssub.s32 %s9, 1
    %s15 = ssub.s32 %s9, 2
    %s16 = sadd.s32 %s9, 1
    %s17 = ssub.s32 %s9, %s16
    %p18 = scmp.eq.s32.totalorder %s17, 0
    %s20 = sadd.s32 %s19, 1
    %s21 = scalar_select %p18, %s19, %s20
    %p24 = pneg %p18
    %p25 = scmp.eq.s32.totalorder %s9, 1
    %p26 = por %p24, %p25
    %p27 = scmp.ne.s32.totalorder %s19, %s22
    %p28 = scmp.eq.s32.totalorder %s9, 0
    %p29 = por %p27, %p28
    %p30 = scmp.ne.s32.totalorder %s19, %s22
    %p31 = scmp.eq.s32.totalorder %s14, 1
    %p32 = por %p30, %p31
    %p33 = scmp.ne.s32.totalorder %s22, %s23
    %p34 = scmp.eq.s32.totalorder %s14, 0
    %p35 = por %p33, %p34
    %p36 = scmp.ne.s32.totalorder %s22, %s23
    %p37 = scmp.eq.s32.totalorder %s15, 1
    %p38 = por %p36, %p37
    %p40 = scmp.ne.s32.totalorder %s23, %s39
    %p41 = scmp.eq.s32.totalorder %s15, 0
    %p42 = por %p40, %p41
    %s44 = sadd.s32 %s43, 1
    %p47 = scmp.eq.s32.totalorder %s9, 1
    %p48 = scmp.ne.s32.totalorder %s43, %s45
    %p49 = scmp.eq.s32.totalorder %s9, 0
    %p50 = por %p48, %p49
    %p51 = scmp.ne.s32.totalorder %s43, %s45
    %p52 = scmp.eq.s32.totalorder %s14, 1
    %p53 = por %p51, %p52
    %p54 = scmp.ne.s32.totalorder %s45, %s46
    %p55 = scmp.eq.s32.totalorder %s14, 0
    %p56 = por %p54, %p55
    %p57 = scmp.ne.s32.totalorder %s45, %s46
    %p58 = scmp.eq.s32.totalorder %s15, 1
    %p59 = por %p57, %p58
    %p61 = scmp.ne.s32.totalorder %s46, %s60
    %p62 = scmp.eq.s32.totalorder %s15, 0
    %p63 = por %p61, %p62
    %s65 = sadd.s32 %s64, 1
    %p68 = scmp.eq.s32.totalorder %s9, 1
    %p69 = scmp.ne.s32.totalorder %s64, %s66
    %p70 = scmp.eq.s32.totalorder %s9, 0
    %p71 = por %p69, %p70
    %p72 = scmp.ne.s32.totalorder %s64, %s66
    %p73 = scmp.eq.s32.totalorder %s14, 1
    %p74 = por %p72, %p73
    %p75 = scmp.ne.s32.totalorder %s66, %s67
    %p76 = scmp.eq.s32.totalorder %s14, 0
    %p77 = por %p75, %p76
    %p78 = scmp.ne.s32.totalorder %s66, %s67
    %p79 = scmp.eq.s32.totalorder %s15, 1
    %p80 = por %p78, %p79
    %p82 = scmp.ne.s32.totalorder %s67, %s81
    %p83 = scmp.eq.s32.totalorder %s15, 0
    %p84 = por %p82, %p83
    %s85 = ssub.s32 %s9, %s16
    %p86 = scmp.eq.s32.totalorder %s85, 0
    %s88 = sadd.s32 %s87, 1
    %s89 = scalar_select %p86, %s87, %s88
    %p92 = pneg %p86
    %p93 = scmp.eq.s32.totalorder %s9, 1
    %p94 = por %p92, %p93
    %p95 = scmp.ne.s32.totalorder %s87, %s90
    %p96 = scmp.eq.s32.totalorder %s9, 0
    %p97 = por %p95, %p96
    %p98 = scmp.ne.s32.totalorder %s87, %s90
    %p99 = scmp.eq.s32.totalorder %s14, 1
    %p100 = por %p98, %p99
    %p101 = scmp.ne.s32.totalorder %s90, %s91
    %p102 = scmp.eq.s32.totalorder %s14, 0
    %p103 = por %p101, %p102
    %p104 = scmp.ne.s32.totalorder %s90, %s91
    %p105 = scmp.eq.s32.totalorder %s15, 1
    %p106 = por %p104, %p105
    %p108 = scmp.ne.s32.totalorder %s91, %s107
    %p109 = scmp.eq.s32.totalorder %s15, 0
    %p110 = por %p108, %p109
    %p111 = scmp.le.s32.totalorder 1, %s9
    %p112 = scmp.lt.s32.totalorder %s9, 3
    %p113 = pnand %p111, %p112
    %p114 = pneg %p113
    // Predicated region
    $region9: #{patch_embed_event_forward.1} parent=5 // pred_check
      _
    $region10: #{patch_embed_event_forward.1} parent=5 // pred_check_branch
      %116 = sbr.rel (%p113) target = $region12
    $region11: #{patch_embed_event_forward.1} parent=5 // pred_region
      %s117 = ssub.s32 %s9, 1
      // Predicated region
      $region13: #{patch_embed_event_forward.1} parent=11 // pred_check
        %p118 = pneg %p56
      $region14: #{patch_embed_event_forward.1} parent=11 // pred_check_branch
        %120 = sbr.rel (%p118) target = $region16
      $region15: #{patch_embed_event_forward.1} parent=11 // pred_region
        _
      $region16: #{patch_embed_event_forward.1} parent=11 // pred_fallthru
        _
      // Predicated region
      $region17: #{patch_embed_event_forward.1} parent=11 // pred_check
        %p121 = pneg %p77
      $region18: #{patch_embed_event_forward.1} parent=11 // pred_check_branch
        %123 = sbr.rel (%p121) target = $region20
      $region19: #{patch_embed_event_forward.1} parent=11 // pred_region
        _
      $region20: #{patch_embed_event_forward.1} parent=11 // pred_fallthru
        _
    $region12: #{patch_embed_event_forward.1} parent=5 // pred_fallthru
      _
    %p124 = scmp.lt.s32.totalorder %s9, 2
    // Predicated region
    $region21: #{patch_embed_event_forward.1} parent=5 // pred_check
      %p125 = pneg %p124
    $region22: #{patch_embed_event_forward.1} parent=5 // pred_check_branch
      %127 = sbr.rel (%p125) target = $region24
    $region23: #{patch_embed_event_forward.1} parent=5 // pred_region
      // Predicated region
      $region25: #{patch_embed_event_forward.1} parent=23 // pred_check
        %p128 = pneg %p29
      $region26: #{patch_embed_event_forward.1} parent=23 // pred_check_branch
        %130 = sbr.rel (%p128) target = $region28
      $region27: #{patch_embed_event_forward.1} parent=23 // pred_region
        %p131 = scmp.lt.s32.totalorder %s9, 1
        %s132 = scalar_select %p131, %s9, 1
        %s133 = smul.addr %s132, 20
        %s134 = smul.addr %s133, 4
        %s135 = scalar_lea.vmem %s0, %s134
      $region28: #{patch_embed_event_forward.1} parent=23 // pred_fallthru
        _
    $region24: #{patch_embed_event_forward.1} parent=5 // pred_fallthru
      _
    %p136 = scmp.le.s32.totalorder 1, %s9
    %p137 = scmp.lt.s32.totalorder %s9, 3
    %p138 = pnand %p136, %p137
    %p139 = pneg %p138
    // Predicated region
    $region29: #{patch_embed_event_forward.1} parent=5 // pred_check
      _
    $region30: #{patch_embed_event_forward.1} parent=5 // pred_check_branch
      %141 = sbr.rel (%p138) target = $region32
    $region31: #{patch_embed_event_forward.1} parent=5 // pred_region
      %s142 = ssub.s32 %s9, 1
      %p143 = scmp.lt.s32.totalorder %s14, 1
      %s144 = scalar_select %p143, %s14, 1
      %s145 = smul.addr %s144, 20
      %s146 = smul.addr %s145, 4
      %s147 = scalar_lea.vmem %s0, %s146
      %p148 = pneg %p35
      %p149 = pneg %p32
      %p150 = pneg %p56
      %p151 = pneg %p53
      %p152 = pneg %p77
      %p153 = pneg %p74
      %p154 = pneg %p103
      %p155 = pneg %p100
      %p156 = scmp.lt.s32.totalorder %s14, 1
      %s157 = scalar_select %p156, %s14, 1
      %s158 = smul.addr %s157, 5
      %s159 = smul.addr %s158, 8
      %s160 = scalar_lea.vmem %s3, %s159
      %p161 = scmp.lt.s32.totalorder %s14, 1
      %s162 = scalar_select %p161, %s14, 1
      %s163 = smul.addr %s162, 20
      %s164 = smul.addr %s163, 4
      %s165 = scalar_lea.vmem %s0, %s164
      %p166 = scmp.lt.s32.totalorder %s14, 1
      %s167 = scalar_select %p166, %s14, 1
      %s168 = smul.addr %s167, 5
      %s169 = smul.addr %s168, 8
      %s170 = scalar_lea.vmem %s3, %s169
      %v172 = vld [vmem:[%s2] sm:$0x1]
      %v174 = vlaneseq
      %v175 = vshrl.u32 %v174, 7
      %v176 = vsub.s32 0, %v175
      %v177 = vrot.slane %v172, %v176
      %v179 = vld [vmem:[%s165] sm:$0xf]
      %v180 = vld [vmem:[%s165 + $0x4] sm:$0x1]
      %v181 = vld [vmem:[%s1] sm:$0xf]
      %v182 = vld [vmem:[%s1 + $0x4] sm:$0xf]
      %v183 = vld [vmem:[%s1 + $0x8] sm:$0xf]
      %v184 = vld [vmem:[%s1 + $0xc] sm:$0xf]
      %v189 = vunpack.c.l.b16 %v181
      %v190 = vunpack.c.l.b16 %v182
      %v191 = vunpack.c.l.b16 %v183
      %v192 = vunpack.c.l.b16 %v184
      %v193 = vpack.c.b16 %v190, %v189
      %v194 = vpack.c.b16 %v192, %v191
      %vm197 = vcmask 261120
      %v199 = vsel %vm197, %v179, 0
      %201 = vmatprep.subr.bf16.mxu0 0
      %202 = vmatpush1.bf16.msra.mxu0 %v193
      %203 = vmatprep.subr.bf16.mxu0 0
      %204 = vmatpush1.bf16.msra.mxu0 %v194
      %205 = vmatprep.subr.bf16.mxu0 0
      %206 = vmatpush1.bf16.msra.mxu0 0
      %207 = vmatprep.subr.bf16.mxu0 0
      %208 = vmatpush1.bf16.msra.mxu0 0
      %209 = vmatprep.subr.bf16.mxu0 0
      %210 = vmatpush1.bf16.msra.mxu0 0
      %211 = vmatprep.subr.bf16.mxu0 0
      %212 = vmatpush1.bf16.msra.mxu0 0
      %213 = vmatprep.subr.bf16.mxu0 0
      %214 = vmatpush1.bf16.msra.mxu0 0
      %215 = vmatprep.subr.bf16.mxu0 0
      %216 = vmatpush1.bf16.msra.mxu0 0
      %217 = vmatprep.subr.bf16.mxu0 0
      %218 = vmatpush1.bf16.msra.mxu0 0
      %219 = vmatprep.subr.bf16.mxu0 0
      %220 = vmatpush1.bf16.msra.mxu0 0
      %221 = vmatprep.subr.bf16.mxu0 0
      %222 = vmatpush1.bf16.msra.mxu0 0
      %223 = vmatprep.subr.bf16.mxu0 0
      %224 = vmatpush1.bf16.msra.mxu0 0
      %225 = vmatprep.subr.bf16.mxu0 0
      %226 = vmatpush1.bf16.msra.mxu0 0
      %227 = vmatprep.subr.bf16.mxu0 0
      %228 = vmatpush1.bf16.msra.mxu0 0
      %229 = vmatprep.subr.bf16.mxu0 0
      %230 = vmatpush1.bf16.msra.mxu0 0
      %231 = vmatprep.subr.bf16.mxu0 0
      %232 = vmatpush1.bf16.msra.mxu0 0
      %233 = vmatprep.mubr.bf16.mxu0 0
      %234 = vmatmul.mubr.bf16.gmra.mrb[0].mxu0 %v199
      %v235 = vpop.f32.mrb[0].mxu0
      %v236 = vadd.f32 0.0, %v235
      %v237 = vpop.f32.mrb[0].mxu0
      %v238 = vpop.f32.mrb[0].mxu0
      %v239 = vpop.f32.mrb[0].mxu0
      %240 = vdwg.mxu0
      %v241 = vadd.f32 %v177, %v236
      %s242 = scalar_lea.vmem %s1, 16
      %v243 = vld [vmem:[%s242] sm:$0xf]
      %v244 = vld [vmem:[%s242 + $0x4] sm:$0xf]
      %v245 = vld [vmem:[%s242 + $0x8] sm:$0xf]
      %v246 = vld [vmem:[%s242 + $0xc] sm:$0xf]
      %v248 = vunpack.c.l.b16 %v179
      %v249 = vpack.c.b16 %v248, %v248
      %v251 = vshrl.u32 %v249, 16
      %v253 = vshll.u32 %v249, 16
      %v255 = vrot.slane %v253, 1
      %v256 = vor.u32 %v251, %v255
      %v261 = vunpack.c.l.b16 %v243
      %v262 = vunpack.c.l.b16 %v244
      %v263 = vunpack.c.l.b16 %v245
      %v264 = vunpack.c.l.b16 %v246
      %v265 = vpack.c.b16 %v262, %v261
      %v266 = vpack.c.b16 %v264, %v263
      %v270 = vsel %vm197, %v256, 0
      %272 = vmatprep.subr.bf16.mxu0 0
      %273 = vmatpush1.bf16.msra.mxu0 %v265
      %274 = vmatprep.subr.bf16.mxu0 0
      %275 = vmatpush1.bf16.msra.mxu0 %v266
      %276 = vmatprep.subr.bf16.mxu0 0
      %277 = vmatpush1.bf16.msra.mxu0 0
      %278 = vmatprep.subr.bf16.mxu0 0
      %279 = vmatpush1.bf16.msra.mxu0 0
      %280 = vmatprep.subr.bf16.mxu0 0
      %281 = vmatpush1.bf16.msra.mxu0 0
      %282 = vmatprep.subr.bf16.mxu0 0
      %283 = vmatpush1.bf16.msra.mxu0 0
      %284 = vmatprep.subr.bf16.mxu0 0
      %285 = vmatpush1.bf16.msra.mxu0 0
      %286 = vmatprep.subr.bf16.mxu0 0
      %287 = vmatpush1.bf16.msra.mxu0 0
      %288 = vmatprep.subr.bf16.mxu0 0
      %289 = vmatpush1.bf16.msra.mxu0 0
      %290 = vmatprep.subr.bf16.mxu0 0
      %291 = vmatpush1.bf16.msra.mxu0 0
      %292 = vmatprep.subr.bf16.mxu0 0
      %293 = vmatpush1.bf16.msra.mxu0 0
      %294 = vmatprep.subr.bf16.mxu0 0
      %295 = vmatpush1.bf16.msra.mxu0 0
      %296 = vmatprep.subr.bf16.mxu0 0
      %297 = vmatpush1.bf16.msra.mxu0 0
      %298 = vmatprep.subr.bf16.mxu0 0
      %299 = vmatpush1.bf16.msra.mxu0 0
      %300 = vmatprep.subr.bf16.mxu0 0
      %301 = vmatpush1.bf16.msra.mxu0 0
      %302 = vmatprep.subr.bf16.mxu0 0
      %303 = vmatpush1.bf16.msra.mxu0 0
      %304 = vmatprep.mubr.bf16.mxu0 0
      %305 = vmatmul.mubr.bf16.gmra.mrb[0].mxu0 %v270
      %v306 = vpop.f32.mrb[0].mxu0
      %v307 = vadd.f32 0.0, %v306
      %v308 = vpop.f32.mrb[0].mxu0
      %v309 = vpop.f32.mrb[0].mxu0
      %v310 = vpop.f32.mrb[0].mxu0
      %311 = vdwg.mxu0
      %v312 = vadd.f32 %v241, %v307
      %s313 = scalar_lea.vmem %s1, 32
      %v314 = vld [vmem:[%s313] sm:$0xf]
      %v315 = vld [vmem:[%s313 + $0x4] sm:$0xf]
      %v316 = vld [vmem:[%s313 + $0x8] sm:$0xf]
      %v317 = vld [vmem:[%s313 + $0xc] sm:$0xf]
      %v318 = vrot.slane %v249, 1
      %v323 = vunpack.c.l.b16 %v314
      %v324 = vunpack.c.l.b16 %v315
      %v325 = vunpack.c.l.b16 %v316
      %v326 = vunpack.c.l.b16 %v317
      %v327 = vpack.c.b16 %v324, %v323
      %v328 = vpack.c.b16 %v326, %v325
      %v332 = vsel %vm197, %v318, 0
      %334 = vmatprep.subr.bf16.mxu0 0
      %335 = vmatpush1.bf16.msra.mxu0 %v327
      %336 = vmatprep.subr.bf16.mxu0 0
      %337 = vmatpush1.bf16.msra.mxu0 %v328
      %338 = vmatprep.subr.bf16.mxu0 0
      %339 = vmatpush1.bf16.msra.mxu0 0
      %340 = vmatprep.subr.bf16.mxu0 0
      %341 = vmatpush1.bf16.msra.mxu0 0
      %342 = vmatprep.subr.bf16.mxu0 0
      %343 = vmatpush1.bf16.msra.mxu0 0
      %344 = vmatprep.subr.bf16.mxu0 0
      %345 = vmatpush1.bf16.msra.mxu0 0
      %346 = vmatprep.subr.bf16.mxu0 0
      %347 = vmatpush1.bf16.msra.mxu0 0
      %348 = vmatprep.subr.bf16.mxu0 0
      %349 = vmatpush1.bf16.msra.mxu0 0
      %350 = vmatprep.subr.bf16.mxu0 0
      %351 = vmatpush1.bf16.msra.mxu0 0
      %352 = vmatprep.subr.bf16.mxu0 0
      %353 = vmatpush1.bf16.msra.mxu0 0
      %354 = vmatprep.subr.bf16.mxu0 0
      %355 = vmatpush1.bf16.msra.mxu0 0
      %356 = vmatprep.subr.bf16.mxu0 0
      %357 = vmatpush1.bf16.msra.mxu0 0
      %358 = vmatprep.subr.bf16.mxu0 0
      %359 = vmatpush1.bf16.msra.mxu0 0
      %360 = vmatprep.subr.bf16.mxu0 0
      %361 = vmatpush1.bf16.msra.mxu0 0
      %362 = vmatprep.subr.bf16.mxu0 0
      %363 = vmatpush1.bf16.msra.mxu0 0
      %364 = vmatprep.subr.bf16.mxu0 0
      %365 = vmatpush1.bf16.msra.mxu0 0
      %366 = vmatprep.mubr.bf16.mxu0 0
      %367 = vmatmul.mubr.bf16.gmra.mrb[0].mxu0 %v332
      %v368 = vpop.f32.mrb[0].mxu0
      %v369 = vadd.f32 0.0, %v368
      %v370 = vpop.f32.mrb[0].mxu0
      %v371 = vpop.f32.mrb[0].mxu0
      %v372 = vpop.f32.mrb[0].mxu0
      %373 = vdwg.mxu0
      %v374 = vadd.f32 %v312, %v369
      %s375 = scalar_lea.vmem %s1, 48
      %v376 = vld [vmem:[%s375] sm:$0xf]
      %v377 = vld [vmem:[%s375 + $0x4] sm:$0xf]
      %v378 = vld [vmem:[%s375 + $0x8] sm:$0xf]
      %v379 = vld [vmem:[%s375 + $0xc] sm:$0xf]
      %v381 = vunpack.c.l.b16 %v180
      %v382 = vpack.c.b16 %v381, %v248
      %v384 = vshrl.u32 %v382, 16
      %v386 = vrot.slane %v384, 1
      %v387 = vshll.u32 %v382, 16
      %v389 = vrot.slane %v387, 2
      %v390 = vor.u32 %v386, %v389
      %v395 = vunpack.c.l.b16 %v376
      %v396 = vunpack.c.l.b16 %v377
      %v397 = vunpack.c.l.b16 %v378
      %v398 = vunpack.c.l.b16 %v379
      %v399 = vpack.c.b16 %v396, %v395
      %v400 = vpack.c.b16 %v398, %v397
      %v404 = vsel %vm197, %v390, 0
      %406 = vmatprep.subr.bf16.mxu0 0
      %407 = vmatpush1.bf16.msra.mxu0 %v399
      %408 = vmatprep.subr.bf16.mxu0 0
      %409 = vmatpush1.bf16.msra.mxu0 %v400
      %410 = vmatprep.subr.bf16.mxu0 0
      %411 = vmatpush1.bf16.msra.mxu0 0
      %412 = vmatprep.subr.bf16.mxu0 0
      %413 = vmatpush1.bf16.msra.mxu0 0
      %414 = vmatprep.subr.bf16.mxu0 0
      %415 = vmatpush1.bf16.msra.mxu0 0
      %416 = vmatprep.subr.bf16.mxu0 0
      %417 = vmatpush1.bf16.msra.mxu0 0
      %418 = vmatprep.subr.bf16.mxu0 0
      %419 = vmatpush1.bf16.msra.mxu0 0
      %420 = vmatprep.subr.bf16.mxu0 0
      %421 = vmatpush1.bf16.msra.mxu0 0
      %422 = vmatprep.subr.bf16.mxu0 0
      %423 = vmatpush1.bf16.msra.mxu0 0
      %424 = vmatprep.subr.bf16.mxu0 0
      %425 = vmatpush1.bf16.msra.mxu0 0
      %426 = vmatprep.subr.bf16.mxu0 0
      %427 = vmatpush1.bf16.msra.mxu0 0
      %428 = vmatprep.subr.bf16.mxu0 0
      %429 = vmatpush1.bf16.msra.mxu0 0
      %430 = vmatprep.subr.bf16.mxu0 0
      %431 = vmatpush1.bf16.msra.mxu0 0
      %432 = vmatprep.subr.bf16.mxu0 0
      %433 = vmatpush1.bf16.msra.mxu0 0
      %434 = vmatprep.subr.bf16.mxu0 0
      %435 = vmatpush1.bf16.msra.mxu0 0
      %436 = vmatprep.subr.bf16.mxu0 0
      %437 = vmatpush1.bf16.msra.mxu0 0
      %438 = vmatprep.mubr.bf16.mxu0 0
      %439 = vmatmul.mubr.bf16.gmra.mrb[0].mxu0 %v404
      %v440 = vpop.f32.mrb[0].mxu0
      %v441 = vadd.f32 0.0, %v440
      %v442 = vpop.f32.mrb[0].mxu0
      %v443 = vpop.f32.mrb[0].mxu0
      %v444 = vpop.f32.mrb[0].mxu0
      %445 = vdwg.mxu0
      %v446 = vadd.f32 %v374, %v441
      %s447 = scalar_lea.vmem %s1, 64
      %v448 = vld [vmem:[%s447] sm:$0xf]
      %v449 = vld [vmem:[%s447 + $0x4] sm:$0xf]
      %v450 = vld [vmem:[%s447 + $0x8] sm:$0xf]
      %v451 = vld [vmem:[%s447 + $0xc] sm:$0xf]
      %v452 = vrot.slane %v382, 2
      %v457 = vunpack.c.l.b16 %v448
      %v458 = vunpack.c.l.b16 %v449
      %v459 = vunpack.c.l.b16 %v450
      %v460 = vunpack.c.l.b16 %v451
      %v461 = vpack.c.b16 %v458, %v457
      %v462 = vpack.c.b16 %v460, %v459
      %v466 = vsel %vm197, %v452, 0
      %468 = vmatprep.subr.bf16.mxu0 0
      %469 = vmatpush1.bf16.msra.mxu0 %v461
      %470 = vmatprep.subr.bf16.mxu0 0
      %471 = vmatpush1.bf16.msra.mxu0 %v462
      %472 = vmatprep.subr.bf16.mxu0 0
      %473 = vmatpush1.bf16.msra.mxu0 0
      %474 = vmatprep.subr.bf16.mxu0 0
      %475 = vmatpush1.bf16.msra.mxu0 0
      %476 = vmatprep.subr.bf16.mxu0 0
      %477 = vmatpush1.bf16.msra.mxu0 0
      %478 = vmatprep.subr.bf16.mxu0 0
      %479 = vmatpush1.bf16.msra.mxu0 0
      %480 = vmatprep.subr.bf16.mxu0 0
      %481 = vmatpush1.bf16.msra.mxu0 0
      %482 = vmatprep.subr.bf16.mxu0 0
      %483 = vmatpush1.bf16.msra.mxu0 0
      %484 = vmatprep.subr.bf16.mxu0 0
      %485 = vmatpush1.bf16.msra.mxu0 0
      %486 = vmatprep.subr.bf16.mxu0 0
      %487 = vmatpush1.bf16.msra.mxu0 0
      %488 = vmatprep.subr.bf16.mxu0 0
      %489 = vmatpush1.bf16.msra.mxu0 0
      %490 = vmatprep.subr.bf16.mxu0 0
      %491 = vmatpush1.bf16.msra.mxu0 0
      %492 = vmatprep.subr.bf16.mxu0 0
      %493 = vmatpush1.bf16.msra.mxu0 0
      %494 = vmatprep.subr.bf16.mxu0 0
      %495 = vmatpush1.bf16.msra.mxu0 0
      %496 = vmatprep.subr.bf16.mxu0 0
      %497 = vmatpush1.bf16.msra.mxu0 0
      %498 = vmatprep.subr.bf16.mxu0 0
      %499 = vmatpush1.bf16.msra.mxu0 0
      %500 = vmatprep.mubr.bf16.mxu0 0
      %501 = vmatmul.mubr.bf16.gmra.mrb[0].mxu0 %v466
      %v502 = vpop.f32.mrb[0].mxu0
      %v503 = vadd.f32 0.0, %v502
      %v504 = vpop.f32.mrb[0].mxu0
      %v505 = vpop.f32.mrb[0].mxu0
      %v506 = vpop.f32.mrb[0].mxu0
      %507 = vdwg.mxu0
      %v508 = vadd.f32 %v446, %v503
      %s509 = scalar_lea.vmem %s165, 8
      %v510 = vld [vmem:[%s509] sm:$0xf]
      %v511 = vld [vmem:[%s509 + $0x4] sm:$0x1]
      %s512 = scalar_lea.vmem %s1, 80
      %v513 = vld [vmem:[%s512] sm:$0xf]
      %v514 = vld [vmem:[%s512 + $0x4] sm:$0xf]
      %v515 = vld [vmem:[%s512 + $0x8] sm:$0xf]
      %v516 = vld [vmem:[%s512 + $0xc] sm:$0xf]
      %v521 = vunpack.c.l.b16 %v513
      %v522 = vunpack.c.l.b16 %v514
      %v523 = vunpack.c.l.b16 %v515
      %v524 = vunpack.c.l.b16 %v516
      %v525 = vpack.c.b16 %v522, %v521
      %v526 = vpack.c.b16 %v524, %v523
      %v530 = vsel %vm197, %v510, 0
      %532 = vmatprep.subr.bf16.mxu0 0
      %533 = vmatpush1.bf16.msra.mxu0 %v525
      %534 = vmatprep.subr.bf16.mxu0 0
      %535 = vmatpush1.bf16.msra.mxu0 %v526
      %536 = vmatprep.subr.bf16.mxu0 0
      %537 = vmatpush1.bf16.msra.mxu0 0
      %538 = vmatprep.subr.bf16.mxu0 0
      %539 = vmatpush1.bf16.msra.mxu0 0
      %540 = vmatprep.subr.bf16.mxu0 0
      %541 = vmatpush1.bf16.msra.mxu0 0
      %542 = vmatprep.subr.bf16.mxu0 0
      %543 = vmatpush1.bf16.msra.mxu0 0
      %544 = vmatprep.subr.bf16.mxu0 0
      %545 = vmatpush1.bf16.msra.mxu0 0
      %546 = vmatprep.subr.bf16.mxu0 0
      %547 = vmatpush1.bf16.msra.mxu0 0
      %548 = vmatprep.subr.bf16.mxu0 0
      %549 = vmatpush1.bf16.msra.mxu0 0
      %550 = vmatprep.subr.bf16.mxu0 0
      %551 = vmatpush1.bf16.msra.mxu0 0
      %552 = vmatprep.subr.bf16.mxu0 0
      %553 = vmatpush1.bf16.msra.mxu0 0
      %554 = vmatprep.subr.bf16.mxu0 0
      %555 = vmatpush1.bf16.msra.mxu0 0
      %556 = vmatprep.subr.bf16.mxu0 0
      %557 = vmatpush1.bf16.msra.mxu0 0
      %558 = vmatprep.subr.bf16.mxu0 0
      %559 = vmatpush1.bf16.msra.mxu0 0
      %560 = vmatprep.subr.bf16.mxu0 0
      %561 = vmatpush1.bf16.msra.mxu0 0
      %562 = vmatprep.subr.bf16.mxu0 0
      %563 = vmatpush1.bf16.msra.mxu0 0
      %564 = vmatprep.mubr.bf16.mxu0 0
      %565 = vmatmul.mubr.bf16.gmra.mrb[0].mxu0 %v530
      %v566 = vpop.f32.mrb[0].mxu0
      %v567 = vadd.f32 0.0, %v566
      %v568 = vpop.f32.mrb[0].mxu0
      %v569 = vpop.f32.mrb[0].mxu0
      %v570 = vpop.f32.mrb[0].mxu0
      %571 = vdwg.mxu0
      %v572 = vadd.f32 %v508, %v567
      %s573 = scalar_lea.vmem %s1, 96
      %v574 = vld [vmem:[%s573] sm:$0xf]
      %v575 = vld [vmem:[%s573 + $0x4] sm:$0xf]
      %v576 = vld [vmem:[%s573 + $0x8] sm:$0xf]
      %v577 = vld [vmem:[%s573 + $0xc] sm:$0xf]
      %v579 = vunpack.c.l.b16 %v510
      %v580 = vpack.c.b16 %v579, %v579
      %v582 = vshrl.u32 %v580, 16
      %v584 = vshll.u32 %v580, 16
      %v586 = vrot.slane %v584, 1
      %v587 = vor.u32 %v582, %v586
      %v592 = vunpack.c.l.b16 %v574
      %v593 = vunpack.c.l.b16 %v575
      %v594 = vunpack.c.l.b16 %v576
      %v595 = vunpack.c.l.b16 %v577
      %v596 = vpack.c.b16 %v593, %v592
      %v597 = vpack.c.b16 %v595, %v594
      %v601 = vsel %vm197, %v587, 0
      %603 = vmatprep.subr.bf16.mxu0 0
      %604 = vmatpush1.bf16.msra.mxu0 %v596
      %605 = vmatprep.subr.bf16.mxu0 0
      %606 = vmatpush1.bf16.msra.mxu0 %v597
      %607 = vmatprep.subr.bf16.mxu0 0
      %608 = vmatpush1.bf16.msra.mxu0 0
      %609 = vmatprep.subr.bf16.mxu0 0
      %610 = vmatpush1.bf16.msra.mxu0 0
      %611 = vmatprep.subr.bf16.mxu0 0
      %612 = vmatpush1.bf16.msra.mxu0 0
      %613 = vmatprep.subr.bf16.mxu0 0
      %614 = vmatpush1.bf16.msra.mxu0 0
      %615 = vmatprep.subr.bf16.mxu0 0
      %616 = vmatpush1.bf16.msra.mxu0 0
      %617 = vmatprep.subr.bf16.mxu0 0
      %618 = vmatpush1.bf16.msra.mxu0 0
      %619 = vmatprep.subr.bf16.mxu0 0
      %620 = vmatpush1.bf16.msra.mxu0 0
      %621 = vmatprep.subr.bf16.mxu0 0
      %622 = vmatpush1.bf16.msra.mxu0 0
      %623 = vmatprep.subr.bf16.mxu0 0
      %624 = vmatpush1.bf16.msra.mxu0 0
      %625 = vmatprep.subr.bf16.mxu0 0
      %626 = vmatpush1.bf16.msra.mxu0 0
      %627 = vmatprep.subr.bf16.mxu0 0
      %628 = vmatpush1.bf16.msra.mxu0 0
      %629 = vmatprep.subr.bf16.mxu0 0
      %630 = vmatpush1.bf16.msra.mxu0 0
      %631 = vmatprep.subr.bf16.mxu0 0
      %632 = vmatpush1.bf16.msra.mxu0 0
      %633 = vmatprep.subr.bf16.mxu0 0
      %634 = vmatpush1.bf16.msra.mxu0 0
      %635 = vmatprep.mubr.bf16.mxu0 0
      %636 = vmatmul.mubr.bf16.gmra.mrb[0].mxu0 %v601
      %v637 = vpop.f32.mrb[0].mxu0
      %v638 = vadd.f32 0.0, %v637
      %v639 = vpop.f32.mrb[0].mxu0
      %v640 = vpop.f32.mrb[0].mxu0
      %v641 = vpop.f32.mrb[0].mxu0
      %642 = vdwg.mxu0
      %v643 = vadd.f32 %v572, %v638
      %s644 = scalar_lea.vmem %s1, 112
      %v645 = vld [vmem:[%s644] sm:$0xf]
      %v646 = vld [vmem:[%s644 + $0x4] sm:$0xf]
      %v647 = vld [vmem:[%s644 + $0x8] sm:$0xf]
      %v648 = vld [vmem:[%s644 + $0xc] sm:$0xf]
      %v649 = vrot.slane %v580, 1
      %v654 = vunpack.c.l.b16 %v645
      %v655 = vunpack.c.l.b16 %v646
      %v656 = vunpack.c.l.b16 %v647
      %v657 = vunpack.c.l.b16 %v648
      %v658 = vpack.c.b16 %v655, %v654
      %v659 = vpack.c.b16 %v657, %v656
      %v663 = vsel %vm197, %v649, 0
      %665 = vmatprep.subr.bf16.mxu0 0
      %666 = vmatpush1.bf16.msra.mxu0 %v658
      %667 = vmatprep.subr.bf16.mxu0 0
      %668 = vmatpush1.bf16.msra.mxu0 %v659
      %669 = vmatprep.subr.bf16.mxu0 0
      %670 = vmatpush1.bf16.msra.mxu0 0
      %671 = vmatprep.subr.bf16.mxu0 0
      %672 = vmatpush1.bf16.msra.mxu0 0
      %673 = vmatprep.subr.bf16.mxu0 0
      %674 = vmatpush1.bf16.msra.mxu0 0
      %675 = vmatprep.subr.bf16.mxu0 0
      %676 = vmatpush1.bf16.msra.mxu0 0
      %677 = vmatprep.subr.bf16.mxu0 0
      %678 = vmatpush1.bf16.msra.mxu0 0
      %679 = vmatprep.subr.bf16.mxu0 0
      %680 = vmatpush1.bf16.msra.mxu0 0
      %681 = vmatprep.subr.bf16.mxu0 0
      %682 = vmatpush1.bf16.msra.mxu0 0
      %683 = vmatprep.subr.bf16.mxu0 0
      %684 = vmatpush1.bf16.msra.mxu0 0
      %685 = vmatprep.subr.bf16.mxu0 0
      %686 = vmatpush1.bf16.msra.mxu0 0
      %687 = vmatprep.subr.bf16.mxu0 0
      %688 = vmatpush1.bf16.msra.mxu0 0
      %689 = vmatprep.subr.bf16.mxu0 0
      %690 = vmatpush1.bf16.msra.mxu0 0
      %691 = vmatprep.subr.bf16.mxu0 0
      %692 = vmatpush1.bf16.msra.mxu0 0
      %693 = vmatprep.subr.bf16.mxu0 0
      %694 = vmatpush1.bf16.msra.mxu0 0
      %695 = vmatprep.subr.bf16.mxu0 0
      %696 = vmatpush1.bf16.msra.mxu0 0
      %697 = vmatprep.mubr.bf16.mxu0 0
      %698 = vmatmul.mubr.bf16.gmra.mrb[0].mxu0 %v663
      %v699 = vpop.f32.mrb[0].mxu0
      %v700 = vadd.f32 0.0, %v699
      %v701 = vpop.f32.mrb[0].mxu0
      %v702 = vpop.f32.mrb[0].mxu0
      %v703 = vpop.f32.mrb[0].mxu0
      %704 = vdwg.mxu0
      %v705 = vadd.f32 %v643, %v700
      %s706 = scalar_lea.vmem %s1, 128
      %v707 = vld [vmem:[%s706] sm:$0xf]
      %v708 = vld [vmem:[%s706 + $0x4] sm:$0xf]
      %v709 = vld [vmem:[%s706 + $0x8] sm:$0xf]
      %v710 = vld [vmem:[%s706 + $0xc] sm:$0xf]
      %v712 = vunpack.c.l.b16 %v511
      %v713 = vpack.c.b16 %v712, %v579
      %v715 = vshrl.u32 %v713, 16
      %v717 = vrot.slane %v715, 1
      %v718 = vshll.u32 %v713, 16
      %v720 = vrot.slane %v718, 2
      %v721 = vor.u32 %v717, %v720
      %v726 = vunpack.c.l.b16 %v707
      %v727 = vunpack.c.l.b16 %v708
      %v728 = vunpack.c.l.b16 %v709
      %v729 = vunpack.c.l.b16 %v710
      %v730 = vpack.c.b16 %v727, %v726
      %v731 = vpack.c.b16 %v729, %v728
      %v735 = vsel %vm197, %v721, 0
      %737 = vmatprep.subr.bf16.mxu0 0
      %738 = vmatpush1.bf16.msra.mxu0 %v730
      %739 = vmatprep.subr.bf16.mxu0 0
      %740 = vmatpush1.bf16.msra.mxu0 %v731
      %741 = vmatprep.subr.bf16.mxu0 0
      %742 = vmatpush1.bf16.msra.mxu0 0
      %743 = vmatprep.subr.bf16.mxu0 0
      %744 = vmatpush1.bf16.msra.mxu0 0
      %745 = vmatprep.subr.bf16.mxu0 0
      %746 = vmatpush1.bf16.msra.mxu0 0
      %747 = vmatprep.subr.bf16.mxu0 0
      %748 = vmatpush1.bf16.msra.mxu0 0
      %749 = vmatprep.subr.bf16.mxu0 0
      %750 = vmatpush1.bf16.msra.mxu0 0
      %751 = vmatprep.subr.bf16.mxu0 0
      %752 = vmatpush1.bf16.msra.mxu0 0
      %753 = vmatprep.subr.bf16.mxu0 0
      %754 = vmatpush1.bf16.msra.mxu0 0
      %755 = vmatprep.subr.bf16.mxu0 0
      %756 = vmatpush1.bf16.msra.mxu0 0
      %757 = vmatprep.subr.bf16.mxu0 0
      %758 = vmatpush1.bf16.msra.mxu0 0
      %759 = vmatprep.subr.bf16.mxu0 0
      %760 = vmatpush1.bf16.msra.mxu0 0
      %761 = vmatprep.subr.bf16.mxu0 0
      %762 = vmatpush1.bf16.msra.mxu0 0
      %763 = vmatprep.subr.bf16.mxu0 0
      %764 = vmatpush1.bf16.msra.mxu0 0
      %765 = vmatprep.subr.bf16.mxu0 0
      %766 = vmatpush1.bf16.msra.mxu0 0
      %767 = vmatprep.subr.bf16.mxu0 0
      %768 = vmatpush1.bf16.msra.mxu0 0
      %769 = vmatprep.mubr.bf16.mxu0 0
      %770 = vmatmul.mubr.bf16.gmra.mrb[0].mxu0 %v735
      %v771 = vpop.f32.mrb[0].mxu0
      %v772 = vadd.f32 0.0, %v771
      %v773 = vpop.f32.mrb[0].mxu0
      %v774 = vpop.f32.mrb[0].mxu0
      %v775 = vpop.f32.mrb[0].mxu0
      %776 = vdwg.mxu0
      %v777 = vadd.f32 %v705, %v772
      %s778 = scalar_lea.vmem %s1, 144
      %v779 = vld [vmem:[%s778] sm:$0xf]
      %v780 = vld [vmem:[%s778 + $0x4] sm:$0xf]
      %v781 = vld [vmem:[%s778 + $0x8] sm:$0xf]
      %v782 = vld [vmem:[%s778 + $0xc] sm:$0xf]
      %v783 = vrot.slane %v713, 2
      %v788 = vunpack.c.l.b16 %v779
      %v789 = vunpack.c.l.b16 %v780
      %v790 = vunpack.c.l.b16 %v781
      %v791 = vunpack.c.l.b16 %v782
      %v792 = vpack.c.b16 %v789, %v788
      %v793 = vpack.c.b16 %v791, %v790
      %v797 = vsel %vm197, %v783, 0
      %799 = vmatprep.subr.bf16.mxu0 0
      %800 = vmatpush1.bf16.msra.mxu0 %v792
      %801 = vmatprep.subr.bf16.mxu0 0
      %802 = vmatpush1.bf16.msra.mxu0 %v793
      %803 = vmatprep.subr.bf16.mxu0 0
      %804 = vmatpush1.bf16.msra.mxu0 0
      %805 = vmatprep.subr.bf16.mxu0 0
      %806 = vmatpush1.bf16.msra.mxu0 0
      %807 = vmatprep.subr.bf16.mxu0 0
      %808 = vmatpush1.bf16.msra.mxu0 0
      %809 = vmatprep.subr.bf16.mxu0 0
      %810 = vmatpush1.bf16.msra.mxu0 0
      %811 = vmatprep.subr.bf16.mxu0 0
      %812 = vmatpush1.bf16.msra.mxu0 0
      %813 = vmatprep.subr.bf16.mxu0 0
      %814 = vmatpush1.bf16.msra.mxu0 0
      %815 = vmatprep.subr.bf16.mxu0 0
      %816 = vmatpush1.bf16.msra.mxu0 0
      %817 = vmatprep.subr.bf16.mxu0 0
      %818 = vmatpush1.bf16.msra.mxu0 0
      %819 = vmatprep.subr.bf16.mxu0 0
      %820 = vmatpush1.bf16.msra.mxu0 0
      %821 = vmatprep.subr.bf16.mxu0 0
      %822 = vmatpush1.bf16.msra.mxu0 0
      %823 = vmatprep.subr.bf16.mxu0 0
      %824 = vmatpush1.bf16.msra.mxu0 0
      %825 = vmatprep.subr.bf16.mxu0 0
      %826 = vmatpush1.bf16.msra.mxu0 0
      %827 = vmatprep.subr.bf16.mxu0 0
      %828 = vmatpush1.bf16.msra.mxu0 0
      %829 = vmatprep.subr.bf16.mxu0 0
      %830 = vmatpush1.bf16.msra.mxu0 0
      %831 = vmatprep.mubr.bf16.mxu0 0
      %832 = vmatmul.mubr.bf16.gmra.mrb[0].mxu0 %v797
      %v833 = vpop.f32.mrb[0].mxu0
      %v834 = vadd.f32 0.0, %v833
      %v835 = vpop.f32.mrb[0].mxu0
      %v836 = vpop.f32.mrb[0].mxu0
      %v837 = vpop.f32.mrb[0].mxu0
      %838 = vdwg.mxu0
      %v839 = vadd.f32 %v777, %v834
      %s840 = scalar_lea.vmem %s165, 16
      %v841 = vld [vmem:[%s840] sm:$0xf]
      %v842 = vld [vmem:[%s840 + $0x4] sm:$0x1]
      %s843 = scalar_lea.vmem %s1, 160
      %v844 = vld [vmem:[%s843] sm:$0xf]
      %v845 = vld [vmem:[%s843 + $0x4] sm:$0xf]
      %v846 = vld [vmem:[%s843 + $0x8] sm:$0xf]
      %v847 = vld [vmem:[%s843 + $0xc] sm:$0xf]
      %v852 = vunpack.c.l.b16 %v844
      %v853 = vunpack.c.l.b16 %v845
      %v854 = vunpack.c.l.b16 %v846
      %v855 = vunpack.c.l.b16 %v847
      %v856 = vpack.c.b16 %v853, %v852
      %v857 = vpack.c.b16 %v855, %v854
      %v861 = vsel %vm197, %v841, 0
      %863 = vmatprep.subr.bf16.mxu0 0
      %864 = vmatpush1.bf16.msra.mxu0 %v856
      %865 = vmatprep.subr.bf16.mxu0 0
      %866 = vmatpush1.bf16.msra.mxu0 %v857
      %867 = vmatprep.subr.bf16.mxu0 0
      %868 = vmatpush1.bf16.msra.mxu0 0
      %869 = vmatprep.subr.bf16.mxu0 0
      %870 = vmatpush1.bf16.msra.mxu0 0
      %871 = vmatprep.subr.bf16.mxu0 0
      %872 = vmatpush1.bf16.msra.mxu0 0
      %873 = vmatprep.subr.bf16.mxu0 0
      %874 = vmatpush1.bf16.msra.mxu0 0
      %875 = vmatprep.subr.bf16.mxu0 0
      %876 = vmatpush1.bf16.msra.mxu0 0
      %877 = vmatprep.subr.bf16.mxu0 0
      %878 = vmatpush1.bf16.msra.mxu0 0
      %879 = vmatprep.subr.bf16.mxu0 0
      %880 = vmatpush1.bf16.msra.mxu0 0
      %881 = vmatprep.subr.bf16.mxu0 0
      %882 = vmatpush1.bf16.msra.mxu0 0
      %883 = vmatprep.subr.bf16.mxu0 0
      %884 = vmatpush1.bf16.msra.mxu0 0
      %885 = vmatprep.subr.bf16.mxu0 0
      %886 = vmatpush1.bf16.msra.mxu0 0
      %887 = vmatprep.subr.bf16.mxu0 0
      %888 = vmatpush1.bf16.msra.mxu0 0
      %889 = vmatprep.subr.bf16.mxu0 0
      %890 = vmatpush1.bf16.msra.mxu0 0
      %891 = vmatprep.subr.bf16.mxu0 0
      %892 = vmatpush1.bf16.msra.mxu0 0
      %893 = vmatprep.subr.bf16.mxu0 0
      %894 = vmatpush1.bf16.msra.mxu0 0
      %895 = vmatprep.mubr.bf16.mxu0 0
      %896 = vmatmul.mubr.bf16.gmra.mrb[0].mxu0 %v861
      %v897 = vpop.f32.mrb[0].mxu0
      %v898 = vadd.f32 0.0, %v897
      %v899 = vpop.f32.mrb[0].mxu0
      %v900 = vpop.f32.mrb[0].mxu0
      %v901 = vpop.f32.mrb[0].mxu0
      %902 = vdwg.mxu0
      %v903 = vadd.f32 %v839, %v898
      %s904 = scalar_lea.vmem %s1, 176
      %v905 = vld [vmem:[%s904] sm:$0xf]
      %v906 = vld [vmem:[%s904 + $0x4] sm:$0xf]
      %v907 = vld [vmem:[%s904 + $0x8] sm:$0xf]
      %v908 = vld [vmem:[%s904 + $0xc] sm:$0xf]
      %v910 = vunpack.c.l.b16 %v841
      %v911 = vpack.c.b16 %v910, %v910
      %v913 = vshrl.u32 %v911, 16
      %v915 = vshll.u32 %v911, 16
      %v917 = vrot.slane %v915, 1
      %v918 = vor.u32 %v913, %v917
      %v923 = vunpack.c.l.b16 %v905
      %v924 = vunpack.c.l.b16 %v906
      %v925 = vunpack.c.l.b16 %v907
      %v926 = vunpack.c.l.b16 %v908
      %v927 = vpack.c.b16 %v924, %v923
      %v928 = vpack.c.b16 %v926, %v925
      %v932 = vsel %vm197, %v918, 0
      %934 = vmatprep.subr.bf16.mxu0 0
      %935 = vmatpush1.bf16.msra.mxu0 %v927
      %936 = vmatprep.subr.bf16.mxu0 0
      %937 = vmatpush1.bf16.msra.mxu0 %v928
      %938 = vmatprep.subr.bf16.mxu0 0
      %939 = vmatpush1.bf16.msra.mxu0 0
      %940 = vmatprep.subr.bf16.mxu0 0
      %941 = vmatpush1.bf16.msra.mxu0 0
      %942 = vmatprep.subr.bf16.mxu0 0
      %943 = vmatpush1.bf16.msra.mxu0 0
      %944 = vmatprep.subr.bf16.mxu0 0
      %945 = vmatpush1.bf16.msra.mxu0 0
      %946 = vmatprep.subr.bf16.mxu0 0
      %947 = vmatpush1.bf16.msra.mxu0 0
      %948 = vmatprep.subr.bf16.mxu0 0
      %949 = vmatpush1.bf16.msra.mxu0 0
      %950 = vmatprep.subr.bf16.mxu0 0
      %951 = vmatpush1.bf16.msra.mxu0 0
      %952 = vmatprep.subr.bf16.mxu0 0
      %953 = vmatpush1.bf16.msra.mxu0 0
      %954 = vmatprep.subr.bf16.mxu0 0
      %955 = vmatpush1.bf16.msra.mxu0 0
      %956 = vmatprep.subr.bf16.mxu0 0
      %957 = vmatpush1.bf16.msra.mxu0 0
      %958 = vmatprep.subr.bf16.mxu0 0
      %959 = vmatpush1.bf16.msra.mxu0 0
      %960 = vmatprep.subr.bf16.mxu0 0
      %961 = vmatpush1.bf16.msra.mxu0 0
      %962 = vmatprep.subr.bf16.mxu0 0
      %963 = vmatpush1.bf16.msra.mxu0 0
      %964 = vmatprep.subr.bf16.mxu0 0
      %965 = vmatpush1.bf16.msra.mxu0 0
      %966 = vmatprep.mubr.bf16.mxu0 0
      %967 = vmatmul.mubr.bf16.gmra.mrb[0].mxu0 %v932
      %v968 = vpop.f32.mrb[0].mxu0
      %v969 = vadd.f32 0.0, %v968
      %v970 = vpop.f32.mrb[0].mxu0
      %v971 = vpop.f32.mrb[0].mxu0
      %v972 = vpop.f32.mrb[0].mxu0
      %973 = vdwg.mxu0
      %v974 = vadd.f32 %v903, %v969
      %s975 = scalar_lea.vmem %s1, 192
      %v976 = vld [vmem:[%s975] sm:$0xf]
      %v977 = vld [vmem:[%s975 + $0x4] sm:$0xf]
      %v978 = vld [vmem:[%s975 + $0x8] sm:$0xf]
      %v979 = vld [vmem:[%s975 + $0xc] sm:$0xf]
      %v980 = vrot.slane %v911, 1
      %v985 = vunpack.c.l.b16 %v976
      %v986 = vunpack.c.l.b16 %v977
      %v987 = vunpack.c.l.b16 %v978
      %v988 = vunpack.c.l.b16 %v979
      %v989 = vpack.c.b16 %v986, %v985
      %v990 = vpack.c.b16 %v988, %v987
      %v994 = vsel %vm197, %v980, 0
      %996 = vmatprep.subr.bf16.mxu0 0
      %997 = vmatpush1.bf16.msra.mxu0 %v989
      %998 = vmatprep.subr.bf16.mxu0 0
      %999 = vmatpush1.bf16.msra.mxu0 %v990
      %1000 = vmatprep.subr.bf16.mxu0 0
      %1001 = vmatpush1.bf16.msra.mxu0 0
      %1002 = vmatprep.subr.bf16.mxu0 0
      %1003 = vmatpush1.bf16.msra.mxu0 0
      %1004 = vmatprep.subr.bf16.mxu0 0
      %1005 = vmatpush1.bf16.msra.mxu0 0
      %1006 = vmatprep.subr.bf16.mxu0 0
      %1007 = vmatpush1.bf16.msra.mxu0 0
      %1008 = vmatprep.subr.bf16.mxu0 0
      %1009 = vmatpush1.bf16.msra.mxu0 0
      %1010 = vmatprep.subr.bf16.mxu0 0
      %1011 = vmatpush1.bf16.msra.mxu0 0
      %1012 = vmatprep.subr.bf16.mxu0 0
      %1013 = vmatpush1.bf16.msra.mxu0 0
      %1014 = vmatprep.subr.bf16.mxu0 0
      %1015 = vmatpush1.bf16.msra.mxu0 0
      %1016 = vmatprep.subr.bf16.mxu0 0
      %1017 = vmatpush1.bf16.msra.mxu0 0
      %1018 = vmatprep.subr.bf16.mxu0 0
      %1019 = vmatpush1.bf16.msra.mxu0 0
      %1020 = vmatprep.subr.bf16.mxu0 0
      %1021 = vmatpush1.bf16.msra.mxu0 0
      %1022 = vmatprep.subr.bf16.mxu0 0
      %1023 = vmatpush1.bf16.msra.mxu0 0
      %1024 = vmatprep.subr.bf16.mxu0 0
      %1025 = vmatpush1.bf16.msra.mxu0 0
      %1026 = vmatprep.subr.bf16.mxu0 0
      %1027 = vmatpush1.bf16.msra.mxu0 0
      %1028 = vmatprep.mubr.bf16.mxu0 0
      %1029 = vmatmul.mubr.bf16.gmra.mrb[0].mxu0 %v994
      %v1030 = vpop.f32.mrb[0].mxu0
      %v1031 = vadd.f32 0.0, %v1030
      %v1032 = vpop.f32.mrb[0].mxu0
      %v1033 = vpop.f32.mrb[0].mxu0
      %v1034 = vpop.f32.mrb[0].mxu0
      %1035 = vdwg.mxu0
      %v1036 = vadd.f32 %v974, %v1031
      %s1037 = scalar_lea.vmem %s1, 208
      %v1038 = vld [vmem:[%s1037] sm:$0xf]
      %v1039 = vld [vmem:[%s1037 + $0x4] sm:$0xf]
      %v1040 = vld [vmem:[%s1037 + $0x8] sm:$0xf]
      %v1041 = vld [vmem:[%s1037 + $0xc] sm:$0xf]
      %v1043 = vunpack.c.l.b16 %v842
      %v1044 = vpack.c.b16 %v1043, %v910
      %v1046 = vshrl.u32 %v1044, 16
      %v1048 = vrot.slane %v1046, 1
      %v1049 = vshll.u32 %v1044, 16
      %v1051 = vrot.slane %v1049, 2
      %v1052 = vor.u32 %v1048, %v1051
      %v1057 = vunpack.c.l.b16 %v1038
      %v1058 = vunpack.c.l.b16 %v1039
      %v1059 = vunpack.c.l.b16 %v1040
      %v1060 = vunpack.c.l.b16 %v1041
      %v1061 = vpack.c.b16 %v1058, %v1057
      %v1062 = vpack.c.b16 %v1060, %v1059
      %v1066 = vsel %vm197, %v1052, 0
      %1068 = vmatprep.subr.bf16.mxu0 0
      %1069 = vmatpush1.bf16.msra.mxu0 %v1061
      %1070 = vmatprep.subr.bf16.mxu0 0
      %1071 = vmatpush1.bf16.msra.mxu0 %v1062
      %1072 = vmatprep.subr.bf16.mxu0 0
      %1073 = vmatpush1.bf16.msra.mxu0 0
      %1074 = vmatprep.subr.bf16.mxu0 0
      %1075 = vmatpush1.bf16.msra.mxu0 0
      %1076 = vmatprep.subr.bf16.mxu0 0
      %1077 = vmatpush1.bf16.msra.mxu0 0
      %1078 = vmatprep.subr.bf16.mxu0 0
      %1079 = vmatpush1.bf16.msra.mxu0 0
      %1080 = vmatprep.subr.bf16.mxu0 0
      %1081 = vmatpush1.bf16.msra.mxu0 0
      %1082 = vmatprep.subr.bf16.mxu0 0
      %1083 = vmatpush1.bf16.msra.mxu0 0
      %1084 = vmatprep.subr.bf16.mxu0 0
      %1085 = vmatpush1.bf16.msra.mxu0 0
      %1086 = vmatprep.subr.bf16.mxu0 0
      %1087 = vmatpush1.bf16.msra.mxu0 0
      %1088 = vmatprep.subr.bf16.mxu0 0
      %1089 = vmatpush1.bf16.msra.mxu0 0
      %1090 = vmatprep.subr.bf16.mxu0 0
      %1091 = vmatpush1.bf16.msra.mxu0 0
      %1092 = vmatprep.subr.bf16.mxu0 0
      %1093 = vmatpush1.bf16.msra.mxu0 0
      %1094 = vmatprep.subr.bf16.mxu0 0
      %1095 = vmatpush1.bf16.msra.mxu0 0
      %1096 = vmatprep.subr.bf16.mxu0 0
      %1097 = vmatpush1.bf16.msra.mxu0 0
      %1098 = vmatprep.subr.bf16.mxu0 0
      %1099 = vmatpush1.bf16.msra.mxu0 0
      %1100 = vmatprep.mubr.bf16.mxu0 0
      %1101 = vmatmul.mubr.bf16.gmra.mrb[0].mxu0 %v1066
      %v1102 = vpop.f32.mrb[0].mxu0
      %v1103 = vadd.f32 0.0, %v1102
      %v1104 = vpop.f32.mrb[0].mxu0
      %v1105 = vpop.f32.mrb[0].mxu0
      %v1106 = vpop.f32.mrb[0].mxu0
      %1107 = vdwg.mxu0
      %v1108 = vadd.f32 %v1036, %v1103
      %s1109 = scalar_lea.vmem %s1, 224
      %v1110 = vld [vmem:[%s1109] sm:$0xf]
      %v1111 = vld [vmem:[%s1109 + $0x4] sm:$0xf]
      %v1112 = vld [vmem:[%s1109 + $0x8] sm:$0xf]
      %v1113 = vld [vmem:[%s1109 + $0xc] sm:$0xf]
      %v1114 = vrot.slane %v1044, 2
      %v1119 = vunpack.c.l.b16 %v1110
      %v1120 = vunpack.c.l.b16 %v1111
      %v1121 = vunpack.c.l.b16 %v1112
      %v1122 = vunpack.c.l.b16 %v1113
      %v1123 = vpack.c.b16 %v1120, %v1119
      %v1124 = vpack.c.b16 %v1122, %v1121
      %v1128 = vsel %vm197, %v1114, 0
      %1130 = vmatprep.subr.bf16.mxu0 0
      %1131 = vmatpush1.bf16.msra.mxu0 %v1123
      %1132 = vmatprep.subr.bf16.mxu0 0
      %1133 = vmatpush1.bf16.msra.mxu0 %v1124
      %1134 = vmatprep.subr.bf16.mxu0 0
      %1135 = vmatpush1.bf16.msra.mxu0 0
      %1136 = vmatprep.subr.bf16.mxu0 0
      %1137 = vmatpush1.bf16.msra.mxu0 0
      %1138 = vmatprep.subr.bf16.mxu0 0
      %1139 = vmatpush1.bf16.msra.mxu0 0
      %1140 = vmatprep.subr.bf16.mxu0 0
      %1141 = vmatpush1.bf16.msra.mxu0 0
      %1142 = vmatprep.subr.bf16.mxu0 0
      %1143 = vmatpush1.bf16.msra.mxu0 0
      %1144 = vmatprep.subr.bf16.mxu0 0
      %1145 = vmatpush1.bf16.msra.mxu0 0
      %1146 = vmatprep.subr.bf16.mxu0 0
      %1147 = vmatpush1.bf16.msra.mxu0 0
      %1148 = vmatprep.subr.bf16.mxu0 0
      %1149 = vmatpush1.bf16.msra.mxu0 0
      %1150 = vmatprep.subr.bf16.mxu0 0
      %1151 = vmatpush1.bf16.msra.mxu0 0
      %1152 = vmatprep.subr.bf16.mxu0 0
      %1153 = vmatpush1.bf16.msra.mxu0 0
      %1154 = vmatprep.subr.bf16.mxu0 0
      %1155 = vmatpush1.bf16.msra.mxu0 0
      %1156 = vmatprep.subr.bf16.mxu0 0
      %1157 = vmatpush1.bf16.msra.mxu0 0
      %1158 = vmatprep.subr.bf16.mxu0 0
      %1159 = vmatpush1.bf16.msra.mxu0 0
      %1160 = vmatprep.subr.bf16.mxu0 0
      %1161 = vmatpush1.bf16.msra.mxu0 0
      %1162 = vmatprep.mubr.bf16.mxu0 0
      %1163 = vmatmul.mubr.bf16.gmra.mrb[0].mxu0 %v1128
      %v1164 = vpop.f32.mrb[0].mxu0
      %v1165 = vadd.f32 0.0, %v1164
      %v1166 = vpop.f32.mrb[0].mxu0
      %v1167 = vpop.f32.mrb[0].mxu0
      %v1168 = vpop.f32.mrb[0].mxu0
      %1169 = vdwg.mxu0
      %v1170 = vadd.f32 %v1108, %v1165
      %s1171 = scalar_lea.vmem %s165, 24
      %v1172 = vld [vmem:[%s1171] sm:$0xf]
      %v1173 = vld [vmem:[%s1171 + $0x4] sm:$0x1]
      %s1174 = scalar_lea.vmem %s1, 240
      %v1175 = vld [vmem:[%s1174] sm:$0xf]
      %v1176 = vld [vmem:[%s1174 + $0x4] sm:$0xf]
      %v1177 = vld [vmem:[%s1174 + $0x8] sm:$0xf]
      %v1178 = vld [vmem:[%s1174 + $0xc] sm:$0xf]
      %v1183 = vunpack.c.l.b16 %v1175
      %v1184 = vunpack.c.l.b16 %v1176
      %v1185 = vunpack.c.l.b16 %v1177
      %v1186 = vunpack.c.l.b16 %v1178
      %v1187 = vpack.c.b16 %v1184, %v1183
      %v1188 = vpack.c.b16 %v1186, %v1185
      %v1192 = vsel %vm197, %v1172, 0
      %1194 = vmatprep.subr.bf16.mxu0 0
      %1195 = vmatpush1.bf16.msra.mxu0 %v1187
      %1196 = vmatprep.subr.bf16.mxu0 0
      %1197 = vmatpush1.bf16.msra.mxu0 %v1188
      %1198 = vmatprep.subr.bf16.mxu0 0
      %1199 = vmatpush1.bf16.msra.mxu0 0
      %1200 = vmatprep.subr.bf16.mxu0 0
      %1201 = vmatpush1.bf16.msra.mxu0 0
      %1202 = vmatprep.subr.bf16.mxu0 0
      %1203 = vmatpush1.bf16.msra.mxu0 0
      %1204 = vmatprep.subr.bf16.mxu0 0
      %1205 = vmatpush1.bf16.msra.mxu0 0
      %1206 = vmatprep.subr.bf16.mxu0 0
      %1207 = vmatpush1.bf16.msra.mxu0 0
      %1208 = vmatprep.subr.bf16.mxu0 0
      %1209 = vmatpush1.bf16.msra.mxu0 0
      %1210 = vmatprep.subr.bf16.mxu0 0
      %1211 = vmatpush1.bf16.msra.mxu0 0
      %1212 = vmatprep.subr.bf16.mxu0 0
      %1213 = vmatpush1.bf16.msra.mxu0 0
      %1214 = vmatprep.subr.bf16.mxu0 0
      %1215 = vmatpush1.bf16.msra.mxu0 0
      %1216 = vmatprep.subr.bf16.mxu0 0
      %1217 = vmatpush1.bf16.msra.mxu0 0
      %1218 = vmatprep.subr.bf16.mxu0 0
      %1219 = vmatpush1.bf16.msra.mxu0 0
      %1220 = vmatprep.subr.bf16.mxu0 0
      %1221 = vmatpush1.bf16.msra.mxu0 0
      %1222 = vmatprep.subr.bf16.mxu0 0
      %1223 = vmatpush1.bf16.msra.mxu0 0
      %1224 = vmatprep.subr.bf16.mxu0 0
      %1225 = vmatpush1.bf16.msra.mxu0 0
      %1226 = vmatprep.mubr.bf16.mxu0 0
      %1227 = vmatmul.mubr.bf16.gmra.mrb[0].mxu0 %v1192
      %v1228 = vpop.f32.mrb[0].mxu0
      %v1229 = vadd.f32 0.0, %v1228
      %v1230 = vpop.f32.mrb[0].mxu0
      %v1231 = vpop.f32.mrb[0].mxu0
      %v1232 = vpop.f32.mrb[0].mxu0
      %1233 = vdwg.mxu0
      %v1234 = vadd.f32 %v1170, %v1229
      %s1235 = scalar_lea.vmem %s1, 256
      %v1236 = vld [vmem:[%s1235] sm:$0xf]
      %v1237 = vld [vmem:[%s1235 + $0x4] sm:$0xf]
      %v1238 = vld [vmem:[%s1235 + $0x8] sm:$0xf]
      %v1239 = vld [vmem:[%s1235 + $0xc] sm:$0xf]
      %v1241 = vunpack.c.l.b16 %v1172
      %v1242 = vpack.c.b16 %v1241, %v1241
      %v1244 = vshrl.u32 %v1242, 16
      %v1246 = vshll.u32 %v1242, 16
      %v1248 = vrot.slane %v1246, 1
      %v1249 = vor.u32 %v1244, %v1248
      %v1254 = vunpack.c.l.b16 %v1236
      %v1255 = vunpack.c.l.b16 %v1237
      %v1256 = vunpack.c.l.b16 %v1238
      %v1257 = vunpack.c.l.b16 %v1239
      %v1258 = vpack.c.b16 %v1255, %v1254
      %v1259 = vpack.c.b16 %v1257, %v1256
      %v1263 = vsel %vm197, %v1249, 0
      %1265 = vmatprep.subr.bf16.mxu0 0
      %1266 = vmatpush1.bf16.msra.mxu0 %v1258
      %1267 = vmatprep.subr.bf16.mxu0 0
      %1268 = vmatpush1.bf16.msra.mxu0 %v1259
      %1269 = vmatprep.subr.bf16.mxu0 0
      %1270 = vmatpush1.bf16.msra.mxu0 0
      %1271 = vmatprep.subr.bf16.mxu0 0
      %1272 = vmatpush1.bf16.msra.mxu0 0
      %1273 = vmatprep.subr.bf16.mxu0 0
      %1274 = vmatpush1.bf16.msra.mxu0 0
      %1275 = vmatprep.subr.bf16.mxu0 0
      %1276 = vmatpush1.bf16.msra.mxu0 0
      %1277 = vmatprep.subr.bf16.mxu0 0
      %1278 = vmatpush1.bf16.msra.mxu0 0
      %1279 = vmatprep.subr.bf16.mxu0 0
      %1280 = vmatpush1.bf16.msra.mxu0 0
      %1281 = vmatprep.subr.bf16.mxu0 0
      %1282 = vmatpush1.bf16.msra.mxu0 0
      %1283 = vmatprep.subr.bf16.mxu0 0
      %1284 = vmatpush1.bf16.msra.mxu0 0
      %1285 = vmatprep.subr.bf16.mxu0 0
      %1286 = vmatpush1.bf16.msra.mxu0 0
      %1287 = vmatprep.subr.bf16.mxu0 0
      %1288 = vmatpush1.bf16.msra.mxu0 0
      %1289 = vmatprep.subr.bf16.mxu0 0
      %1290 = vmatpush1.bf16.msra.mxu0 0
      %1291 = vmatprep.subr.bf16.mxu0 0
      %1292 = vmatpush1.bf16.msra.mxu0 0
      %1293 = vmatprep.subr.bf16.mxu0 0
      %1294 = vmatpush1.bf16.msra.mxu0 0
      %1295 = vmatprep.subr.bf16.mxu0 0
      %1296 = vmatpush1.bf16.msra.mxu0 0
      %1297 = vmatprep.mubr.bf16.mxu0 0
      %1298 = vmatmul.mubr.bf16.gmra.mrb[0].mxu0 %v1263
      %v1299 = vpop.f32.mrb[0].mxu0
      %v1300 = vadd.f32 0.0, %v1299
      %v1301 = vpop.f32.mrb[0].mxu0
      %v1302 = vpop.f32.mrb[0].mxu0
      %v1303 = vpop.f32.mrb[0].mxu0
      %1304 = vdwg.mxu0
      %v1305 = vadd.f32 %v1234, %v1300
      %s1306 = scalar_lea.vmem %s1, 272
      %v1307 = vld [vmem:[%s1306] sm:$0xf]
      %v1308 = vld [vmem:[%s1306 + $0x4] sm:$0xf]
      %v1309 = vld [vmem:[%s1306 + $0x8] sm:$0xf]
      %v1310 = vld [vmem:[%s1306 + $0xc] sm:$0xf]
      %v1311 = vrot.slane %v1242, 1
      %v1316 = vunpack.c.l.b16 %v1307
      %v1317 = vunpack.c.l.b16 %v1308
      %v1318 = vunpack.c.l.b16 %v1309
      %v1319 = vunpack.c.l.b16 %v1310
      %v1320 = vpack.c.b16 %v1317, %v1316
      %v1321 = vpack.c.b16 %v1319, %v1318
      %v1325 = vsel %vm197, %v1311, 0
      %1327 = vmatprep.subr.bf16.mxu0 0
      %1328 = vmatpush1.bf16.msra.mxu0 %v1320
      %1329 = vmatprep.subr.bf16.mxu0 0
      %1330 = vmatpush1.bf16.msra.mxu0 %v1321
      %1331 = vmatprep.subr.bf16.mxu0 0
      %1332 = vmatpush1.bf16.msra.mxu0 0
      %1333 = vmatprep.subr.bf16.mxu0 0
      %1334 = vmatpush1.bf16.msra.mxu0 0
      %1335 = vmatprep.subr.bf16.mxu0 0
      %1336 = vmatpush1.bf16.msra.mxu0 0
      %1337 = vmatprep.subr.bf16.mxu0 0
      %1338 = vmatpush1.bf16.msra.mxu0 0
      %1339 = vmatprep.subr.bf16.mxu0 0
      %1340 = vmatpush1.bf16.msra.mxu0 0
      %1341 = vmatprep.subr.bf16.mxu0 0
      %1342 = vmatpush1.bf16.msra.mxu0 0
      %1343 = vmatprep.subr.bf16.mxu0 0
      %1344 = vmatpush1.bf16.msra.mxu0 0
      %1345 = vmatprep.subr.bf16.mxu0 0
      %1346 = vmatpush1.bf16.msra.mxu0 0
      %1347 = vmatprep.subr.bf16.mxu0 0
      %1348 = vmatpush1.bf16.msra.mxu0 0
      %1349 = vmatprep.subr.bf16.mxu0 0
      %1350 = vmatpush1.bf16.msra.mxu0 0
      %1351 = vmatprep.subr.bf16.mxu0 0
      %1352 = vmatpush1.bf16.msra.mxu0 0
      %1353 = vmatprep.subr.bf16.mxu0 0
      %1354 = vmatpush1.bf16.msra.mxu0 0
      %1355 = vmatprep.subr.bf16.mxu0 0
      %1356 = vmatpush1.bf16.msra.mxu0 0
      %1357 = vmatprep.subr.bf16.mxu0 0
      %1358 = vmatpush1.bf16.msra.mxu0 0
      %1359 = vmatprep.mubr.bf16.mxu0 0
      %1360 = vmatmul.mubr.bf16.gmra.mrb[0].mxu0 %v1325
      %v1361 = vpop.f32.mrb[0].mxu0
      %v1362 = vadd.f32 0.0, %v1361
      %v1363 = vpop.f32.mrb[0].mxu0
      %v1364 = vpop.f32.mrb[0].mxu0
      %v1365 = vpop.f32.mrb[0].mxu0
      %1366 = vdwg.mxu0
      %v1367 = vadd.f32 %v1305, %v1362
      %s1368 = scalar_lea.vmem %s1, 288
      %v1369 = vld [vmem:[%s1368] sm:$0xf]
      %v1370 = vld [vmem:[%s1368 + $0x4] sm:$0xf]
      %v1371 = vld [vmem:[%s1368 + $0x8] sm:$0xf]
      %v1372 = vld [vmem:[%s1368 + $0xc] sm:$0xf]
      %v1374 = vunpack.c.l.b16 %v1173
      %v1375 = vpack.c.b16 %v1374, %v1241
      %v1377 = vshrl.u32 %v1375, 16
      %v1379 = vrot.slane %v1377, 1
      %v1380 = vshll.u32 %v1375, 16
      %v1382 = vrot.slane %v1380, 2
      %v1383 = vor.u32 %v1379, %v1382
      %v1388 = vunpack.c.l.b16 %v1369
      %v1389 = vunpack.c.l.b16 %v1370
      %v1390 = vunpack.c.l.b16 %v1371
      %v1391 = vunpack.c.l.b16 %v1372
      %v1392 = vpack.c.b16 %v1389, %v1388
      %v1393 = vpack.c.b16 %v1391, %v1390
      %v1397 = vsel %vm197, %v1383, 0
      %1399 = vmatprep.subr.bf16.mxu0 0
      %1400 = vmatpush1.bf16.msra.mxu0 %v1392
      %1401 = vmatprep.subr.bf16.mxu0 0
      %1402 = vmatpush1.bf16.msra.mxu0 %v1393
      %1403 = vmatprep.subr.bf16.mxu0 0
      %1404 = vmatpush1.bf16.msra.mxu0 0
      %1405 = vmatprep.subr.bf16.mxu0 0
      %1406 = vmatpush1.bf16.msra.mxu0 0
      %1407 = vmatprep.subr.bf16.mxu0 0
      %1408 = vmatpush1.bf16.msra.mxu0 0
      %1409 = vmatprep.subr.bf16.mxu0 0
      %1410 = vmatpush1.bf16.msra.mxu0 0
      %1411 = vmatprep.subr.bf16.mxu0 0
      %1412 = vmatpush1.bf16.msra.mxu0 0
      %1413 = vmatprep.subr.bf16.mxu0 0
      %1414 = vmatpush1.bf16.msra.mxu0 0
      %1415 = vmatprep.subr.bf16.mxu0 0
      %1416 = vmatpush1.bf16.msra.mxu0 0
      %1417 = vmatprep.subr.bf16.mxu0 0
      %1418 = vmatpush1.bf16.msra.mxu0 0
      %1419 = vmatprep.subr.bf16.mxu0 0
      %1420 = vmatpush1.bf16.msra.mxu0 0
      %1421 = vmatprep.subr.bf16.mxu0 0
      %1422 = vmatpush1.bf16.msra.mxu0 0
      %1423 = vmatprep.subr.bf16.mxu0 0
      %1424 = vmatpush1.bf16.msra.mxu0 0
      %1425 = vmatprep.subr.bf16.mxu0 0
      %1426 = vmatpush1.bf16.msra.mxu0 0
      %1427 = vmatprep.subr.bf16.mxu0 0
      %1428 = vmatpush1.bf16.msra.mxu0 0
      %1429 = vmatprep.subr.bf16.mxu0 0
      %1430 = vmatpush1.bf16.msra.mxu0 0
      %1431 = vmatprep.mubr.bf16.mxu0 0
      %1432 = vmatmul.mubr.bf16.gmra.mrb[0].mxu0 %v1397
      %v1433 = vpop.f32.mrb[0].mxu0
      %v1434 = vadd.f32 0.0, %v1433
      %v1435 = vpop.f32.mrb[0].mxu0
      %v1436 = vpop.f32.mrb[0].mxu0
      %v1437 = vpop.f32.mrb[0].mxu0
      %1438 = vdwg.mxu0
      %v1439 = vadd.f32 %v1367, %v1434
      %s1440 = scalar_lea.vmem %s1, 304
      %v1441 = vld [vmem:[%s1440] sm:$0xf]
      %v1442 = vld [vmem:[%s1440 + $0x4] sm:$0xf]
      %v1443 = vld [vmem:[%s1440 + $0x8] sm:$0xf]
      %v1444 = vld [vmem:[%s1440 + $0xc] sm:$0xf]
      %v1445 = vrot.slane %v1375, 2
      %v1450 = vunpack.c.l.b16 %v1441
      %v1451 = vunpack.c.l.b16 %v1442
      %v1452 = vunpack.c.l.b16 %v1443
      %v1453 = vunpack.c.l.b16 %v1444
      %v1454 = vpack.c.b16 %v1451, %v1450
      %v1455 = vpack.c.b16 %v1453, %v1452
      %v1459 = vsel %vm197, %v1445, 0
      %1461 = vmatprep.subr.bf16.mxu0 0
      %1462 = vmatpush1.bf16.msra.mxu0 %v1454
      %1463 = vmatprep.subr.bf16.mxu0 0
      %1464 = vmatpush1.bf16.msra.mxu0 %v1455
      %1465 = vmatprep.subr.bf16.mxu0 0
      %1466 = vmatpush1.bf16.msra.mxu0 0
      %1467 = vmatprep.subr.bf16.mxu0 0
      %1468 = vmatpush1.bf16.msra.mxu0 0
      %1469 = vmatprep.subr.bf16.mxu0 0
      %1470 = vmatpush1.bf16.msra.mxu0 0
      %1471 = vmatprep.subr.bf16.mxu0 0
      %1472 = vmatpush1.bf16.msra.mxu0 0
      %1473 = vmatprep.subr.bf16.mxu0 0
      %1474 = vmatpush1.bf16.msra.mxu0 0
      %1475 = vmatprep.subr.bf16.mxu0 0
      %1476 = vmatpush1.bf16.msra.mxu0 0
      %1477 = vmatprep.subr.bf16.mxu0 0
      %1478 = vmatpush1.bf16.msra.mxu0 0
      %1479 = vmatprep.subr.bf16.mxu0 0
      %1480 = vmatpush1.bf16.msra.mxu0 0
      %1481 = vmatprep.subr.bf16.mxu0 0
      %1482 = vmatpush1.bf16.msra.mxu0 0
      %1483 = vmatprep.subr.bf16.mxu0 0
      %1484 = vmatpush1.bf16.msra.mxu0 0
      %1485 = vmatprep.subr.bf16.mxu0 0
      %1486 = vmatpush1.bf16.msra.mxu0 0
      %1487 = vmatprep.subr.bf16.mxu0 0
      %1488 = vmatpush1.bf16.msra.mxu0 0
      %1489 = vmatprep.subr.bf16.mxu0 0
      %1490 = vmatpush1.bf16.msra.mxu0 0
      %1491 = vmatprep.subr.bf16.mxu0 0
      %1492 = vmatpush1.bf16.msra.mxu0 0
      %1493 = vmatprep.mubr.bf16.mxu0 0
      %1494 = vmatmul.mubr.bf16.gmra.mrb[0].mxu0 %v1459
      %v1495 = vpop.f32.mrb[0].mxu0
      %v1496 = vadd.f32 0.0, %v1495
      %v1497 = vpop.f32.mrb[0].mxu0
      %v1498 = vpop.f32.mrb[0].mxu0
      %v1499 = vpop.f32.mrb[0].mxu0
      %1500 = vdwg.mxu0
      %v1501 = vadd.f32 %v1439, %v1496
      %s1502 = scalar_lea.vmem %s165, 32
      %v1503 = vld [vmem:[%s1502] sm:$0xf]
      %v1504 = vld [vmem:[%s1502 + $0x4] sm:$0x1]
      %s1505 = scalar_lea.vmem %s1, 320
      %v1506 = vld [vmem:[%s1505] sm:$0xf]
      %v1507 = vld [vmem:[%s1505 + $0x4] sm:$0xf]
      %v1508 = vld [vmem:[%s1505 + $0x8] sm:$0xf]
      %v1509 = vld [vmem:[%s1505 + $0xc] sm:$0xf]
      %v1514 = vunpack.c.l.b16 %v1506
      %v1515 = vunpack.c.l.b16 %v1507
      %v1516 = vunpack.c.l.b16 %v1508
      %v1517 = vunpack.c.l.b16 %v1509
      %v1518 = vpack.c.b16 %v1515, %v1514
      %v1519 = vpack.c.b16 %v1517, %v1516
      %v1523 = vsel %vm197, %v1503, 0
      %1525 = vmatprep.subr.bf16.mxu0 0
      %1526 = vmatpush1.bf16.msra.mxu0 %v1518
      %1527 = vmatprep.subr.bf16.mxu0 0
      %1528 = vmatpush1.bf16.msra.mxu0 %v1519
      %1529 = vmatprep.subr.bf16.mxu0 0
      %1530 = vmatpush1.bf16.msra.mxu0 0
      %1531 = vmatprep.subr.bf16.mxu0 0
      %1532 = vmatpush1.bf16.msra.mxu0 0
      %1533 = vmatprep.subr.bf16.mxu0 0
      %1534 = vmatpush1.bf16.msra.mxu0 0
      %1535 = vmatprep.subr.bf16.mxu0 0
      %1536 = vmatpush1.bf16.msra.mxu0 0
      %1537 = vmatprep.subr.bf16.mxu0 0
      %1538 = vmatpush1.bf16.msra.mxu0 0
      %1539 = vmatprep.subr.bf16.mxu0 0
      %1540 = vmatpush1.bf16.msra.mxu0 0
      %1541 = vmatprep.subr.bf16.mxu0 0
      %1542 = vmatpush1.bf16.msra.mxu0 0
      %1543 = vmatprep.subr.bf16.mxu0 0
      %1544 = vmatpush1.bf16.msra.mxu0 0
      %1545 = vmatprep.subr.bf16.mxu0 0
      %1546 = vmatpush1.bf16.msra.mxu0 0
      %1547 = vmatprep.subr.bf16.mxu0 0
      %1548 = vmatpush1.bf16.msra.mxu0 0
      %1549 = vmatprep.subr.bf16.mxu0 0
      %1550 = vmatpush1.bf16.msra.mxu0 0
      %1551 = vmatprep.subr.bf16.mxu0 0
      %1552 = vmatpush1.bf16.msra.mxu0 0
      %1553 = vmatprep.subr.bf16.mxu0 0
      %1554 = vmatpush1.bf16.msra.mxu0 0
      %1555 = vmatprep.subr.bf16.mxu0 0
      %1556 = vmatpush1.bf16.msra.mxu0 0
      %1557 = vmatprep.mubr.bf16.mxu0 0
      %1558 = vmatmul.mubr.bf16.gmra.mrb[0].mxu0 %v1523
      %v1559 = vpop.f32.mrb[0].mxu0
      %v1560 = vadd.f32 0.0, %v1559
      %v1561 = vpop.f32.mrb[0].mxu0
      %v1562 = vpop.f32.mrb[0].mxu0
      %v1563 = vpop.f32.mrb[0].mxu0
      %1564 = vdwg.mxu0
      %v1565 = vadd.f32 %v1501, %v1560
      %s1566 = scalar_lea.vmem %s1, 336
      %v1567 = vld [vmem:[%s1566] sm:$0xf]
      %v1568 = vld [vmem:[%s1566 + $0x4] sm:$0xf]
      %v1569 = vld [vmem:[%s1566 + $0x8] sm:$0xf]
      %v1570 = vld [vmem:[%s1566 + $0xc] sm:$0xf]
      %v1572 = vunpack.c.l.b16 %v1503
      %v1573 = vpack.c.b16 %v1572, %v1572
      %v1575 = vshrl.u32 %v1573, 16
      %v1577 = vshll.u32 %v1573, 16
      %v1579 = vrot.slane %v1577, 1
      %v1580 = vor.u32 %v1575, %v1579
      %v1585 = vunpack.c.l.b16 %v1567
      %v1586 = vunpack.c.l.b16 %v1568
      %v1587 = vunpack.c.l.b16 %v1569
      %v1588 = vunpack.c.l.b16 %v1570
      %v1589 = vpack.c.b16 %v1586, %v1585
      %v1590 = vpack.c.b16 %v1588, %v1587
      %v1594 = vsel %vm197, %v1580, 0
      %1596 = vmatprep.subr.bf16.mxu0 0
      %1597 = vmatpush1.bf16.msra.mxu0 %v1589
      %1598 = vmatprep.subr.bf16.mxu0 0
      %1599 = vmatpush1.bf16.msra.mxu0 %v1590
      %1600 = vmatprep.subr.bf16.mxu0 0
      %1601 = vmatpush1.bf16.msra.mxu0 0
      %1602 = vmatprep.subr.bf16.mxu0 0
      %1603 = vmatpush1.bf16.msra.mxu0 0
      %1604 = vmatprep.subr.bf16.mxu0 0
      %1605 = vmatpush1.bf16.msra.mxu0 0
      %1606 = vmatprep.subr.bf16.mxu0 0
      %1607 = vmatpush1.bf16.msra.mxu0 0
      %1608 = vmatprep.subr.bf16.mxu0 0
      %1609 = vmatpush1.bf16.msra.mxu0 0
      %1610 = vmatprep.subr.bf16.mxu0 0
      %1611 = vmatpush1.bf16.msra.mxu0 0
      %1612 = vmatprep.subr.bf16.mxu0 0
      %1613 = vmatpush1.bf16.msra.mxu0 0
      %1614 = vmatprep.subr.bf16.mxu0 0
      %1615 = vmatpush1.bf16.msra.mxu0 0
      %1616 = vmatprep.subr.bf16.mxu0 0
      %1617 = vmatpush1.bf16.msra.mxu0 0
      %1618 = vmatprep.subr.bf16.mxu0 0
      %1619 = vmatpush1.bf16.msra.mxu0 0
      %1620 = vmatprep.subr.bf16.mxu0 0
      %1621 = vmatpush1.bf16.msra.mxu0 0
      %1622 = vmatprep.subr.bf16.mxu0 0
      %1623 = vmatpush1.bf16.msra.mxu0 0
      %1624 = vmatprep.subr.bf16.mxu0 0
      %1625 = vmatpush1.bf16.msra.mxu0 0
      %1626 = vmatprep.subr.bf16.mxu0 0
      %1627 = vmatpush1.bf16.msra.mxu0 0
      %1628 = vmatprep.mubr.bf16.mxu0 0
      %1629 = vmatmul.mubr.bf16.gmra.mrb[0].mxu0 %v1594
      %v1630 = vpop.f32.mrb[0].mxu0
      %v1631 = vadd.f32 0.0, %v1630
      %v1632 = vpop.f32.mrb[0].mxu0
      %v1633 = vpop.f32.mrb[0].mxu0
      %v1634 = vpop.f32.mrb[0].mxu0
      %1635 = vdwg.mxu0
      %v1636 = vadd.f32 %v1565, %v1631
      %s1637 = scalar_lea.vmem %s1, 352
      %v1638 = vld [vmem:[%s1637] sm:$0xf]
      %v1639 = vld [vmem:[%s1637 + $0x4] sm:$0xf]
      %v1640 = vld [vmem:[%s1637 + $0x8] sm:$0xf]
      %v1641 = vld [vmem:[%s1637 + $0xc] sm:$0xf]
      %v1642 = vrot.slane %v1573, 1
      %v1647 = vunpack.c.l.b16 %v1638
      %v1648 = vunpack.c.l.b16 %v1639
      %v1649 = vunpack.c.l.b16 %v1640
      %v1650 = vunpack.c.l.b16 %v1641
      %v1651 = vpack.c.b16 %v1648, %v1647
      %v1652 = vpack.c.b16 %v1650, %v1649
      %v1656 = vsel %vm197, %v1642, 0
      %1658 = vmatprep.subr.bf16.mxu0 0
      %1659 = vmatpush1.bf16.msra.mxu0 %v1651
      %1660 = vmatprep.subr.bf16.mxu0 0
      %1661 = vmatpush1.bf16.msra.mxu0 %v1652
      %1662 = vmatprep.subr.bf16.mxu0 0
      %1663 = vmatpush1.bf16.msra.mxu0 0
      %1664 = vmatprep.subr.bf16.mxu0 0
      %1665 = vmatpush1.bf16.msra.mxu0 0
      %1666 = vmatprep.subr.bf16.mxu0 0
      %1667 = vmatpush1.bf16.msra.mxu0 0
      %1668 = vmatprep.subr.bf16.mxu0 0
      %1669 = vmatpush1.bf16.msra.mxu0 0
      %1670 = vmatprep.subr.bf16.mxu0 0
      %1671 = vmatpush1.bf16.msra.mxu0 0
      %1672 = vmatprep.subr.bf16.mxu0 0
      %1673 = vmatpush1.bf16.msra.mxu0 0
      %1674 = vmatprep.subr.bf16.mxu0 0
      %1675 = vmatpush1.bf16.msra.mxu0 0
      %1676 = vmatprep.subr.bf16.mxu0 0
      %1677 = vmatpush1.bf16.msra.mxu0 0
      %1678 = vmatprep.subr.bf16.mxu0 0
      %1679 = vmatpush1.bf16.msra.mxu0 0
      %1680 = vmatprep.subr.bf16.mxu0 0
      %1681 = vmatpush1.bf16.msra.mxu0 0
      %1682 = vmatprep.subr.bf16.mxu0 0
      %1683 = vmatpush1.bf16.msra.mxu0 0
      %1684 = vmatprep.subr.bf16.mxu0 0
      %1685 = vmatpush1.bf16.msra.mxu0 0
      %1686 = vmatprep.subr.bf16.mxu0 0
      %1687 = vmatpush1.bf16.msra.mxu0 0
      %1688 = vmatprep.subr.bf16.mxu0 0
      %1689 = vmatpush1.bf16.msra.mxu0 0
      %1690 = vmatprep.mubr.bf16.mxu0 0
      %1691 = vmatmul.mubr.bf16.gmra.mrb[0].mxu0 %v1656
      %v1692 = vpop.f32.mrb[0].mxu0
      %v1693 = vadd.f32 0.0, %v1692
      %v1694 = vpop.f32.mrb[0].mxu0
      %v1695 = vpop.f32.mrb[0].mxu0
      %v1696 = vpop.f32.mrb[0].mxu0
      %1697 = vdwg.mxu0
      %v1698 = vadd.f32 %v1636, %v1693
      %s1699 = scalar_lea.vmem %s1, 368
      %v1700 = vld [vmem:[%s1699] sm:$0xf]
      %v1701 = vld [vmem:[%s1699 + $0x4] sm:$0xf]
      %v1702 = vld [vmem:[%s1699 + $0x8] sm:$0xf]
      %v1703 = vld [vmem:[%s1699 + $0xc] sm:$0xf]
      %v1705 = vunpack.c.l.b16 %v1504
      %v1706 = vpack.c.b16 %v1705, %v1572
      %v1708 = vshrl.u32 %v1706, 16
      %v1710 = vrot.slane %v1708, 1
      %v1711 = vshll.u32 %v1706, 16
      %v1713 = vrot.slane %v1711, 2
      %v1714 = vor.u32 %v1710, %v1713
      %v1719 = vunpack.c.l.b16 %v1700
      %v1720 = vunpack.c.l.b16 %v1701
      %v1721 = vunpack.c.l.b16 %v1702
      %v1722 = vunpack.c.l.b16 %v1703
      %v1723 = vpack.c.b16 %v1720, %v1719
      %v1724 = vpack.c.b16 %v1722, %v1721
      %v1728 = vsel %vm197, %v1714, 0
      %1730 = vmatprep.subr.bf16.mxu0 0
      %1731 = vmatpush1.bf16.msra.mxu0 %v1723
      %1732 = vmatprep.subr.bf16.mxu0 0
      %1733 = vmatpush1.bf16.msra.mxu0 %v1724
      %1734 = vmatprep.subr.bf16.mxu0 0
      %1735 = vmatpush1.bf16.msra.mxu0 0
      %1736 = vmatprep.subr.bf16.mxu0 0
      %1737 = vmatpush1.bf16.msra.mxu0 0
      %1738 = vmatprep.subr.bf16.mxu0 0
      %1739 = vmatpush1.bf16.msra.mxu0 0
      %1740 = vmatprep.subr.bf16.mxu0 0
      %1741 = vmatpush1.bf16.msra.mxu0 0
      %1742 = vmatprep.subr.bf16.mxu0 0
      %1743 = vmatpush1.bf16.msra.mxu0 0
      %1744 = vmatprep.subr.bf16.mxu0 0
      %1745 = vmatpush1.bf16.msra.mxu0 0
      %1746 = vmatprep.subr.bf16.mxu0 0
      %1747 = vmatpush1.bf16.msra.mxu0 0
      %1748 = vmatprep.subr.bf16.mxu0 0
      %1749 = vmatpush1.bf16.msra.mxu0 0
      %1750 = vmatprep.subr.bf16.mxu0 0
      %1751 = vmatpush1.bf16.msra.mxu0 0
      %1752 = vmatprep.subr.bf16.mxu0 0
      %1753 = vmatpush1.bf16.msra.mxu0 0
      %1754 = vmatprep.subr.bf16.mxu0 0
      %1755 = vmatpush1.bf16.msra.mxu0 0
      %1756 = vmatprep.subr.bf16.mxu0 0
      %1757 = vmatpush1.bf16.msra.mxu0 0
      %1758 = vmatprep.subr.bf16.mxu0 0
      %1759 = vmatpush1.bf16.msra.mxu0 0
      %1760 = vmatprep.subr.bf16.mxu0 0
      %1761 = vmatpush1.bf16.msra.mxu0 0
      %1762 = vmatprep.mubr.bf16.mxu0 0
      %1763 = vmatmul.mubr.bf16.gmra.mrb[0].mxu0 %v1728
      %v1764 = vpop.f32.mrb[0].mxu0
      %v1765 = vadd.f32 0.0, %v1764
      %v1766 = vpop.f32.mrb[0].mxu0
      %v1767 = vpop.f32.mrb[0].mxu0
      %v1768 = vpop.f32.mrb[0].mxu0
      %1769 = vdwg.mxu0
      %v1770 = vadd.f32 %v1698, %v1765
      %s1771 = scalar_lea.vmem %s1, 384
      %v1772 = vld [vmem:[%s1771] sm:$0xf]
      %v1773 = vld [vmem:[%s1771 + $0x4] sm:$0xf]
      %v1774 = vld [vmem:[%s1771 + $0x8] sm:$0xf]
      %v1775 = vld [vmem:[%s1771 + $0xc] sm:$0xf]
      %v1776 = vrot.slane %v1706, 2
      %v1781 = vunpack.c.l.b16 %v1772
      %v1782 = vunpack.c.l.b16 %v1773
      %v1783 = vunpack.c.l.b16 %v1774
      %v1784 = vunpack.c.l.b16 %v1775
      %v1785 = vpack.c.b16 %v1782, %v1781
      %v1786 = vpack.c.b16 %v1784, %v1783
      %v1790 = vsel %vm197, %v1776, 0
      %1792 = vmatprep.subr.bf16.mxu0 0
      %1793 = vmatpush1.bf16.msra.mxu0 %v1785
      %1794 = vmatprep.subr.bf16.mxu0 0
      %1795 = vmatpush1.bf16.msra.mxu0 %v1786
      %1796 = vmatprep.subr.bf16.mxu0 0
      %1797 = vmatpush1.bf16.msra.mxu0 0
      %1798 = vmatprep.subr.bf16.mxu0 0
      %1799 = vmatpush1.bf16.msra.mxu0 0
      %1800 = vmatprep.subr.bf16.mxu0 0
      %1801 = vmatpush1.bf16.msra.mxu0 0
      %1802 = vmatprep.subr.bf16.mxu0 0
      %1803 = vmatpush1.bf16.msra.mxu0 0
      %1804 = vmatprep.subr.bf16.mxu0 0
      %1805 = vmatpush1.bf16.msra.mxu0 0
      %1806 = vmatprep.subr.bf16.mxu0 0
      %1807 = vmatpush1.bf16.msra.mxu0 0
      %1808 = vmatprep.subr.bf16.mxu0 0
      %1809 = vmatpush1.bf16.msra.mxu0 0
      %1810 = vmatprep.subr.bf16.mxu0 0
      %1811 = vmatpush1.bf16.msra.mxu0 0
      %1812 = vmatprep.subr.bf16.mxu0 0
      %1813 = vmatpush1.bf16.msra.mxu0 0
      %1814 = vmatprep.subr.bf16.mxu0 0
      %1815 = vmatpush1.bf16.msra.mxu0 0
      %1816 = vmatprep.subr.bf16.mxu0 0
      %1817 = vmatpush1.bf16.msra.mxu0 0
      %1818 = vmatprep.subr.bf16.mxu0 0
      %1819 = vmatpush1.bf16.msra.mxu0 0
      %1820 = vmatprep.subr.bf16.mxu0 0
      %1821 = vmatpush1.bf16.msra.mxu0 0
      %1822 = vmatprep.subr.bf16.mxu0 0
      %1823 = vmatpush1.bf16.msra.mxu0 0
      %1824 = vmatprep.mubr.bf16.mxu0 0
      %1825 = vmatmul.mubr.bf16.gmra.mrb[0].mxu0 %v1790
      %v1826 = vpop.f32.mrb[0].mxu0
      %v1827 = vadd.f32 0.0, %v1826
      %v1828 = vpop.f32.mrb[0].mxu0
      %v1829 = vpop.f32.mrb[0].mxu0
      %v1830 = vpop.f32.mrb[0].mxu0
      %1831 = vdwg.mxu0
      %v1832 = vadd.f32 %v1770, %v1827
      %1833 = vst [vmem:[%s170] sm:$0x3f] %v1832
      %v1834 = vld [vmem:[%s509] sm:$0xf]
      %v1835 = vld [vmem:[%s509 + $0x4] sm:$0x1]
      %v1836 = vld [vmem:[%s1] sm:$0xf]
      %v1837 = vld [vmem:[%s1 + $0x4] sm:$0xf]
      %v1838 = vld [vmem:[%s1 + $0x8] sm:$0xf]
      %v1839 = vld [vmem:[%s1 + $0xc] sm:$0xf]
      %v1844 = vunpack.c.l.b16 %v1836
      %v1845 = vunpack.c.l.b16 %v1837
      %v1846 = vunpack.c.l.b16 %v1838
      %v1847 = vunpack.c.l.b16 %v1839
      %v1848 = vpack.c.b16 %v1845, %v1844
      %v1849 = vpack.c.b16 %v1847, %v1846
      %v1853 = vsel %vm197, %v1834, 0
      %1855 = vmatprep.subr.bf16.mxu0 0
      %1856 = vmatpush1.bf16.msra.mxu0 %v1848
      %1857 = vmatprep.subr.bf16.mxu0 0
      %1858 = vmatpush1.bf16.msra.mxu0 %v1849
      %1859 = vmatprep.subr.bf16.mxu0 0
      %1860 = vmatpush1.bf16.msra.mxu0 0
      %1861 = vmatprep.subr.bf16.mxu0 0
      %1862 = vmatpush1.bf16.msra.mxu0 0
      %1863 = vmatprep.subr.bf16.mxu0 0
      %1864 = vmatpush1.bf16.msra.mxu0 0
      %1865 = vmatprep.subr.bf16.mxu0 0
      %1866 = vmatpush1.bf16.msra.mxu0 0
      %1867 = vmatprep.subr.bf16.mxu0 0
      %1868 = vmatpush1.bf16.msra.mxu0 0
      %1869 = vmatprep.subr.bf16.mxu0 0
      %1870 = vmatpush1.bf16.msra.mxu0 0
      %1871 = vmatprep.subr.bf16.mxu0 0
      %1872 = vmatpush1.bf16.msra.mxu0 0
      %1873 = vmatprep.subr.bf16.mxu0 0
      %1874 = vmatpush1.bf16.msra.mxu0 0
      %1875 = vmatprep.subr.bf16.mxu0 0
      %1876 = vmatpush1.bf16.msra.mxu0 0
      %1877 = vmatprep.subr.bf16.mxu0 0
      %1878 = vmatpush1.bf16.msra.mxu0 0
      %1879 = vmatprep.subr.bf16.mxu0 0
      %1880 = vmatpush1.bf16.msra.mxu0 0
      %1881 = vmatprep.subr.bf16.mxu0 0
      %1882 = vmatpush1.bf16.msra.mxu0 0
      %1883 = vmatprep.subr.bf16.mxu0 0
      %1884 = vmatpush1.bf16.msra.mxu0 0
      %1885 = vmatprep.subr.bf16.mxu0 0
      %1886 = vmatpush1.bf16.msra.mxu0 0
      %1887 = vmatprep.mubr.bf16.mxu0 0
      %1888 = vmatmul.mubr.bf16.gmra.mrb[0].mxu0 %v1853
      %v1889 = vpop.f32.mrb[0].mxu0
      %v1890 = vadd.f32 0.0, %v1889
      %v1891 = vpop.f32.mrb[0].mxu0
      %v1892 = vpop.f32.mrb[0].mxu0
      %v1893 = vpop.f32.mrb[0].mxu0
      %1894 = vdwg.mxu0
      %v1895 = vadd.f32 %v177, %v1890
      %v1896 = vld [vmem:[%s242] sm:$0xf]
      %v1897 = vld [vmem:[%s242 + $0x4] sm:$0xf]
      %v1898 = vld [vmem:[%s242 + $0x8] sm:$0xf]
      %v1899 = vld [vmem:[%s242 + $0xc] sm:$0xf]
      %v1901 = vunpack.c.l.b16 %v1834
      %v1902 = vpack.c.b16 %v1901, %v1901
      %v1904 = vshrl.u32 %v1902, 16
      %v1906 = vshll.u32 %v1902, 16
      %v1908 = vrot.slane %v1906, 1
      %v1909 = vor.u32 %v1904, %v1908
      %v1914 = vunpack.c.l.b16 %v1896
      %v1915 = vunpack.c.l.b16 %v1897
      %v1916 = vunpack.c.l.b16 %v1898
      %v1917 = vunpack.c.l.b16 %v1899
      %v1918 = vpack.c.b16 %v1915, %v1914
      %v1919 = vpack.c.b16 %v1917, %v1916
      %v1923 = vsel %vm197, %v1909, 0
      %1925 = vmatprep.subr.bf16.mxu0 0
      %1926 = vmatpush1.bf16.msra.mxu0 %v1918
      %1927 = vmatprep.subr.bf16.mxu0 0
      %1928 = vmatpush1.bf16.msra.mxu0 %v1919
      %1929 = vmatprep.subr.bf16.mxu0 0
      %1930 = vmatpush1.bf16.msra.mxu0 0
      %1931 = vmatprep.subr.bf16.mxu0 0
      %1932 = vmatpush1.bf16.msra.mxu0 0
      %1933 = vmatprep.subr.bf16.mxu0 0
      %1934 = vmatpush1.bf16.msra.mxu0 0
      %1935 = vmatprep.subr.bf16.mxu0 0
      %1936 = vmatpush1.bf16.msra.mxu0 0
      %1937 = vmatprep.subr.bf16.mxu0 0
      %1938 = vmatpush1.bf16.msra.mxu0 0
      %1939 = vmatprep.subr.bf16.mxu0 0
      %1940 = vmatpush1.bf16.msra.mxu0 0
      %1941 = vmatprep.subr.bf16.mxu0 0
      %1942 = vmatpush1.bf16.msra.mxu0 0
      %1943 = vmatprep.subr.bf16.mxu0 0
      %1944 = vmatpush1.bf16.msra.mxu0 0
      %1945 = vmatprep.subr.bf16.mxu0 0
      %1946 = vmatpush1.bf16.msra.mxu0 0
      %1947 = vmatprep.subr.bf16.mxu0 0
      %1948 = vmatpush1.bf16.msra.mxu0 0
      %1949 = vmatprep.subr.bf16.mxu0 0
      %1950 = vmatpush1.bf16.msra.mxu0 0
      %1951 = vmatprep.subr.bf16.mxu0 0
      %1952 = vmatpush1.bf16.msra.mxu0 0
      %1953 = vmatprep.subr.bf16.mxu0 0
      %1954 = vmatpush1.bf16.msra.mxu0 0
      %1955 = vmatprep.subr.bf16.mxu0 0
      %1956 = vmatpush1.bf16.msra.mxu0 0
      %1957 = vmatprep.mubr.bf16.mxu0 0
      %1958 = vmatmul.mubr.bf16.gmra.mrb[0].mxu0 %v1923
      %v1959 = vpop.f32.mrb[0].mxu0
      %v1960 = vadd.f32 0.0, %v1959
      %v1961 = vpop.f32.mrb[0].mxu0
      %v1962 = vpop.f32.mrb[0].mxu0
      %v1963 = vpop.f32.mrb[0].mxu0
      %1964 = vdwg.mxu0
      %v1965 = vadd.f32 %v1895, %v1960
      %v1966 = vld [vmem:[%s313] sm:$0xf]
      %v1967 = vld [vmem:[%s313 + $0x4] sm:$0xf]
      %v1968 = vld [vmem:[%s313 + $0x8] sm:$0xf]
      %v1969 = vld [vmem:[%s313 + $0xc] sm:$0xf]
      %v1970 = vrot.slane %v1902, 1
      %v1975 = vunpack.c.l.b16 %v1966
      %v1976 = vunpack.c.l.b16 %v1967
      %v1977 = vunpack.c.l.b16 %v1968
      %v1978 = vunpack.c.l.b16 %v1969
      %v1979 = vpack.c.b16 %v1976, %v1975
      %v1980 = vpack.c.b16 %v1978, %v1977
      %v1984 = vsel %vm197, %v1970, 0
      %1986 = vmatprep.subr.bf16.mxu0 0
      %1987 = vmatpush1.bf16.msra.mxu0 %v1979
      %1988 = vmatprep.subr.bf16.mxu0 0
      %1989 = vmatpush1.bf16.msra.mxu0 %v1980
      %1990 = vmatprep.subr.bf16.mxu0 0
      %1991 = vmatpush1.bf16.msra.mxu0 0
      %1992 = vmatprep.subr.bf16.mxu0 0
      %1993 = vmatpush1.bf16.msra.mxu0 0
      %1994 = vmatprep.subr.bf16.mxu0 0
      %1995 = vmatpush1.bf16.msra.mxu0 0
      %1996 = vmatprep.subr.bf16.mxu0 0
      %1997 = vmatpush1.bf16.msra.mxu0 0
      %1998 = vmatprep.subr.bf16.mxu0 0
      %1999 = vmatpush1.bf16.msra.mxu0 0
      %2000 = vmatprep.subr.bf16.mxu0 0
      %2001 = vmatpush1.bf16.msra.mxu0 0
      %2002 = vmatprep.subr.bf16.mxu0 0
      %2003 = vmatpush1.bf16.msra.mxu0 0
      %2004 = vmatprep.subr.bf16.mxu0 0
      %2005 = vmatpush1.bf16.msra.mxu0 0
      %2006 = vmatprep.subr.bf16.mxu0 0
      %2007 = vmatpush1.bf16.msra.mxu0 0
      %2008 = vmatprep.subr.bf16.mxu0 0
      %2009 = vmatpush1.bf16.msra.mxu0 0
      %2010 = vmatprep.subr.bf16.mxu0 0
      %2011 = vmatpush1.bf16.msra.mxu0 0
      %2012 = vmatprep.subr.bf16.mxu0 0
      %2013 = vmatpush1.bf16.msra.mxu0 0
      %2014 = vmatprep.subr.bf16.mxu0 0
      %2015 = vmatpush1.bf16.msra.mxu0 0
      %2016 = vmatprep.subr.bf16.mxu0 0
      %2017 = vmatpush1.bf16.msra.mxu0 0
      %2018 = vmatprep.mubr.bf16.mxu0 0
      %2019 = vmatmul.mubr.bf16.gmra.mrb[0].mxu0 %v1984
      %v2020 = vpop.f32.mrb[0].mxu0
      %v2021 = vadd.f32 0.0, %v2020
      %v2022 = vpop.f32.mrb[0].mxu0
      %v2023 = vpop.f32.mrb[0].mxu0
      %v2024 = vpop.f32.mrb[0].mxu0
      %2025 = vdwg.mxu0
      %v2026 = vadd.f32 %v1965, %v2021
      %v2027 = vld [vmem:[%s375] sm:$0xf]
      %v2028 = vld [vmem:[%s375 + $0x4] sm:$0xf]
      %v2029 = vld [vmem:[%s375 + $0x8] sm:$0xf]
      %v2030 = vld [vmem:[%s375 + $0xc] sm:$0xf]
      %v2032 = vunpack.c.l.b16 %v1835
      %v2033 = vpack.c.b16 %v2032, %v1901
      %v2035 = vshrl.u32 %v2033, 16
      %v2037 = vrot.slane %v2035, 1
      %v2038 = vshll.u32 %v2033, 16
      %v2040 = vrot.slane %v2038, 2
      %v2041 = vor.u32 %v2037, %v2040
      %v2046 = vunpack.c.l.b16 %v2027
      %v2047 = vunpack.c.l.b16 %v2028
      %v2048 = vunpack.c.l.b16 %v2029
      %v2049 = vunpack.c.l.b16 %v2030
      %v2050 = vpack.c.b16 %v2047, %v2046
      %v2051 = vpack.c.b16 %v2049, %v2048
      %v2055 = vsel %vm197, %v2041, 0
      %2057 = vmatprep.subr.bf16.mxu0 0
      %2058 = vmatpush1.bf16.msra.mxu0 %v2050
      %2059 = vmatprep.subr.bf16.mxu0 0
      %2060 = vmatpush1.bf16.msra.mxu0 %v2051
      %2061 = vmatprep.subr.bf16.mxu0 0
      %2062 = vmatpush1.bf16.msra.mxu0 0
      %2063 = vmatprep.subr.bf16.mxu0 0
      %2064 = vmatpush1.bf16.msra.mxu0 0
      %2065 = vmatprep.subr.bf16.mxu0 0
      %2066 = vmatpush1.bf16.msra.mxu0 0
      %2067 = vmatprep.subr.bf16.mxu0 0
      %2068 = vmatpush1.bf16.msra.mxu0 0
      %2069 = vmatprep.subr.bf16.mxu0 0
      %2070 = vmatpush1.bf16.msra.mxu0 0
      %2071 = vmatprep.subr.bf16.mxu0 0
      %2072 = vmatpush1.bf16.msra.mxu0 0
      %2073 = vmatprep.subr.bf16.mxu0 0
      %2074 = vmatpush1.bf16.msra.mxu0 0
      %2075 = vmatprep.subr.bf16.mxu0 0
      %2076 = vmatpush1.bf16.msra.mxu0 0
      %2077 = vmatprep.subr.bf16.mxu0 0
      %2078 = vmatpush1.bf16.msra.mxu0 0
      %2079 = vmatprep.subr.bf16.mxu0 0
      %2080 = vmatpush1.bf16.msra.mxu0 0
      %2081 = vmatprep.subr.bf16.mxu0 0
      %2082 = vmatpush1.bf16.msra.mxu0 0
      %2083 = vmatprep.subr.bf16.mxu0 0
      %2084 = vmatpush1.bf16.msra.mxu0 0
      %2085 = vmatprep.subr.bf16.mxu0 0
      %2086 = vmatpush1.bf16.msra.mxu0 0
      %2087 = vmatprep.subr.bf16.mxu0 0
      %2088 = vmatpush1.bf16.msra.mxu0 0
      %2089 = vmatprep.mubr.bf16.mxu0 0
      %2090 = vmatmul.mubr.bf16.gmra.mrb[0].mxu0 %v2055
      %v2091 = vpop.f32.mrb[0].mxu0
      %v2092 = vadd.f32 0.0, %v2091
      %v2093 = vpop.f32.mrb[0].mxu0
      %v2094 = vpop.f32.mrb[0].mxu0
      %v2095 = vpop.f32.mrb[0].mxu0
      %2096 = vdwg.mxu0
      %v2097 = vadd.f32 %v2026, %v2092
      %v2098 = vld [vmem:[%s447] sm:$0xf]
      %v2099 = vld [vmem:[%s447 + $0x4] sm:$0xf]
      %v2100 = vld [vmem:[%s447 + $0x8] sm:$0xf]
      %v2101 = vld [vmem:[%s447 + $0xc] sm:$0xf]
      %v2102 = vrot.slane %v2033, 2
      %v2107 = vunpack.c.l.b16 %v2098
      %v2108 = vunpack.c.l.b16 %v2099
      %v2109 = vunpack.c.l.b16 %v2100
      %v2110 = vunpack.c.l.b16 %v2101
      %v2111 = vpack.c.b16 %v2108, %v2107
      %v2112 = vpack.c.b16 %v2110, %v2109
      %v2116 = vsel %vm197, %v2102, 0
      %2118 = vmatprep.subr.bf16.mxu0 0
      %2119 = vmatpush1.bf16.msra.mxu0 %v2111
      %2120 = vmatprep.subr.bf16.mxu0 0
      %2121 = vmatpush1.bf16.msra.mxu0 %v2112
      %2122 = vmatprep.subr.bf16.mxu0 0
      %2123 = vmatpush1.bf16.msra.mxu0 0
      %2124 = vmatprep.subr.bf16.mxu0 0
      %2125 = vmatpush1.bf16.msra.mxu0 0
      %2126 = vmatprep.subr.bf16.mxu0 0
      %2127 = vmatpush1.bf16.msra.mxu0 0
      %2128 = vmatprep.subr.bf16.mxu0 0
      %2129 = vmatpush1.bf16.msra.mxu0 0
      %2130 = vmatprep.subr.bf16.mxu0 0
      %2131 = vmatpush1.bf16.msra.mxu0 0
      %2132 = vmatprep.subr.bf16.mxu0 0
      %2133 = vmatpush1.bf16.msra.mxu0 0
      %2134 = vmatprep.subr.bf16.mxu0 0
      %2135 = vmatpush1.bf16.msra.mxu0 0
      %2136 = vmatprep.subr.bf16.mxu0 0
      %2137 = vmatpush1.bf16.msra.mxu0 0
      %2138 = vmatprep.subr.bf16.mxu0 0
      %2139 = vmatpush1.bf16.msra.mxu0 0
      %2140 = vmatprep.subr.bf16.mxu0 0
      %2141 = vmatpush1.bf16.msra.mxu0 0
      %2142 = vmatprep.subr.bf16.mxu0 0
      %2143 = vmatpush1.bf16.msra.mxu0 0
      %2144 = vmatprep.subr.bf16.mxu0 0
      %2145 = vmatpush1.bf16.msra.mxu0 0
      %2146 = vmatprep.subr.bf16.mxu0 0
      %2147 = vmatpush1.bf16.msra.mxu0 0
      %2148 = vmatprep.subr.bf16.mxu0 0
      %2149 = vmatpush1.bf16.msra.mxu0 0
      %2150 = vmatprep.mubr.bf16.mxu0 0
      %2151 = vmatmul.mubr.bf16.gmra.mrb[0].mxu0 %v2116
      %v2152 = vpop.f32.mrb[0].mxu0
      %v2153 = vadd.f32 0.0, %v2152
      %v2154 = vpop.f32.mrb[0].mxu0
      %v2155 = vpop.f32.mrb[0].mxu0
      %v2156 = vpop.f32.mrb[0].mxu0
      %2157 = vdwg.mxu0
      %v2158 = vadd.f32 %v2097, %v2153
      %v2159 = vld [vmem:[%s840] sm:$0xf]
      %v2160 = vld [vmem:[%s840 + $0x4] sm:$0x1]
      %v2161 = vld [vmem:[%s512] sm:$0xf]
      %v2162 = vld [vmem:[%s512 + $0x4] sm:$0xf]
      %v2163 = vld [vmem:[%s512 + $0x8] sm:$0xf]
      %v2164 = vld [vmem:[%s512 + $0xc] sm:$0xf]
      %v2169 = vunpack.c.l.b16 %v2161
      %v2170 = vunpack.c.l.b16 %v2162
      %v2171 = vunpack.c.l.b16 %v2163
      %v2172 = vunpack.c.l.b16 %v2164
      %v2173 = vpack.c.b16 %v2170, %v2169
      %v2174 = vpack.c.b16 %v2172, %v2171
      %v2178 = vsel %vm197, %v2159, 0
      %2180 = vmatprep.subr.bf16.mxu0 0
      %2181 = vmatpush1.bf16.msra.mxu0 %v2173
      %2182 = vmatprep.subr.bf16.mxu0 0
      %2183 = vmatpush1.bf16.msra.mxu0 %v2174
      %2184 = vmatprep.subr.bf16.mxu0 0
      %2185 = vmatpush1.bf16.msra.mxu0 0
      %2186 = vmatprep.subr.bf16.mxu0 0
      %2187 = vmatpush1.bf16.msra.mxu0 0
      %2188 = vmatprep.subr.bf16.mxu0 0
      %2189 = vmatpush1.bf16.msra.mxu0 0
      %2190 = vmatprep.subr.bf16.mxu0 0
      %2191 = vmatpush1.bf16.msra.mxu0 0
      %2192 = vmatprep.subr.bf16.mxu0 0
      %2193 = vmatpush1.bf16.msra.mxu0 0
      %2194 = vmatprep.subr.bf16.mxu0 0
      %2195 = vmatpush1.bf16.msra.mxu0 0
      %2196 = vmatprep.subr.bf16.mxu0 0
      %2197 = vmatpush1.bf16.msra.mxu0 0
      %2198 = vmatprep.subr.bf16.mxu0 0
      %2199 = vmatpush1.bf16.msra.mxu0 0
      %2200 = vmatprep.subr.bf16.mxu0 0
      %2201 = vmatpush1.bf16.msra.mxu0 0
      %2202 = vmatprep.subr.bf16.mxu0 0
      %2203 = vmatpush1.bf16.msra.mxu0 0
      %2204 = vmatprep.subr.bf16.mxu0 0
      %2205 = vmatpush1.bf16.msra.mxu0 0
      %2206 = vmatprep.subr.bf16.mxu0 0
      %2207 = vmatpush1.bf16.msra.mxu0 0
      %2208 = vmatprep.subr.bf16.mxu0 0
      %2209 = vmatpush1.bf16.msra.mxu0 0
      %2210 = vmatprep.subr.bf16.mxu0 0
      %2211 = vmatpush1.bf16.msra.mxu0 0
      %2212 = vmatprep.mubr.bf16.mxu0 0
      %2213 = vmatmul.mubr.bf16.gmra.mrb[0].mxu0 %v2178
      %v2214 = vpop.f32.mrb[0].mxu0
      %v2215 = vadd.f32 0.0, %v2214
      %v2216 = vpop.f32.mrb[0].mxu0
      %v2217 = vpop.f32.mrb[0].mxu0
      %v2218 = vpop.f32.mrb[0].mxu0
      %2219 = vdwg.mxu0
      %v2220 = vadd.f32 %v2158, %v2215
      %v2221 = vld [vmem:[%s573] sm:$0xf]
      %v2222 = vld [vmem:[%s573 + $0x4] sm:$0xf]
      %v2223 = vld [vmem:[%s573 + $0x8] sm:$0xf]
      %v2224 = vld [vmem:[%s573 + $0xc] sm:$0xf]
      %v2226 = vunpack.c.l.b16 %v2159
      %v2227 = vpack.c.b16 %v2226, %v2226
      %v2229 = vshrl.u32 %v2227, 16
      %v2231 = vshll.u32 %v2227, 16
      %v2233 = vrot.slane %v2231, 1
      %v2234 = vor.u32 %v2229, %v2233
      %v2239 = vunpack.c.l.b16 %v2221
      %v2240 = vunpack.c.l.b16 %v2222
      %v2241 = vunpack.c.l.b16 %v2223
      %v2242 = vunpack.c.l.b16 %v2224
      %v2243 = vpack.c.b16 %v2240, %v2239
      %v2244 = vpack.c.b16 %v2242, %v2241
      %v2248 = vsel %vm197, %v2234, 0
      %2250 = vmatprep.subr.bf16.mxu0 0
      %2251 = vmatpush1.bf16.msra.mxu0 %v2243
      %2252 = vmatprep.subr.bf16.mxu0 0
      %2253 = vmatpush1.bf16.msra.mxu0 %v2244
      %2254 = vmatprep.subr.bf16.mxu0 0
      %2255 = vmatpush1.bf16.msra.mxu0 0
      %2256 = vmatprep.subr.bf16.mxu0 0
      %2257 = vmatpush1.bf16.msra.mxu0 0
      %2258 = vmatprep.subr.bf16.mxu0 0
      %2259 = vmatpush1.bf16.msra.mxu0 0
      %2260 = vmatprep.subr.bf16.mxu0 0
      %2261 = vmatpush1.bf16.msra.mxu0 0
      %2262 = vmatprep.subr.bf16.mxu0 0
      %2263 = vmatpush1.bf16.msra.mxu0 0
      %2264 = vmatprep.subr.bf16.mxu0 0
      %2265 = vmatpush1.bf16.msra.mxu0 0
      %2266 = vmatprep.subr.bf16.mxu0 0
      %2267 = vmatpush1.bf16.msra.mxu0 0
      %2268 = vmatprep.subr.bf16.mxu0 0
      %2269 = vmatpush1.bf16.msra.mxu0 0
      %2270 = vmatprep.subr.bf16.mxu0 0
      %2271 = vmatpush1.bf16.msra.mxu0 0
      %2272 = vmatprep.subr.bf16.mxu0 0
      %2273 = vmatpush1.bf16.msra.mxu0 0
      %2274 = vmatprep.subr.bf16.mxu0 0
      %2275 = vmatpush1.bf16.msra.mxu0 0
      %2276 = vmatprep.subr.bf16.mxu0 0
      %2277 = vmatpush1.bf16.msra.mxu0 0
      %2278 = vmatprep.subr.bf16.mxu0 0
      %2279 = vmatpush1.bf16.msra.mxu0 0
      %2280 = vmatprep.subr.bf16.mxu0 0
      %2281 = vmatpush1.bf16.msra.mxu0 0
      %2282 = vmatprep.mubr.bf16.mxu0 0
      %2283 = vmatmul.mubr.bf16.gmra.mrb[0].mxu0 %v2248
      %v2284 = vpop.f32.mrb[0].mxu0
      %v2285 = vadd.f32 0.0, %v2284
      %v2286 = vpop.f32.mrb[0].mxu0
      %v2287 = vpop.f32.mrb[0].mxu0
      %v2288 = vpop.f32.mrb[0].mxu0
      %2289 = vdwg.mxu0
      %v2290 = vadd.f32 %v2220, %v2285
      %v2291 = vld [vmem:[%s644] sm:$0xf]
      %v2292 = vld [vmem:[%s644 + $0x4] sm:$0xf]
      %v2293 = vld [vmem:[%s644 + $0x8] sm:$0xf]
      %v2294 = vld [vmem:[%s644 + $0xc] sm:$0xf]
      %v2295 = vrot.slane %v2227, 1
      %v2300 = vunpack.c.l.b16 %v2291
      %v2301 = vunpack.c.l.b16 %v2292
      %v2302 = vunpack.c.l.b16 %v2293
      %v2303 = vunpack.c.l.b16 %v2294
      %v2304 = vpack.c.b16 %v2301, %v2300
      %v2305 = vpack.c.b16 %v2303, %v2302
      %v2309 = vsel %vm197, %v2295, 0
      %2311 = vmatprep.subr.bf16.mxu0 0
      %2312 = vmatpush1.bf16.msra.mxu0 %v2304
      %2313 = vmatprep.subr.bf16.mxu0 0
      %2314 = vmatpush1.bf16.msra.mxu0 %v2305
      %2315 = vmatprep.subr.bf16.mxu0 0
      %2316 = vmatpush1.bf16.msra.mxu0 0
      %2317 = vmatprep.subr.bf16.mxu0 0
      %2318 = vmatpush1.bf16.msra.mxu0 0
      %2319 = vmatprep.subr.bf16.mxu0 0
      %2320 = vmatpush1.bf16.msra.mxu0 0
      %2321 = vmatprep.subr.bf16.mxu0 0
      %2322 = vmatpush1.bf16.msra.mxu0 0
      %2323 = vmatprep.subr.bf16.mxu0 0
      %2324 = vmatpush1.bf16.msra.mxu0 0
      %2325 = vmatprep.subr.bf16.mxu0 0
      %2326 = vmatpush1.bf16.msra.mxu0 0
      %2327 = vmatprep.subr.bf16.mxu0 0
      %2328 = vmatpush1.bf16.msra.mxu0 0
      %2329 = vmatprep.subr.bf16.mxu0 0
      %2330 = vmatpush1.bf16.msra.mxu0 0
      %2331 = vmatprep.subr.bf16.mxu0 0
      %2332 = vmatpush1.bf16.msra.mxu0 0
      %2333 = vmatprep.subr.bf16.mxu0 0
      %2334 = vmatpush1.bf16.msra.mxu0 0
      %2335 = vmatprep.subr.bf16.mxu0 0
      %2336 = vmatpush1.bf16.msra.mxu0 0
      %2337 = vmatprep.subr.bf16.mxu0 0
      %2338 = vmatpush1.bf16.msra.mxu0 0
      %2339 = vmatprep.subr.bf16.mxu0 0
      %2340 = vmatpush1.bf16.msra.mxu0 0
      %2341 = vmatprep.subr.bf16.mxu0 0
      %2342 = vmatpush1.bf16.msra.mxu0 0
      %2343 = vmatprep.mubr.bf16.mxu0 0
      %2344 = vmatmul.mubr.bf16.gmra.mrb[0].mxu0 %v2309
      %v2345 = vpop.f32.mrb[0].mxu0
      %v2346 = vadd.f32 0.0, %v2345
      %v2347 = vpop.f32.mrb[0].mxu0
      %v2348 = vpop.f32.mrb[0].mxu0
      %v2349 = vpop.f32.mrb[0].mxu0
      %2350 = vdwg.mxu0
      %v2351 = vadd.f32 %v2290, %v2346
      %v2352 = vld [vmem:[%s706] sm:$0xf]
      %v2353 = vld [vmem:[%s706 + $0x4] sm:$0xf]
      %v2354 = vld [vmem:[%s706 + $0x8] sm:$0xf]
      %v2355 = vld [vmem:[%s706 + $0xc] sm:$0xf]
      %v2357 = vunpack.c.l.b16 %v2160
      %v2358 = vpack.c.b16 %v2357, %v2226
      %v2360 = vshrl.u32 %v2358, 16
      %v2362 = vrot.slane %v2360, 1
      %v2363 = vshll.u32 %v2358, 16
      %v2365 = vrot.slane %v2363, 2
      %v2366 = vor.u32 %v2362, %v2365
      %v2371 = vunpack.c.l.b16 %v2352
      %v2372 = vunpack.c.l.b16 %v2353
      %v2373 = vunpack.c.l.b16 %v2354
      %v2374 = vunpack.c.l.b16 %v2355
      %v2375 = vpack.c.b16 %v2372, %v2371
      %v2376 = vpack.c.b16 %v2374, %v2373
      %v2380 = vsel %vm197, %v2366, 0
      %2382 = vmatprep.subr.bf16.mxu0 0
      %2383 = vmatpush1.bf16.msra.mxu0 %v2375
      %2384 = vmatprep.subr.bf16.mxu0 0
      %2385 = vmatpush1.bf16.msra.mxu0 %v2376
      %2386 = vmatprep.subr.bf16.mxu0 0
      %2387 = vmatpush1.bf16.msra.mxu0 0
      %2388 = vmatprep.subr.bf16.mxu0 0
      %2389 = vmatpush1.bf16.msra.mxu0 0
      %2390 = vmatprep.subr.bf16.mxu0 0
      %2391 = vmatpush1.bf16.msra.mxu0 0
      %2392 = vmatprep.subr.bf16.mxu0 0
      %2393 = vmatpush1.bf16.msra.mxu0 0
      %2394 = vmatprep.subr.bf16.mxu0 0
      %2395 = vmatpush1.bf16.msra.mxu0 0
      %2396 = vmatprep.subr.bf16.mxu0 0
      %2397 = vmatpush1.bf16.msra.mxu0 0
      %2398 = vmatprep.subr.bf16.mxu0 0
      %2399 = vmatpush1.bf16.msra.mxu0 0
      %2400 = vmatprep.subr.bf16.mxu0 0
      %2401 = vmatpush1.bf16.msra.mxu0 0
      %2402 = vmatprep.subr.bf16.mxu0 0
      %2403 = vmatpush1.bf16.msra.mxu0 0
      %2404 = vmatprep.subr.bf16.mxu0 0
      %2405 = vmatpush1.bf16.msra.mxu0 0
      %2406 = vmatprep.subr.bf16.mxu0 0
      %2407 = vmatpush1.bf16.msra.mxu0 0
      %2408 = vmatprep.subr.bf16.mxu0 0
      %2409 = vmatpush1.bf16.msra.mxu0 0
      %2410 = vmatprep.subr.bf16.mxu0 0
      %2411 = vmatpush1.bf16.msra.mxu0 0
      %2412 = vmatprep.subr.bf16.mxu0 0
      %2413 = vmatpush1.bf16.msra.mxu0 0
      %2414 = vmatprep.mubr.bf16.mxu0 0
      %2415 = vmatmul.mubr.bf16.gmra.mrb[0].mxu0 %v2380
      %v2416 = vpop.f32.mrb[0].mxu0
      %v2417 = vadd.f32 0.0, %v2416
      %v2418 = vpop.f32.mrb[0].mxu0
      %v2419 = vpop.f32.mrb[0].mxu0
      %v2420 = vpop.f32.mrb[0].mxu0
      %2421 = vdwg.mxu0
      %v2422 = vadd.f32 %v2351, %v2417
      %v2423 = vld [vmem:[%s778] sm:$0xf]
      %v2424 = vld [vmem:[%s778 + $0x4] sm:$0xf]
      %v2425 = vld [vmem:[%s778 + $0x8] sm:$0xf]
      %v2426 = vld [vmem:[%s778 + $0xc] sm:$0xf]
      %v2427 = vrot.slane %v2358, 2
      %v2432 = vunpack.c.l.b16 %v2423
      %v2433 = vunpack.c.l.b16 %v2424
      %v2434 = vunpack.c.l.b16 %v2425
      %v2435 = vunpack.c.l.b16 %v2426
      %v2436 = vpack.c.b16 %v2433, %v2432
      %v2437 = vpack.c.b16 %v2435, %v2434
      %v2441 = vsel %vm197, %v2427, 0
      %2443 = vmatprep.subr.bf16.mxu0 0
      %2444 = vmatpush1.bf16.msra.mxu0 %v2436
      %2445 = vmatprep.subr.bf16.mxu0 0
      %2446 = vmatpush1.bf16.msra.mxu0 %v2437
      %2447 = vmatprep.subr.bf16.mxu0 0
      %2448 = vmatpush1.bf16.msra.mxu0 0
      %2449 = vmatprep.subr.bf16.mxu0 0
      %2450 = vmatpush1.bf16.msra.mxu0 0
      %2451 = vmatprep.subr.bf16.mxu0 0
      %2452 = vmatpush1.bf16.msra.mxu0 0
      %2453 = vmatprep.subr.bf16.mxu0 0
      %2454 = vmatpush1.bf16.msra.mxu0 0
      %2455 = vmatprep.subr.bf16.mxu0 0
      %2456 = vmatpush1.bf16.msra.mxu0 0
      %2457 = vmatprep.subr.bf16.mxu0 0
      %2458 = vmatpush1.bf16.msra.mxu0 0
      %2459 = vmatprep.subr.bf16.mxu0 0
      %2460 = vmatpush1.bf16.msra.mxu0 0
      %2461 = vmatprep.subr.bf16.mxu0 0
      %2462 = vmatpush1.bf16.msra.mxu0 0
      %2463 = vmatprep.subr.bf16.mxu0 0
      %2464 = vmatpush1.bf16.msra.mxu0 0
      %2465 = vmatprep.subr.bf16.mxu0 0
      %2466 = vmatpush1.bf16.msra.mxu0 0
      %2467 = vmatprep.subr.bf16.mxu0 0
      %2468 = vmatpush1.bf16.msra.mxu0 0
      %2469 = vmatprep.subr.bf16.mxu0 0
      %2470 = vmatpush1.bf16.msra.mxu0 0
      %2471 = vmatprep.subr.bf16.mxu0 0
      %2472 = vmatpush1.bf16.msra.mxu0 0
      %2473 = vmatprep.subr.bf16.mxu0 0
      %2474 = vmatpush1.bf16.msra.mxu0 0
      %2475 = vmatprep.mubr.bf16.mxu0 0
      %2476 = vmatmul.mubr.bf16.gmra.mrb[0].mxu0 %v2441
      %v2477 = vpop.f32.mrb[0].mxu0
      %v2478 = vadd.f32 0.0, %v2477
      %v2479 = vpop.f32.mrb[0].mxu0
      %v2480 = vpop.f32.mrb[0].mxu0
      %v2481 = vpop.f32.mrb[0].mxu0
      %2482 = vdwg.mxu0
      %v2483 = vadd.f32 %v2422, %v2478
      %v2484 = vld [vmem:[%s1171] sm:$0xf]
      %v2485 = vld [vmem:[%s1171 + $0x4] sm:$0x1]
      %v2486 = vld [vmem:[%s843] sm:$0xf]
      %v2487 = vld [vmem:[%s843 + $0x4] sm:$0xf]
      %v2488 = vld [vmem:[%s843 + $0x8] sm:$0xf]
      %v2489 = vld [vmem:[%s843 + $0xc] sm:$0xf]
      %v2494 = vunpack.c.l.b16 %v2486
      %v2495 = vunpack.c.l.b16 %v2487
      %v2496 = vunpack.c.l.b16 %v2488
      %v2497 = vunpack.c.l.b16 %v2489
      %v2498 = vpack.c.b16 %v2495, %v2494
      %v2499 = vpack.c.b16 %v2497, %v2496
      %v2503 = vsel %vm197, %v2484, 0
      %2505 = vmatprep.subr.bf16.mxu0 0
      %2506 = vmatpush1.bf16.msra.mxu0 %v2498
      %2507 = vmatprep.subr.bf16.mxu0 0
      %2508 = vmatpush1.bf16.msra.mxu0 %v2499
      %2509 = vmatprep.subr.bf16.mxu0 0
      %2510 = vmatpush1.bf16.msra.mxu0 0
      %2511 = vmatprep.subr.bf16.mxu0 0
      %2512 = vmatpush1.bf16.msra.mxu0 0
      %2513 = vmatprep.subr.bf16.mxu0 0
      %2514 = vmatpush1.bf16.msra.mxu0 0
      %2515 = vmatprep.subr.bf16.mxu0 0
      %2516 = vmatpush1.bf16.msra.mxu0 0
      %2517 = vmatprep.subr.bf16.mxu0 0
      %2518 = vmatpush1.bf16.msra.mxu0 0
      %2519 = vmatprep.subr.bf16.mxu0 0
      %2520 = vmatpush1.bf16.msra.mxu0 0
      %2521 = vmatprep.subr.bf16.mxu0 0
      %2522 = vmatpush1.bf16.msra.mxu0 0
      %2523 = vmatprep.subr.bf16.mxu0 0
      %2524 = vmatpush1.bf16.msra.mxu0 0
      %2525 = vmatprep.subr.bf16.mxu0 0
      %2526 = vmatpush1.bf16.msra.mxu0 0
      %2527 = vmatprep.subr.bf16.mxu0 0
      %2528 = vmatpush1.bf16.msra.mxu0 0
      %2529 = vmatprep.subr.bf16.mxu0 0
      %2530 = vmatpush1.bf16.msra.mxu0 0
      %2531 = vmatprep.subr.bf16.mxu0 0
      %2532 = vmatpush1.bf16.msra.mxu0 0
      %2533 = vmatprep.subr.bf16.mxu0 0
      %2534 = vmatpush1.bf16.msra.mxu0 0
      %2535 = vmatprep.subr.bf16.mxu0 0
      %2536 = vmatpush1.bf16.msra.mxu0 0
      %2537 = vmatprep.mubr.bf16.mxu0 0
      %2538 = vmatmul.mubr.bf16.gmra.mrb[0].mxu0 %v2503
      %v2539 = vpop.f32.mrb[0].mxu0
      %v2540 = vadd.f32 0.0, %v2539
      %v2541 = vpop.f32.mrb[0].mxu0
      %v2542 = vpop.f32.mrb[0].mxu0
      %v2543 = vpop.f32.mrb[0].mxu0
      %2544 = vdwg.mxu0
      %v2545 = vadd.f32 %v2483, %v2540
      %v2546 = vld [vmem:[%s904] sm:$0xf]
      %v2547 = vld [vmem:[%s904 + $0x4] sm:$0xf]
      %v2548 = vld [vmem:[%s904 + $0x8] sm:$0xf]
      %v2549 = vld [vmem:[%s904 + $0xc] sm:$0xf]
      %v2551 = vunpack.c.l.b16 %v2484
      %v2552 = vpack.c.b16 %v2551, %v2551
      %v2554 = vshrl.u32 %v2552, 16
      %v2556 = vshll.u32 %v2552, 16
      %v2558 = vrot.slane %v2556, 1
      %v2559 = vor.u32 %v2554, %v2558
      %v2564 = vunpack.c.l.b16 %v2546
      %v2565 = vunpack.c.l.b16 %v2547
      %v2566 = vunpack.c.l.b16 %v2548
      %v2567 = vunpack.c.l.b16 %v2549
      %v2568 = vpack.c.b16 %v2565, %v2564
      %v2569 = vpack.c.b16 %v2567, %v2566
      %v2573 = vsel %vm197, %v2559, 0
      %2575 = vmatprep.subr.bf16.mxu0 0
      %2576 = vmatpush1.bf16.msra.mxu0 %v2568
      %2577 = vmatprep.subr.bf16.mxu0 0
      %2578 = vmatpush1.bf16.msra.mxu0 %v2569
      %2579 = vmatprep.subr.bf16.mxu0 0
      %2580 = vmatpush1.bf16.msra.mxu0 0
      %2581 = vmatprep.subr.bf16.mxu0 0
      %2582 = vmatpush1.bf16.msra.mxu0 0
      %2583 = vmatprep.subr.bf16.mxu0 0
      %2584 = vmatpush1.bf16.msra.mxu0 0
      %2585 = vmatprep.subr.bf16.mxu0 0
      %2586 = vmatpush1.bf16.msra.mxu0 0
      %2587 = vmatprep.subr.bf16.mxu0 0
      %2588 = vmatpush1.bf16.msra.mxu0 0
      %2589 = vmatprep.subr.bf16.mxu0 0
      %2590 = vmatpush1.bf16.msra.mxu0 0
      %2591 = vmatprep.subr.bf16.mxu0 0
      %2592 = vmatpush1.bf16.msra.mxu0 0
      %2593 = vmatprep.subr.bf16.mxu0 0
      %2594 = vmatpush1.bf16.msra.mxu0 0
      %2595 = vmatprep.subr.bf16.mxu0 0
      %2596 = vmatpush1.bf16.msra.mxu0 0
      %2597 = vmatprep.subr.bf16.mxu0 0
      %2598 = vmatpush1.bf16.msra.mxu0 0
      %2599 = vmatprep.subr.bf16.mxu0 0
      %2600 = vmatpush1.bf16.msra.mxu0 0
      %2601 = vmatprep.subr.bf16.mxu0 0
      %2602 = vmatpush1.bf16.msra.mxu0 0
      %2603 = vmatprep.subr.bf16.mxu0 0
      %2604 = vmatpush1.bf16.msra.mxu0 0
      %2605 = vmatprep.subr.bf16.mxu0 0
      %2606 = vmatpush1.bf16.msra.mxu0 0
      %2607 = vmatprep.mubr.bf16.mxu0 0
      %2608 = vmatmul.mubr.bf16.gmra.mrb[0].mxu0 %v2573
      %v2609 = vpop.f32.mrb[0].mxu0
      %v2610 = vadd.f32 0.0, %v2609
      %v2611 = vpop.f32.mrb[0].mxu0
      %v2612 = vpop.f32.mrb[0].mxu0
      %v2613 = vpop.f32.mrb[0].mxu0
      %2614 = vdwg.mxu0
      %v2615 = vadd.f32 %v2545, %v2610
      %v2616 = vld [vmem:[%s975] sm:$0xf]
      %v2617 = vld [vmem:[%s975 + $0x4] sm:$0xf]
      %v2618 = vld [vmem:[%s975 + $0x8] sm:$0xf]
      %v2619 = vld [vmem:[%s975 + $0xc] sm:$0xf]
      %v2620 = vrot.slane %v2552, 1
      %v2625 = vunpack.c.l.b16 %v2616
      %v2626 = vunpack.c.l.b16 %v2617
      %v2627 = vunpack.c.l.b16 %v2618
      %v2628 = vunpack.c.l.b16 %v2619
      %v2629 = vpack.c.b16 %v2626, %v2625
      %v2630 = vpack.c.b16 %v2628, %v2627
      %v2634 = vsel %vm197, %v2620, 0
      %2636 = vmatprep.subr.bf16.mxu0 0
      %2637 = vmatpush1.bf16.msra.mxu0 %v2629
      %2638 = vmatprep.subr.bf16.mxu0 0
      %2639 = vmatpush1.bf16.msra.mxu0 %v2630
      %2640 = vmatprep.subr.bf16.mxu0 0
      %2641 = vmatpush1.bf16.msra.mxu0 0
      %2642 = vmatprep.subr.bf16.mxu0 0
      %2643 = vmatpush1.bf16.msra.mxu0 0
      %2644 = vmatprep.subr.bf16.mxu0 0
      %2645 = vmatpush1.bf16.msra.mxu0 0
      %2646 = vmatprep.subr.bf16.mxu0 0
      %2647 = vmatpush1.bf16.msra.mxu0 0
      %2648 = vmatprep.subr.bf16.mxu0 0
      %2649 = vmatpush1.bf16.msra.mxu0 0
      %2650 = vmatprep.subr.bf16.mxu0 0
      %2651 = vmatpush1.bf16.msra.mxu0 0
      %2652 = vmatprep.subr.bf16.mxu0 0
      %2653 = vmatpush1.bf16.msra.mxu0 0
      %2654 = vmatprep.subr.bf16.mxu0 0
      %2655 = vmatpush1.bf16.msra.mxu0 0
      %2656 = vmatprep.subr.bf16.mxu0 0
      %2657 = vmatpush1.bf16.msra.mxu0 0
      %2658 = vmatprep.subr.bf16.mxu0 0
      %2659 = vmatpush1.bf16.msra.mxu0 0
      %2660 = vmatprep.subr.bf16.mxu0 0
      %2661 = vmatpush1.bf16.msra.mxu0 0
      %2662 = vmatprep.subr.bf16.mxu0 0
      %2663 = vmatpush1.bf16.msra.mxu0 0
      %2664 = vmatprep.subr.bf16.mxu0 0
      %2665 = vmatpush1.bf16.msra.mxu0 0
      %2666 = vmatprep.subr.bf16.mxu0 0
      %2667 = vmatpush1.bf16.msra.mxu0 0
      %2668 = vmatprep.mubr.bf16.mxu0 0
      %2669 = vmatmul.mubr.bf16.gmra.mrb[0].mxu0 %v2634
      %v2670 = vpop.f32.mrb[0].mxu0
      %v2671 = vadd.f32 0.0, %v2670
      %v2672 = vpop.f32.mrb[0].mxu0
      %v2673 = vpop.f32.mrb[0].mxu0
      %v2674 = vpop.f32.mrb[0].mxu0
      %2675 = vdwg.mxu0
      %v2676 = vadd.f32 %v2615, %v2671
      %v2677 = vld [vmem:[%s1037] sm:$0xf]
      %v2678 = vld [vmem:[%s1037 + $0x4] sm:$0xf]
      %v2679 = vld [vmem:[%s1037 + $0x8] sm:$0xf]
      %v2680 = vld [vmem:[%s1037 + $0xc] sm:$0xf]
      %v2682 = vunpack.c.l.b16 %v2485
      %v2683 = vpack.c.b16 %v2682, %v2551
      %v2685 = vshrl.u32 %v2683, 16
      %v2687 = vrot.slane %v2685, 1
      %v2688 = vshll.u32 %v2683, 16
      %v2690 = vrot.slane %v2688, 2
      %v2691 = vor.u32 %v2687, %v2690
      %v2696 = vunpack.c.l.b16 %v2677
      %v2697 = vunpack.c.l.b16 %v2678
      %v2698 = vunpack.c.l.b16 %v2679
      %v2699 = vunpack.c.l.b16 %v2680
      %v2700 = vpack.c.b16 %v2697, %v2696
      %v2701 = vpack.c.b16 %v2699, %v2698
      %v2705 = vsel %vm197, %v2691, 0
      %2707 = vmatprep.subr.bf16.mxu0 0
      %2708 = vmatpush1.bf16.msra.mxu0 %v2700
      %2709 = vmatprep.subr.bf16.mxu0 0
      %2710 = vmatpush1.bf16.msra.mxu0 %v2701
      %2711 = vmatprep.subr.bf16.mxu0 0
      %2712 = vmatpush1.bf16.msra.mxu0 0
      %2713 = vmatprep.subr.bf16.mxu0 0
      %2714 = vmatpush1.bf16.msra.mxu0 0
      %2715 = vmatprep.subr.bf16.mxu0 0
      %2716 = vmatpush1.bf16.msra.mxu0 0
      %2717 = vmatprep.subr.bf16.mxu0 0
      %2718 = vmatpush1.bf16.msra.mxu0 0
      %2719 = vmatprep.subr.bf16.mxu0 0
      %2720 = vmatpush1.bf16.msra.mxu0 0
      %2721 = vmatprep.subr.bf16.mxu0 0
      %2722 = vmatpush1.bf16.msra.mxu0 0
      %2723 = vmatprep.subr.bf16.mxu0 0
      %2724 = vmatpush1.bf16.msra.mxu0 0
      %2725 = vmatprep.subr.bf16.mxu0 0
      %2726 = vmatpush1.bf16.msra.mxu0 0
      %2727 = vmatprep.subr.bf16.mxu0 0
      %2728 = vmatpush1.bf16.msra.mxu0 0
      %2729 = vmatprep.subr.bf16.mxu0 0
      %2730 = vmatpush1.bf16.msra.mxu0 0
      %2731 = vmatprep.subr.bf16.mxu0 0
      %2732 = vmatpush1.bf16.msra.mxu0 0
      %2733 = vmatprep.subr.bf16.mxu0 0
      %2734 = vmatpush1.bf16.msra.mxu0 0
      %2735 = vmatprep.subr.bf16.mxu0 0
      %2736 = vmatpush1.bf16.msra.mxu0 0
      %2737 = vmatprep.subr.bf16.mxu0 0
      %2738 = vmatpush1.bf16.msra.mxu0 0
      %2739 = vmatprep.mubr.bf16.mxu0 0
      %2740 = vmatmul.mubr.bf16.gmra.mrb[0].mxu0 %v2705
      %v2741 = vpop.f32.mrb[0].mxu0
      %v2742 = vadd.f32 0.0, %v2741
      %v2743 = vpop.f32.mrb[0].mxu0
      %v2744 = vpop.f32.mrb[0].mxu0
      %v2745 = vpop.f32.mrb[0].mxu0
      %2746 = vdwg.mxu0
      %v2747 = vadd.f32 %v2676, %v2742
      %v2748 = vld [vmem:[%s1109] sm:$0xf]
      %v2749 = vld [vmem:[%s1109 + $0x4] sm:$0xf]
      %v2750 = vld [vmem:[%s1109 + $0x8] sm:$0xf]
      %v2751 = vld [vmem:[%s1109 + $0xc] sm:$0xf]
      %v2752 = vrot.slane %v2683, 2
      %v2757 = vunpack.c.l.b16 %v2748
      %v2758 = vunpack.c.l.b16 %v2749
      %v2759 = vunpack.c.l.b16 %v2750
      %v2760 = vunpack.c.l.b16 %v2751
      %v2761 = vpack.c.b16 %v2758, %v2757
      %v2762 = vpack.c.b16 %v2760, %v2759
      %v2766 = vsel %vm197, %v2752, 0
      %2768 = vmatprep.subr.bf16.mxu0 0
      %2769 = vmatpush1.bf16.msra.mxu0 %v2761
      %2770 = vmatprep.subr.bf16.mxu0 0
      %2771 = vmatpush1.bf16.msra.mxu0 %v2762
      %2772 = vmatprep.subr.bf16.mxu0 0
      %2773 = vmatpush1.bf16.msra.mxu0 0
      %2774 = vmatprep.subr.bf16.mxu0 0
      %2775 = vmatpush1.bf16.msra.mxu0 0
      %2776 = vmatprep.subr.bf16.mxu0 0
      %2777 = vmatpush1.bf16.msra.mxu0 0
      %2778 = vmatprep.subr.bf16.mxu0 0
      %2779 = vmatpush1.bf16.msra.mxu0 0
      %2780 = vmatprep.subr.bf16.mxu0 0
      %2781 = vmatpush1.bf16.msra.mxu0 0
      %2782 = vmatprep.subr.bf16.mxu0 0
      %2783 = vmatpush1.bf16.msra.mxu0 0
      %2784 = vmatprep.subr.bf16.mxu0 0
      %2785 = vmatpush1.bf16.msra.mxu0 0
      %2786 = vmatprep.subr.bf16.mxu0 0
      %2787 = vmatpush1.bf16.msra.mxu0 0
      %2788 = vmatprep.subr.bf16.mxu0 0
      %2789 = vmatpush1.bf16.msra.mxu0 0
      %2790 = vmatprep.subr.bf16.mxu0 0
      %2791 = vmatpush1.bf16.msra.mxu0 0
      %2792 = vmatprep.subr.bf16.mxu0 0
      %2793 = vmatpush1.bf16.msra.mxu0 0
      %2794 = vmatprep.subr.bf16.mxu0 0
      %2795 = vmatpush1.bf16.msra.mxu0 0
      %2796 = vmatprep.subr.bf16.mxu0 0
      %2797 = vmatpush1.bf16.msra.mxu0 0
      %2798 = vmatprep.subr.bf16.mxu0 0
      %2799 = vmatpush1.bf16.msra.mxu0 0
      %2800 = vmatprep.mubr.bf16.mxu0 0
      %2801 = vmatmul.mubr.bf16.gmra.mrb[0].mxu0 %v2766
      %v2802 = vpop.f32.mrb[0].mxu0
      %v2803 = vadd.f32 0.0, %v2802
      %v2804 = vpop.f32.mrb[0].mxu0
      %v2805 = vpop.f32.mrb[0].mxu0
      %v2806 = vpop.f32.mrb[0].mxu0
      %2807 = vdwg.mxu0
      %v2808 = vadd.f32 %v2747, %v2803
      %v2809 = vld [vmem:[%s1502] sm:$0xf]
      %v2810 = vld [vmem:[%s1502 + $0x4] sm:$0x1]
      %v2811 = vld [vmem:[%s1174] sm:$0xf]
      %v2812 = vld [vmem:[%s1174 + $0x4] sm:$0xf]
      %v2813 = vld [vmem:[%s1174 + $0x8] sm:$0xf]
      %v2814 = vld [vmem:[%s1174 + $0xc] sm:$0xf]
      %v2819 = vunpack.c.l.b16 %v2811
      %v2820 = vunpack.c.l.b16 %v2812
      %v2821 = vunpack.c.l.b16 %v2813
      %v2822 = vunpack.c.l.b16 %v2814
      %v2823 = vpack.c.b16 %v2820, %v2819
      %v2824 = vpack.c.b16 %v2822, %v2821
      %v2828 = vsel %vm197, %v2809, 0
      %2830 = vmatprep.subr.bf16.mxu0 0
      %2831 = vmatpush1.bf16.msra.mxu0 %v2823
      %2832 = vmatprep.subr.bf16.mxu0 0
      %2833 = vmatpush1.bf16.msra.mxu0 %v2824
      %2834 = vmatprep.subr.bf16.mxu0 0
      %2835 = vmatpush1.bf16.msra.mxu0 0
      %2836 = vmatprep.subr.bf16.mxu0 0
      %2837 = vmatpush1.bf16.msra.mxu0 0
      %2838 = vmatprep.subr.bf16.mxu0 0
      %2839 = vmatpush1.bf16.msra.mxu0 0
      %2840 = vmatprep.subr.bf16.mxu0 0
      %2841 = vmatpush1.bf16.msra.mxu0 0
      %2842 = vmatprep.subr.bf16.mxu0 0
      %2843 = vmatpush1.bf16.msra.mxu0 0
      %2844 = vmatprep.subr.bf16.mxu0 0
      %2845 = vmatpush1.bf16.msra.mxu0 0
      %2846 = vmatprep.subr.bf16.mxu0 0
      %2847 = vmatpush1.bf16.msra.mxu0 0
      %2848 = vmatprep.subr.bf16.mxu0 0
      %2849 = vmatpush1.bf16.msra.mxu0 0
      %2850 = vmatprep.subr.bf16.mxu0 0
      %2851 = vmatpush1.bf16.msra.mxu0 0
      %2852 = vmatprep.subr.bf16.mxu0 0
      %2853 = vmatpush1.bf16.msra.mxu0 0
      %2854 = vmatprep.subr.bf16.mxu0 0
      %2855 = vmatpush1.bf16.msra.mxu0 0
      %2856 = vmatprep.subr.bf16.mxu0 0
      %2857 = vmatpush1.bf16.msra.mxu0 0
      %2858 = vmatprep.subr.bf16.mxu0 0
      %2859 = vmatpush1.bf16.msra.mxu0 0
      %2860 = vmatprep.subr.bf16.mxu0 0
      %2861 = vmatpush1.bf16.msra.mxu0 0
      %2862 = vmatprep.mubr.bf16.mxu0 0
      %2863 = vmatmul.mubr.bf16.gmra.mrb[0].mxu0 %v2828
      %v2864 = vpop.f32.mrb[0].mxu0
      %v2865 = vadd.f32 0.0, %v2864
      %v2866 = vpop.f32.mrb[0].mxu0
      %v2867 = vpop.f32.mrb[0].mxu0
      %v2868 = vpop.f32.mrb[0].mxu0
      %2869 = vdwg.mxu0
      %v2870 = vadd.f32 %v2808, %v2865
      %v2871 = vld [vmem:[%s1235] sm:$0xf]
      %v2872 = vld [vmem:[%s1235 + $0x4] sm:$0xf]
      %v2873 = vld [vmem:[%s1235 + $0x8] sm:$0xf]
      %v2874 = vld [vmem:[%s1235 + $0xc] sm:$0xf]
      %v2876 = vunpack.c.l.b16 %v2809
      %v2877 = vpack.c.b16 %v2876, %v2876
      %v2879 = vshrl.u32 %v2877, 16
      %v2881 = vshll.u32 %v2877, 16
      %v2883 = vrot.slane %v2881, 1
      %v2884 = vor.u32 %v2879, %v2883
      %v2889 = vunpack.c.l.b16 %v2871
      %v2890 = vunpack.c.l.b16 %v2872
      %v2891 = vunpack.c.l.b16 %v2873
      %v2892 = vunpack.c.l.b16 %v2874
      %v2893 = vpack.c.b16 %v2890, %v2889
      %v2894 = vpack.c.b16 %v2892, %v2891
      %v2898 = vsel %vm197, %v2884, 0
      %2900 = vmatprep.subr.bf16.mxu0 0
      %2901 = vmatpush1.bf16.msra.mxu0 %v2893
      %2902 = vmatprep.subr.bf16.mxu0 0
      %2903 = vmatpush1.bf16.msra.mxu0 %v2894
      %2904 = vmatprep.subr.bf16.mxu0 0
      %2905 = vmatpush1.bf16.msra.mxu0 0
      %2906 = vmatprep.subr.bf16.mxu0 0
      %2907 = vmatpush1.bf16.msra.mxu0 0
      %2908 = vmatprep.subr.bf16.mxu0 0
      %2909 = vmatpush1.bf16.msra.mxu0 0
      %2910 = vmatprep.subr.bf16.mxu0 0
      %2911 = vmatpush1.bf16.msra.mxu0 0
      %2912 = vmatprep.subr.bf16.mxu0 0
      %2913 = vmatpush1.bf16.msra.mxu0 0
      %2914 = vmatprep.subr.bf16.mxu0 0
      %2915 = vmatpush1.bf16.msra.mxu0 0
      %2916 = vmatprep.subr.bf16.mxu0 0
      %2917 = vmatpush1.bf16.msra.mxu0 0
      %2918 = vmatprep.subr.bf16.mxu0 0
      %2919 = vmatpush1.bf16.msra.mxu0 0
      %2920 = vmatprep.subr.bf16.mxu0 0
      %2921 = vmatpush1.bf16.msra.mxu0 0
      %2922 = vmatprep.subr.bf16.mxu0 0
      %2923 = vmatpush1.bf16.msra.mxu0 0
      %2924 = vmatprep.subr.bf16.mxu0 0
      %2925 = vmatpush1.bf16.msra.mxu0 0
      %2926 = vmatprep.subr.bf16.mxu0 0
      %2927 = vmatpush1.bf16.msra.mxu0 0
      %2928 = vmatprep.subr.bf16.mxu0 0
      %2929 = vmatpush1.bf16.msra.mxu0 0
      %2930 = vmatprep.subr.bf16.mxu0 0
      %2931 = vmatpush1.bf16.msra.mxu0 0
      %2932 = vmatprep.mubr.bf16.mxu0 0
      %2933 = vmatmul.mubr.bf16.gmra.mrb[0].mxu0 %v2898
      %v2934 = vpop.f32.mrb[0].mxu0
      %v2935 = vadd.f32 0.0, %v2934
      %v2936 = vpop.f32.mrb[0].mxu0
      %v2937 = vpop.f32.mrb[0].mxu0
      %v2938 = vpop.f32.mrb[0].mxu0
      %2939 = vdwg.mxu0
      %v2940 = vadd.f32 %v2870, %v2935
      %v2941 = vld [vmem:[%s1306] sm:$0xf]
      %v2942 = vld [vmem:[%s1306 + $0x4] sm:$0xf]
      %v2943 = vld [vmem:[%s1306 + $0x8] sm:$0xf]
      %v2944 = vld [vmem:[%s1306 + $0xc] sm:$0xf]
      %v2945 = vrot.slane %v2877, 1
      %v2950 = vunpack.c.l.b16 %v2941
      %v2951 = vunpack.c.l.b16 %v2942
      %v2952 = vunpack.c.l.b16 %v2943
      %v2953 = vunpack.c.l.b16 %v2944
      %v2954 = vpack.c.b16 %v2951, %v2950
      %v2955 = vpack.c.b16 %v2953, %v2952
      %v2959 = vsel %vm197, %v2945, 0
      %2961 = vmatprep.subr.bf16.mxu0 0
      %2962 = vmatpush1.bf16.msra.mxu0 %v2954
      %2963 = vmatprep.subr.bf16.mxu0 0
      %2964 = vmatpush1.bf16.msra.mxu0 %v2955
      %2965 = vmatprep.subr.bf16.mxu0 0
      %2966 = vmatpush1.bf16.msra.mxu0 0
      %2967 = vmatprep.subr.bf16.mxu0 0
      %2968 = vmatpush1.bf16.msra.mxu0 0
      %2969 = vmatprep.subr.bf16.mxu0 0
      %2970 = vmatpush1.bf16.msra.mxu0 0
      %2971 = vmatprep.subr.bf16.mxu0 0
      %2972 = vmatpush1.bf16.msra.mxu0 0
      %2973 = vmatprep.subr.bf16.mxu0 0
      %2974 = vmatpush1.bf16.msra.mxu0 0
      %2975 = vmatprep.subr.bf16.mxu0 0
      %2976 = vmatpush1.bf16.msra.mxu0 0
      %2977 = vmatprep.subr.bf16.mxu0 0
      %2978 = vmatpush1.bf16.msra.mxu0 0
      %2979 = vmatprep.subr.bf16.mxu0 0
      %2980 = vmatpush1.bf16.msra.mxu0 0
      %2981 = vmatprep.subr.bf16.mxu0 0
      %2982 = vmatpush1.bf16.msra.mxu0 0
      %2983 = vmatprep.subr.bf16.mxu0 0
      %2984 = vmatpush1.bf16.msra.mxu0 0
      %2985 = vmatprep.subr.bf16.mxu0 0
      %2986 = vmatpush1.bf16.msra.mxu0 0
      %2987 = vmatprep.subr.bf16.mxu0 0
      %2988 = vmatpush1.bf16.msra.mxu0 0
      %2989 = vmatprep.subr.bf16.mxu0 0
      %2990 = vmatpush1.bf16.msra.mxu0 0
      %2991 = vmatprep.subr.bf16.mxu0 0
      %2992 = vmatpush1.bf16.msra.mxu0 0
      %2993 = vmatprep.mubr.bf16.mxu0 0
      %2994 = vmatmul.mubr.bf16.gmra.mrb[0].mxu0 %v2959
      %v2995 = vpop.f32.mrb[0].mxu0
      %v2996 = vadd.f32 0.0, %v2995
      %v2997 = vpop.f32.mrb[0].mxu0
      %v2998 = vpop.f32.mrb[0].mxu0
      %v2999 = vpop.f32.mrb[0].mxu0
      %3000 = vdwg.mxu0
      %v3001 = vadd.f32 %v2940, %v2996
      %v3002 = vld [vmem:[%s1368] sm:$0xf]
      %v3003 = vld [vmem:[%s1368 + $0x4] sm:$0xf]
      %v3004 = vld [vmem:[%s1368 + $0x8] sm:$0xf]
      %v3005 = vld [vmem:[%s1368 + $0xc] sm:$0xf]
      %v3007 = vunpack.c.l.b16 %v2810
      %v3008 = vpack.c.b16 %v3007, %v2876
      %v3010 = vshrl.u32 %v3008, 16
      %v3012 = vrot.slane %v3010, 1
      %v3013 = vshll.u32 %v3008, 16
      %v3015 = vrot.slane %v3013, 2
      %v3016 = vor.u32 %v3012, %v3015
      %v3021 = vunpack.c.l.b16 %v3002
      %v3022 = vunpack.c.l.b16 %v3003
      %v3023 = vunpack.c.l.b16 %v3004
      %v3024 = vunpack.c.l.b16 %v3005
      %v3025 = vpack.c.b16 %v3022, %v3021
      %v3026 = vpack.c.b16 %v3024, %v3023
      %v3030 = vsel %vm197, %v3016, 0
      %3032 = vmatprep.subr.bf16.mxu0 0
      %3033 = vmatpush1.bf16.msra.mxu0 %v3025
      %3034 = vmatprep.subr.bf16.mxu0 0
      %3035 = vmatpush1.bf16.msra.mxu0 %v3026
      %3036 = vmatprep.subr.bf16.mxu0 0
      %3037 = vmatpush1.bf16.msra.mxu0 0
      %3038 = vmatprep.subr.bf16.mxu0 0
      %3039 = vmatpush1.bf16.msra.mxu0 0
      %3040 = vmatprep.subr.bf16.mxu0 0
      %3041 = vmatpush1.bf16.msra.mxu0 0
      %3042 = vmatprep.subr.bf16.mxu0 0
      %3043 = vmatpush1.bf16.msra.mxu0 0
      %3044 = vmatprep.subr.bf16.mxu0 0
      %3045 = vmatpush1.bf16.msra.mxu0 0
      %3046 = vmatprep.subr.bf16.mxu0 0
      %3047 = vmatpush1.bf16.msra.mxu0 0
      %3048 = vmatprep.subr.bf16.mxu0 0
      %3049 = vmatpush1.bf16.msra.mxu0 0
      %3050 = vmatprep.subr.bf16.mxu0 0
      %3051 = vmatpush1.bf16.msra.mxu0 0
      %3052 = vmatprep.subr.bf16.mxu0 0
      %3053 = vmatpush1.bf16.msra.mxu0 0
      %3054 = vmatprep.subr.bf16.mxu0 0
      %3055 = vmatpush1.bf16.msra.mxu0 0
      %3056 = vmatprep.subr.bf16.mxu0 0
      %3057 = vmatpush1.bf16.msra.mxu0 0
      %3058 = vmatprep.subr.bf16.mxu0 0
      %3059 = vmatpush1.bf16.msra.mxu0 0
      %3060 = vmatprep.subr.bf16.mxu0 0
      %3061 = vmatpush1.bf16.msra.mxu0 0
      %3062 = vmatprep.subr.bf16.mxu0 0
      %3063 = vmatpush1.bf16.msra.mxu0 0
      %3064 = vmatprep.mubr.bf16.mxu0 0
      %3065 = vmatmul.mubr.bf16.gmra.mrb[0].mxu0 %v3030
      %v3066 = vpop.f32.mrb[0].mxu0
      %v3067 = vadd.f32 0.0, %v3066
      %v3068 = vpop.f32.mrb[0].mxu0
      %v3069 = vpop.f32.mrb[0].mxu0
      %v3070 = vpop.f32.mrb[0].mxu0
      %3071 = vdwg.mxu0
      %v3072 = vadd.f32 %v3001, %v3067
      %v3073 = vld [vmem:[%s1440] sm:$0xf]
      %v3074 = vld [vmem:[%s1440 + $0x4] sm:$0xf]
      %v3075 = vld [vmem:[%s1440 + $0x8] sm:$0xf]
      %v3076 = vld [vmem:[%s1440 + $0xc] sm:$0xf]
      %v3077 = vrot.slane %v3008, 2
      %v3082 = vunpack.c.l.b16 %v3073
      %v3083 = vunpack.c.l.b16 %v3074
      %v3084 = vunpack.c.l.b16 %v3075
      %v3085 = vunpack.c.l.b16 %v3076
      %v3086 = vpack.c.b16 %v3083, %v3082
      %v3087 = vpack.c.b16 %v3085, %v3084
      %v3091 = vsel %vm197, %v3077, 0
      %3093 = vmatprep.subr.bf16.mxu0 0
      %3094 = vmatpush1.bf16.msra.mxu0 %v3086
      %3095 = vmatprep.subr.bf16.mxu0 0
      %3096 = vmatpush1.bf16.msra.mxu0 %v3087
      %3097 = vmatprep.subr.bf16.mxu0 0
      %3098 = vmatpush1.bf16.msra.mxu0 0
      %3099 = vmatprep.subr.bf16.mxu0 0
      %3100 = vmatpush1.bf16.msra.mxu0 0
      %3101 = vmatprep.subr.bf16.mxu0 0
      %3102 = vmatpush1.bf16.msra.mxu0 0
      %3103 = vmatprep.subr.bf16.mxu0 0
      %3104 = vmatpush1.bf16.msra.mxu0 0
      %3105 = vmatprep.subr.bf16.mxu0 0
      %3106 = vmatpush1.bf16.msra.mxu0 0
      %3107 = vmatprep.subr.bf16.mxu0 0
      %3108 = vmatpush1.bf16.msra.mxu0 0
      %3109 = vmatprep.subr.bf16.mxu0 0
      %3110 = vmatpush1.bf16.msra.mxu0 0
      %3111 = vmatprep.subr.bf16.mxu0 0
      %3112 = vmatpush1.bf16.msra.mxu0 0
      %3113 = vmatprep.subr.bf16.mxu0 0
      %3114 = vmatpush1.bf16.msra.mxu0 0
      %3115 = vmatprep.subr.bf16.mxu0 0
      %3116 = vmatpush1.bf16.msra.mxu0 0
      %3117 = vmatprep.subr.bf16.mxu0 0
      %3118 = vmatpush1.bf16.msra.mxu0 0
      %3119 = vmatprep.subr.bf16.mxu0 0
      %3120 = vmatpush1.bf16.msra.mxu0 0
      %3121 = vmatprep.subr.bf16.mxu0 0
      %3122 = vmatpush1.bf16.msra.mxu0 0
      %3123 = vmatprep.subr.bf16.mxu0 0
      %3124 = vmatpush1.bf16.msra.mxu0 0
      %3125 = vmatprep.mubr.bf16.mxu0 0
      %3126 = vmatmul.mubr.bf16.gmra.mrb[0].mxu0 %v3091
      %v3127 = vpop.f32.mrb[0].mxu0
      %v3128 = vadd.f32 0.0, %v3127
      %v3129 = vpop.f32.mrb[0].mxu0
      %v3130 = vpop.f32.mrb[0].mxu0
      %v3131 = vpop.f32.mrb[0].mxu0
      %3132 = vdwg.mxu0
      %v3133 = vadd.f32 %v3072, %v3128
      %s3134 = scalar_lea.vmem %s165, 40
      %v3135 = vld [vmem:[%s3134] sm:$0xf]
      %v3136 = vld [vmem:[%s3134 + $0x4] sm:$0x1]
      %v3137 = vld [vmem:[%s1505] sm:$0xf]
      %v3138 = vld [vmem:[%s1505 + $0x4] sm:$0xf]
      %v3139 = vld [vmem:[%s1505 + $0x8] sm:$0xf]
      %v3140 = vld [vmem:[%s1505 + $0xc] sm:$0xf]
      %v3145 = vunpack.c.l.b16 %v3137
      %v3146 = vunpack.c.l.b16 %v3138
      %v3147 = vunpack.c.l.b16 %v3139
      %v3148 = vunpack.c.l.b16 %v3140
      %v3149 = vpack.c.b16 %v3146, %v3145
      %v3150 = vpack.c.b16 %v3148, %v3147
      %v3154 = vsel %vm197, %v3135, 0
      %3156 = vmatprep.subr.bf16.mxu0 0
      %3157 = vmatpush1.bf16.msra.mxu0 %v3149
      %3158 = vmatprep.subr.bf16.mxu0 0
      %3159 = vmatpush1.bf16.msra.mxu0 %v3150
      %3160 = vmatprep.subr.bf16.mxu0 0
      %3161 = vmatpush1.bf16.msra.mxu0 0
      %3162 = vmatprep.subr.bf16.mxu0 0
      %3163 = vmatpush1.bf16.msra.mxu0 0
      %3164 = vmatprep.subr.bf16.mxu0 0
      %3165 = vmatpush1.bf16.msra.mxu0 0
      %3166 = vmatprep.subr.bf16.mxu0 0
      %3167 = vmatpush1.bf16.msra.mxu0 0
      %3168 = vmatprep.subr.bf16.mxu0 0
      %3169 = vmatpush1.bf16.msra.mxu0 0
      %3170 = vmatprep.subr.bf16.mxu0 0
      %3171 = vmatpush1.bf16.msra.mxu0 0
      %3172 = vmatprep.subr.bf16.mxu0 0
      %3173 = vmatpush1.bf16.msra.mxu0 0
      %3174 = vmatprep.subr.bf16.mxu0 0
      %3175 = vmatpush1.bf16.msra.mxu0 0
      %3176 = vmatprep.subr.bf16.mxu0 0
      %3177 = vmatpush1.bf16.msra.mxu0 0
      %3178 = vmatprep.subr.bf16.mxu0 0
      %3179 = vmatpush1.bf16.msra.mxu0 0
      %3180 = vmatprep.subr.bf16.mxu0 0
      %3181 = vmatpush1.bf16.msra.mxu0 0
      %3182 = vmatprep.subr.bf16.mxu0 0
      %3183 = vmatpush1.bf16.msra.mxu0 0
      %3184 = vmatprep.subr.bf16.mxu0 0
      %3185 = vmatpush1.bf16.msra.mxu0 0
      %3186 = vmatprep.subr.bf16.mxu0 0
      %3187 = vmatpush1.bf16.msra.mxu0 0
      %3188 = vmatprep.mubr.bf16.mxu0 0
      %3189 = vmatmul.mubr.bf16.gmra.mrb[0].mxu0 %v3154
      %v3190 = vpop.f32.mrb[0].mxu0
      %v3191 = vadd.f32 0.0, %v3190
      %v3192 = vpop.f32.mrb[0].mxu0
      %v3193 = vpop.f32.mrb[0].mxu0
      %v3194 = vpop.f32.mrb[0].mxu0
      %3195 = vdwg.mxu0
      %v3196 = vadd.f32 %v3133, %v3191
      %v3197 = vld [vmem:[%s1566] sm:$0xf]
      %v3198 = vld [vmem:[%s1566 + $0x4] sm:$0xf]
      %v3199 = vld [vmem:[%s1566 + $0x8] sm:$0xf]
      %v3200 = vld [vmem:[%s1566 + $0xc] sm:$0xf]
      %v3202 = vunpack.c.l.b16 %v3135
      %v3203 = vpack.c.b16 %v3202, %v3202
      %v3205 = vshrl.u32 %v3203, 16
      %v3207 = vshll.u32 %v3203, 16
      %v3209 = vrot.slane %v3207, 1
      %v3210 = vor.u32 %v3205, %v3209
      %v3215 = vunpack.c.l.b16 %v3197
      %v3216 = vunpack.c.l.b16 %v3198
      %v3217 = vunpack.c.l.b16 %v3199
      %v3218 = vunpack.c.l.b16 %v3200
      %v3219 = vpack.c.b16 %v3216, %v3215
      %v3220 = vpack.c.b16 %v3218, %v3217
      %v3224 = vsel %vm197, %v3210, 0
      %3226 = vmatprep.subr.bf16.mxu0 0
      %3227 = vmatpush1.bf16.msra.mxu0 %v3219
      %3228 = vmatprep.subr.bf16.mxu0 0
      %3229 = vmatpush1.bf16.msra.mxu0 %v3220
      %3230 = vmatprep.subr.bf16.mxu0 0
      %3231 = vmatpush1.bf16.msra.mxu0 0
      %3232 = vmatprep.subr.bf16.mxu0 0
      %3233 = vmatpush1.bf16.msra.mxu0 0
      %3234 = vmatprep.subr.bf16.mxu0 0
      %3235 = vmatpush1.bf16.msra.mxu0 0
      %3236 = vmatprep.subr.bf16.mxu0 0
      %3237 = vmatpush1.bf16.msra.mxu0 0
      %3238 = vmatprep.subr.bf16.mxu0 0
      %3239 = vmatpush1.bf16.msra.mxu0 0
      %3240 = vmatprep.subr.bf16.mxu0 0
      %3241 = vmatpush1.bf16.msra.mxu0 0
      %3242 = vmatprep.subr.bf16.mxu0 0
      %3243 = vmatpush1.bf16.msra.mxu0 0
      %3244 = vmatprep.subr.bf16.mxu0 0
      %3245 = vmatpush1.bf16.msra.mxu0 0
      %3246 = vmatprep.subr.bf16.mxu0 0
      %3247 = vmatpush1.bf16.msra.mxu0 0
      %3248 = vmatprep.subr.bf16.mxu0 0
      %3249 = vmatpush1.bf16.msra.mxu0 0
      %3250 = vmatprep.subr.bf16.mxu0 0
      %3251 = vmatpush1.bf16.msra.mxu0 0
      %3252 = vmatprep.subr.bf16.mxu0 0
      %3253 = vmatpush1.bf16.msra.mxu0 0
      %3254 = vmatprep.subr.bf16.mxu0 0
      %3255 = vmatpush1.bf16.msra.mxu0 0
      %3256 = vmatprep.subr.bf16.mxu0 0
      %3257 = vmatpush1.bf16.msra.mxu0 0
      %3258 = vmatprep.mubr.bf16.mxu0 0
      %3259 = vmatmul.mubr.bf16.gmra.mrb[0].mxu0 %v3224
      %v3260 = vpop.f32.mrb[0].mxu0
      %v3261 = vadd.f32 0.0, %v3260
      %v3262 = vpop.f32.mrb[0].mxu0
      %v3263 = vpop.f32.mrb[0].mxu0
      %v3264 = vpop.f32.mrb[0].mxu0
      %3265 = vdwg.mxu0
      %v3266 = vadd.f32 %v3196, %v3261
      %v3267 = vld [vmem:[%s1637] sm:$0xf]
      %v3268 = vld [vmem:[%s1637 + $0x4] sm:$0xf]
      %v3269 = vld [vmem:[%s1637 + $0x8] sm:$0xf]
      %v3270 = vld [vmem:[%s1637 + $0xc] sm:$0xf]
      %v3271 = vrot.slane %v3203, 1
      %v3276 = vunpack.c.l.b16 %v3267
      %v3277 = vunpack.c.l.b16 %v3268
      %v3278 = vunpack.c.l.b16 %v3269
      %v3279 = vunpack.c.l.b16 %v3270
      %v3280 = vpack.c.b16 %v3277, %v3276
      %v3281 = vpack.c.b16 %v3279, %v3278
      %v3285 = vsel %vm197, %v3271, 0
      %3287 = vmatprep.subr.bf16.mxu0 0
      %3288 = vmatpush1.bf16.msra.mxu0 %v3280
      %3289 = vmatprep.subr.bf16.mxu0 0
      %3290 = vmatpush1.bf16.msra.mxu0 %v3281
      %3291 = vmatprep.subr.bf16.mxu0 0
      %3292 = vmatpush1.bf16.msra.mxu0 0
      %3293 = vmatprep.subr.bf16.mxu0 0
      %3294 = vmatpush1.bf16.msra.mxu0 0
      %3295 = vmatprep.subr.bf16.mxu0 0
      %3296 = vmatpush1.bf16.msra.mxu0 0
      %3297 = vmatprep.subr.bf16.mxu0 0
      %3298 = vmatpush1.bf16.msra.mxu0 0
      %3299 = vmatprep.subr.bf16.mxu0 0
      %3300 = vmatpush1.bf16.msra.mxu0 0
      %3301 = vmatprep.subr.bf16.mxu0 0
      %3302 = vmatpush1.bf16.msra.mxu0 0
      %3303 = vmatprep.subr.bf16.mxu0 0
      %3304 = vmatpush1.bf16.msra.mxu0 0
      %3305 = vmatprep.subr.bf16.mxu0 0
      %3306 = vmatpush1.bf16.msra.mxu0 0
      %3307 = vmatprep.subr.bf16.mxu0 0
      %3308 = vmatpush1.bf16.msra.mxu0 0
      %3309 = vmatprep.subr.bf16.mxu0 0
      %3310 = vmatpush1.bf16.msra.mxu0 0
      %3311 = vmatprep.subr.bf16.mxu0 0
      %3312 = vmatpush1.bf16.msra.mxu0 0
      %3313 = vmatprep.subr.bf16.mxu0 0
      %3314 = vmatpush1.bf16.msra.mxu0 0
      %3315 = vmatprep.subr.bf16.mxu0 0
      %3316 = vmatpush1.bf16.msra.mxu0 0
      %3317 = vmatprep.subr.bf16.mxu0 0
      %3318 = vmatpush1.bf16.msra.mxu0 0
      %3319 = vmatprep.mubr.bf16.mxu0 0
      %3320 = vmatmul.mubr.bf16.gmra.mrb[0].mxu0 %v3285
      %v3321 = vpop.f32.mrb[0].mxu0
      %v3322 = vadd.f32 0.0, %v3321
      %v3323 = vpop.f32.mrb[0].mxu0
      %v3324 = vpop.f32.mrb[0].mxu0
      %v3325 = vpop.f32.mrb[0].mxu0
      %3326 = vdwg.mxu0
      %v3327 = vadd.f32 %v3266, %v3322
      %v3328 = vld [vmem:[%s1699] sm:$0xf]
      %v3329 = vld [vmem:[%s1699 + $0x4] sm:$0xf]
      %v3330 = vld [vmem:[%s1699 + $0x8] sm:$0xf]
      %v3331 = vld [vmem:[%s1699 + $0xc] sm:$0xf]
      %v3333 = vunpack.c.l.b16 %v3136
      %v3334 = vpack.c.b16 %v3333, %v3202
      %v3336 = vshrl.u32 %v3334, 16
      %v3338 = vrot.slane %v3336, 1
      %v3339 = vshll.u32 %v3334, 16
      %v3341 = vrot.slane %v3339, 2
      %v3342 = vor.u32 %v3338, %v3341
      %v3347 = vunpack.c.l.b16 %v3328
      %v3348 = vunpack.c.l.b16 %v3329
      %v3349 = vunpack.c.l.b16 %v3330
      %v3350 = vunpack.c.l.b16 %v3331
      %v3351 = vpack.c.b16 %v3348, %v3347
      %v3352 = vpack.c.b16 %v3350, %v3349
      %v3356 = vsel %vm197, %v3342, 0
      %3358 = vmatprep.subr.bf16.mxu0 0
      %3359 = vmatpush1.bf16.msra.mxu0 %v3351
      %3360 = vmatprep.subr.bf16.mxu0 0
      %3361 = vmatpush1.bf16.msra.mxu0 %v3352
      %3362 = vmatprep.subr.bf16.mxu0 0
      %3363 = vmatpush1.bf16.msra.mxu0 0
      %3364 = vmatprep.subr.bf16.mxu0 0
      %3365 = vmatpush1.bf16.msra.mxu0 0
      %3366 = vmatprep.subr.bf16.mxu0 0
      %3367 = vmatpush1.bf16.msra.mxu0 0
      %3368 = vmatprep.subr.bf16.mxu0 0
      %3369 = vmatpush1.bf16.msra.mxu0 0
      %3370 = vmatprep.subr.bf16.mxu0 0
      %3371 = vmatpush1.bf16.msra.mxu0 0
      %3372 = vmatprep.subr.bf16.mxu0 0
      %3373 = vmatpush1.bf16.msra.mxu0 0
      %3374 = vmatprep.subr.bf16.mxu0 0
      %3375 = vmatpush1.bf16.msra.mxu0 0
      %3376 = vmatprep.subr.bf16.mxu0 0
      %3377 = vmatpush1.bf16.msra.mxu0 0
      %3378 = vmatprep.subr.bf16.mxu0 0
      %3379 = vmatpush1.bf16.msra.mxu0 0
      %3380 = vmatprep.subr.bf16.mxu0 0
      %3381 = vmatpush1.bf16.msra.mxu0 0
      %3382 = vmatprep.subr.bf16.mxu0 0
      %3383 = vmatpush1.bf16.msra.mxu0 0
      %3384 = vmatprep.subr.bf16.mxu0 0
      %3385 = vmatpush1.bf16.msra.mxu0 0
      %3386 = vmatprep.subr.bf16.mxu0 0
      %3387 = vmatpush1.bf16.msra.mxu0 0
      %3388 = vmatprep.subr.bf16.mxu0 0
      %3389 = vmatpush1.bf16.msra.mxu0 0
      %3390 = vmatprep.mubr.bf16.mxu0 0
      %3391 = vmatmul.mubr.bf16.gmra.mrb[0].mxu0 %v3356
      %v3392 = vpop.f32.mrb[0].mxu0
      %v3393 = vadd.f32 0.0, %v3392
      %v3394 = vpop.f32.mrb[0].mxu0
      %v3395 = vpop.f32.mrb[0].mxu0
      %v3396 = vpop.f32.mrb[0].mxu0
      %3397 = vdwg.mxu0
      %v3398 = vadd.f32 %v3327, %v3393
      %v3399 = vld [vmem:[%s1771] sm:$0xf]
      %v3400 = vld [vmem:[%s1771 + $0x4] sm:$0xf]
      %v3401 = vld [vmem:[%s1771 + $0x8] sm:$0xf]
      %v3402 = vld [vmem:[%s1771 + $0xc] sm:$0xf]
      %v3403 = vrot.slane %v3334, 2
      %v3408 = vunpack.c.l.b16 %v3399
      %v3409 = vunpack.c.l.b16 %v3400
      %v3410 = vunpack.c.l.b16 %v3401
      %v3411 = vunpack.c.l.b16 %v3402
      %v3412 = vpack.c.b16 %v3409, %v3408
      %v3413 = vpack.c.b16 %v3411, %v3410
      %v3417 = vsel %vm197, %v3403, 0
      %3419 = vmatprep.subr.bf16.mxu0 0
      %3420 = vmatpush1.bf16.msra.mxu0 %v3412
      %3421 = vmatprep.subr.bf16.mxu0 0
      %3422 = vmatpush1.bf16.msra.mxu0 %v3413
      %3423 = vmatprep.subr.bf16.mxu0 0
      %3424 = vmatpush1.bf16.msra.mxu0 0
      %3425 = vmatprep.subr.bf16.mxu0 0
      %3426 = vmatpush1.bf16.msra.mxu0 0
      %3427 = vmatprep.subr.bf16.mxu0 0
      %3428 = vmatpush1.bf16.msra.mxu0 0
      %3429 = vmatprep.subr.bf16.mxu0 0
      %3430 = vmatpush1.bf16.msra.mxu0 0
      %3431 = vmatprep.subr.bf16.mxu0 0
      %3432 = vmatpush1.bf16.msra.mxu0 0
      %3433 = vmatprep.subr.bf16.mxu0 0
      %3434 = vmatpush1.bf16.msra.mxu0 0
      %3435 = vmatprep.subr.bf16.mxu0 0
      %3436 = vmatpush1.bf16.msra.mxu0 0
      %3437 = vmatprep.subr.bf16.mxu0 0
      %3438 = vmatpush1.bf16.msra.mxu0 0
      %3439 = vmatprep.subr.bf16.mxu0 0
      %3440 = vmatpush1.bf16.msra.mxu0 0
      %3441 = vmatprep.subr.bf16.mxu0 0
      %3442 = vmatpush1.bf16.msra.mxu0 0
      %3443 = vmatprep.subr.bf16.mxu0 0
      %3444 = vmatpush1.bf16.msra.mxu0 0
      %3445 = vmatprep.subr.bf16.mxu0 0
      %3446 = vmatpush1.bf16.msra.mxu0 0
      %3447 = vmatprep.subr.bf16.mxu0 0
      %3448 = vmatpush1.bf16.msra.mxu0 0
      %3449 = vmatprep.subr.bf16.mxu0 0
      %3450 = vmatpush1.bf16.msra.mxu0 0
      %3451 = vmatprep.mubr.bf16.mxu0 0
      %3452 = vmatmul.mubr.bf16.gmra.mrb[0].mxu0 %v3417
      %v3453 = vpop.f32.mrb[0].mxu0
      %v3454 = vadd.f32 0.0, %v3453
      %v3455 = vpop.f32.mrb[0].mxu0
      %v3456 = vpop.f32.mrb[0].mxu0
      %v3457 = vpop.f32.mrb[0].mxu0
      %3458 = vdwg.mxu0
      %v3459 = vadd.f32 %v3398, %v3454
      %3460 = vst [vmem:[%s170 + $0x6] sm:$0x3f] %v3459
      %v3461 = vld [vmem:[%s840] sm:$0xf]
      %v3462 = vld [vmem:[%s840 + $0x4] sm:$0x1]
      %v3463 = vld [vmem:[%s1] sm:$0xf]
      %v3464 = vld [vmem:[%s1 + $0x4] sm:$0xf]
      %v3465 = vld [vmem:[%s1 + $0x8] sm:$0xf]
      %v3466 = vld [vmem:[%s1 + $0xc] sm:$0xf]
      %v3471 = vunpack.c.l.b16 %v3463
      %v3472 = vunpack.c.l.b16 %v3464
      %v3473 = vunpack.c.l.b16 %v3465
      %v3474 = vunpack.c.l.b16 %v3466
      %v3475 = vpack.c.b16 %v3472, %v3471
      %v3476 = vpack.c.b16 %v3474, %v3473
      %v3480 = vsel %vm197, %v3461, 0
      %3482 = vmatprep.subr.bf16.mxu0 0
      %3483 = vmatpush1.bf16.msra.mxu0 %v3475
      %3484 = vmatprep.subr.bf16.mxu0 0
      %3485 = vmatpush1.bf16.msra.mxu0 %v3476
      %3486 = vmatprep.subr.bf16.mxu0 0
      %3487 = vmatpush1.bf16.msra.mxu0 0
      %3488 = vmatprep.subr.bf16.mxu0 0
      %3489 = vmatpush1.bf16.msra.mxu0 0
      %3490 = vmatprep.subr.bf16.mxu0 0
      %3491 = vmatpush1.bf16.msra.mxu0 0
      %3492 = vmatprep.subr.bf16.mxu0 0
      %3493 = vmatpush1.bf16.msra.mxu0 0
      %3494 = vmatprep.subr.bf16.mxu0 0
      %3495 = vmatpush1.bf16.msra.mxu0 0
      %3496 = vmatprep.subr.bf16.mxu0 0
      %3497 = vmatpush1.bf16.msra.mxu0 0
      %3498 = vmatprep.subr.bf16.mxu0 0
      %3499 = vmatpush1.bf16.msra.mxu0 0
      %3500 = vmatprep.subr.bf16.mxu0 0
      %3501 = vmatpush1.bf16.msra.mxu0 0
      %3502 = vmatprep.subr.bf16.mxu0 0
      %3503 = vmatpush1.bf16.msra.mxu0 0
      %3504 = vmatprep.subr.bf16.mxu0 0
      %3505 = vmatpush1.bf16.msra.mxu0 0
      %3506 = vmatprep.subr.bf16.mxu0 0
      %3507 = vmatpush1.bf16.msra.mxu0 0
      %3508 = vmatprep.subr.bf16.mxu0 0
      %3509 = vmatpush1.bf16.msra.mxu0 0
      %3510 = vmatprep.subr.bf16.mxu0 0
      %3511 = vmatpush1.bf16.msra.mxu0 0
      %3512 = vmatprep.subr.bf16.mxu0 0
      %3513 = vmatpush1.bf16.msra.mxu0 0
      %3514 = vmatprep.mubr.bf16.mxu0 0
      %3515 = vmatmul.mubr.bf16.gmra.mrb[0].mxu0 %v3480
      %v3516 = vpop.f32.mrb[0].mxu0
      %v3517 = vadd.f32 0.0, %v3516
      %v3518 = vpop.f32.mrb[0].mxu0
      %v3519 = vpop.f32.mrb[0].mxu0
      %v3520 = vpop.f32.mrb[0].mxu0
      %3521 = vdwg.mxu0
      %v3522 = vadd.f32 %v177, %v3517
      %v3523 = vld [vmem:[%s242] sm:$0xf]
      %v3524 = vld [vmem:[%s242 + $0x4] sm:$0xf]
      %v3525 = vld [vmem:[%s242 + $0x8] sm:$0xf]
      %v3526 = vld [vmem:[%s242 + $0xc] sm:$0xf]
      %v3528 = vunpack.c.l.b16 %v3461
      %v3529 = vpack.c.b16 %v3528, %v3528
      %v3531 = vshrl.u32 %v3529, 16
      %v3533 = vshll.u32 %v3529, 16
      %v3535 = vrot.slane %v3533, 1
      %v3536 = vor.u32 %v3531, %v3535
      %v3541 = vunpack.c.l.b16 %v3523
      %v3542 = vunpack.c.l.b16 %v3524
      %v3543 = vunpack.c.l.b16 %v3525
      %v3544 = vunpack.c.l.b16 %v3526
      %v3545 = vpack.c.b16 %v3542, %v3541
      %v3546 = vpack.c.b16 %v3544, %v3543
      %v3550 = vsel %vm197, %v3536, 0
      %3552 = vmatprep.subr.bf16.mxu0 0
      %3553 = vmatpush1.bf16.msra.mxu0 %v3545
      %3554 = vmatprep.subr.bf16.mxu0 0
      %3555 = vmatpush1.bf16.msra.mxu0 %v3546
      %3556 = vmatprep.subr.bf16.mxu0 0
      %3557 = vmatpush1.bf16.msra.mxu0 0
      %3558 = vmatprep.subr.bf16.mxu0 0
      %3559 = vmatpush1.bf16.msra.mxu0 0
      %3560 = vmatprep.subr.bf16.mxu0 0
      %3561 = vmatpush1.bf16.msra.mxu0 0
      %3562 = vmatprep.subr.bf16.mxu0 0
      %3563 = vmatpush1.bf16.msra.mxu0 0
      %3564 = vmatprep.subr.bf16.mxu0 0
      %3565 = vmatpush1.bf16.msra.mxu0 0
      %3566 = vmatprep.subr.bf16.mxu0 0
      %3567 = vmatpush1.bf16.msra.mxu0 0
      %3568 = vmatprep.subr.bf16.mxu0 0
      %3569 = vmatpush1.bf16.msra.mxu0 0
      %3570 = vmatprep.subr.bf16.mxu0 0
      %3571 = vmatpush1.bf16.msra.mxu0 0
      %3572 = vmatprep.subr.bf16.mxu0 0
      %3573 = vmatpush1.bf16.msra.mxu0 0
      %3574 = vmatprep.subr.bf16.mxu0 0
      %3575 = vmatpush1.bf16.msra.mxu0 0
      %3576 = vmatprep.subr.bf16.mxu0 0
      %3577 = vmatpush1.bf16.msra.mxu0 0
      %3578 = vmatprep.subr.bf16.mxu0 0
      %3579 = vmatpush1.bf16.msra.mxu0 0
      %3580 = vmatprep.subr.bf16.mxu0 0
      %3581 = vmatpush1.bf16.msra.mxu0 0
      %3582 = vmatprep.subr.bf16.mxu0 0
      %3583 = vmatpush1.bf16.msra.mxu0 0
      %3584 = vmatprep.mubr.bf16.mxu0 0
      %3585 = vmatmul.mubr.bf16.gmra.mrb[0].mxu0 %v3550
      %v3586 = vpop.f32.mrb[0].mxu0
      %v3587 = vadd.f32 0.0, %v3586
      %v3588 = vpop.f32.mrb[0].mxu0
      %v3589 = vpop.f32.mrb[0].mxu0
      %v3590 = vpop.f32.mrb[0].mxu0
      %3591 = vdwg.mxu0
      %v3592 = vadd.f32 %v3522, %v3587
      %v3593 = vld [vmem:[%s313] sm:$0xf]
      %v3594 = vld [vmem:[%s313 + $0x4] sm:$0xf]
      %v3595 = vld [vmem:[%s313 + $0x8] sm:$0xf]
      %v3596 = vld [vmem:[%s313 + $0xc] sm:$0xf]
      %v3597 = vrot.slane %v3529, 1
      %v3602 = vunpack.c.l.b16 %v3593
      %v3603 = vunpack.c.l.b16 %v3594
      %v3604 = vunpack.c.l.b16 %v3595
      %v3605 = vunpack.c.l.b16 %v3596
      %v3606 = vpack.c.b16 %v3603, %v3602
      %v3607 = vpack.c.b16 %v3605, %v3604
      %v3611 = vsel %vm197, %v3597, 0
      %3613 = vmatprep.subr.bf16.mxu0 0
      %3614 = vmatpush1.bf16.msra.mxu0 %v3606
      %3615 = vmatprep.subr.bf16.mxu0 0
      %3616 = vmatpush1.bf16.msra.mxu0 %v3607
      %3617 = vmatprep.subr.bf16.mxu0 0
      %3618 = vmatpush1.bf16.msra.mxu0 0
      %3619 = vmatprep.subr.bf16.mxu0 0
      %3620 = vmatpush1.bf16.msra.mxu0 0
      %3621 = vmatprep.subr.bf16.mxu0 0
      %3622 = vmatpush1.bf16.msra.mxu0 0
      %3623 = vmatprep.subr.bf16.mxu0 0
      %3624 = vmatpush1.bf16.msra.mxu0 0
      %3625 = vmatprep.subr.bf16.mxu0 0
      %3626 = vmatpush1.bf16.msra.mxu0 0
      %3627 = vmatprep.subr.bf16.mxu0 0
      %3628 = vmatpush1.bf16.msra.mxu0 0
      %3629 = vmatprep.subr.bf16.mxu0 0
      %3630 = vmatpush1.bf16.msra.mxu0 0
      %3631 = vmatprep.subr.bf16.mxu0 0
      %3632 = vmatpush1.bf16.msra.mxu0 0
      %3633 = vmatprep.subr.bf16.mxu0 0
      %3634 = vmatpush1.bf16.msra.mxu0 0
      %3635 = vmatprep.subr.bf16.mxu0 0
      %3636 = vmatpush1.bf16.msra.mxu0 0
      %3637 = vmatprep.subr.bf16.mxu0 0
      %3638 = vmatpush1.bf16.msra.mxu0 0
      %3639 = vmatprep.subr.bf16.mxu0 0
      %3640 = vmatpush1.bf16.msra.mxu0 0
      %3641 = vmatprep.subr.bf16.mxu0 0
      %3642 = vmatpush1.bf16.msra.mxu0 0
      %3643 = vmatprep.subr.bf16.mxu0 0
      %3644 = vmatpush1.bf16.msra.mxu0 0
      %3645 = vmatprep.mubr.bf16.mxu0 0
      %3646 = vmatmul.mubr.bf16.gmra.mrb[0].mxu0 %v3611
      %v3647 = vpop.f32.mrb[0].mxu0
      %v3648 = vadd.f32 0.0, %v3647
      %v3649 = vpop.f32.mrb[0].mxu0
      %v3650 = vpop.f32.mrb[0].mxu0
      %v3651 = vpop.f32.mrb[0].mxu0
      %3652 = vdwg.mxu0
      %v3653 = vadd.f32 %v3592, %v3648
      %v3654 = vld [vmem:[%s375] sm:$0xf]
      %v3655 = vld [vmem:[%s375 + $0x4] sm:$0xf]
      %v3656 = vld [vmem:[%s375 + $0x8] sm:$0xf]
      %v3657 = vld [vmem:[%s375 + $0xc] sm:$0xf]
      %v3659 = vunpack.c.l.b16 %v3462
      %v3660 = vpack.c.b16 %v3659, %v3528
      %v3662 = vshrl.u32 %v3660, 16
      %v3664 = vrot.slane %v3662, 1
      %v3665 = vshll.u32 %v3660, 16
      %v3667 = vrot.slane %v3665, 2
      %v3668 = vor.u32 %v3664, %v3667
      %v3673 = vunpack.c.l.b16 %v3654
      %v3674 = vunpack.c.l.b16 %v3655
      %v3675 = vunpack.c.l.b16 %v3656
      %v3676 = vunpack.c.l.b16 %v3657
      %v3677 = vpack.c.b16 %v3674, %v3673
      %v3678 = vpack.c.b16 %v3676, %v3675
      %v3682 = vsel %vm197, %v3668, 0
      %3684 = vmatprep.subr.bf16.mxu0 0
      %3685 = vmatpush1.bf16.msra.mxu0 %v3677
      %3686 = vmatprep.subr.bf16.mxu0 0
      %3687 = vmatpush1.bf16.msra.mxu0 %v3678
      %3688 = vmatprep.subr.bf16.mxu0 0
      %3689 = vmatpush1.bf16.msra.mxu0 0
      %3690 = vmatprep.subr.bf16.mxu0 0
      %3691 = vmatpush1.bf16.msra.mxu0 0
      %3692 = vmatprep.subr.bf16.mxu0 0
      %3693 = vmatpush1.bf16.msra.mxu0 0
      %3694 = vmatprep.subr.bf16.mxu0 0
      %3695 = vmatpush1.bf16.msra.mxu0 0
      %3696 = vmatprep.subr.bf16.mxu0 0
      %3697 = vmatpush1.bf16.msra.mxu0 0
      %3698 = vmatprep.subr.bf16.mxu0 0
      %3699 = vmatpush1.bf16.msra.mxu0 0
      %3700 = vmatprep.subr.bf16.mxu0 0
      %3701 = vmatpush1.bf16.msra.mxu0 0
      %3702 = vmatprep.subr.bf16.mxu0 0
      %3703 = vmatpush1.bf16.msra.mxu0 0
      %3704 = vmatprep.subr.bf16.mxu0 0
      %3705 = vmatpush1.bf16.msra.mxu0 0
      %3706 = vmatprep.subr.bf16.mxu0 0
      %3707 = vmatpush1.bf16.msra.mxu0 0
      %3708 = vmatprep.subr.bf16.mxu0 0
      %3709 = vmatpush1.bf16.msra.mxu0 0
      %3710 = vmatprep.subr.bf16.mxu0 0
      %3711 = vmatpush1.bf16.msra.mxu0 0
      %3712 = vmatprep.subr.bf16.mxu0 0
      %3713 = vmatpush1.bf16.msra.mxu0 0
      %3714 = vmatprep.subr.bf16.mxu0 0
      %3715 = vmatpush1.bf16.msra.mxu0 0
      %3716 = vmatprep.mubr.bf16.mxu0 0
      %3717 = vmatmul.mubr.bf16.gmra.mrb[0].mxu0 %v3682
      %v3718 = vpop.f32.mrb[0].mxu0
      %v3719 = vadd.f32 0.0, %v3718
      %v3720 = vpop.f32.mrb[0].mxu0
      %v3721 = vpop.f32.mrb[0].mxu0
      %v3722 = vpop.f32.mrb[0].mxu0
      %3723 = vdwg.mxu0
      %v3724 = vadd.f32 %v3653, %v3719
      %v3725 = vld [vmem:[%s447] sm:$0xf]
      %v3726 = vld [vmem:[%s447 + $0x4] sm:$0xf]
      %v3727 = vld [vmem:[%s447 + $0x8] sm:$0xf]
      %v3728 = vld [vmem:[%s447 + $0xc] sm:$0xf]
      %v3729 = vrot.slane %v3660, 2
      %v3734 = vunpack.c.l.b16 %v3725
      %v3735 = vunpack.c.l.b16 %v3726
      %v3736 = vunpack.c.l.b16 %v3727
      %v3737 = vunpack.c.l.b16 %v3728
      %v3738 = vpack.c.b16 %v3735, %v3734
      %v3739 = vpack.c.b16 %v3737, %v3736
      %v3743 = vsel %vm197, %v3729, 0
      %3745 = vmatprep.subr.bf16.mxu0 0
      %3746 = vmatpush1.bf16.msra.mxu0 %v3738
      %3747 = vmatprep.subr.bf16.mxu0 0
      %3748 = vmatpush1.bf16.msra.mxu0 %v3739
      %3749 = vmatprep.subr.bf16.mxu0 0
      %3750 = vmatpush1.bf16.msra.mxu0 0
      %3751 = vmatprep.subr.bf16.mxu0 0
      %3752 = vmatpush1.bf16.msra.mxu0 0
      %3753 = vmatprep.subr.bf16.mxu0 0
      %3754 = vmatpush1.bf16.msra.mxu0 0
      %3755 = vmatprep.subr.bf16.mxu0 0
      %3756 = vmatpush1.bf16.msra.mxu0 0
      %3757 = vmatprep.subr.bf16.mxu0 0
      %3758 = vmatpush1.bf16.msra.mxu0 0
      %3759 = vmatprep.subr.bf16.mxu0 0
      %3760 = vmatpush1.bf16.msra.mxu0 0
      %3761 = vmatprep.subr.bf16.mxu0 0
      %3762 = vmatpush1.bf16.msra.mxu0 0
      %3763 = vmatprep.subr.bf16.mxu0 0
      %3764 = vmatpush1.bf16.msra.mxu0 0
      %3765 = vmatprep.subr.bf16.mxu0 0
      %3766 = vmatpush1.bf16.msra.mxu0 0
      %3767 = vmatprep.subr.bf16.mxu0 0
      %3768 = vmatpush1.bf16.msra.mxu0 0
      %3769 = vmatprep.subr.bf16.mxu0 0
      %3770 = vmatpush1.bf16.msra.mxu0 0
      %3771 = vmatprep.subr.bf16.mxu0 0
      %3772 = vmatpush1.bf16.msra.mxu0 0
      %3773 = vmatprep.subr.bf16.mxu0 0
      %3774 = vmatpush1.bf16.msra.mxu0 0
      %3775 = vmatprep.subr.bf16.mxu0 0
      %3776 = vmatpush1.bf16.msra.mxu0 0
      %3777 = vmatprep.mubr.bf16.mxu0 0
      %3778 = vmatmul.mubr.bf16.gmra.mrb[0].mxu0 %v3743
      %v3779 = vpop.f32.mrb[0].mxu0
      %v3780 = vadd.f32 0.0, %v3779
      %v3781 = vpop.f32.mrb[0].mxu0
      %v3782 = vpop.f32.mrb[0].mxu0
      %v3783 = vpop.f32.mrb[0].mxu0
      %3784 = vdwg.mxu0
      %v3785 = vadd.f32 %v3724, %v3780
      %v3786 = vld [vmem:[%s1171] sm:$0xf]
      %v3787 = vld [vmem:[%s1171 + $0x4] sm:$0x1]
      %v3788 = vld [vmem:[%s512] sm:$0xf]
      %v3789 = vld [vmem:[%s512 + $0x4] sm:$0xf]
      %v3790 = vld [vmem:[%s512 + $0x8] sm:$0xf]
      %v3791 = vld [vmem:[%s512 + $0xc] sm:$0xf]
      %v3796 = vunpack.c.l.b16 %v3788
      %v3797 = vunpack.c.l.b16 %v3789
      %v3798 = vunpack.c.l.b16 %v3790
      %v3799 = vunpack.c.l.b16 %v3791
      %v3800 = vpack.c.b16 %v3797, %v3796
      %v3801 = vpack.c.b16 %v3799, %v3798
      %v3805 = vsel %vm197, %v3786, 0
      %3807 = vmatprep.subr.bf16.mxu0 0
      %3808 = vmatpush1.bf16.msra.mxu0 %v3800
      %3809 = vmatprep.subr.bf16.mxu0 0
      %3810 = vmatpush1.bf16.msra.mxu0 %v3801
      %3811 = vmatprep.subr.bf16.mxu0 0
      %3812 = vmatpush1.bf16.msra.mxu0 0
      %3813 = vmatprep.subr.bf16.mxu0 0
      %3814 = vmatpush1.bf16.msra.mxu0 0
      %3815 = vmatprep.subr.bf16.mxu0 0
      %3816 = vmatpush1.bf16.msra.mxu0 0
      %3817 = vmatprep.subr.bf16.mxu0 0
      %3818 = vmatpush1.bf16.msra.mxu0 0
      %3819 = vmatprep.subr.bf16.mxu0 0
      %3820 = vmatpush1.bf16.msra.mxu0 0
      %3821 = vmatprep.subr.bf16.mxu0 0
      %3822 = vmatpush1.bf16.msra.mxu0 0
      %3823 = vmatprep.subr.bf16.mxu0 0
      %3824 = vmatpush1.bf16.msra.mxu0 0
      %3825 = vmatprep.subr.bf16.mxu0 0
      %3826 = vmatpush1.bf16.msra.mxu0 0
      %3827 = vmatprep.subr.bf16.mxu0 0
      %3828 = vmatpush1.bf16.msra.mxu0 0
      %3829 = vmatprep.subr.bf16.mxu0 0
      %3830 = vmatpush1.bf16.msra.mxu0 0
      %3831 = vmatprep.subr.bf16.mxu0 0
      %3832 = vmatpush1.bf16.msra.mxu0 0
      %3833 = vmatprep.subr.bf16.mxu0 0
      %3834 = vmatpush1.bf16.msra.mxu0 0
      %3835 = vmatprep.subr.bf16.mxu0 0
      %3836 = vmatpush1.bf16.msra.mxu0 0
      %3837 = vmatprep.subr.bf16.mxu0 0
      %3838 = vmatpush1.bf16.msra.mxu0 0
      %3839 = vmatprep.mubr.bf16.mxu0 0
      %3840 = vmatmul.mubr.bf16.gmra.mrb[0].mxu0 %v3805
      %v3841 = vpop.f32.mrb[0].mxu0
      %v3842 = vadd.f32 0.0, %v3841
      %v3843 = vpop.f32.mrb[0].mxu0
      %v3844 = vpop.f32.mrb[0].mxu0
      %v3845 = vpop.f32.mrb[0].mxu0
      %3846 = vdwg.mxu0
      %v3847 = vadd.f32 %v3785, %v3842
      %v3848 = vld [vmem:[%s573] sm:$0xf]
      %v3849 = vld [vmem:[%s573 + $0x4] sm:$0xf]
      %v3850 = vld [vmem:[%s573 + $0x8] sm:$0xf]
      %v3851 = vld [vmem:[%s573 + $0xc] sm:$0xf]
      %v3853 = vunpack.c.l.b16 %v3786
      %v3854 = vpack.c.b16 %v3853, %v3853
      %v3856 = vshrl.u32 %v3854, 16
      %v3858 = vshll.u32 %v3854, 16
      %v3860 = vrot.slane %v3858, 1
      %v3861 = vor.u32 %v3856, %v3860
      %v3866 = vunpack.c.l.b16 %v3848
      %v3867 = vunpack.c.l.b16 %v3849
      %v3868 = vunpack.c.l.b16 %v3850
      %v3869 = vunpack.c.l.b16 %v3851
      %v3870 = vpack.c.b16 %v3867, %v3866
      %v3871 = vpack.c.b16 %v3869, %v3868
      %v3875 = vsel %vm197, %v3861, 0
      %3877 = vmatprep.subr.bf16.mxu0 0
      %3878 = vmatpush1.bf16.msra.mxu0 %v3870
      %3879 = vmatprep.subr.bf16.mxu0 0
      %3880 = vmatpush1.bf16.msra.mxu0 %v3871
      %3881 = vmatprep.subr.bf16.mxu0 0
      %3882 = vmatpush1.bf16.msra.mxu0 0
      %3883 = vmatprep.subr.bf16.mxu0 0
      %3884 = vmatpush1.bf16.msra.mxu0 0
      %3885 = vmatprep.subr.bf16.mxu0 0
      %3886 = vmatpush1.bf16.msra.mxu0 0
      %3887 = vmatprep.subr.bf16.mxu0 0
      %3888 = vmatpush1.bf16.msra.mxu0 0
      %3889 = vmatprep.subr.bf16.mxu0 0
      %3890 = vmatpush1.bf16.msra.mxu0 0
      %3891 = vmatprep.subr.bf16.mxu0 0
      %3892 = vmatpush1.bf16.msra.mxu0 0
      %3893 = vmatprep.subr.bf16.mxu0 0
      %3894 = vmatpush1.bf16.msra.mxu0 0
      %3895 = vmatprep.subr.bf16.mxu0 0
      %3896 = vmatpush1.bf16.msra.mxu0 0
      %3897 = vmatprep.subr.bf16.mxu0 0
      %3898 = vmatpush1.bf16.msra.mxu0 0
      %3899 = vmatprep.subr.bf16.mxu0 0
      %3900 = vmatpush1.bf16.msra.mxu0 0
      %3901 = vmatprep.subr.bf16.mxu0 0
      %3902 = vmatpush1.bf16.msra.mxu0 0
      %3903 = vmatprep.subr.bf16.mxu0 0
      %3904 = vmatpush1.bf16.msra.mxu0 0
      %3905 = vmatprep.subr.bf16.mxu0 0
      %3906 = vmatpush1.bf16.msra.mxu0 0
      %3907 = vmatprep.subr.bf16.mxu0 0
      %3908 = vmatpush1.bf16.msra.mxu0 0
      %3909 = vmatprep.mubr.bf16.mxu0 0
      %3910 = vmatmul.mubr.bf16.gmra.mrb[0].mxu0 %v3875
      %v3911 = vpop.f32.mrb[0].mxu0
      %v3912 = vadd.f32 0.0, %v3911
      %v3913 = vpop.f32.mrb[0].mxu0
      %v3914 = vpop.f32.mrb[0].mxu0
      %v3915 = vpop.f32.mrb[0].mxu0
      %3916 = vdwg.mxu0
      %v3917 = vadd.f32 %v3847, %v3912
      %v3918 = vld [vmem:[%s644] sm:$0xf]
      %v3919 = vld [vmem:[%s644 + $0x4] sm:$0xf]
      %v3920 = vld [vmem:[%s644 + $0x8] sm:$0xf]
      %v3921 = vld [vmem:[%s644 + $0xc] sm:$0xf]
      %v3922 = vrot.slane %v3854, 1
      %v3927 = vunpack.c.l.b16 %v3918
      %v3928 = vunpack.c.l.b16 %v3919
      %v3929 = vunpack.c.l.b16 %v3920
      %v3930 = vunpack.c.l.b16 %v3921
      %v3931 = vpack.c.b16 %v3928, %v3927
      %v3932 = vpack.c.b16 %v3930, %v3929
      %v3936 = vsel %vm197, %v3922, 0
      %3938 = vmatprep.subr.bf16.mxu0 0
      %3939 = vmatpush1.bf16.msra.mxu0 %v3931
      %3940 = vmatprep.subr.bf16.mxu0 0
      %3941 = vmatpush1.bf16.msra.mxu0 %v3932
      %3942 = vmatprep.subr.bf16.mxu0 0
      %3943 = vmatpush1.bf16.msra.mxu0 0
      %3944 = vmatprep.subr.bf16.mxu0 0
      %3945 = vmatpush1.bf16.msra.mxu0 0
      %3946 = vmatprep.subr.bf16.mxu0 0
      %3947 = vmatpush1.bf16.msra.mxu0 0
      %3948 = vmatprep.subr.bf16.mxu0 0
      %3949 = vmatpush1.bf16.msra.mxu0 0
      %3950 = vmatprep.subr.bf16.mxu0 0
      %3951 = vmatpush1.bf16.msra.mxu0 0
      %3952 = vmatprep.subr.bf16.mxu0 0
      %3953 = vmatpush1.bf16.msra.mxu0 0
      %3954 = vmatprep.subr.bf16.mxu0 0
      %3955 = vmatpush1.bf16.msra.mxu0 0
      %3956 = vmatprep.subr.bf16.mxu0 0
      %3957 = vmatpush1.bf16.msra.mxu0 0
      %3958 = vmatprep.subr.bf16.mxu0 0
      %3959 = vmatpush1.bf16.msra.mxu0 0
      %3960 = vmatprep.subr.bf16.mxu0 0
      %3961 = vmatpush1.bf16.msra.mxu0 0
      %3962 = vmatprep.subr.bf16.mxu0 0
      %3963 = vmatpush1.bf16.msra.mxu0 0
      %3964 = vmatprep.subr.bf16.mxu0 0
      %3965 = vmatpush1.bf16.msra.mxu0 0
      %3966 = vmatprep.subr.bf16.mxu0 0
      %3967 = vmatpush1.bf16.msra.mxu0 0
      %3968 = vmatprep.subr.bf16.mxu0 0
      %3969 = vmatpush1.bf16.msra.mxu0 0
      %3970 = vmatprep.mubr.bf16.mxu0 0
      %3971 = vmatmul.mubr.bf16.gmra.mrb[0].mxu0 %v3936
      %v3972 = vpop.f32.mrb[0].mxu0
      %v3973 = vadd.f32 0.0, %v3972
      %v3974 = vpop.f32.mrb[0].mxu0
      %v3975 = vpop.f32.mrb[0].mxu0
      %v3976 = vpop.f32.mrb[0].mxu0
      %3977 = vdwg.mxu0
      %v3978 = vadd.f32 %v3917, %v3973
      %v3979 = vld [vmem:[%s706] sm:$0xf]
      %v3980 = vld [vmem:[%s706 + $0x4] sm:$0xf]
      %v3981 = vld [vmem:[%s706 + $0x8] sm:$0xf]
      %v3982 = vld [vmem:[%s706 + $0xc] sm:$0xf]
      %v3984 = vunpack.c.l.b16 %v3787
      %v3985 = vpack.c.b16 %v3984, %v3853
      %v3987 = vshrl.u32 %v3985, 16
      %v3989 = vrot.slane %v3987, 1
      %v3990 = vshll.u32 %v3985, 16
      %v3992 = vrot.slane %v3990, 2
      %v3993 = vor.u32 %v3989, %v3992
      %v3998 = vunpack.c.l.b16 %v3979
      %v3999 = vunpack.c.l.b16 %v3980
      %v4000 = vunpack.c.l.b16 %v3981
      %v4001 = vunpack.c.l.b16 %v3982
      %v4002 = vpack.c.b16 %v3999, %v3998
      %v4003 = vpack.c.b16 %v4001, %v4000
      %v4007 = vsel %vm197, %v3993, 0
      %4009 = vmatprep.subr.bf16.mxu0 0
      %4010 = vmatpush1.bf16.msra.mxu0 %v4002
      %4011 = vmatprep.subr.bf16.mxu0 0
      %4012 = vmatpush1.bf16.msra.mxu0 %v4003
      %4013 = vmatprep.subr.bf16.mxu0 0
      %4014 = vmatpush1.bf16.msra.mxu0 0
      %4015 = vmatprep.subr.bf16.mxu0 0
      %4016 = vmatpush1.bf16.msra.mxu0 0
      %4017 = vmatprep.subr.bf16.mxu0 0
      %4018 = vmatpush1.bf16.msra.mxu0 0
      %4019 = vmatprep.subr.bf16.mxu0 0
      %4020 = vmatpush1.bf16.msra.mxu0 0
      %4021 = vmatprep.subr.bf16.mxu0 0
      %4022 = vmatpush1.bf16.msra.mxu0 0
      %4023 = vmatprep.subr.bf16.mxu0 0
      %4024 = vmatpush1.bf16.msra.mxu0 0
      %4025 = vmatprep.subr.bf16.mxu0 0
      %4026 = vmatpush1.bf16.msra.mxu0 0
      %4027 = vmatprep.subr.bf16.mxu0 0
      %4028 = vmatpush1.bf16.msra.mxu0 0
      %4029 = vmatprep.subr.bf16.mxu0 0
      %4030 = vmatpush1.bf16.msra.mxu0 0
      %4031 = vmatprep.subr.bf16.mxu0 0
      %4032 = vmatpush1.bf16.msra.mxu0 0
      %4033 = vmatprep.subr.bf16.mxu0 0
      %4034 = vmatpush1.bf16.msra.mxu0 0
      %4035 = vmatprep.subr.bf16.mxu0 0
      %4036 = vmatpush1.bf16.msra.mxu0 0
      %4037 = vmatprep.subr.bf16.mxu0 0
      %4038 = vmatpush1.bf16.msra.mxu0 0
      %4039 = vmatprep.subr.bf16.mxu0 0
      %4040 = vmatpush1.bf16.msra.mxu0 0
      %4041 = vmatprep.mubr.bf16.mxu0 0
      %4042 = vmatmul.mubr.bf16.gmra.mrb[0].mxu0 %v4007
      %v4043 = vpop.f32.mrb[0].mxu0
      %v4044 = vadd.f32 0.0, %v4043
      %v4045 = vpop.f32.mrb[0].mxu0
      %v4046 = vpop.f32.mrb[0].mxu0
      %v4047 = vpop.f32.mrb[0].mxu0
      %4048 = vdwg.mxu0
      %v4049 = vadd.f32 %v3978, %v4044
      %v4050 = vld [vmem:[%s778] sm:$0xf]
      %v4051 = vld [vmem:[%s778 + $0x4] sm:$0xf]
      %v4052 = vld [vmem:[%s778 + $0x8] sm:$0xf]
      %v4053 = vld [vmem:[%s778 + $0xc] sm:$0xf]
      %v4054 = vrot.slane %v3985, 2
      %v4059 = vunpack.c.l.b16 %v4050
      %v4060 = vunpack.c.l.b16 %v4051
      %v4061 = vunpack.c.l.b16 %v4052
      %v4062 = vunpack.c.l.b16 %v4053
      %v4063 = vpack.c.b16 %v4060, %v4059
      %v4064 = vpack.c.b16 %v4062, %v4061
      %v4068 = vsel %vm197, %v4054, 0
      %4070 = vmatprep.subr.bf16.mxu0 0
      %4071 = vmatpush1.bf16.msra.mxu0 %v4063
      %4072 = vmatprep.subr.bf16.mxu0 0
      %4073 = vmatpush1.bf16.msra.mxu0 %v4064
      %4074 = vmatprep.subr.bf16.mxu0 0
      %4075 = vmatpush1.bf16.msra.mxu0 0
      %4076 = vmatprep.subr.bf16.mxu0 0
      %4077 = vmatpush1.bf16.msra.mxu0 0
      %4078 = vmatprep.subr.bf16.mxu0 0
      %4079 = vmatpush1.bf16.msra.mxu0 0
      %4080 = vmatprep.subr.bf16.mxu0 0
      %4081 = vmatpush1.bf16.msra.mxu0 0
      %4082 = vmatprep.subr.bf16.mxu0 0
      %4083 = vmatpush1.bf16.msra.mxu0 0
      %4084 = vmatprep.subr.bf16.mxu0 0
      %4085 = vmatpush1.bf16.msra.mxu0 0
      %4086 = vmatprep.subr.bf16.mxu0 0
      %4087 = vmatpush1.bf16.msra.mxu0 0
      %4088 = vmatprep.subr.bf16.mxu0 0
      %4089 = vmatpush1.bf16.msra.mxu0 0
      %4090 = vmatprep.subr.bf16.mxu0 0
      %4091 = vmatpush1.bf16.msra.mxu0 0
      %4092 = vmatprep.subr.bf16.mxu0 0
      %4093 = vmatpush1.bf16.msra.mxu0 0
      %4094 = vmatprep.subr.bf16.mxu0 0
      %4095 = vmatpush1.bf16.msra.mxu0 0
      %4096 = vmatprep.subr.bf16.mxu0 0
      %4097 = vmatpush1.bf16.msra.mxu0 0
      %4098 = vmatprep.subr.bf16.mxu0 0
      %4099 = vmatpush1.bf16.msra.mxu0 0
      %4100 = vmatprep.subr.bf16.mxu0 0
      %4101 = vmatpush1.bf16.msra.mxu0 0
      %4102 = vmatprep.mubr.bf16.mxu0 0
      %4103 = vmatmul.mubr.bf16.gmra.mrb[0].mxu0 %v4068
      %v4104 = vpop.f32.mrb[0].mxu0
      %v4105 = vadd.f32 0.0, %v4104
      %v4106 = vpop.f32.mrb[0].mxu0
      %v4107 = vpop.f32.mrb[0].mxu0
      %v4108 = vpop.f32.mrb[0].mxu0
      %4109 = vdwg.mxu0
      %v4110 = vadd.f32 %v4049, %v4105
      %v4111 = vld [vmem:[%s1502] sm:$0xf]
      %v4112 = vld [vmem:[%s1502 + $0x4] sm:$0x1]
      %v4113 = vld [vmem:[%s843] sm:$0xf]
      %v4114 = vld [vmem:[%s843 + $0x4] sm:$0xf]
      %v4115 = vld [vmem:[%s843 + $0x8] sm:$0xf]
      %v4116 = vld [vmem:[%s843 + $0xc] sm:$0xf]
      %v4121 = vunpack.c.l.b16 %v4113
      %v4122 = vunpack.c.l.b16 %v4114
      %v4123 = vunpack.c.l.b16 %v4115
      %v4124 = vunpack.c.l.b16 %v4116
      %v4125 = vpack.c.b16 %v4122, %v4121
      %v4126 = vpack.c.b16 %v4124, %v4123
      %v4130 = vsel %vm197, %v4111, 0
      %4132 = vmatprep.subr.bf16.mxu0 0
      %4133 = vmatpush1.bf16.msra.mxu0 %v4125
      %4134 = vmatprep.subr.bf16.mxu0 0
      %4135 = vmatpush1.bf16.msra.mxu0 %v4126
      %4136 = vmatprep.subr.bf16.mxu0 0
      %4137 = vmatpush1.bf16.msra.mxu0 0
      %4138 = vmatprep.subr.bf16.mxu0 0
      %4139 = vmatpush1.bf16.msra.mxu0 0
      %4140 = vmatprep.subr.bf16.mxu0 0
      %4141 = vmatpush1.bf16.msra.mxu0 0
      %4142 = vmatprep.subr.bf16.mxu0 0
      %4143 = vmatpush1.bf16.msra.mxu0 0
      %4144 = vmatprep.subr.bf16.mxu0 0
      %4145 = vmatpush1.bf16.msra.mxu0 0
      %4146 = vmatprep.subr.bf16.mxu0 0
      %4147 = vmatpush1.bf16.msra.mxu0 0
      %4148 = vmatprep.subr.bf16.mxu0 0
      %4149 = vmatpush1.bf16.msra.mxu0 0
      %4150 = vmatprep.subr.bf16.mxu0 0
      %4151 = vmatpush1.bf16.msra.mxu0 0
      %4152 = vmatprep.subr.bf16.mxu0 0
      %4153 = vmatpush1.bf16.msra.mxu0 0
      %4154 = vmatprep.subr.bf16.mxu0 0
      %4155 = vmatpush1.bf16.msra.mxu0 0
      %4156 = vmatprep.subr.bf16.mxu0 0
      %4157 = vmatpush1.bf16.msra.mxu0 0
      %4158 = vmatprep.subr.bf16.mxu0 0
      %4159 = vmatpush1.bf16.msra.mxu0 0
      %4160 = vmatprep.subr.bf16.mxu0 0
      %4161 = vmatpush1.bf16.msra.mxu0 0
      %4162 = vmatprep.subr.bf16.mxu0 0
      %4163 = vmatpush1.bf16.msra.mxu0 0
      %4164 = vmatprep.mubr.bf16.mxu0 0
      %4165 = vmatmul.mubr.bf16.gmra.mrb[0].mxu0 %v4130
      %v4166 = vpop.f32.mrb[0].mxu0
      %v4167 = vadd.f32 0.0, %v4166
      %v4168 = vpop.f32.mrb[0].mxu0
      %v4169 = vpop.f32.mrb[0].mxu0
      %v4170 = vpop.f32.mrb[0].mxu0
      %4171 = vdwg.mxu0
      %v4172 = vadd.f32 %v4110, %v4167
      %v4173 = vld [vmem:[%s904] sm:$0xf]
      %v4174 = vld [vmem:[%s904 + $0x4] sm:$0xf]
      %v4175 = vld [vmem:[%s904 + $0x8] sm:$0xf]
      %v4176 = vld [vmem:[%s904 + $0xc] sm:$0xf]
      %v4178 = vunpack.c.l.b16 %v4111
      %v4179 = vpack.c.b16 %v4178, %v4178
      %v4181 = vshrl.u32 %v4179, 16
      %v4183 = vshll.u32 %v4179, 16
      %v4185 = vrot.slane %v4183, 1
      %v4186 = vor.u32 %v4181, %v4185
      %v4191 = vunpack.c.l.b16 %v4173
      %v4192 = vunpack.c.l.b16 %v4174
      %v4193 = vunpack.c.l.b16 %v4175
      %v4194 = vunpack.c.l.b16 %v4176
      %v4195 = vpack.c.b16 %v4192, %v4191
      %v4196 = vpack.c.b16 %v4194, %v4193
      %v4200 = vsel %vm197, %v4186, 0
      %4202 = vmatprep.subr.bf16.mxu0 0
      %4203 = vmatpush1.bf16.msra.mxu0 %v4195
      %4204 = vmatprep.subr.bf16.mxu0 0
      %4205 = vmatpush1.bf16.msra.mxu0 %v4196
      %4206 = vmatprep.subr.bf16.mxu0 0
      %4207 = vmatpush1.bf16.msra.mxu0 0
      %4208 = vmatprep.subr.bf16.mxu0 0
      %4209 = vmatpush1.bf16.msra.mxu0 0
      %4210 = vmatprep.subr.bf16.mxu0 0
      %4211 = vmatpush1.bf16.msra.mxu0 0
      %4212 = vmatprep.subr.bf16.mxu0 0
      %4213 = vmatpush1.bf16.msra.mxu0 0
      %4214 = vmatprep.subr.bf16.mxu0 0
      %4215 = vmatpush1.bf16.msra.mxu0 0
      %4216 = vmatprep.subr.bf16.mxu0 0
      %4217 = vmatpush1.bf16.msra.mxu0 0
      %4218 = vmatprep.subr.bf16.mxu0 0
      %4219 = vmatpush1.bf16.msra.mxu0 0
      %4220 = vmatprep.subr.bf16.mxu0 0
      %4221 = vmatpush1.bf16.msra.mxu0 0
      %4222 = vmatprep.subr.bf16.mxu0 0
      %4223 = vmatpush1.bf16.msra.mxu0 0
      %4224 = vmatprep.subr.bf16.mxu0 0
      %4225 = vmatpush1.bf16.msra.mxu0 0
      %4226 = vmatprep.subr.bf16.mxu0 0
      %4227 = vmatpush1.bf16.msra.mxu0 0
      %4228 = vmatprep.subr.bf16.mxu0 0
      %4229 = vmatpush1.bf16.msra.mxu0 0
      %4230 = vmatprep.subr.bf16.mxu0 0
      %4231 = vmatpush1.bf16.msra.mxu0 0
      %4232 = vmatprep.subr.bf16.mxu0 0
      %4233 = vmatpush1.bf16.msra.mxu0 0
      %4234 = vmatprep.mubr.bf16.mxu0 0
      %4235 = vmatmul.mubr.bf16.gmra.mrb[0].mxu0 %v4200
      %v4236 = vpop.f32.mrb[0].mxu0
      %v4237 = vadd.f32 0.0, %v4236
      %v4238 = vpop.f32.mrb[0].mxu0
      %v4239 = vpop.f32.mrb[0].mxu0
      %v4240 = vpop.f32.mrb[0].mxu0
      %4241 = vdwg.mxu0
      %v4242 = vadd.f32 %v4172, %v4237
      %v4243 = vld [vmem:[%s975] sm:$0xf]
      %v4244 = vld [vmem:[%s975 + $0x4] sm:$0xf]
      %v4245 = vld [vmem:[%s975 + $0x8] sm:$0xf]
      %v4246 = vld [vmem:[%s975 + $0xc] sm:$0xf]
      %v4247 = vrot.slane %v4179, 1
      %v4252 = vunpack.c.l.b16 %v4243
      %v4253 = vunpack.c.l.b16 %v4244
      %v4254 = vunpack.c.l.b16 %v4245
      %v4255 = vunpack.c.l.b16 %v4246
      %v4256 = vpack.c.b16 %v4253, %v4252
      %v4257 = vpack.c.b16 %v4255, %v4254
      %v4261 = vsel %vm197, %v4247, 0
      %4263 = vmatprep.subr.bf16.mxu0 0
      %4264 = vmatpush1.bf16.msra.mxu0 %v4256
      %4265 = vmatprep.subr.bf16.mxu0 0
      %4266 = vmatpush1.bf16.msra.mxu0 %v4257
      %4267 = vmatprep.subr.bf16.mxu0 0
      %4268 = vmatpush1.bf16.msra.mxu0 0
      %4269 = vmatprep.subr.bf16.mxu0 0
      %4270 = vmatpush1.bf16.msra.mxu0 0
      %4271 = vmatprep.subr.bf16.mxu0 0
      %4272 = vmatpush1.bf16.msra.mxu0 0
      %4273 = vmatprep.subr.bf16.mxu0 0
      %4274 = vmatpush1.bf16.msra.mxu0 0
      %4275 = vmatprep.subr.bf16.mxu0 0
      %4276 = vmatpush1.bf16.msra.mxu0 0
      %4277 = vmatprep.subr.bf16.mxu0 0
      %4278 = vmatpush1.bf16.msra.mxu0 0
      %4279 = vmatprep.subr.bf16.mxu0 0
      %4280 = vmatpush1.bf16.msra.mxu0 0
      %4281 = vmatprep.subr.bf16.mxu0 0
      %4282 = vmatpush1.bf16.msra.mxu0 0
      %4283 = vmatprep.subr.bf16.mxu0 0
      %4284 = vmatpush1.bf16.msra.mxu0 0
      %4285 = vmatprep.subr.bf16.mxu0 0
      %4286 = vmatpush1.bf16.msra.mxu0 0
      %4287 = vmatprep.subr.bf16.mxu0 0
      %4288 = vmatpush1.bf16.msra.mxu0 0
      %4289 = vmatprep.subr.bf16.mxu0 0
      %4290 = vmatpush1.bf16.msra.mxu0 0
      %4291 = vmatprep.subr.bf16.mxu0 0
      %4292 = vmatpush1.bf16.msra.mxu0 0
      %4293 = vmatprep.subr.bf16.mxu0 0
      %4294 = vmatpush1.bf16.msra.mxu0 0
      %4295 = vmatprep.mubr.bf16.mxu0 0
      %4296 = vmatmul.mubr.bf16.gmra.mrb[0].mxu0 %v4261
      %v4297 = vpop.f32.mrb[0].mxu0
      %v4298 = vadd.f32 0.0, %v4297
      %v4299 = vpop.f32.mrb[0].mxu0
      %v4300 = vpop.f32.mrb[0].mxu0
      %v4301 = vpop.f32.mrb[0].mxu0
      %4302 = vdwg.mxu0
      %v4303 = vadd.f32 %v4242, %v4298
      %v4304 = vld [vmem:[%s1037] sm:$0xf]
      %v4305 = vld [vmem:[%s1037 + $0x4] sm:$0xf]
      %v4306 = vld [vmem:[%s1037 + $0x8] sm:$0xf]
      %v4307 = vld [vmem:[%s1037 + $0xc] sm:$0xf]
      %v4309 = vunpack.c.l.b16 %v4112
      %v4310 = vpack.c.b16 %v4309, %v4178
      %v4312 = vshrl.u32 %v4310, 16
      %v4314 = vrot.slane %v4312, 1
      %v4315 = vshll.u32 %v4310, 16
      %v4317 = vrot.slane %v4315, 2
      %v4318 = vor.u32 %v4314, %v4317
      %v4323 = vunpack.c.l.b16 %v4304
      %v4324 = vunpack.c.l.b16 %v4305
      %v4325 = vunpack.c.l.b16 %v4306
      %v4326 = vunpack.c.l.b16 %v4307
      %v4327 = vpack.c.b16 %v4324, %v4323
      %v4328 = vpack.c.b16 %v4326, %v4325
      %v4332 = vsel %vm197, %v4318, 0
      %4334 = vmatprep.subr.bf16.mxu0 0
      %4335 = vmatpush1.bf16.msra.mxu0 %v4327
      %4336 = vmatprep.subr.bf16.mxu0 0
      %4337 = vmatpush1.bf16.msra.mxu0 %v4328
      %4338 = vmatprep.subr.bf16.mxu0 0
      %4339 = vmatpush1.bf16.msra.mxu0 0
      %4340 = vmatprep.subr.bf16.mxu0 0
      %4341 = vmatpush1.bf16.msra.mxu0 0
      %4342 = vmatprep.subr.bf16.mxu0 0
      %4343 = vmatpush1.bf16.msra.mxu0 0
      %4344 = vmatprep.subr.bf16.mxu0 0
      %4345 = vmatpush1.bf16.msra.mxu0 0
      %4346 = vmatprep.subr.bf16.mxu0 0
      %4347 = vmatpush1.bf16.msra.mxu0 0
      %4348 = vmatprep.subr.bf16.mxu0 0
      %4349 = vmatpush1.bf16.msra.mxu0 0
      %4350 = vmatprep.subr.bf16.mxu0 0
      %4351 = vmatpush1.bf16.msra.mxu0 0
      %4352 = vmatprep.subr.bf16.mxu0 0
      %4353 = vmatpush1.bf16.msra.mxu0 0
      %4354 = vmatprep.subr.bf16.mxu0 0
      %4355 = vmatpush1.bf16.msra.mxu0 0
      %4356 = vmatprep.subr.bf16.mxu0 0
      %4357 = vmatpush1.bf16.msra.mxu0 0
      %4358 = vmatprep.subr.bf16.mxu0 0
      %4359 = vmatpush1.bf16.msra.mxu0 0
      %4360 = vmatprep.subr.bf16.mxu0 0
      %4361 = vmatpush1.bf16.msra.mxu0 0
      %4362 = vmatprep.subr.bf16.mxu0 0
      %4363 = vmatpush1.bf16.msra.mxu0 0
      %4364 = vmatprep.subr.bf16.mxu0 0
      %4365 = vmatpush1.bf16.msra.mxu0 0
      %4366 = vmatprep.mubr.bf16.mxu0 0
      %4367 = vmatmul.mubr.bf16.gmra.mrb[0].mxu0 %v4332
      %v4368 = vpop.f32.mrb[0].mxu0
      %v4369 = vadd.f32 0.0, %v4368
      %v4370 = vpop.f32.mrb[0].mxu0
      %v4371 = vpop.f32.mrb[0].mxu0
      %v4372 = vpop.f32.mrb[0].mxu0
      %4373 = vdwg.mxu0
      %v4374 = vadd.f32 %v4303, %v4369
      %v4375 = vld [vmem:[%s1109] sm:$0xf]
      %v4376 = vld [vmem:[%s1109 + $0x4] sm:$0xf]
      %v4377 = vld [vmem:[%s1109 + $0x8] sm:$0xf]
      %v4378 = vld [vmem:[%s1109 + $0xc] sm:$0xf]
      %v4379 = vrot.slane %v4310, 2
      %v4384 = vunpack.c.l.b16 %v4375
      %v4385 = vunpack.c.l.b16 %v4376
      %v4386 = vunpack.c.l.b16 %v4377
      %v4387 = vunpack.c.l.b16 %v4378
      %v4388 = vpack.c.b16 %v4385, %v4384
      %v4389 = vpack.c.b16 %v4387, %v4386
      %v4393 = vsel %vm197, %v4379, 0
      %4395 = vmatprep.subr.bf16.mxu0 0
      %4396 = vmatpush1.bf16.msra.mxu0 %v4388
      %4397 = vmatprep.subr.bf16.mxu0 0
      %4398 = vmatpush1.bf16.msra.mxu0 %v4389
      %4399 = vmatprep.subr.bf16.mxu0 0
      %4400 = vmatpush1.bf16.msra.mxu0 0
      %4401 = vmatprep.subr.bf16.mxu0 0
      %4402 = vmatpush1.bf16.msra.mxu0 0
      %4403 = vmatprep.subr.bf16.mxu0 0
      %4404 = vmatpush1.bf16.msra.mxu0 0
      %4405 = vmatprep.subr.bf16.mxu0 0
      %4406 = vmatpush1.bf16.msra.mxu0 0
      %4407 = vmatprep.subr.bf16.mxu0 0
      %4408 = vmatpush1.bf16.msra.mxu0 0
      %4409 = vmatprep.subr.bf16.mxu0 0
      %4410 = vmatpush1.bf16.msra.mxu0 0
      %4411 = vmatprep.subr.bf16.mxu0 0
      %4412 = vmatpush1.bf16.msra.mxu0 0
      %4413 = vmatprep.subr.bf16.mxu0 0
      %4414 = vmatpush1.bf16.msra.mxu0 0
      %4415 = vmatprep.subr.bf16.mxu0 0
      %4416 = vmatpush1.bf16.msra.mxu0 0
      %4417 = vmatprep.subr.bf16.mxu0 0
      %4418 = vmatpush1.bf16.msra.mxu0 0
      %4419 = vmatprep.subr.bf16.mxu0 0
      %4420 = vmatpush1.bf16.msra.mxu0 0
      %4421 = vmatprep.subr.bf16.mxu0 0
      %4422 = vmatpush1.bf16.msra.mxu0 0
      %4423 = vmatprep.subr.bf16.mxu0 0
      %4424 = vmatpush1.bf16.msra.mxu0 0
      %4425 = vmatprep.subr.bf16.mxu0 0
      %4426 = vmatpush1.bf16.msra.mxu0 0
      %4427 = vmatprep.mubr.bf16.mxu0 0
      %4428 = vmatmul.mubr.bf16.gmra.mrb[0].mxu0 %v4393
      %v4429 = vpop.f32.mrb[0].mxu0
      %v4430 = vadd.f32 0.0, %v4429
      %v4431 = vpop.f32.mrb[0].mxu0
      %v4432 = vpop.f32.mrb[0].mxu0
      %v4433 = vpop.f32.mrb[0].mxu0
      %4434 = vdwg.mxu0
      %v4435 = vadd.f32 %v4374, %v4430
      %v4436 = vld [vmem:[%s3134] sm:$0xf]
      %v4437 = vld [vmem:[%s3134 + $0x4] sm:$0x1]
      %v4438 = vld [vmem:[%s1174] sm:$0xf]
      %v4439 = vld [vmem:[%s1174 + $0x4] sm:$0xf]
      %v4440 = vld [vmem:[%s1174 + $0x8] sm:$0xf]
      %v4441 = vld [vmem:[%s1174 + $0xc] sm:$0xf]
      %v4446 = vunpack.c.l.b16 %v4438
      %v4447 = vunpack.c.l.b16 %v4439
      %v4448 = vunpack.c.l.b16 %v4440
      %v4449 = vunpack.c.l.b16 %v4441
      %v4450 = vpack.c.b16 %v4447, %v4446
      %v4451 = vpack.c.b16 %v4449, %v4448
      %v4455 = vsel %vm197, %v4436, 0
      %4457 = vmatprep.subr.bf16.mxu0 0
      %4458 = vmatpush1.bf16.msra.mxu0 %v4450
      %4459 = vmatprep.subr.bf16.mxu0 0
      %4460 = vmatpush1.bf16.msra.mxu0 %v4451
      %4461 = vmatprep.subr.bf16.mxu0 0
      %4462 = vmatpush1.bf16.msra.mxu0 0
      %4463 = vmatprep.subr.bf16.mxu0 0
      %4464 = vmatpush1.bf16.msra.mxu0 0
      %4465 = vmatprep.subr.bf16.mxu0 0
      %4466 = vmatpush1.bf16.msra.mxu0 0
      %4467 = vmatprep.subr.bf16.mxu0 0
      %4468 = vmatpush1.bf16.msra.mxu0 0
      %4469 = vmatprep.subr.bf16.mxu0 0
      %4470 = vmatpush1.bf16.msra.mxu0 0
      %4471 = vmatprep.subr.bf16.mxu0 0
      %4472 = vmatpush1.bf16.msra.mxu0 0
      %4473 = vmatprep.subr.bf16.mxu0 0
      %4474 = vmatpush1.bf16.msra.mxu0 0
      %4475 = vmatprep.subr.bf16.mxu0 0
      %4476 = vmatpush1.bf16.msra.mxu0 0
      %4477 = vmatprep.subr.bf16.mxu0 0
      %4478 = vmatpush1.bf16.msra.mxu0 0
      %4479 = vmatprep.subr.bf16.mxu0 0
      %4480 = vmatpush1.bf16.msra.mxu0 0
      %4481 = vmatprep.subr.bf16.mxu0 0
      %4482 = vmatpush1.bf16.msra.mxu0 0
      %4483 = vmatprep.subr.bf16.mxu0 0
      %4484 = vmatpush1.bf16.msra.mxu0 0
      %4485 = vmatprep.subr.bf16.mxu0 0
      %4486 = vmatpush1.bf16.msra.mxu0 0
      %4487 = vmatprep.subr.bf16.mxu0 0
      %4488 = vmatpush1.bf16.msra.mxu0 0
      %4489 = vmatprep.mubr.bf16.mxu0 0
      %4490 = vmatmul.mubr.bf16.gmra.mrb[0].mxu0 %v4455
      %v4491 = vpop.f32.mrb[0].mxu0
      %v4492 = vadd.f32 0.0, %v4491
      %v4493 = vpop.f32.mrb[0].mxu0
      %v4494 = vpop.f32.mrb[0].mxu0
      %v4495 = vpop.f32.mrb[0].mxu0
      %4496 = vdwg.mxu0
      %v4497 = vadd.f32 %v4435, %v4492
      %v4498 = vld [vmem:[%s1235] sm:$0xf]
      %v4499 = vld [vmem:[%s1235 + $0x4] sm:$0xf]
      %v4500 = vld [vmem:[%s1235 + $0x8] sm:$0xf]
      %v4501 = vld [vmem:[%s1235 + $0xc] sm:$0xf]
      %v4503 = vunpack.c.l.b16 %v4436
      %v4504 = vpack.c.b16 %v4503, %v4503
      %v4506 = vshrl.u32 %v4504, 16
      %v4508 = vshll.u32 %v4504, 16
      %v4510 = vrot.slane %v4508, 1
      %v4511 = vor.u32 %v4506, %v4510
      %v4516 = vunpack.c.l.b16 %v4498
      %v4517 = vunpack.c.l.b16 %v4499
      %v4518 = vunpack.c.l.b16 %v4500
      %v4519 = vunpack.c.l.b16 %v4501
      %v4520 = vpack.c.b16 %v4517, %v4516
      %v4521 = vpack.c.b16 %v4519, %v4518
      %v4525 = vsel %vm197, %v4511, 0
      %4527 = vmatprep.subr.bf16.mxu0 0
      %4528 = vmatpush1.bf16.msra.mxu0 %v4520
      %4529 = vmatprep.subr.bf16.mxu0 0
      %4530 = vmatpush1.bf16.msra.mxu0 %v4521
      %4531 = vmatprep.subr.bf16.mxu0 0
      %4532 = vmatpush1.bf16.msra.mxu0 0
      %4533 = vmatprep.subr.bf16.mxu0 0
      %4534 = vmatpush1.bf16.msra.mxu0 0
      %4535 = vmatprep.subr.bf16.mxu0 0
      %4536 = vmatpush1.bf16.msra.mxu0 0
      %4537 = vmatprep.subr.bf16.mxu0 0
      %4538 = vmatpush1.bf16.msra.mxu0 0
      %4539 = vmatprep.subr.bf16.mxu0 0
      %4540 = vmatpush1.bf16.msra.mxu0 0
      %4541 = vmatprep.subr.bf16.mxu0 0
      %4542 = vmatpush1.bf16.msra.mxu0 0
      %4543 = vmatprep.subr.bf16.mxu0 0
      %4544 = vmatpush1.bf16.msra.mxu0 0
      %4545 = vmatprep.subr.bf16.mxu0 0
      %4546 = vmatpush1.bf16.msra.mxu0 0
      %4547 = vmatprep.subr.bf16.mxu0 0
      %4548 = vmatpush1.bf16.msra.mxu0 0
      %4549 = vmatprep.subr.bf16.mxu0 0
      %4550 = vmatpush1.bf16.msra.mxu0 0
      %4551 = vmatprep.subr.bf16.mxu0 0
      %4552 = vmatpush1.bf16.msra.mxu0 0
      %4553 = vmatprep.subr.bf16.mxu0 0
      %4554 = vmatpush1.bf16.msra.mxu0 0
      %4555 = vmatprep.subr.bf16.mxu0 0
      %4556 = vmatpush1.bf16.msra.mxu0 0
      %4557 = vmatprep.subr.bf16.mxu0 0
      %4558 = vmatpush1.bf16.msra.mxu0 0
      %4559 = vmatprep.mubr.bf16.mxu0 0
      %4560 = vmatmul.mubr.bf16.gmra.mrb[0].mxu0 %v4525
      %v4561 = vpop.f32.mrb[0].mxu0
      %v4562 = vadd.f32 0.0, %v4561
      %v4563 = vpop.f32.mrb[0].mxu0
      %v4564 = vpop.f32.mrb[0].mxu0
      %v4565 = vpop.f32.mrb[0].mxu0
      %4566 = vdwg.mxu0
      %v4567 = vadd.f32 %v4497, %v4562
      %v4568 = vld [vmem:[%s1306] sm:$0xf]
      %v4569 = vld [vmem:[%s1306 + $0x4] sm:$0xf]
      %v4570 = vld [vmem:[%s1306 + $0x8] sm:$0xf]
      %v4571 = vld [vmem:[%s1306 + $0xc] sm:$0xf]
      %v4572 = vrot.slane %v4504, 1
      %v4577 = vunpack.c.l.b16 %v4568
      %v4578 = vunpack.c.l.b16 %v4569
      %v4579 = vunpack.c.l.b16 %v4570
      %v4580 = vunpack.c.l.b16 %v4571
      %v4581 = vpack.c.b16 %v4578, %v4577
      %v4582 = vpack.c.b16 %v4580, %v4579
      %v4586 = vsel %vm197, %v4572, 0
      %4588 = vmatprep.subr.bf16.mxu0 0
      %4589 = vmatpush1.bf16.msra.mxu0 %v4581
      %4590 = vmatprep.subr.bf16.mxu0 0
      %4591 = vmatpush1.bf16.msra.mxu0 %v4582
      %4592 = vmatprep.subr.bf16.mxu0 0
      %4593 = vmatpush1.bf16.msra.mxu0 0
      %4594 = vmatprep.subr.bf16.mxu0 0
      %4595 = vmatpush1.bf16.msra.mxu0 0
      %4596 = vmatprep.subr.bf16.mxu0 0
      %4597 = vmatpush1.bf16.msra.mxu0 0
      %4598 = vmatprep.subr.bf16.mxu0 0
      %4599 = vmatpush1.bf16.msra.mxu0 0
      %4600 = vmatprep.subr.bf16.mxu0 0
      %4601 = vmatpush1.bf16.msra.mxu0 0
      %4602 = vmatprep.subr.bf16.mxu0 0
      %4603 = vmatpush1.bf16.msra.mxu0 0
      %4604 = vmatprep.subr.bf16.mxu0 0
      %4605 = vmatpush1.bf16.msra.mxu0 0
      %4606 = vmatprep.subr.bf16.mxu0 0
      %4607 = vmatpush1.bf16.msra.mxu0 0
      %4608 = vmatprep.subr.bf16.mxu0 0
      %4609 = vmatpush1.bf16.msra.mxu0 0
      %4610 = vmatprep.subr.bf16.mxu0 0
      %4611 = vmatpush1.bf16.msra.mxu0 0
      %4612 = vmatprep.subr.bf16.mxu0 0
      %4613 = vmatpush1.bf16.msra.mxu0 0
      %4614 = vmatprep.subr.bf16.mxu0 0
      %4615 = vmatpush1.bf16.msra.mxu0 0
      %4616 = vmatprep.subr.bf16.mxu0 0
      %4617 = vmatpush1.bf16.msra.mxu0 0
      %4618 = vmatprep.subr.bf16.mxu0 0
      %4619 = vmatpush1.bf16.msra.mxu0 0
      %4620 = vmatprep.mubr.bf16.mxu0 0
      %4621 = vmatmul.mubr.bf16.gmra.mrb[0].mxu0 %v4586
      %v4622 = vpop.f32.mrb[0].mxu0
      %v4623 = vadd.f32 0.0, %v4622
      %v4624 = vpop.f32.mrb[0].mxu0
      %v4625 = vpop.f32.mrb[0].mxu0
      %v4626 = vpop.f32.mrb[0].mxu0
      %4627 = vdwg.mxu0
      %v4628 = vadd.f32 %v4567, %v4623
      %v4629 = vld [vmem:[%s1368] sm:$0xf]
      %v4630 = vld [vmem:[%s1368 + $0x4] sm:$0xf]
      %v4631 = vld [vmem:[%s1368 + $0x8] sm:$0xf]
      %v4632 = vld [vmem:[%s1368 + $0xc] sm:$0xf]
      %v4634 = vunpack.c.l.b16 %v4437
      %v4635 = vpack.c.b16 %v4634, %v4503
      %v4637 = vshrl.u32 %v4635, 16
      %v4639 = vrot.slane %v4637, 1
      %v4640 = vshll.u32 %v4635, 16
      %v4642 = vrot.slane %v4640, 2
      %v4643 = vor.u32 %v4639, %v4642
      %v4648 = vunpack.c.l.b16 %v4629
      %v4649 = vunpack.c.l.b16 %v4630
      %v4650 = vunpack.c.l.b16 %v4631
      %v4651 = vunpack.c.l.b16 %v4632
      %v4652 = vpack.c.b16 %v4649, %v4648
      %v4653 = vpack.c.b16 %v4651, %v4650
      %v4657 = vsel %vm197, %v4643, 0
      %4659 = vmatprep.subr.bf16.mxu0 0
      %4660 = vmatpush1.bf16.msra.mxu0 %v4652
      %4661 = vmatprep.subr.bf16.mxu0 0
      %4662 = vmatpush1.bf16.msra.mxu0 %v4653
      %4663 = vmatprep.subr.bf16.mxu0 0
      %4664 = vmatpush1.bf16.msra.mxu0 0
      %4665 = vmatprep.subr.bf16.mxu0 0
      %4666 = vmatpush1.bf16.msra.mxu0 0
      %4667 = vmatprep.subr.bf16.mxu0 0
      %4668 = vmatpush1.bf16.msra.mxu0 0
      %4669 = vmatprep.subr.bf16.mxu0 0
      %4670 = vmatpush1.bf16.msra.mxu0 0
      %4671 = vmatprep.subr.bf16.mxu0 0
      %4672 = vmatpush1.bf16.msra.mxu0 0
      %4673 = vmatprep.subr.bf16.mxu0 0
      %4674 = vmatpush1.bf16.msra.mxu0 0
      %4675 = vmatprep.subr.bf16.mxu0 0
      %4676 = vmatpush1.bf16.msra.mxu0 0
      %4677 = vmatprep.subr.bf16.mxu0 0
      %4678 = vmatpush1.bf16.msra.mxu0 0
      %4679 = vmatprep.subr.bf16.mxu0 0
      %4680 = vmatpush1.bf16.msra.mxu0 0
      %4681 = vmatprep.subr.bf16.mxu0 0
      %4682 = vmatpush1.bf16.msra.mxu0 0
      %4683 = vmatprep.subr.bf16.mxu0 0
      %4684 = vmatpush1.bf16.msra.mxu0 0
      %4685 = vmatprep.subr.bf16.mxu0 0
      %4686 = vmatpush1.bf16.msra.mxu0 0
      %4687 = vmatprep.subr.bf16.mxu0 0
      %4688 = vmatpush1.bf16.msra.mxu0 0
      %4689 = vmatprep.subr.bf16.mxu0 0
      %4690 = vmatpush1.bf16.msra.mxu0 0
      %4691 = vmatprep.mubr.bf16.mxu0 0
      %4692 = vmatmul.mubr.bf16.gmra.mrb[0].mxu0 %v4657
      %v4693 = vpop.f32.mrb[0].mxu0
      %v4694 = vadd.f32 0.0, %v4693
      %v4695 = vpop.f32.mrb[0].mxu0
      %v4696 = vpop.f32.mrb[0].mxu0
      %v4697 = vpop.f32.mrb[0].mxu0
      %4698 = vdwg.mxu0
      %v4699 = vadd.f32 %v4628, %v4694
      %v4700 = vld [vmem:[%s1440] sm:$0xf]
      %v4701 = vld [vmem:[%s1440 + $0x4] sm:$0xf]
      %v4702 = vld [vmem:[%s1440 + $0x8] sm:$0xf]
      %v4703 = vld [vmem:[%s1440 + $0xc] sm:$0xf]
      %v4704 = vrot.slane %v4635, 2
      %v4709 = vunpack.c.l.b16 %v4700
      %v4710 = vunpack.c.l.b16 %v4701
      %v4711 = vunpack.c.l.b16 %v4702
      %v4712 = vunpack.c.l.b16 %v4703
      %v4713 = vpack.c.b16 %v4710, %v4709
      %v4714 = vpack.c.b16 %v4712, %v4711
      %v4718 = vsel %vm197, %v4704, 0
      %4720 = vmatprep.subr.bf16.mxu0 0
      %4721 = vmatpush1.bf16.msra.mxu0 %v4713
      %4722 = vmatprep.subr.bf16.mxu0 0
      %4723 = vmatpush1.bf16.msra.mxu0 %v4714
      %4724 = vmatprep.subr.bf16.mxu0 0
      %4725 = vmatpush1.bf16.msra.mxu0 0
      %4726 = vmatprep.subr.bf16.mxu0 0
      %4727 = vmatpush1.bf16.msra.mxu0 0
      %4728 = vmatprep.subr.bf16.mxu0 0
      %4729 = vmatpush1.bf16.msra.mxu0 0
      %4730 = vmatprep.subr.bf16.mxu0 0
      %4731 = vmatpush1.bf16.msra.mxu0 0
      %4732 = vmatprep.subr.bf16.mxu0 0
      %4733 = vmatpush1.bf16.msra.mxu0 0
      %4734 = vmatprep.subr.bf16.mxu0 0
      %4735 = vmatpush1.bf16.msra.mxu0 0
      %4736 = vmatprep.subr.bf16.mxu0 0
      %4737 = vmatpush1.bf16.msra.mxu0 0
      %4738 = vmatprep.subr.bf16.mxu0 0
      %4739 = vmatpush1.bf16.msra.mxu0 0
      %4740 = vmatprep.subr.bf16.mxu0 0
      %4741 = vmatpush1.bf16.msra.mxu0 0
      %4742 = vmatprep.subr.bf16.mxu0 0
      %4743 = vmatpush1.bf16.msra.mxu0 0
      %4744 = vmatprep.subr.bf16.mxu0 0
      %4745 = vmatpush1.bf16.msra.mxu0 0
      %4746 = vmatprep.subr.bf16.mxu0 0
      %4747 = vmatpush1.bf16.msra.mxu0 0
      %4748 = vmatprep.subr.bf16.mxu0 0
      %4749 = vmatpush1.bf16.msra.mxu0 0
      %4750 = vmatprep.subr.bf16.mxu0 0
      %4751 = vmatpush1.bf16.msra.mxu0 0
      %4752 = vmatprep.mubr.bf16.mxu0 0
      %4753 = vmatmul.mubr.bf16.gmra.mrb[0].mxu0 %v4718
      %v4754 = vpop.f32.mrb[0].mxu0
      %v4755 = vadd.f32 0.0, %v4754
      %v4756 = vpop.f32.mrb[0].mxu0
      %v4757 = vpop.f32.mrb[0].mxu0
      %v4758 = vpop.f32.mrb[0].mxu0
      %4759 = vdwg.mxu0
      %v4760 = vadd.f32 %v4699, %v4755
      %s4761 = scalar_lea.vmem %s165, 48
      %v4762 = vld [vmem:[%s4761] sm:$0xf]
      %v4763 = vld [vmem:[%s4761 + $0x4] sm:$0x1]
      %v4764 = vld [vmem:[%s1505] sm:$0xf]
      %v4765 = vld [vmem:[%s1505 + $0x4] sm:$0xf]
      %v4766 = vld [vmem:[%s1505 + $0x8] sm:$0xf]
      %v4767 = vld [vmem:[%s1505 + $0xc] sm:$0xf]
      %v4772 = vunpack.c.l.b16 %v4764
      %v4773 = vunpack.c.l.b16 %v4765
      %v4774 = vunpack.c.l.b16 %v4766
      %v4775 = vunpack.c.l.b16 %v4767
      %v4776 = vpack.c.b16 %v4773, %v4772
      %v4777 = vpack.c.b16 %v4775, %v4774
      %v4781 = vsel %vm197, %v4762, 0
      %4783 = vmatprep.subr.bf16.mxu0 0
      %4784 = vmatpush1.bf16.msra.mxu0 %v4776
      %4785 = vmatprep.subr.bf16.mxu0 0
      %4786 = vmatpush1.bf16.msra.mxu0 %v4777
      %4787 = vmatprep.subr.bf16.mxu0 0
      %4788 = vmatpush1.bf16.msra.mxu0 0
      %4789 = vmatprep.subr.bf16.mxu0 0
      %4790 = vmatpush1.bf16.msra.mxu0 0
      %4791 = vmatprep.subr.bf16.mxu0 0
      %4792 = vmatpush1.bf16.msra.mxu0 0
      %4793 = vmatprep.subr.bf16.mxu0 0
      %4794 = vmatpush1.bf16.msra.mxu0 0
      %4795 = vmatprep.subr.bf16.mxu0 0
      %4796 = vmatpush1.bf16.msra.mxu0 0
      %4797 = vmatprep.subr.bf16.mxu0 0
      %4798 = vmatpush1.bf16.msra.mxu0 0
      %4799 = vmatprep.subr.bf16.mxu0 0
      %4800 = vmatpush1.bf16.msra.mxu0 0
      %4801 = vmatprep.subr.bf16.mxu0 0
      %4802 = vmatpush1.bf16.msra.mxu0 0
      %4803 = vmatprep.subr.bf16.mxu0 0
      %4804 = vmatpush1.bf16.msra.mxu0 0
      %4805 = vmatprep.subr.bf16.mxu0 0
      %4806 = vmatpush1.bf16.msra.mxu0 0
      %4807 = vmatprep.subr.bf16.mxu0 0
      %4808 = vmatpush1.bf16.msra.mxu0 0
      %4809 = vmatprep.subr.bf16.mxu0 0
      %4810 = vmatpush1.bf16.msra.mxu0 0
      %4811 = vmatprep.subr.bf16.mxu0 0
      %4812 = vmatpush1.bf16.msra.mxu0 0
      %4813 = vmatprep.subr.bf16.mxu0 0
      %4814 = vmatpush1.bf16.msra.mxu0 0
      %4815 = vmatprep.mubr.bf16.mxu0 0
      %4816 = vmatmul.mubr.bf16.gmra.mrb[0].mxu0 %v4781
      %v4817 = vpop.f32.mrb[0].mxu0
      %v4818 = vadd.f32 0.0, %v4817
      %v4819 = vpop.f32.mrb[0].mxu0
      %v4820 = vpop.f32.mrb[0].mxu0
      %v4821 = vpop.f32.mrb[0].mxu0
      %4822 = vdwg.mxu0
      %v4823 = vadd.f32 %v4760, %v4818
      %v4824 = vld [vmem:[%s1566] sm:$0xf]
      %v4825 = vld [vmem:[%s1566 + $0x4] sm:$0xf]
      %v4826 = vld [vmem:[%s1566 + $0x8] sm:$0xf]
      %v4827 = vld [vmem:[%s1566 + $0xc] sm:$0xf]
      %v4829 = vunpack.c.l.b16 %v4762
      %v4830 = vpack.c.b16 %v4829, %v4829
      %v4832 = vshrl.u32 %v4830, 16
      %v4834 = vshll.u32 %v4830, 16
      %v4836 = vrot.slane %v4834, 1
      %v4837 = vor.u32 %v4832, %v4836
      %v4842 = vunpack.c.l.b16 %v4824
      %v4843 = vunpack.c.l.b16 %v4825
      %v4844 = vunpack.c.l.b16 %v4826
      %v4845 = vunpack.c.l.b16 %v4827
      %v4846 = vpack.c.b16 %v4843, %v4842
      %v4847 = vpack.c.b16 %v4845, %v4844
      %v4851 = vsel %vm197, %v4837, 0
      %4853 = vmatprep.subr.bf16.mxu0 0
      %4854 = vmatpush1.bf16.msra.mxu0 %v4846
      %4855 = vmatprep.subr.bf16.mxu0 0
      %4856 = vmatpush1.bf16.msra.mxu0 %v4847
      %4857 = vmatprep.subr.bf16.mxu0 0
      %4858 = vmatpush1.bf16.msra.mxu0 0
      %4859 = vmatprep.subr.bf16.mxu0 0
      %4860 = vmatpush1.bf16.msra.mxu0 0
      %4861 = vmatprep.subr.bf16.mxu0 0
      %4862 = vmatpush1.bf16.msra.mxu0 0
      %4863 = vmatprep.subr.bf16.mxu0 0
      %4864 = vmatpush1.bf16.msra.mxu0 0
      %4865 = vmatprep.subr.bf16.mxu0 0
      %4866 = vmatpush1.bf16.msra.mxu0 0
      %4867 = vmatprep.subr.bf16.mxu0 0
      %4868 = vmatpush1.bf16.msra.mxu0 0
      %4869 = vmatprep.subr.bf16.mxu0 0
      %4870 = vmatpush1.bf16.msra.mxu0 0
      %4871 = vmatprep.subr.bf16.mxu0 0
      %4872 = vmatpush1.bf16.msra.mxu0 0
      %4873 = vmatprep.subr.bf16.mxu0 0
      %4874 = vmatpush1.bf16.msra.mxu0 0
      %4875 = vmatprep.subr.bf16.mxu0 0
      %4876 = vmatpush1.bf16.msra.mxu0 0
      %4877 = vmatprep.subr.bf16.mxu0 0
      %4878 = vmatpush1.bf16.msra.mxu0 0
      %4879 = vmatprep.subr.bf16.mxu0 0
      %4880 = vmatpush1.bf16.msra.mxu0 0
      %4881 = vmatprep.subr.bf16.mxu0 0
      %4882 = vmatpush1.bf16.msra.mxu0 0
      %4883 = vmatprep.subr.bf16.mxu0 0
      %4884 = vmatpush1.bf16.msra.mxu0 0
      %4885 = vmatprep.mubr.bf16.mxu0 0
      %4886 = vmatmul.mubr.bf16.gmra.mrb[0].mxu0 %v4851
      %v4887 = vpop.f32.mrb[0].mxu0
      %v4888 = vadd.f32 0.0, %v4887
      %v4889 = vpop.f32.mrb[0].mxu0
      %v4890 = vpop.f32.mrb[0].mxu0
      %v4891 = vpop.f32.mrb[0].mxu0
      %4892 = vdwg.mxu0
      %v4893 = vadd.f32 %v4823, %v4888
      %v4894 = vld [vmem:[%s1637] sm:$0xf]
      %v4895 = vld [vmem:[%s1637 + $0x4] sm:$0xf]
      %v4896 = vld [vmem:[%s1637 + $0x8] sm:$0xf]
      %v4897 = vld [vmem:[%s1637 + $0xc] sm:$0xf]
      %v4898 = vrot.slane %v4830, 1
      %v4903 = vunpack.c.l.b16 %v4894
      %v4904 = vunpack.c.l.b16 %v4895
      %v4905 = vunpack.c.l.b16 %v4896
      %v4906 = vunpack.c.l.b16 %v4897
      %v4907 = vpack.c.b16 %v4904, %v4903
      %v4908 = vpack.c.b16 %v4906, %v4905
      %v4912 = vsel %vm197, %v4898, 0
      %4914 = vmatprep.subr.bf16.mxu0 0
      %4915 = vmatpush1.bf16.msra.mxu0 %v4907
      %4916 = vmatprep.subr.bf16.mxu0 0
      %4917 = vmatpush1.bf16.msra.mxu0 %v4908
      %4918 = vmatprep.subr.bf16.mxu0 0
      %4919 = vmatpush1.bf16.msra.mxu0 0
      %4920 = vmatprep.subr.bf16.mxu0 0
      %4921 = vmatpush1.bf16.msra.mxu0 0
      %4922 = vmatprep.subr.bf16.mxu0 0
      %4923 = vmatpush1.bf16.msra.mxu0 0
      %4924 = vmatprep.subr.bf16.mxu0 0
      %4925 = vmatpush1.bf16.msra.mxu0 0
      %4926 = vmatprep.subr.bf16.mxu0 0
      %4927 = vmatpush1.bf16.msra.mxu0 0
      %4928 = vmatprep.subr.bf16.mxu0 0
      %4929 = vmatpush1.bf16.msra.mxu0 0
      %4930 = vmatprep.subr.bf16.mxu0 0
      %4931 = vmatpush1.bf16.msra.mxu0 0
      %4932 = vmatprep.subr.bf16.mxu0 0
      %4933 = vmatpush1.bf16.msra.mxu0 0
      %4934 = vmatprep.subr.bf16.mxu0 0
      %4935 = vmatpush1.bf16.msra.mxu0 0
      %4936 = vmatprep.subr.bf16.mxu0 0
      %4937 = vmatpush1.bf16.msra.mxu0 0
      %4938 = vmatprep.subr.bf16.mxu0 0
      %4939 = vmatpush1.bf16.msra.mxu0 0
      %4940 = vmatprep.subr.bf16.mxu0 0
      %4941 = vmatpush1.bf16.msra.mxu0 0
      %4942 = vmatprep.subr.bf16.mxu0 0
      %4943 = vmatpush1.bf16.msra.mxu0 0
      %4944 = vmatprep.subr.bf16.mxu0 0
      %4945 = vmatpush1.bf16.msra.mxu0 0
      %4946 = vmatprep.mubr.bf16.mxu0 0
      %4947 = vmatmul.mubr.bf16.gmra.mrb[0].mxu0 %v4912
      %v4948 = vpop.f32.mrb[0].mxu0
      %v4949 = vadd.f32 0.0, %v4948
      %v4950 = vpop.f32.mrb[0].mxu0
      %v4951 = vpop.f32.mrb[0].mxu0
      %v4952 = vpop.f32.mrb[0].mxu0
      %4953 = vdwg.mxu0
      %v4954 = vadd.f32 %v4893, %v4949
      %v4955 = vld [vmem:[%s1699] sm:$0xf]
      %v4956 = vld [vmem:[%s1699 + $0x4] sm:$0xf]
      %v4957 = vld [vmem:[%s1699 + $0x8] sm:$0xf]
      %v4958 = vld [vmem:[%s1699 + $0xc] sm:$0xf]
      %v4960 = vunpack.c.l.b16 %v4763
      %v4961 = vpack.c.b16 %v4960, %v4829
      %v4963 = vshrl.u32 %v4961, 16
      %v4965 = vrot.slane %v4963, 1
      %v4966 = vshll.u32 %v4961, 16
      %v4968 = vrot.slane %v4966, 2
      %v4969 = vor.u32 %v4965, %v4968
      %v4974 = vunpack.c.l.b16 %v4955
      %v4975 = vunpack.c.l.b16 %v4956
      %v4976 = vunpack.c.l.b16 %v4957
      %v4977 = vunpack.c.l.b16 %v4958
      %v4978 = vpack.c.b16 %v4975, %v4974
      %v4979 = vpack.c.b16 %v4977, %v4976
      %v4983 = vsel %vm197, %v4969, 0
      %4985 = vmatprep.subr.bf16.mxu0 0
      %4986 = vmatpush1.bf16.msra.mxu0 %v4978
      %4987 = vmatprep.subr.bf16.mxu0 0
      %4988 = vmatpush1.bf16.msra.mxu0 %v4979
      %4989 = vmatprep.subr.bf16.mxu0 0
      %4990 = vmatpush1.bf16.msra.mxu0 0
      %4991 = vmatprep.subr.bf16.mxu0 0
      %4992 = vmatpush1.bf16.msra.mxu0 0
      %4993 = vmatprep.subr.bf16.mxu0 0
      %4994 = vmatpush1.bf16.msra.mxu0 0
      %4995 = vmatprep.subr.bf16.mxu0 0
      %4996 = vmatpush1.bf16.msra.mxu0 0
      %4997 = vmatprep.subr.bf16.mxu0 0
      %4998 = vmatpush1.bf16.msra.mxu0 0
      %4999 = vmatprep.subr.bf16.mxu0 0
      %5000 = vmatpush1.bf16.msra.mxu0 0
      %5001 = vmatprep.subr.bf16.mxu0 0
      %5002 = vmatpush1.bf16.msra.mxu0 0
      %5003 = vmatprep.subr.bf16.mxu0 0
      %5004 = vmatpush1.bf16.msra.mxu0 0
      %5005 = vmatprep.subr.bf16.mxu0 0
      %5006 = vmatpush1.bf16.msra.mxu0 0
      %5007 = vmatprep.subr.bf16.mxu0 0
      %5008 = vmatpush1.bf16.msra.mxu0 0
      %5009 = vmatprep.subr.bf16.mxu0 0
      %5010 = vmatpush1.bf16.msra.mxu0 0
      %5011 = vmatprep.subr.bf16.mxu0 0
      %5012 = vmatpush1.bf16.msra.mxu0 0
      %5013 = vmatprep.subr.bf16.mxu0 0
      %5014 = vmatpush1.bf16.msra.mxu0 0
      %5015 = vmatprep.subr.bf16.mxu0 0
      %5016 = vmatpush1.bf16.msra.mxu0 0
      %5017 = vmatprep.mubr.bf16.mxu0 0
      %5018 = vmatmul.mubr.bf16.gmra.mrb[0].mxu0 %v4983
      %v5019 = vpop.f32.mrb[0].mxu0
      %v5020 = vadd.f32 0.0, %v5019
      %v5021 = vpop.f32.mrb[0].mxu0
      %v5022 = vpop.f32.mrb[0].mxu0
      %v5023 = vpop.f32.mrb[0].mxu0
      %5024 = vdwg.mxu0
      %v5025 = vadd.f32 %v4954, %v5020
      %v5026 = vld [vmem:[%s1771] sm:$0xf]
      %v5027 = vld [vmem:[%s1771 + $0x4] sm:$0xf]
      %v5028 = vld [vmem:[%s1771 + $0x8] sm:$0xf]
      %v5029 = vld [vmem:[%s1771 + $0xc] sm:$0xf]
      %v5030 = vrot.slane %v4961, 2
      %v5035 = vunpack.c.l.b16 %v5026
      %v5036 = vunpack.c.l.b16 %v5027
      %v5037 = vunpack.c.l.b16 %v5028
      %v5038 = vunpack.c.l.b16 %v5029
      %v5039 = vpack.c.b16 %v5036, %v5035
      %v5040 = vpack.c.b16 %v5038, %v5037
      %v5044 = vsel %vm197, %v5030, 0
      %5046 = vmatprep.subr.bf16.mxu0 0
      %5047 = vmatpush1.bf16.msra.mxu0 %v5039
      %5048 = vmatprep.subr.bf16.mxu0 0
      %5049 = vmatpush1.bf16.msra.mxu0 %v5040
      %5050 = vmatprep.subr.bf16.mxu0 0
      %5051 = vmatpush1.bf16.msra.mxu0 0
      %5052 = vmatprep.subr.bf16.mxu0 0
      %5053 = vmatpush1.bf16.msra.mxu0 0
      %5054 = vmatprep.subr.bf16.mxu0 0
      %5055 = vmatpush1.bf16.msra.mxu0 0
      %5056 = vmatprep.subr.bf16.mxu0 0
      %5057 = vmatpush1.bf16.msra.mxu0 0
      %5058 = vmatprep.subr.bf16.mxu0 0
      %5059 = vmatpush1.bf16.msra.mxu0 0
      %5060 = vmatprep.subr.bf16.mxu0 0
      %5061 = vmatpush1.bf16.msra.mxu0 0
      %5062 = vmatprep.subr.bf16.mxu0 0
      %5063 = vmatpush1.bf16.msra.mxu0 0
      %5064 = vmatprep.subr.bf16.mxu0 0
      %5065 = vmatpush1.bf16.msra.mxu0 0
      %5066 = vmatprep.subr.bf16.mxu0 0
      %5067 = vmatpush1.bf16.msra.mxu0 0
      %5068 = vmatprep.subr.bf16.mxu0 0
      %5069 = vmatpush1.bf16.msra.mxu0 0
      %5070 = vmatprep.subr.bf16.mxu0 0
      %5071 = vmatpush1.bf16.msra.mxu0 0
      %5072 = vmatprep.subr.bf16.mxu0 0
      %5073 = vmatpush1.bf16.msra.mxu0 0
      %5074 = vmatprep.subr.bf16.mxu0 0
      %5075 = vmatpush1.bf16.msra.mxu0 0
      %5076 = vmatprep.subr.bf16.mxu0 0
      %5077 = vmatpush1.bf16.msra.mxu0 0
      %5078 = vmatprep.mubr.bf16.mxu0 0
      %5079 = vmatmul.mubr.bf16.gmra.mrb[0].mxu0 %v5044
      %v5080 = vpop.f32.mrb[0].mxu0
      %v5081 = vadd.f32 0.0, %v5080
      %v5082 = vpop.f32.mrb[0].mxu0
      %v5083 = vpop.f32.mrb[0].mxu0
      %v5084 = vpop.f32.mrb[0].mxu0
      %5085 = vdwg.mxu0
      %v5086 = vadd.f32 %v5025, %v5081
      %5087 = vst [vmem:[%s170 + $0xc] sm:$0x3f] %v5086
      %v5088 = vld [vmem:[%s1171] sm:$0xf]
      %v5089 = vld [vmem:[%s1171 + $0x4] sm:$0x1]
      %v5090 = vld [vmem:[%s1] sm:$0xf]
      %v5091 = vld [vmem:[%s1 + $0x4] sm:$0xf]
      %v5092 = vld [vmem:[%s1 + $0x8] sm:$0xf]
      %v5093 = vld [vmem:[%s1 + $0xc] sm:$0xf]
      %v5098 = vunpack.c.l.b16 %v5090
      %v5099 = vunpack.c.l.b16 %v5091
      %v5100 = vunpack.c.l.b16 %v5092
      %v5101 = vunpack.c.l.b16 %v5093
      %v5102 = vpack.c.b16 %v5099, %v5098
      %v5103 = vpack.c.b16 %v5101, %v5100
      %v5107 = vsel %vm197, %v5088, 0
      %5109 = vmatprep.subr.bf16.mxu0 0
      %5110 = vmatpush1.bf16.msra.mxu0 %v5102
      %5111 = vmatprep.subr.bf16.mxu0 0
      %5112 = vmatpush1.bf16.msra.mxu0 %v5103
      %5113 = vmatprep.subr.bf16.mxu0 0
      %5114 = vmatpush1.bf16.msra.mxu0 0
      %5115 = vmatprep.subr.bf16.mxu0 0
      %5116 = vmatpush1.bf16.msra.mxu0 0
      %5117 = vmatprep.subr.bf16.mxu0 0
      %5118 = vmatpush1.bf16.msra.mxu0 0
      %5119 = vmatprep.subr.bf16.mxu0 0
      %5120 = vmatpush1.bf16.msra.mxu0 0
      %5121 = vmatprep.subr.bf16.mxu0 0
      %5122 = vmatpush1.bf16.msra.mxu0 0
      %5123 = vmatprep.subr.bf16.mxu0 0
      %5124 = vmatpush1.bf16.msra.mxu0 0
      %5125 = vmatprep.subr.bf16.mxu0 0
      %5126 = vmatpush1.bf16.msra.mxu0 0
      %5127 = vmatprep.subr.bf16.mxu0 0
      %5128 = vmatpush1.bf16.msra.mxu0 0
      %5129 = vmatprep.subr.bf16.mxu0 0
      %5130 = vmatpush1.bf16.msra.mxu0 0
      %5131 = vmatprep.subr.bf16.mxu0 0
      %5132 = vmatpush1.bf16.msra.mxu0 0
      %5133 = vmatprep.subr.bf16.mxu0 0
      %5134 = vmatpush1.bf16.msra.mxu0 0
      %5135 = vmatprep.subr.bf16.mxu0 0
      %5136 = vmatpush1.bf16.msra.mxu0 0
      %5137 = vmatprep.subr.bf16.mxu0 0
      %5138 = vmatpush1.bf16.msra.mxu0 0
      %5139 = vmatprep.subr.bf16.mxu0 0
      %5140 = vmatpush1.bf16.msra.mxu0 0
      %5141 = vmatprep.mubr.bf16.mxu0 0
      %5142 = vmatmul.mubr.bf16.gmra.mrb[0].mxu0 %v5107
      %v5143 = vpop.f32.mrb[0].mxu0
      %v5144 = vadd.f32 0.0, %v5143
      %v5145 = vpop.f32.mrb[0].mxu0
      %v5146 = vpop.f32.mrb[0].mxu0
      %v5147 = vpop.f32.mrb[0].mxu0
      %5148 = vdwg.mxu0
      %v5149 = vadd.f32 %v177, %v5144
      %v5150 = vld [vmem:[%s242] sm:$0xf]
      %v5151 = vld [vmem:[%s242 + $0x4] sm:$0xf]
      %v5152 = vld [vmem:[%s242 + $0x8] sm:$0xf]
      %v5153 = vld [vmem:[%s242 + $0xc] sm:$0xf]
      %v5155 = vunpack.c.l.b16 %v5088
      %v5156 = vpack.c.b16 %v5155, %v5155
      %v5158 = vshrl.u32 %v5156, 16
      %v5160 = vshll.u32 %v5156, 16
      %v5162 = vrot.slane %v5160, 1
      %v5163 = vor.u32 %v5158, %v5162
      %v5168 = vunpack.c.l.b16 %v5150
      %v5169 = vunpack.c.l.b16 %v5151
      %v5170 = vunpack.c.l.b16 %v5152
      %v5171 = vunpack.c.l.b16 %v5153
      %v5172 = vpack.c.b16 %v5169, %v5168
      %v5173 = vpack.c.b16 %v5171, %v5170
      %v5177 = vsel %vm197, %v5163, 0
      %5179 = vmatprep.subr.bf16.mxu0 0
      %5180 = vmatpush1.bf16.msra.mxu0 %v5172
      %5181 = vmatprep.subr.bf16.mxu0 0
      %5182 = vmatpush1.bf16.msra.mxu0 %v5173
      %5183 = vmatprep.subr.bf16.mxu0 0
      %5184 = vmatpush1.bf16.msra.mxu0 0
      %5185 = vmatprep.subr.bf16.mxu0 0
      %5186 = vmatpush1.bf16.msra.mxu0 0
      %5187 = vmatprep.subr.bf16.mxu0 0
      %5188 = vmatpush1.bf16.msra.mxu0 0
      %5189 = vmatprep.subr.bf16.mxu0 0
      %5190 = vmatpush1.bf16.msra.mxu0 0
      %5191 = vmatprep.subr.bf16.mxu0 0
      %5192 = vmatpush1.bf16.msra.mxu0 0
      %5193 = vmatprep.subr.bf16.mxu0 0
      %5194 = vmatpush1.bf16.msra.mxu0 0
      %5195 = vmatprep.subr.bf16.mxu0 0
      %5196 = vmatpush1.bf16.msra.mxu0 0
      %5197 = vmatprep.subr.bf16.mxu0 0
      %5198 = vmatpush1.bf16.msra.mxu0 0
      %5199 = vmatprep.subr.bf16.mxu0 0
      %5200 = vmatpush1.bf16.msra.mxu0 0
      %5201 = vmatprep.subr.bf16.mxu0 0
      %5202 = vmatpush1.bf16.msra.mxu0 0
      %5203 = vmatprep.subr.bf16.mxu0 0
      %5204 = vmatpush1.bf16.msra.mxu0 0
      %5205 = vmatprep.subr.bf16.mxu0 0
      %5206 = vmatpush1.bf16.msra.mxu0 0
      %5207 = vmatprep.subr.bf16.mxu0 0
      %5208 = vmatpush1.bf16.msra.mxu0 0
      %5209 = vmatprep.subr.bf16.mxu0 0
      %5210 = vmatpush1.bf16.msra.mxu0 0
      %5211 = vmatprep.mubr.bf16.mxu0 0
      %5212 = vmatmul.mubr.bf16.gmra.mrb[0].mxu0 %v5177
      %v5213 = vpop.f32.mrb[0].mxu0
      %v5214 = vadd.f32 0.0, %v5213
      %v5215 = vpop.f32.mrb[0].mxu0
      %v5216 = vpop.f32.mrb[0].mxu0
      %v5217 = vpop.f32.mrb[0].mxu0
      %5218 = vdwg.mxu0
      %v5219 = vadd.f32 %v5149, %v5214
      %v5220 = vld [vmem:[%s313] sm:$0xf]
      %v5221 = vld [vmem:[%s313 + $0x4] sm:$0xf]
      %v5222 = vld [vmem:[%s313 + $0x8] sm:$0xf]
      %v5223 = vld [vmem:[%s313 + $0xc] sm:$0xf]
      %v5224 = vrot.slane %v5156, 1
      %v5229 = vunpack.c.l.b16 %v5220
      %v5230 = vunpack.c.l.b16 %v5221
      %v5231 = vunpack.c.l.b16 %v5222
      %v5232 = vunpack.c.l.b16 %v5223
      %v5233 = vpack.c.b16 %v5230, %v5229
      %v5234 = vpack.c.b16 %v5232, %v5231
      %v5238 = vsel %vm197, %v5224, 0
      %5240 = vmatprep.subr.bf16.mxu0 0
      %5241 = vmatpush1.bf16.msra.mxu0 %v5233
      %5242 = vmatprep.subr.bf16.mxu0 0
      %5243 = vmatpush1.bf16.msra.mxu0 %v5234
      %5244 = vmatprep.subr.bf16.mxu0 0
      %5245 = vmatpush1.bf16.msra.mxu0 0
      %5246 = vmatprep.subr.bf16.mxu0 0
      %5247 = vmatpush1.bf16.msra.mxu0 0
      %5248 = vmatprep.subr.bf16.mxu0 0
      %5249 = vmatpush1.bf16.msra.mxu0 0
      %5250 = vmatprep.subr.bf16.mxu0 0
      %5251 = vmatpush1.bf16.msra.mxu0 0
      %5252 = vmatprep.subr.bf16.mxu0 0
      %5253 = vmatpush1.bf16.msra.mxu0 0
      %5254 = vmatprep.subr.bf16.mxu0 0
      %5255 = vmatpush1.bf16.msra.mxu0 0
      %5256 = vmatprep.subr.bf16.mxu0 0
      %5257 = vmatpush1.bf16.msra.mxu0 0
      %5258 = vmatprep.subr.bf16.mxu0 0
      %5259 = vmatpush1.bf16.msra.mxu0 0
      %5260 = vmatprep.subr.bf16.mxu0 0
      %5261 = vmatpush1.bf16.msra.mxu0 0
      %5262 = vmatprep.subr.bf16.mxu0 0
      %5263 = vmatpush1.bf16.msra.mxu0 0
      %5264 = vmatprep.subr.bf16.mxu0 0
      %5265 = vmatpush1.bf16.msra.mxu0 0
      %5266 = vmatprep.subr.bf16.mxu0 0
      %5267 = vmatpush1.bf16.msra.mxu0 0
      %5268 = vmatprep.subr.bf16.mxu0 0
      %5269 = vmatpush1.bf16.msra.mxu0 0
      %5270 = vmatprep.subr.bf16.mxu0 0
      %5271 = vmatpush1.bf16.msra.mxu0 0
      %5272 = vmatprep.mubr.bf16.mxu0 0
      %5273 = vmatmul.mubr.bf16.gmra.mrb[0].mxu0 %v5238
      %v5274 = vpop.f32.mrb[0].mxu0
      %v5275 = vadd.f32 0.0, %v5274
      %v5276 = vpop.f32.mrb[0].mxu0
      %v5277 = vpop.f32.mrb[0].mxu0
      %v5278 = vpop.f32.mrb[0].mxu0
      %5279 = vdwg.mxu0
      %v5280 = vadd.f32 %v5219, %v5275
      %v5281 = vld [vmem:[%s375] sm:$0xf]
      %v5282 = vld [vmem:[%s375 + $0x4] sm:$0xf]
      %v5283 = vld [vmem:[%s375 + $0x8] sm:$0xf]
      %v5284 = vld [vmem:[%s375 + $0xc] sm:$0xf]
      %v5286 = vunpack.c.l.b16 %v5089
      %v5287 = vpack.c.b16 %v5286, %v5155
      %v5289 = vshrl.u32 %v5287, 16
      %v5291 = vrot.slane %v5289, 1
      %v5292 = vshll.u32 %v5287, 16
      %v5294 = vrot.slane %v5292, 2
      %v5295 = vor.u32 %v5291, %v5294
      %v5300 = vunpack.c.l.b16 %v5281
      %v5301 = vunpack.c.l.b16 %v5282
      %v5302 = vunpack.c.l.b16 %v5283
      %v5303 = vunpack.c.l.b16 %v5284
      %v5304 = vpack.c.b16 %v5301, %v5300
      %v5305 = vpack.c.b16 %v5303, %v5302
      %v5309 = vsel %vm197, %v5295, 0
      %5311 = vmatprep.subr.bf16.mxu0 0
      %5312 = vmatpush1.bf16.msra.mxu0 %v5304
      %5313 = vmatprep.subr.bf16.mxu0 0
      %5314 = vmatpush1.bf16.msra.mxu0 %v5305
      %5315 = vmatprep.subr.bf16.mxu0 0
      %5316 = vmatpush1.bf16.msra.mxu0 0
      %5317 = vmatprep.subr.bf16.mxu0 0
      %5318 = vmatpush1.bf16.msra.mxu0 0
      %5319 = vmatprep.subr.bf16.mxu0 0
      %5320 = vmatpush1.bf16.msra.mxu0 0
      %5321 = vmatprep.subr.bf16.mxu0 0
      %5322 = vmatpush1.bf16.msra.mxu0 0
      %5323 = vmatprep.subr.bf16.mxu0 0
      %5324 = vmatpush1.bf16.msra.mxu0 0
      %5325 = vmatprep.subr.bf16.mxu0 0
      %5326 = vmatpush1.bf16.msra.mxu0 0
      %5327 = vmatprep.subr.bf16.mxu0 0
      %5328 = vmatpush1.bf16.msra.mxu0 0
      %5329 = vmatprep.subr.bf16.mxu0 0
      %5330 = vmatpush1.bf16.msra.mxu0 0
      %5331 = vmatprep.subr.bf16.mxu0 0
      %5332 = vmatpush1.bf16.msra.mxu0 0
      %5333 = vmatprep.subr.bf16.mxu0 0
      %5334 = vmatpush1.bf16.msra.mxu0 0
      %5335 = vmatprep.subr.bf16.mxu0 0
      %5336 = vmatpush1.bf16.msra.mxu0 0
      %5337 = vmatprep.subr.bf16.mxu0 0
      %5338 = vmatpush1.bf16.msra.mxu0 0
      %5339 = vmatprep.subr.bf16.mxu0 0
      %5340 = vmatpush1.bf16.msra.mxu0 0
      %5341 = vmatprep.subr.bf16.mxu0 0
      %5342 = vmatpush1.bf16.msra.mxu0 0
      %5343 = vmatprep.mubr.bf16.mxu0 0
      %5344 = vmatmul.mubr.bf16.gmra.mrb[0].mxu0 %v5309
      %v5345 = vpop.f32.mrb[0].mxu0
      %v5346 = vadd.f32 0.0, %v5345
      %v5347 = vpop.f32.mrb[0].mxu0
      %v5348 = vpop.f32.mrb[0].mxu0
      %v5349 = vpop.f32.mrb[0].mxu0
      %5350 = vdwg.mxu0
      %v5351 = vadd.f32 %v5280, %v5346
      %v5352 = vld [vmem:[%s447] sm:$0xf]
      %v5353 = vld [vmem:[%s447 + $0x4] sm:$0xf]
      %v5354 = vld [vmem:[%s447 + $0x8] sm:$0xf]
      %v5355 = vld [vmem:[%s447 + $0xc] sm:$0xf]
      %v5356 = vrot.slane %v5287, 2
      %v5361 = vunpack.c.l.b16 %v5352
      %v5362 = vunpack.c.l.b16 %v5353
      %v5363 = vunpack.c.l.b16 %v5354
      %v5364 = vunpack.c.l.b16 %v5355
      %v5365 = vpack.c.b16 %v5362, %v5361
      %v5366 = vpack.c.b16 %v5364, %v5363
      %v5370 = vsel %vm197, %v5356, 0
      %5372 = vmatprep.subr.bf16.mxu0 0
      %5373 = vmatpush1.bf16.msra.mxu0 %v5365
      %5374 = vmatprep.subr.bf16.mxu0 0
      %5375 = vmatpush1.bf16.msra.mxu0 %v5366
      %5376 = vmatprep.subr.bf16.mxu0 0
      %5377 = vmatpush1.bf16.msra.mxu0 0
      %5378 = vmatprep.subr.bf16.mxu0 0
      %5379 = vmatpush1.bf16.msra.mxu0 0
      %5380 = vmatprep.subr.bf16.mxu0 0
      %5381 = vmatpush1.bf16.msra.mxu0 0
      %5382 = vmatprep.subr.bf16.mxu0 0
      %5383 = vmatpush1.bf16.msra.mxu0 0
      %5384 = vmatprep.subr.bf16.mxu0 0
      %5385 = vmatpush1.bf16.msra.mxu0 0
      %5386 = vmatprep.subr.bf16.mxu0 0
      %5387 = vmatpush1.bf16.msra.mxu0 0
      %5388 = vmatprep.subr.bf16.mxu0 0
      %5389 = vmatpush1.bf16.msra.mxu0 0
      %5390 = vmatprep.subr.bf16.mxu0 0
      %5391 = vmatpush1.bf16.msra.mxu0 0
      %5392 = vmatprep.subr.bf16.mxu0 0
      %5393 = vmatpush1.bf16.msra.mxu0 0
      %5394 = vmatprep.subr.bf16.mxu0 0
      %5395 = vmatpush1.bf16.msra.mxu0 0
      %5396 = vmatprep.subr.bf16.mxu0 0
      %5397 = vmatpush1.bf16.msra.mxu0 0
      %5398 = vmatprep.subr.bf16.mxu0 0
      %5399 = vmatpush1.bf16.msra.mxu0 0
      %5400 = vmatprep.subr.bf16.mxu0 0
      %5401 = vmatpush1.bf16.msra.mxu0 0
      %5402 = vmatprep.subr.bf16.mxu0 0
      %5403 = vmatpush1.bf16.msra.mxu0 0
      %5404 = vmatprep.mubr.bf16.mxu0 0
      %5405 = vmatmul.mubr.bf16.gmra.mrb[0].mxu0 %v5370
      %v5406 = vpop.f32.mrb[0].mxu0
      %v5407 = vadd.f32 0.0, %v5406
      %v5408 = vpop.f32.mrb[0].mxu0
      %v5409 = vpop.f32.mrb[0].mxu0
      %v5410 = vpop.f32.mrb[0].mxu0
      %5411 = vdwg.mxu0
      %v5412 = vadd.f32 %v5351, %v5407
      %v5413 = vld [vmem:[%s1502] sm:$0xf]
      %v5414 = vld [vmem:[%s1502 + $0x4] sm:$0x1]
      %v5415 = vld [vmem:[%s512] sm:$0xf]
      %v5416 = vld [vmem:[%s512 + $0x4] sm:$0xf]
      %v5417 = vld [vmem:[%s512 + $0x8] sm:$0xf]
      %v5418 = vld [vmem:[%s512 + $0xc] sm:$0xf]
      %v5423 = vunpack.c.l.b16 %v5415
      %v5424 = vunpack.c.l.b16 %v5416
      %v5425 = vunpack.c.l.b16 %v5417
      %v5426 = vunpack.c.l.b16 %v5418
      %v5427 = vpack.c.b16 %v5424, %v5423
      %v5428 = vpack.c.b16 %v5426, %v5425
      %v5432 = vsel %vm197, %v5413, 0
      %5434 = vmatprep.subr.bf16.mxu0 0
      %5435 = vmatpush1.bf16.msra.mxu0 %v5427
      %5436 = vmatprep.subr.bf16.mxu0 0
      %5437 = vmatpush1.bf16.msra.mxu0 %v5428
      %5438 = vmatprep.subr.bf16.mxu0 0
      %5439 = vmatpush1.bf16.msra.mxu0 0
      %5440 = vmatprep.subr.bf16.mxu0 0
      %5441 = vmatpush1.bf16.msra.mxu0 0
      %5442 = vmatprep.subr.bf16.mxu0 0
      %5443 = vmatpush1.bf16.msra.mxu0 0
      %5444 = vmatprep.subr.bf16.mxu0 0
      %5445 = vmatpush1.bf16.msra.mxu0 0
      %5446 = vmatprep.subr.bf16.mxu0 0
      %5447 = vmatpush1.bf16.msra.mxu0 0
      %5448 = vmatprep.subr.bf16.mxu0 0
      %5449 = vmatpush1.bf16.msra.mxu0 0
      %5450 = vmatprep.subr.bf16.mxu0 0
      %5451 = vmatpush1.bf16.msra.mxu0 0
      %5452 = vmatprep.subr.bf16.mxu0 0
      %5453 = vmatpush1.bf16.msra.mxu0 0
      %5454 = vmatprep.subr.bf16.mxu0 0
      %5455 = vmatpush1.bf16.msra.mxu0 0
      %5456 = vmatprep.subr.bf16.mxu0 0
      %5457 = vmatpush1.bf16.msra.mxu0 0
      %5458 = vmatprep.subr.bf16.mxu0 0
      %5459 = vmatpush1.bf16.msra.mxu0 0
      %5460 = vmatprep.subr.bf16.mxu0 0
      %5461 = vmatpush1.bf16.msra.mxu0 0
      %5462 = vmatprep.subr.bf16.mxu0 0
      %5463 = vmatpush1.bf16.msra.mxu0 0
      %5464 = vmatprep.subr.bf16.mxu0 0
      %5465 = vmatpush1.bf16.msra.mxu0 0
      %5466 = vmatprep.mubr.bf16.mxu0 0
      %5467 = vmatmul.mubr.bf16.gmra.mrb[0].mxu0 %v5432
      %v5468 = vpop.f32.mrb[0].mxu0
      %v5469 = vadd.f32 0.0, %v5468
      %v5470 = vpop.f32.mrb[0].mxu0
      %v5471 = vpop.f32.mrb[0].mxu0
      %v5472 = vpop.f32.mrb[0].mxu0
      %5473 = vdwg.mxu0
      %v5474 = vadd.f32 %v5412, %v5469
      %v5475 = vld [vmem:[%s573] sm:$0xf]
      %v5476 = vld [vmem:[%s573 + $0x4] sm:$0xf]
      %v5477 = vld [vmem:[%s573 + $0x8] sm:$0xf]
      %v5478 = vld [vmem:[%s573 + $0xc] sm:$0xf]
      %v5480 = vunpack.c.l.b16 %v5413
      %v5481 = vpack.c.b16 %v5480, %v5480
      %v5483 = vshrl.u32 %v5481, 16
      %v5485 = vshll.u32 %v5481, 16
      %v5487 = vrot.slane %v5485, 1
      %v5488 = vor.u32 %v5483, %v5487
      %v5493 = vunpack.c.l.b16 %v5475
      %v5494 = vunpack.c.l.b16 %v5476
      %v5495 = vunpack.c.l.b16 %v5477
      %v5496 = vunpack.c.l.b16 %v5478
      %v5497 = vpack.c.b16 %v5494, %v5493
      %v5498 = vpack.c.b16 %v5496, %v5495
      %v5502 = vsel %vm197, %v5488, 0
      %5504 = vmatprep.subr.bf16.mxu0 0
      %5505 = vmatpush1.bf16.msra.mxu0 %v5497
      %5506 = vmatprep.subr.bf16.mxu0 0
      %5507 = vmatpush1.bf16.msra.mxu0 %v5498
      %5508 = vmatprep.subr.bf16.mxu0 0
      %5509 = vmatpush1.bf16.msra.mxu0 0
      %5510 = vmatprep.subr.bf16.mxu0 0
      %5511 = vmatpush1.bf16.msra.mxu0 0
      %5512 = vmatprep.subr.bf16.mxu0 0
      %5513 = vmatpush1.bf16.msra.mxu0 0
      %5514 = vmatprep.subr.bf16.mxu0 0
      %5515 = vmatpush1.bf16.msra.mxu0 0
      %5516 = vmatprep.subr.bf16.mxu0 0
      %5517 = vmatpush1.bf16.msra.mxu0 0
      %5518 = vmatprep.subr.bf16.mxu0 0
      %5519 = vmatpush1.bf16.msra.mxu0 0
      %5520 = vmatprep.subr.bf16.mxu0 0
      %5521 = vmatpush1.bf16.msra.mxu0 0
      %5522 = vmatprep.subr.bf16.mxu0 0
      %5523 = vmatpush1.bf16.msra.mxu0 0
      %5524 = vmatprep.subr.bf16.mxu0 0
      %5525 = vmatpush1.bf16.msra.mxu0 0
      %5526 = vmatprep.subr.bf16.mxu0 0
      %5527 = vmatpush1.bf16.msra.mxu0 0
      %5528 = vmatprep.subr.bf16.mxu0 0
      %5529 = vmatpush1.bf16.msra.mxu0 0
      %5530 = vmatprep.subr.bf16.mxu0 0
      %5531 = vmatpush1.bf16.msra.mxu0 0
      %5532 = vmatprep.subr.bf16.mxu0 0
      %5533 = vmatpush1.bf16.msra.mxu0 0
      %5534 = vmatprep.subr.bf16.mxu0 0
      %5535 = vmatpush1.bf16.msra.mxu0 0
      %5536 = vmatprep.mubr.bf16.mxu0 0
      %5537 = vmatmul.mubr.bf16.gmra.mrb[0].mxu0 %v5502
      %v5538 = vpop.f32.mrb[0].mxu0
      %v5539 = vadd.f32 0.0, %v5538
      %v5540 = vpop.f32.mrb[0].mxu0
      %v5541 = vpop.f32.mrb[0].mxu0
      %v5542 = vpop.f32.mrb[0].mxu0
      %5543 = vdwg.mxu0
      %v5544 = vadd.f32 %v5474, %v5539
      %v5545 = vld [vmem:[%s644] sm:$0xf]
      %v5546 = vld [vmem:[%s644 + $0x4] sm:$0xf]
      %v5547 = vld [vmem:[%s644 + $0x8] sm:$0xf]
      %v5548 = vld [vmem:[%s644 + $0xc] sm:$0xf]
      %v5549 = vrot.slane %v5481, 1
      %v5554 = vunpack.c.l.b16 %v5545
      %v5555 = vunpack.c.l.b16 %v5546
      %v5556 = vunpack.c.l.b16 %v5547
      %v5557 = vunpack.c.l.b16 %v5548
      %v5558 = vpack.c.b16 %v5555, %v5554
      %v5559 = vpack.c.b16 %v5557, %v5556
      %v5563 = vsel %vm197, %v5549, 0
      %5565 = vmatprep.subr.bf16.mxu0 0
      %5566 = vmatpush1.bf16.msra.mxu0 %v5558
      %5567 = vmatprep.subr.bf16.mxu0 0
      %5568 = vmatpush1.bf16.msra.mxu0 %v5559
      %5569 = vmatprep.subr.bf16.mxu0 0
      %5570 = vmatpush1.bf16.msra.mxu0 0
      %5571 = vmatprep.subr.bf16.mxu0 0
      %5572 = vmatpush1.bf16.msra.mxu0 0
      %5573 = vmatprep.subr.bf16.mxu0 0
      %5574 = vmatpush1.bf16.msra.mxu0 0
      %5575 = vmatprep.subr.bf16.mxu0 0
      %5576 = vmatpush1.bf16.msra.mxu0 0
      %5577 = vmatprep.subr.bf16.mxu0 0
      %5578 = vmatpush1.bf16.msra.mxu0 0
      %5579 = vmatprep.subr.bf16.mxu0 0
      %5580 = vmatpush1.bf16.msra.mxu0 0
      %5581 = vmatprep.subr.bf16.mxu0 0
      %5582 = vmatpush1.bf16.msra.mxu0 0
      %5583 = vmatprep.subr.bf16.mxu0 0
      %5584 = vmatpush1.bf16.msra.mxu0 0
      %5585 = vmatprep.subr.bf16.mxu0 0
      %5586 = vmatpush1.bf16.msra.mxu0 0
      %5587 = vmatprep.subr.bf16.mxu0 0
      %5588 = vmatpush1.bf16.msra.mxu0 0
      %5589 = vmatprep.subr.bf16.mxu0 0
      %5590 = vmatpush1.bf16.msra.mxu0 0
      %5591 = vmatprep.subr.bf16.mxu0 0
      %5592 = vmatpush1.bf16.msra.mxu0 0
      %5593 = vmatprep.subr.bf16.mxu0 0
      %5594 = vmatpush1.bf16.msra.mxu0 0
      %5595 = vmatprep.subr.bf16.mxu0 0
      %5596 = vmatpush1.bf16.msra.mxu0 0
      %5597 = vmatprep.mubr.bf16.mxu0 0
      %5598 = vmatmul.mubr.bf16.gmra.mrb[0].mxu0 %v5563
      %v5599 = vpop.f32.mrb[0].mxu0
      %v5600 = vadd.f32 0.0, %v5599
      %v5601 = vpop.f32.mrb[0].mxu0
      %v5602 = vpop.f32.mrb[0].mxu0
      %v5603 = vpop.f32.mrb[0].mxu0
      %5604 = vdwg.mxu0
      %v5605 = vadd.f32 %v5544, %v5600
      %v5606 = vld [vmem:[%s706] sm:$0xf]
      %v5607 = vld [vmem:[%s706 + $0x4] sm:$0xf]
      %v5608 = vld [vmem:[%s706 + $0x8] sm:$0xf]
      %v5609 = vld [vmem:[%s706 + $0xc] sm:$0xf]
      %v5611 = vunpack.c.l.b16 %v5414
      %v5612 = vpack.c.b16 %v5611, %v5480
      %v5614 = vshrl.u32 %v5612, 16
      %v5616 = vrot.slane %v5614, 1
      %v5617 = vshll.u32 %v5612, 16
      %v5619 = vrot.slane %v5617, 2
      %v5620 = vor.u32 %v5616, %v5619
      %v5625 = vunpack.c.l.b16 %v5606
      %v5626 = vunpack.c.l.b16 %v5607
      %v5627 = vunpack.c.l.b16 %v5608
      %v5628 = vunpack.c.l.b16 %v5609
      %v5629 = vpack.c.b16 %v5626, %v5625
      %v5630 = vpack.c.b16 %v5628, %v5627
      %v5634 = vsel %vm197, %v5620, 0
      %5636 = vmatprep.subr.bf16.mxu0 0
      %5637 = vmatpush1.bf16.msra.mxu0 %v5629
      %5638 = vmatprep.subr.bf16.mxu0 0
      %5639 = vmatpush1.bf16.msra.mxu0 %v5630
      %5640 = vmatprep.subr.bf16.mxu0 0
      %5641 = vmatpush1.bf16.msra.mxu0 0
      %5642 = vmatprep.subr.bf16.mxu0 0
      %5643 = vmatpush1.bf16.msra.mxu0 0
      %5644 = vmatprep.subr.bf16.mxu0 0
      %5645 = vmatpush1.bf16.msra.mxu0 0
      %5646 = vmatprep.subr.bf16.mxu0 0
      %5647 = vmatpush1.bf16.msra.mxu0 0
      %5648 = vmatprep.subr.bf16.mxu0 0
      %5649 = vmatpush1.bf16.msra.mxu0 0
      %5650 = vmatprep.subr.bf16.mxu0 0
      %5651 = vmatpush1.bf16.msra.mxu0 0
      %5652 = vmatprep.subr.bf16.mxu0 0
      %5653 = vmatpush1.bf16.msra.mxu0 0
      %5654 = vmatprep.subr.bf16.mxu0 0
      %5655 = vmatpush1.bf16.msra.mxu0 0
      %5656 = vmatprep.subr.bf16.mxu0 0
      %5657 = vmatpush1.bf16.msra.mxu0 0
      %5658 = vmatprep.subr.bf16.mxu0 0
      %5659 = vmatpush1.bf16.msra.mxu0 0
      %5660 = vmatprep.subr.bf16.mxu0 0
      %5661 = vmatpush1.bf16.msra.mxu0 0
      %5662 = vmatprep.subr.bf16.mxu0 0
      %5663 = vmatpush1.bf16.msra.mxu0 0
      %5664 = vmatprep.subr.bf16.mxu0 0
      %5665 = vmatpush1.bf16.msra.mxu0 0
      %5666 = vmatprep.subr.bf16.mxu0 0
      %5667 = vmatpush1.bf16.msra.mxu0 0
      %5668 = vmatprep.mubr.bf16.mxu0 0
      %5669 = vmatmul.mubr.bf16.gmra.mrb[0].mxu0 %v5634
      %v5670 = vpop.f32.mrb[0].mxu0
      %v5671 = vadd.f32 0.0, %v5670
      %v5672 = vpop.f32.mrb[0].mxu0
      %v5673 = vpop.f32.mrb[0].mxu0
      %v5674 = vpop.f32.mrb[0].mxu0
      %5675 = vdwg.mxu0
      %v5676 = vadd.f32 %v5605, %v5671
      %v5677 = vld [vmem:[%s778] sm:$0xf]
      %v5678 = vld [vmem:[%s778 + $0x4] sm:$0xf]
      %v5679 = vld [vmem:[%s778 + $0x8] sm:$0xf]
      %v5680 = vld [vmem:[%s778 + $0xc] sm:$0xf]
      %v5681 = vrot.slane %v5612, 2
      %v5686 = vunpack.c.l.b16 %v5677
      %v5687 = vunpack.c.l.b16 %v5678
      %v5688 = vunpack.c.l.b16 %v5679
      %v5689 = vunpack.c.l.b16 %v5680
      %v5690 = vpack.c.b16 %v5687, %v5686
      %v5691 = vpack.c.b16 %v5689, %v5688
      %v5695 = vsel %vm197, %v5681, 0
      %5697 = vmatprep.subr.bf16.mxu0 0
      %5698 = vmatpush1.bf16.msra.mxu0 %v5690
      %5699 = vmatprep.subr.bf16.mxu0 0
      %5700 = vmatpush1.bf16.msra.mxu0 %v5691
      %5701 = vmatprep.subr.bf16.mxu0 0
      %5702 = vmatpush1.bf16.msra.mxu0 0
      %5703 = vmatprep.subr.bf16.mxu0 0
      %5704 = vmatpush1.bf16.msra.mxu0 0
      %5705 = vmatprep.subr.bf16.mxu0 0
      %5706 = vmatpush1.bf16.msra.mxu0 0
      %5707 = vmatprep.subr.bf16.mxu0 0
      %5708 = vmatpush1.bf16.msra.mxu0 0
      %5709 = vmatprep.subr.bf16.mxu0 0
      %5710 = vmatpush1.bf16.msra.mxu0 0
      %5711 = vmatprep.subr.bf16.mxu0 0
      %5712 = vmatpush1.bf16.msra.mxu0 0
      %5713 = vmatprep.subr.bf16.mxu0 0
      %5714 = vmatpush1.bf16.msra.mxu0 0
      %5715 = vmatprep.subr.bf16.mxu0 0
      %5716 = vmatpush1.bf16.msra.mxu0 0
      %5717 = vmatprep.subr.bf16.mxu0 0
      %5718 = vmatpush1.bf16.msra.mxu0 0
      %5719 = vmatprep.subr.bf16.mxu0 0
      %5720 = vmatpush1.bf16.msra.mxu0 0
      %5721 = vmatprep.subr.bf16.mxu0 0
      %5722 = vmatpush1.bf16.msra.mxu0 0
      %5723 = vmatprep.subr.bf16.mxu0 0
      %5724 = vmatpush1.bf16.msra.mxu0 0
      %5725 = vmatprep.subr.bf16.mxu0 0
      %5726 = vmatpush1.bf16.msra.mxu0 0
      %5727 = vmatprep.subr.bf16.mxu0 0
      %5728 = vmatpush1.bf16.msra.mxu0 0
      %5729 = vmatprep.mubr.bf16.mxu0 0
      %5730 = vmatmul.mubr.bf16.gmra.mrb[0].mxu0 %v5695
      %v5731 = vpop.f32.mrb[0].mxu0
      %v5732 = vadd.f32 0.0, %v5731
      %v5733 = vpop.f32.mrb[0].mxu0
      %v5734 = vpop.f32.mrb[0].mxu0
      %v5735 = vpop.f32.mrb[0].mxu0
      %5736 = vdwg.mxu0
      %v5737 = vadd.f32 %v5676, %v5732
      %v5738 = vld [vmem:[%s3134] sm:$0xf]
      %v5739 = vld [vmem:[%s3134 + $0x4] sm:$0x1]
      %v5740 = vld [vmem:[%s843] sm:$0xf]
      %v5741 = vld [vmem:[%s843 + $0x4] sm:$0xf]
      %v5742 = vld [vmem:[%s843 + $0x8] sm:$0xf]
      %v5743 = vld [vmem:[%s843 + $0xc] sm:$0xf]
      %v5748 = vunpack.c.l.b16 %v5740
      %v5749 = vunpack.c.l.b16 %v5741
      %v5750 = vunpack.c.l.b16 %v5742
      %v5751 = vunpack.c.l.b16 %v5743
      %v5752 = vpack.c.b16 %v5749, %v5748
      %v5753 = vpack.c.b16 %v5751, %v5750
      %v5757 = vsel %vm197, %v5738, 0
      %5759 = vmatprep.subr.bf16.mxu0 0
      %5760 = vmatpush1.bf16.msra.mxu0 %v5752
      %5761 = vmatprep.subr.bf16.mxu0 0
      %5762 = vmatpush1.bf16.msra.mxu0 %v5753
      %5763 = vmatprep.subr.bf16.mxu0 0
      %5764 = vmatpush1.bf16.msra.mxu0 0
      %5765 = vmatprep.subr.bf16.mxu0 0
      %5766 = vmatpush1.bf16.msra.mxu0 0
      %5767 = vmatprep.subr.bf16.mxu0 0
      %5768 = vmatpush1.bf16.msra.mxu0 0
      %5769 = vmatprep.subr.bf16.mxu0 0
      %5770 = vmatpush1.bf16.msra.mxu0 0
      %5771 = vmatprep.subr.bf16.mxu0 0
      %5772 = vmatpush1.bf16.msra.mxu0 0
      %5773 = vmatprep.subr.bf16.mxu0 0
      %5774 = vmatpush1.bf16.msra.mxu0 0
      %5775 = vmatprep.subr.bf16.mxu0 0
      %5776 = vmatpush1.bf16.msra.mxu0 0
      %5777 = vmatprep.subr.bf16.mxu0 0
      %5778 = vmatpush1.bf16.msra.mxu0 0
      %5779 = vmatprep.subr.bf16.mxu0 0
      %5780 = vmatpush1.bf16.msra.mxu0 0
      %5781 = vmatprep.subr.bf16.mxu0 0
      %5782 = vmatpush1.bf16.msra.mxu0 0
      %5783 = vmatprep.subr.bf16.mxu0 0
      %5784 = vmatpush1.bf16.msra.mxu0 0
      %5785 = vmatprep.subr.bf16.mxu0 0
      %5786 = vmatpush1.bf16.msra.mxu0 0
      %5787 = vmatprep.subr.bf16.mxu0 0
      %5788 = vmatpush1.bf16.msra.mxu0 0
      %5789 = vmatprep.subr.bf16.mxu0 0
      %5790 = vmatpush1.bf16.msra.mxu0 0
      %5791 = vmatprep.mubr.bf16.mxu0 0
      %5792 = vmatmul.mubr.bf16.gmra.mrb[0].mxu0 %v5757
      %v5793 = vpop.f32.mrb[0].mxu0
      %v5794 = vadd.f32 0.0, %v5793
      %v5795 = vpop.f32.mrb[0].mxu0
      %v5796 = vpop.f32.mrb[0].mxu0
      %v5797 = vpop.f32.mrb[0].mxu0
      %5798 = vdwg.mxu0
      %v5799 = vadd.f32 %v5737, %v5794
      %v5800 = vld [vmem:[%s904] sm:$0xf]
      %v5801 = vld [vmem:[%s904 + $0x4] sm:$0xf]
      %v5802 = vld [vmem:[%s904 + $0x8] sm:$0xf]
      %v5803 = vld [vmem:[%s904 + $0xc] sm:$0xf]
      %v5805 = vunpack.c.l.b16 %v5738
      %v5806 = vpack.c.b16 %v5805, %v5805
      %v5808 = vshrl.u32 %v5806, 16
      %v5810 = vshll.u32 %v5806, 16
      %v5812 = vrot.slane %v5810, 1
      %v5813 = vor.u32 %v5808, %v5812
      %v5818 = vunpack.c.l.b16 %v5800
      %v5819 = vunpack.c.l.b16 %v5801
      %v5820 = vunpack.c.l.b16 %v5802
      %v5821 = vunpack.c.l.b16 %v5803
      %v5822 = vpack.c.b16 %v5819, %v5818
      %v5823 = vpack.c.b16 %v5821, %v5820
      %v5827 = vsel %vm197, %v5813, 0
      %5829 = vmatprep.subr.bf16.mxu0 0
      %5830 = vmatpush1.bf16.msra.mxu0 %v5822
      %5831 = vmatprep.subr.bf16.mxu0 0
      %5832 = vmatpush1.bf16.msra.mxu0 %v5823
      %5833 = vmatprep.subr.bf16.mxu0 0
      %5834 = vmatpush1.bf16.msra.mxu0 0
      %5835 = vmatprep.subr.bf16.mxu0 0
      %5836 = vmatpush1.bf16.msra.mxu0 0
      %5837 = vmatprep.subr.bf16.mxu0 0
      %5838 = vmatpush1.bf16.msra.mxu0 0
      %5839 = vmatprep.subr.bf16.mxu0 0
      %5840 = vmatpush1.bf16.msra.mxu0 0
      %5841 = vmatprep.subr.bf16.mxu0 0
      %5842 = vmatpush1.bf16.msra.mxu0 0
      %5843 = vmatprep.subr.bf16.mxu0 0
      %5844 = vmatpush1.bf16.msra.mxu0 0
      %5845 = vmatprep.subr.bf16.mxu0 0
      %5846 = vmatpush1.bf16.msra.mxu0 0
      %5847 = vmatprep.subr.bf16.mxu0 0
      %5848 = vmatpush1.bf16.msra.mxu0 0
      %5849 = vmatprep.subr.bf16.mxu0 0
      %5850 = vmatpush1.bf16.msra.mxu0 0
      %5851 = vmatprep.subr.bf16.mxu0 0
      %5852 = vmatpush1.bf16.msra.mxu0 0
      %5853 = vmatprep.subr.bf16.mxu0 0
      %5854 = vmatpush1.bf16.msra.mxu0 0
      %5855 = vmatprep.subr.bf16.mxu0 0
      %5856 = vmatpush1.bf16.msra.mxu0 0
      %5857 = vmatprep.subr.bf16.mxu0 0
      %5858 = vmatpush1.bf16.msra.mxu0 0
      %5859 = vmatprep.subr.bf16.mxu0 0
      %5860 = vmatpush1.bf16.msra.mxu0 0
      %5861 = vmatprep.mubr.bf16.mxu0 0
      %5862 = vmatmul.mubr.bf16.gmra.mrb[0].mxu0 %v5827
      %v5863 = vpop.f32.mrb[0].mxu0
      %v5864 = vadd.f32 0.0, %v5863
      %v5865 = vpop.f32.mrb[0].mxu0
      %v5866 = vpop.f32.mrb[0].mxu0
      %v5867 = vpop.f32.mrb[0].mxu0
      %5868 = vdwg.mxu0
      %v5869 = vadd.f32 %v5799, %v5864
      %v5870 = vld [vmem:[%s975] sm:$0xf]
      %v5871 = vld [vmem:[%s975 + $0x4] sm:$0xf]
      %v5872 = vld [vmem:[%s975 + $0x8] sm:$0xf]
      %v5873 = vld [vmem:[%s975 + $0xc] sm:$0xf]
      %v5874 = vrot.slane %v5806, 1
      %v5879 = vunpack.c.l.b16 %v5870
      %v5880 = vunpack.c.l.b16 %v5871
      %v5881 = vunpack.c.l.b16 %v5872
      %v5882 = vunpack.c.l.b16 %v5873
      %v5883 = vpack.c.b16 %v5880, %v5879
      %v5884 = vpack.c.b16 %v5882, %v5881
      %v5888 = vsel %vm197, %v5874, 0
      %5890 = vmatprep.subr.bf16.mxu0 0
      %5891 = vmatpush1.bf16.msra.mxu0 %v5883
      %5892 = vmatprep.subr.bf16.mxu0 0
      %5893 = vmatpush1.bf16.msra.mxu0 %v5884
      %5894 = vmatprep.subr.bf16.mxu0 0
      %5895 = vmatpush1.bf16.msra.mxu0 0
      %5896 = vmatprep.subr.bf16.mxu0 0
      %5897 = vmatpush1.bf16.msra.mxu0 0
      %5898 = vmatprep.subr.bf16.mxu0 0
      %5899 = vmatpush1.bf16.msra.mxu0 0
      %5900 = vmatprep.subr.bf16.mxu0 0
      %5901 = vmatpush1.bf16.msra.mxu0 0
      %5902 = vmatprep.subr.bf16.mxu0 0
      %5903 = vmatpush1.bf16.msra.mxu0 0
      %5904 = vmatprep.subr.bf16.mxu0 0
      %5905 = vmatpush1.bf16.msra.mxu0 0
      %5906 = vmatprep.subr.bf16.mxu0 0
      %5907 = vmatpush1.bf16.msra.mxu0 0
      %5908 = vmatprep.subr.bf16.mxu0 0
      %5909 = vmatpush1.bf16.msra.mxu0 0
      %5910 = vmatprep.subr.bf16.mxu0 0
      %5911 = vmatpush1.bf16.msra.mxu0 0
      %5912 = vmatprep.subr.bf16.mxu0 0
      %5913 = vmatpush1.bf16.msra.mxu0 0
      %5914 = vmatprep.subr.bf16.mxu0 0
      %5915 = vmatpush1.bf16.msra.mxu0 0
      %5916 = vmatprep.subr.bf16.mxu0 0
      %5917 = vmatpush1.bf16.msra.mxu0 0
      %5918 = vmatprep.subr.bf16.mxu0 0
      %5919 = vmatpush1.bf16.msra.mxu0 0
      %5920 = vmatprep.subr.bf16.mxu0 0
      %5921 = vmatpush1.bf16.msra.mxu0 0
      %5922 = vmatprep.mubr.bf16.mxu0 0
      %5923 = vmatmul.mubr.bf16.gmra.mrb[0].mxu0 %v5888
      %v5924 = vpop.f32.mrb[0].mxu0
      %v5925 = vadd.f32 0.0, %v5924
      %v5926 = vpop.f32.mrb[0].mxu0
      %v5927 = vpop.f32.mrb[0].mxu0
      %v5928 = vpop.f32.mrb[0].mxu0
      %5929 = vdwg.mxu0
      %v5930 = vadd.f32 %v5869, %v5925
      %v5931 = vld [vmem:[%s1037] sm:$0xf]
      %v5932 = vld [vmem:[%s1037 + $0x4] sm:$0xf]
      %v5933 = vld [vmem:[%s1037 + $0x8] sm:$0xf]
      %v5934 = vld [vmem:[%s1037 + $0xc] sm:$0xf]
      %v5936 = vunpack.c.l.b16 %v5739
      %v5937 = vpack.c.b16 %v5936, %v5805
      %v5939 = vshrl.u32 %v5937, 16
      %v5941 = vrot.slane %v5939, 1
      %v5942 = vshll.u32 %v5937, 16
      %v5944 = vrot.slane %v5942, 2
      %v5945 = vor.u32 %v5941, %v5944
      %v5950 = vunpack.c.l.b16 %v5931
      %v5951 = vunpack.c.l.b16 %v5932
      %v5952 = vunpack.c.l.b16 %v5933
      %v5953 = vunpack.c.l.b16 %v5934
      %v5954 = vpack.c.b16 %v5951, %v5950
      %v5955 = vpack.c.b16 %v5953, %v5952
      %v5959 = vsel %vm197, %v5945, 0
      %5961 = vmatprep.subr.bf16.mxu0 0
      %5962 = vmatpush1.bf16.msra.mxu0 %v5954
      %5963 = vmatprep.subr.bf16.mxu0 0
      %5964 = vmatpush1.bf16.msra.mxu0 %v5955
      %5965 = vmatprep.subr.bf16.mxu0 0
      %5966 = vmatpush1.bf16.msra.mxu0 0
      %5967 = vmatprep.subr.bf16.mxu0 0
      %5968 = vmatpush1.bf16.msra.mxu0 0
      %5969 = vmatprep.subr.bf16.mxu0 0
      %5970 = vmatpush1.bf16.msra.mxu0 0
      %5971 = vmatprep.subr.bf16.mxu0 0
      %5972 = vmatpush1.bf16.msra.mxu0 0
      %5973 = vmatprep.subr.bf16.mxu0 0
      %5974 = vmatpush1.bf16.msra.mxu0 0
      %5975 = vmatprep.subr.bf16.mxu0 0
      %5976 = vmatpush1.bf16.msra.mxu0 0
      %5977 = vmatprep.subr.bf16.mxu0 0
      %5978 = vmatpush1.bf16.msra.mxu0 0
      %5979 = vmatprep.subr.bf16.mxu0 0
      %5980 = vmatpush1.bf16.msra.mxu0 0
      %5981 = vmatprep.subr.bf16.mxu0 0
      %5982 = vmatpush1.bf16.msra.mxu0 0
      %5983 = vmatprep.subr.bf16.mxu0 0
      %5984 = vmatpush1.bf16.msra.mxu0 0
      %5985 = vmatprep.subr.bf16.mxu0 0
      %5986 = vmatpush1.bf16.msra.mxu0 0
      %5987 = vmatprep.subr.bf16.mxu0 0
      %5988 = vmatpush1.bf16.msra.mxu0 0
      %5989 = vmatprep.subr.bf16.mxu0 0
      %5990 = vmatpush1.bf16.msra.mxu0 0
      %5991 = vmatprep.subr.bf16.mxu0 0
      %5992 = vmatpush1.bf16.msra.mxu0 0
      %5993 = vmatprep.mubr.bf16.mxu0 0
      %5994 = vmatmul.mubr.bf16.gmra.mrb[0].mxu0 %v5959
      %v5995 = vpop.f32.mrb[0].mxu0
      %v5996 = vadd.f32 0.0, %v5995
      %v5997 = vpop.f32.mrb[0].mxu0
      %v5998 = vpop.f32.mrb[0].mxu0
      %v5999 = vpop.f32.mrb[0].mxu0
      %6000 = vdwg.mxu0
      %v6001 = vadd.f32 %v5930, %v5996
      %v6002 = vld [vmem:[%s1109] sm:$0xf]
      %v6003 = vld [vmem:[%s1109 + $0x4] sm:$0xf]
      %v6004 = vld [vmem:[%s1109 + $0x8] sm:$0xf]
      %v6005 = vld [vmem:[%s1109 + $0xc] sm:$0xf]
      %v6006 = vrot.slane %v5937, 2
      %v6011 = vunpack.c.l.b16 %v6002
      %v6012 = vunpack.c.l.b16 %v6003
      %v6013 = vunpack.c.l.b16 %v6004
      %v6014 = vunpack.c.l.b16 %v6005
      %v6015 = vpack.c.b16 %v6012, %v6011
      %v6016 = vpack.c.b16 %v6014, %v6013
      %v6020 = vsel %vm197, %v6006, 0
      %6022 = vmatprep.subr.bf16.mxu0 0
      %6023 = vmatpush1.bf16.msra.mxu0 %v6015
      %6024 = vmatprep.subr.bf16.mxu0 0
      %6025 = vmatpush1.bf16.msra.mxu0 %v6016
      %6026 = vmatprep.subr.bf16.mxu0 0
      %6027 = vmatpush1.bf16.msra.mxu0 0
      %6028 = vmatprep.subr.bf16.mxu0 0
      %6029 = vmatpush1.bf16.msra.mxu0 0
      %6030 = vmatprep.subr.bf16.mxu0 0
      %6031 = vmatpush1.bf16.msra.mxu0 0
      %6032 = vmatprep.subr.bf16.mxu0 0
      %6033 = vmatpush1.bf16.msra.mxu0 0
      %6034 = vmatprep.subr.bf16.mxu0 0
      %6035 = vmatpush1.bf16.msra.mxu0 0
      %6036 = vmatprep.subr.bf16.mxu0 0
      %6037 = vmatpush1.bf16.msra.mxu0 0
      %6038 = vmatprep.subr.bf16.mxu0 0
      %6039 = vmatpush1.bf16.msra.mxu0 0
      %6040 = vmatprep.subr.bf16.mxu0 0
      %6041 = vmatpush1.bf16.msra.mxu0 0
      %6042 = vmatprep.subr.bf16.mxu0 0
      %6043 = vmatpush1.bf16.msra.mxu0 0
      %6044 = vmatprep.subr.bf16.mxu0 0
      %6045 = vmatpush1.bf16.msra.mxu0 0
      %6046 = vmatprep.subr.bf16.mxu0 0
      %6047 = vmatpush1.bf16.msra.mxu0 0
      %6048 = vmatprep.subr.bf16.mxu0 0
      %6049 = vmatpush1.bf16.msra.mxu0 0
      %6050 = vmatprep.subr.bf16.mxu0 0
      %6051 = vmatpush1.bf16.msra.mxu0 0
      %6052 = vmatprep.subr.bf16.mxu0 0
      %6053 = vmatpush1.bf16.msra.mxu0 0
      %6054 = vmatprep.mubr.bf16.mxu0 0
      %6055 = vmatmul.mubr.bf16.gmra.mrb[0].mxu0 %v6020
      %v6056 = vpop.f32.mrb[0].mxu0
      %v6057 = vadd.f32 0.0, %v6056
      %v6058 = vpop.f32.mrb[0].mxu0
      %v6059 = vpop.f32.mrb[0].mxu0
      %v6060 = vpop.f32.mrb[0].mxu0
      %6061 = vdwg.mxu0
      %v6062 = vadd.f32 %v6001, %v6057
      %v6063 = vld [vmem:[%s4761] sm:$0xf]
      %v6064 = vld [vmem:[%s4761 + $0x4] sm:$0x1]
      %v6065 = vld [vmem:[%s1174] sm:$0xf]
      %v6066 = vld [vmem:[%s1174 + $0x4] sm:$0xf]
      %v6067 = vld [vmem:[%s1174 + $0x8] sm:$0xf]
      %v6068 = vld [vmem:[%s1174 + $0xc] sm:$0xf]
      %v6073 = vunpack.c.l.b16 %v6065
      %v6074 = vunpack.c.l.b16 %v6066
      %v6075 = vunpack.c.l.b16 %v6067
      %v6076 = vunpack.c.l.b16 %v6068
      %v6077 = vpack.c.b16 %v6074, %v6073
      %v6078 = vpack.c.b16 %v6076, %v6075
      %v6082 = vsel %vm197, %v6063, 0
      %6084 = vmatprep.subr.bf16.mxu0 0
      %6085 = vmatpush1.bf16.msra.mxu0 %v6077
      %6086 = vmatprep.subr.bf16.mxu0 0
      %6087 = vmatpush1.bf16.msra.mxu0 %v6078
      %6088 = vmatprep.subr.bf16.mxu0 0
      %6089 = vmatpush1.bf16.msra.mxu0 0
      %6090 = vmatprep.subr.bf16.mxu0 0
      %6091 = vmatpush1.bf16.msra.mxu0 0
      %6092 = vmatprep.subr.bf16.mxu0 0
      %6093 = vmatpush1.bf16.msra.mxu0 0
      %6094 = vmatprep.subr.bf16.mxu0 0
      %6095 = vmatpush1.bf16.msra.mxu0 0
      %6096 = vmatprep.subr.bf16.mxu0 0
      %6097 = vmatpush1.bf16.msra.mxu0 0
      %6098 = vmatprep.subr.bf16.mxu0 0
      %6099 = vmatpush1.bf16.msra.mxu0 0
      %6100 = vmatprep.subr.bf16.mxu0 0
      %6101 = vmatpush1.bf16.msra.mxu0 0
      %6102 = vmatprep.subr.bf16.mxu0 0
      %6103 = vmatpush1.bf16.msra.mxu0 0
      %6104 = vmatprep.subr.bf16.mxu0 0
      %6105 = vmatpush1.bf16.msra.mxu0 0
      %6106 = vmatprep.subr.bf16.mxu0 0
      %6107 = vmatpush1.bf16.msra.mxu0 0
      %6108 = vmatprep.subr.bf16.mxu0 0
      %6109 = vmatpush1.bf16.msra.mxu0 0
      %6110 = vmatprep.subr.bf16.mxu0 0
      %6111 = vmatpush1.bf16.msra.mxu0 0
      %6112 = vmatprep.subr.bf16.mxu0 0
      %6113 = vmatpush1.bf16.msra.mxu0 0
      %6114 = vmatprep.subr.bf16.mxu0 0
      %6115 = vmatpush1.bf16.msra.mxu0 0
      %6116 = vmatprep.mubr.bf16.mxu0 0
      %6117 = vmatmul.mubr.bf16.gmra.mrb[0].mxu0 %v6082
      %v6118 = vpop.f32.mrb[0].mxu0
      %v6119 = vadd.f32 0.0, %v6118
      %v6120 = vpop.f32.mrb[0].mxu0
      %v6121 = vpop.f32.mrb[0].mxu0
      %v6122 = vpop.f32.mrb[0].mxu0
      %6123 = vdwg.mxu0
      %v6124 = vadd.f32 %v6062, %v6119
      %v6125 = vld [vmem:[%s1235] sm:$0xf]
      %v6126 = vld [vmem:[%s1235 + $0x4] sm:$0xf]
      %v6127 = vld [vmem:[%s1235 + $0x8] sm:$0xf]
      %v6128 = vld [vmem:[%s1235 + $0xc] sm:$0xf]
      %v6130 = vunpack.c.l.b16 %v6063
      %v6131 = vpack.c.b16 %v6130, %v6130
      %v6133 = vshrl.u32 %v6131, 16
      %v6135 = vshll.u32 %v6131, 16
      %v6137 = vrot.slane %v6135, 1
      %v6138 = vor.u32 %v6133, %v6137
      %v6143 = vunpack.c.l.b16 %v6125
      %v6144 = vunpack.c.l.b16 %v6126
      %v6145 = vunpack.c.l.b16 %v6127
      %v6146 = vunpack.c.l.b16 %v6128
      %v6147 = vpack.c.b16 %v6144, %v6143
      %v6148 = vpack.c.b16 %v6146, %v6145
      %v6152 = vsel %vm197, %v6138, 0
      %6154 = vmatprep.subr.bf16.mxu0 0
      %6155 = vmatpush1.bf16.msra.mxu0 %v6147
      %6156 = vmatprep.subr.bf16.mxu0 0
      %6157 = vmatpush1.bf16.msra.mxu0 %v6148
      %6158 = vmatprep.subr.bf16.mxu0 0
      %6159 = vmatpush1.bf16.msra.mxu0 0
      %6160 = vmatprep.subr.bf16.mxu0 0
      %6161 = vmatpush1.bf16.msra.mxu0 0
      %6162 = vmatprep.subr.bf16.mxu0 0
      %6163 = vmatpush1.bf16.msra.mxu0 0
      %6164 = vmatprep.subr.bf16.mxu0 0
      %6165 = vmatpush1.bf16.msra.mxu0 0
      %6166 = vmatprep.subr.bf16.mxu0 0
      %6167 = vmatpush1.bf16.msra.mxu0 0
      %6168 = vmatprep.subr.bf16.mxu0 0
      %6169 = vmatpush1.bf16.msra.mxu0 0
      %6170 = vmatprep.subr.bf16.mxu0 0
      %6171 = vmatpush1.bf16.msra.mxu0 0
      %6172 = vmatprep.subr.bf16.mxu0 0
      %6173 = vmatpush1.bf16.msra.mxu0 0
      %6174 = vmatprep.subr.bf16.mxu0 0
      %6175 = vmatpush1.bf16.msra.mxu0 0
      %6176 = vmatprep.subr.bf16.mxu0 0
      %6177 = vmatpush1.bf16.msra.mxu0 0
      %6178 = vmatprep.subr.bf16.mxu0 0
      %6179 = vmatpush1.bf16.msra.mxu0 0
      %6180 = vmatprep.subr.bf16.mxu0 0
      %6181 = vmatpush1.bf16.msra.mxu0 0
      %6182 = vmatprep.subr.bf16.mxu0 0
      %6183 = vmatpush1.bf16.msra.mxu0 0
      %6184 = vmatprep.subr.bf16.mxu0 0
      %6185 = vmatpush1.bf16.msra.mxu0 0
      %6186 = vmatprep.mubr.bf16.mxu0 0
      %6187 = vmatmul.mubr.bf16.gmra.mrb[0].mxu0 %v6152
      %v6188 = vpop.f32.mrb[0].mxu0
      %v6189 = vadd.f32 0.0, %v6188
      %v6190 = vpop.f32.mrb[0].mxu0
      %v6191 = vpop.f32.mrb[0].mxu0
      %v6192 = vpop.f32.mrb[0].mxu0
      %6193 = vdwg.mxu0
      %v6194 = vadd.f32 %v6124, %v6189
      %v6195 = vld [vmem:[%s1306] sm:$0xf]
      %v6196 = vld [vmem:[%s1306 + $0x4] sm:$0xf]
      %v6197 = vld [vmem:[%s1306 + $0x8] sm:$0xf]
      %v6198 = vld [vmem:[%s1306 + $0xc] sm:$0xf]
      %v6199 = vrot.slane %v6131, 1
      %v6204 = vunpack.c.l.b16 %v6195
      %v6205 = vunpack.c.l.b16 %v6196
      %v6206 = vunpack.c.l.b16 %v6197
      %v6207 = vunpack.c.l.b16 %v6198
      %v6208 = vpack.c.b16 %v6205, %v6204
      %v6209 = vpack.c.b16 %v6207, %v6206
      %v6213 = vsel %vm197, %v6199, 0
      %6215 = vmatprep.subr.bf16.mxu0 0
      %6216 = vmatpush1.bf16.msra.mxu0 %v6208
      %6217 = vmatprep.subr.bf16.mxu0 0
      %6218 = vmatpush1.bf16.msra.mxu0 %v6209
      %6219 = vmatprep.subr.bf16.mxu0 0
      %6220 = vmatpush1.bf16.msra.mxu0 0
      %6221 = vmatprep.subr.bf16.mxu0 0
      %6222 = vmatpush1.bf16.msra.mxu0 0
      %6223 = vmatprep.subr.bf16.mxu0 0
      %6224 = vmatpush1.bf16.msra.mxu0 0
      %6225 = vmatprep.subr.bf16.mxu0 0
      %6226 = vmatpush1.bf16.msra.mxu0 0
      %6227 = vmatprep.subr.bf16.mxu0 0
      %6228 = vmatpush1.bf16.msra.mxu0 0
      %6229 = vmatprep.subr.bf16.mxu0 0
      %6230 = vmatpush1.bf16.msra.mxu0 0
      %6231 = vmatprep.subr.bf16.mxu0 0
      %6232 = vmatpush1.bf16.msra.mxu0 0
      %6233 = vmatprep.subr.bf16.mxu0 0
      %6234 = vmatpush1.bf16.msra.mxu0 0
      %6235 = vmatprep.subr.bf16.mxu0 0
      %6236 = vmatpush1.bf16.msra.mxu0 0
      %6237 = vmatprep.subr.bf16.mxu0 0
      %6238 = vmatpush1.bf16.msra.mxu0 0
      %6239 = vmatprep.subr.bf16.mxu0 0
      %6240 = vmatpush1.bf16.msra.mxu0 0
      %6241 = vmatprep.subr.bf16.mxu0 0
      %6242 = vmatpush1.bf16.msra.mxu0 0
      %6243 = vmatprep.subr.bf16.mxu0 0
      %6244 = vmatpush1.bf16.msra.mxu0 0
      %6245 = vmatprep.subr.bf16.mxu0 0
      %6246 = vmatpush1.bf16.msra.mxu0 0
      %6247 = vmatprep.mubr.bf16.mxu0 0
      %6248 = vmatmul.mubr.bf16.gmra.mrb[0].mxu0 %v6213
      %v6249 = vpop.f32.mrb[0].mxu0
      %v6250 = vadd.f32 0.0, %v6249
      %v6251 = vpop.f32.mrb[0].mxu0
      %v6252 = vpop.f32.mrb[0].mxu0
      %v6253 = vpop.f32.mrb[0].mxu0
      %6254 = vdwg.mxu0
      %v6255 = vadd.f32 %v6194, %v6250
      %v6256 = vld [vmem:[%s1368] sm:$0xf]
      %v6257 = vld [vmem:[%s1368 + $0x4] sm:$0xf]
      %v6258 = vld [vmem:[%s1368 + $0x8] sm:$0xf]
      %v6259 = vld [vmem:[%s1368 + $0xc] sm:$0xf]
      %v6261 = vunpack.c.l.b16 %v6064
      %v6262 = vpack.c.b16 %v6261, %v6130
      %v6264 = vshrl.u32 %v6262, 16
      %v6266 = vrot.slane %v6264, 1
      %v6267 = vshll.u32 %v6262, 16
      %v6269 = vrot.slane %v6267, 2
      %v6270 = vor.u32 %v6266, %v6269
      %v6275 = vunpack.c.l.b16 %v6256
      %v6276 = vunpack.c.l.b16 %v6257
      %v6277 = vunpack.c.l.b16 %v6258
      %v6278 = vunpack.c.l.b16 %v6259
      %v6279 = vpack.c.b16 %v6276, %v6275
      %v6280 = vpack.c.b16 %v6278, %v6277
      %v6284 = vsel %vm197, %v6270, 0
      %6286 = vmatprep.subr.bf16.mxu0 0
      %6287 = vmatpush1.bf16.msra.mxu0 %v6279
      %6288 = vmatprep.subr.bf16.mxu0 0
      %6289 = vmatpush1.bf16.msra.mxu0 %v6280
      %6290 = vmatprep.subr.bf16.mxu0 0
      %6291 = vmatpush1.bf16.msra.mxu0 0
      %6292 = vmatprep.subr.bf16.mxu0 0
      %6293 = vmatpush1.bf16.msra.mxu0 0
      %6294 = vmatprep.subr.bf16.mxu0 0
      %6295 = vmatpush1.bf16.msra.mxu0 0
      %6296 = vmatprep.subr.bf16.mxu0 0
      %6297 = vmatpush1.bf16.msra.mxu0 0
      %6298 = vmatprep.subr.bf16.mxu0 0
      %6299 = vmatpush1.bf16.msra.mxu0 0
      %6300 = vmatprep.subr.bf16.mxu0 0
      %6301 = vmatpush1.bf16.msra.mxu0 0
      %6302 = vmatprep.subr.bf16.mxu0 0
      %6303 = vmatpush1.bf16.msra.mxu0 0
      %6304 = vmatprep.subr.bf16.mxu0 0
      %6305 = vmatpush1.bf16.msra.mxu0 0
      %6306 = vmatprep.subr.bf16.mxu0 0
      %6307 = vmatpush1.bf16.msra.mxu0 0
      %6308 = vmatprep.subr.bf16.mxu0 0
      %6309 = vmatpush1.bf16.msra.mxu0 0
      %6310 = vmatprep.subr.bf16.mxu0 0
      %6311 = vmatpush1.bf16.msra.mxu0 0
      %6312 = vmatprep.subr.bf16.mxu0 0
      %6313 = vmatpush1.bf16.msra.mxu0 0
      %6314 = vmatprep.subr.bf16.mxu0 0
      %6315 = vmatpush1.bf16.msra.mxu0 0
      %6316 = vmatprep.subr.bf16.mxu0 0
      %6317 = vmatpush1.bf16.msra.mxu0 0
      %6318 = vmatprep.mubr.bf16.mxu0 0
      %6319 = vmatmul.mubr.bf16.gmra.mrb[0].mxu0 %v6284
      %v6320 = vpop.f32.mrb[0].mxu0
      %v6321 = vadd.f32 0.0, %v6320
      %v6322 = vpop.f32.mrb[0].mxu0
      %v6323 = vpop.f32.mrb[0].mxu0
      %v6324 = vpop.f32.mrb[0].mxu0
      %6325 = vdwg.mxu0
      %v6326 = vadd.f32 %v6255, %v6321
      %v6327 = vld [vmem:[%s1440] sm:$0xf]
      %v6328 = vld [vmem:[%s1440 + $0x4] sm:$0xf]
      %v6329 = vld [vmem:[%s1440 + $0x8] sm:$0xf]
      %v6330 = vld [vmem:[%s1440 + $0xc] sm:$0xf]
      %v6331 = vrot.slane %v6262, 2
      %v6336 = vunpack.c.l.b16 %v6327
      %v6337 = vunpack.c.l.b16 %v6328
      %v6338 = vunpack.c.l.b16 %v6329
      %v6339 = vunpack.c.l.b16 %v6330
      %v6340 = vpack.c.b16 %v6337, %v6336
      %v6341 = vpack.c.b16 %v6339, %v6338
      %v6345 = vsel %vm197, %v6331, 0
      %6347 = vmatprep.subr.bf16.mxu0 0
      %6348 = vmatpush1.bf16.msra.mxu0 %v6340
      %6349 = vmatprep.subr.bf16.mxu0 0
      %6350 = vmatpush1.bf16.msra.mxu0 %v6341
      %6351 = vmatprep.subr.bf16.mxu0 0
      %6352 = vmatpush1.bf16.msra.mxu0 0
      %6353 = vmatprep.subr.bf16.mxu0 0
      %6354 = vmatpush1.bf16.msra.mxu0 0
      %6355 = vmatprep.subr.bf16.mxu0 0
      %6356 = vmatpush1.bf16.msra.mxu0 0
      %6357 = vmatprep.subr.bf16.mxu0 0
      %6358 = vmatpush1.bf16.msra.mxu0 0
      %6359 = vmatprep.subr.bf16.mxu0 0
      %6360 = vmatpush1.bf16.msra.mxu0 0
      %6361 = vmatprep.subr.bf16.mxu0 0
      %6362 = vmatpush1.bf16.msra.mxu0 0
      %6363 = vmatprep.subr.bf16.mxu0 0
      %6364 = vmatpush1.bf16.msra.mxu0 0
      %6365 = vmatprep.subr.bf16.mxu0 0
      %6366 = vmatpush1.bf16.msra.mxu0 0
      %6367 = vmatprep.subr.bf16.mxu0 0
      %6368 = vmatpush1.bf16.msra.mxu0 0
      %6369 = vmatprep.subr.bf16.mxu0 0
      %6370 = vmatpush1.bf16.msra.mxu0 0
      %6371 = vmatprep.subr.bf16.mxu0 0
      %6372 = vmatpush1.bf16.msra.mxu0 0
      %6373 = vmatprep.subr.bf16.mxu0 0
      %6374 = vmatpush1.bf16.msra.mxu0 0
      %6375 = vmatprep.subr.bf16.mxu0 0
      %6376 = vmatpush1.bf16.msra.mxu0 0
      %6377 = vmatprep.subr.bf16.mxu0 0
      %6378 = vmatpush1.bf16.msra.mxu0 0
      %6379 = vmatprep.mubr.bf16.mxu0 0
      %6380 = vmatmul.mubr.bf16.gmra.mrb[0].mxu0 %v6345
      %v6381 = vpop.f32.mrb[0].mxu0
      %v6382 = vadd.f32 0.0, %v6381
      %v6383 = vpop.f32.mrb[0].mxu0
      %v6384 = vpop.f32.mrb[0].mxu0
      %v6385 = vpop.f32.mrb[0].mxu0
      %6386 = vdwg.mxu0
      %v6387 = vadd.f32 %v6326, %v6382
      %s6388 = scalar_lea.vmem %s165, 56
      %v6389 = vld [vmem:[%s6388] sm:$0xf]
      %v6390 = vld [vmem:[%s6388 + $0x4] sm:$0x1]
      %v6391 = vld [vmem:[%s1505] sm:$0xf]
      %v6392 = vld [vmem:[%s1505 + $0x4] sm:$0xf]
      %v6393 = vld [vmem:[%s1505 + $0x8] sm:$0xf]
      %v6394 = vld [vmem:[%s1505 + $0xc] sm:$0xf]
      %v6399 = vunpack.c.l.b16 %v6391
      %v6400 = vunpack.c.l.b16 %v6392
      %v6401 = vunpack.c.l.b16 %v6393
      %v6402 = vunpack.c.l.b16 %v6394
      %v6403 = vpack.c.b16 %v6400, %v6399
      %v6404 = vpack.c.b16 %v6402, %v6401
      %v6408 = vsel %vm197, %v6389, 0
      %6410 = vmatprep.subr.bf16.mxu0 0
      %6411 = vmatpush1.bf16.msra.mxu0 %v6403
      %6412 = vmatprep.subr.bf16.mxu0 0
      %6413 = vmatpush1.bf16.msra.mxu0 %v6404
      %6414 = vmatprep.subr.bf16.mxu0 0
      %6415 = vmatpush1.bf16.msra.mxu0 0
      %6416 = vmatprep.subr.bf16.mxu0 0
      %6417 = vmatpush1.bf16.msra.mxu0 0
      %6418 = vmatprep.subr.bf16.mxu0 0
      %6419 = vmatpush1.bf16.msra.mxu0 0
      %6420 = vmatprep.subr.bf16.mxu0 0
      %6421 = vmatpush1.bf16.msra.mxu0 0
      %6422 = vmatprep.subr.bf16.mxu0 0
      %6423 = vmatpush1.bf16.msra.mxu0 0
      %6424 = vmatprep.subr.bf16.mxu0 0
      %6425 = vmatpush1.bf16.msra.mxu0 0
      %6426 = vmatprep.subr.bf16.mxu0 0
      %6427 = vmatpush1.bf16.msra.mxu0 0
      %6428 = vmatprep.subr.bf16.mxu0 0
      %6429 = vmatpush1.bf16.msra.mxu0 0
      %6430 = vmatprep.subr.bf16.mxu0 0
      %6431 = vmatpush1.bf16.msra.mxu0 0
      %6432 = vmatprep.subr.bf16.mxu0 0
      %6433 = vmatpush1.bf16.msra.mxu0 0
      %6434 = vmatprep.subr.bf16.mxu0 0
      %6435 = vmatpush1.bf16.msra.mxu0 0
      %6436 = vmatprep.subr.bf16.mxu0 0
      %6437 = vmatpush1.bf16.msra.mxu0 0
      %6438 = vmatprep.subr.bf16.mxu0 0
      %6439 = vmatpush1.bf16.msra.mxu0 0
      %6440 = vmatprep.subr.bf16.mxu0 0
      %6441 = vmatpush1.bf16.msra.mxu0 0
      %6442 = vmatprep.mubr.bf16.mxu0 0
      %6443 = vmatmul.mubr.bf16.gmra.mrb[0].mxu0 %v6408
      %v6444 = vpop.f32.mrb[0].mxu0
      %v6445 = vadd.f32 0.0, %v6444
      %v6446 = vpop.f32.mrb[0].mxu0
      %v6447 = vpop.f32.mrb[0].mxu0
      %v6448 = vpop.f32.mrb[0].mxu0
      %6449 = vdwg.mxu0
      %v6450 = vadd.f32 %v6387, %v6445
      %v6451 = vld [vmem:[%s1566] sm:$0xf]
      %v6452 = vld [vmem:[%s1566 + $0x4] sm:$0xf]
      %v6453 = vld [vmem:[%s1566 + $0x8] sm:$0xf]
      %v6454 = vld [vmem:[%s1566 + $0xc] sm:$0xf]
      %v6456 = vunpack.c.l.b16 %v6389
      %v6457 = vpack.c.b16 %v6456, %v6456
      %v6459 = vshrl.u32 %v6457, 16
      %v6461 = vshll.u32 %v6457, 16
      %v6463 = vrot.slane %v6461, 1
      %v6464 = vor.u32 %v6459, %v6463
      %v6469 = vunpack.c.l.b16 %v6451
      %v6470 = vunpack.c.l.b16 %v6452
      %v6471 = vunpack.c.l.b16 %v6453
      %v6472 = vunpack.c.l.b16 %v6454
      %v6473 = vpack.c.b16 %v6470, %v6469
      %v6474 = vpack.c.b16 %v6472, %v6471
      %v6478 = vsel %vm197, %v6464, 0
      %6480 = vmatprep.subr.bf16.mxu0 0
      %6481 = vmatpush1.bf16.msra.mxu0 %v6473
      %6482 = vmatprep.subr.bf16.mxu0 0
      %6483 = vmatpush1.bf16.msra.mxu0 %v6474
      %6484 = vmatprep.subr.bf16.mxu0 0
      %6485 = vmatpush1.bf16.msra.mxu0 0
      %6486 = vmatprep.subr.bf16.mxu0 0
      %6487 = vmatpush1.bf16.msra.mxu0 0
      %6488 = vmatprep.subr.bf16.mxu0 0
      %6489 = vmatpush1.bf16.msra.mxu0 0
      %6490 = vmatprep.subr.bf16.mxu0 0
      %6491 = vmatpush1.bf16.msra.mxu0 0
      %6492 = vmatprep.subr.bf16.mxu0 0
      %6493 = vmatpush1.bf16.msra.mxu0 0
      %6494 = vmatprep.subr.bf16.mxu0 0
      %6495 = vmatpush1.bf16.msra.mxu0 0
      %6496 = vmatprep.subr.bf16.mxu0 0
      %6497 = vmatpush1.bf16.msra.mxu0 0
      %6498 = vmatprep.subr.bf16.mxu0 0
      %6499 = vmatpush1.bf16.msra.mxu0 0
      %6500 = vmatprep.subr.bf16.mxu0 0
      %6501 = vmatpush1.bf16.msra.mxu0 0
      %6502 = vmatprep.subr.bf16.mxu0 0
      %6503 = vmatpush1.bf16.msra.mxu0 0
      %6504 = vmatprep.subr.bf16.mxu0 0
      %6505 = vmatpush1.bf16.msra.mxu0 0
      %6506 = vmatprep.subr.bf16.mxu0 0
      %6507 = vmatpush1.bf16.msra.mxu0 0
      %6508 = vmatprep.subr.bf16.mxu0 0
      %6509 = vmatpush1.bf16.msra.mxu0 0
      %6510 = vmatprep.subr.bf16.mxu0 0
      %6511 = vmatpush1.bf16.msra.mxu0 0
      %6512 = vmatprep.mubr.bf16.mxu0 0
      %6513 = vmatmul.mubr.bf16.gmra.mrb[0].mxu0 %v6478
      %v6514 = vpop.f32.mrb[0].mxu0
      %v6515 = vadd.f32 0.0, %v6514
      %v6516 = vpop.f32.mrb[0].mxu0
      %v6517 = vpop.f32.mrb[0].mxu0
      %v6518 = vpop.f32.mrb[0].mxu0
      %6519 = vdwg.mxu0
      %v6520 = vadd.f32 %v6450, %v6515
      %v6521 = vld [vmem:[%s1637] sm:$0xf]
      %v6522 = vld [vmem:[%s1637 + $0x4] sm:$0xf]
      %v6523 = vld [vmem:[%s1637 + $0x8] sm:$0xf]
      %v6524 = vld [vmem:[%s1637 + $0xc] sm:$0xf]
      %v6525 = vrot.slane %v6457, 1
      %v6530 = vunpack.c.l.b16 %v6521
      %v6531 = vunpack.c.l.b16 %v6522
      %v6532 = vunpack.c.l.b16 %v6523
      %v6533 = vunpack.c.l.b16 %v6524
      %v6534 = vpack.c.b16 %v6531, %v6530
      %v6535 = vpack.c.b16 %v6533, %v6532
      %v6539 = vsel %vm197, %v6525, 0
      %6541 = vmatprep.subr.bf16.mxu0 0
      %6542 = vmatpush1.bf16.msra.mxu0 %v6534
      %6543 = vmatprep.subr.bf16.mxu0 0
      %6544 = vmatpush1.bf16.msra.mxu0 %v6535
      %6545 = vmatprep.subr.bf16.mxu0 0
      %6546 = vmatpush1.bf16.msra.mxu0 0
      %6547 = vmatprep.subr.bf16.mxu0 0
      %6548 = vmatpush1.bf16.msra.mxu0 0
      %6549 = vmatprep.subr.bf16.mxu0 0
      %6550 = vmatpush1.bf16.msra.mxu0 0
      %6551 = vmatprep.subr.bf16.mxu0 0
      %6552 = vmatpush1.bf16.msra.mxu0 0
      %6553 = vmatprep.subr.bf16.mxu0 0
      %6554 = vmatpush1.bf16.msra.mxu0 0
      %6555 = vmatprep.subr.bf16.mxu0 0
      %6556 = vmatpush1.bf16.msra.mxu0 0
      %6557 = vmatprep.subr.bf16.mxu0 0
      %6558 = vmatpush1.bf16.msra.mxu0 0
      %6559 = vmatprep.subr.bf16.mxu0 0
      %6560 = vmatpush1.bf16.msra.mxu0 0
      %6561 = vmatprep.subr.bf16.mxu0 0
      %6562 = vmatpush1.bf16.msra.mxu0 0
      %6563 = vmatprep.subr.bf16.mxu0 0
      %6564 = vmatpush1.bf16.msra.mxu0 0
      %6565 = vmatprep.subr.bf16.mxu0 0
      %6566 = vmatpush1.bf16.msra.mxu0 0
      %6567 = vmatprep.subr.bf16.mxu0 0
      %6568 = vmatpush1.bf16.msra.mxu0 0
      %6569 = vmatprep.subr.bf16.mxu0 0
      %6570 = vmatpush1.bf16.msra.mxu0 0
      %6571 = vmatprep.subr.bf16.mxu0 0
      %6572 = vmatpush1.bf16.msra.mxu0 0
      %6573 = vmatprep.mubr.bf16.mxu0 0
      %6574 = vmatmul.mubr.bf16.gmra.mrb[0].mxu0 %v6539
      %v6575 = vpop.f32.mrb[0].mxu0
      %v6576 = vadd.f32 0.0, %v6575
      %v6577 = vpop.f32.mrb[0].mxu0
      %v6578 = vpop.f32.mrb[0].mxu0
      %v6579 = vpop.f32.mrb[0].mxu0
      %6580 = vdwg.mxu0
      %v6581 = vadd.f32 %v6520, %v6576
      %v6582 = vld [vmem:[%s1699] sm:$0xf]
      %v6583 = vld [vmem:[%s1699 + $0x4] sm:$0xf]
      %v6584 = vld [vmem:[%s1699 + $0x8] sm:$0xf]
      %v6585 = vld [vmem:[%s1699 + $0xc] sm:$0xf]
      %v6587 = vunpack.c.l.b16 %v6390
      %v6588 = vpack.c.b16 %v6587, %v6456
      %v6590 = vshrl.u32 %v6588, 16
      %v6592 = vrot.slane %v6590, 1
      %v6593 = vshll.u32 %v6588, 16
      %v6595 = vrot.slane %v6593, 2
      %v6596 = vor.u32 %v6592, %v6595
      %v6601 = vunpack.c.l.b16 %v6582
      %v6602 = vunpack.c.l.b16 %v6583
      %v6603 = vunpack.c.l.b16 %v6584
      %v6604 = vunpack.c.l.b16 %v6585
      %v6605 = vpack.c.b16 %v6602, %v6601
      %v6606 = vpack.c.b16 %v6604, %v6603
      %v6610 = vsel %vm197, %v6596, 0
      %6612 = vmatprep.subr.bf16.mxu0 0
      %6613 = vmatpush1.bf16.msra.mxu0 %v6605
      %6614 = vmatprep.subr.bf16.mxu0 0
      %6615 = vmatpush1.bf16.msra.mxu0 %v6606
      %6616 = vmatprep.subr.bf16.mxu0 0
      %6617 = vmatpush1.bf16.msra.mxu0 0
      %6618 = vmatprep.subr.bf16.mxu0 0
      %6619 = vmatpush1.bf16.msra.mxu0 0
      %6620 = vmatprep.subr.bf16.mxu0 0
      %6621 = vmatpush1.bf16.msra.mxu0 0
      %6622 = vmatprep.subr.bf16.mxu0 0
      %6623 = vmatpush1.bf16.msra.mxu0 0
      %6624 = vmatprep.subr.bf16.mxu0 0
      %6625 = vmatpush1.bf16.msra.mxu0 0
      %6626 = vmatprep.subr.bf16.mxu0 0
      %6627 = vmatpush1.bf16.msra.mxu0 0
      %6628 = vmatprep.subr.bf16.mxu0 0
      %6629 = vmatpush1.bf16.msra.mxu0 0
      %6630 = vmatprep.subr.bf16.mxu0 0
      %6631 = vmatpush1.bf16.msra.mxu0 0
      %6632 = vmatprep.subr.bf16.mxu0 0
      %6633 = vmatpush1.bf16.msra.mxu0 0
      %6634 = vmatprep.subr.bf16.mxu0 0
      %6635 = vmatpush1.bf16.msra.mxu0 0
      %6636 = vmatprep.subr.bf16.mxu0 0
      %6637 = vmatpush1.bf16.msra.mxu0 0
      %6638 = vmatprep.subr.bf16.mxu0 0
      %6639 = vmatpush1.bf16.msra.mxu0 0
      %6640 = vmatprep.subr.bf16.mxu0 0
      %6641 = vmatpush1.bf16.msra.mxu0 0
      %6642 = vmatprep.subr.bf16.mxu0 0
      %6643 = vmatpush1.bf16.msra.mxu0 0
      %6644 = vmatprep.mubr.bf16.mxu0 0
      %6645 = vmatmul.mubr.bf16.gmra.mrb[0].mxu0 %v6610
      %v6646 = vpop.f32.mrb[0].mxu0
      %v6647 = vadd.f32 0.0, %v6646
      %v6648 = vpop.f32.mrb[0].mxu0
      %v6649 = vpop.f32.mrb[0].mxu0
      %v6650 = vpop.f32.mrb[0].mxu0
      %6651 = vdwg.mxu0
      %v6652 = vadd.f32 %v6581, %v6647
      %v6653 = vld [vmem:[%s1771] sm:$0xf]
      %v6654 = vld [vmem:[%s1771 + $0x4] sm:$0xf]
      %v6655 = vld [vmem:[%s1771 + $0x8] sm:$0xf]
      %v6656 = vld [vmem:[%s1771 + $0xc] sm:$0xf]
      %v6657 = vrot.slane %v6588, 2
      %v6662 = vunpack.c.l.b16 %v6653
      %v6663 = vunpack.c.l.b16 %v6654
      %v6664 = vunpack.c.l.b16 %v6655
      %v6665 = vunpack.c.l.b16 %v6656
      %v6666 = vpack.c.b16 %v6663, %v6662
      %v6667 = vpack.c.b16 %v6665, %v6664
      %v6671 = vsel %vm197, %v6657, 0
      %6673 = vmatprep.subr.bf16.mxu0 0
      %6674 = vmatpush1.bf16.msra.mxu0 %v6666
      %6675 = vmatprep.subr.bf16.mxu0 0
      %6676 = vmatpush1.bf16.msra.mxu0 %v6667
      %6677 = vmatprep.subr.bf16.mxu0 0
      %6678 = vmatpush1.bf16.msra.mxu0 0
      %6679 = vmatprep.subr.bf16.mxu0 0
      %6680 = vmatpush1.bf16.msra.mxu0 0
      %6681 = vmatprep.subr.bf16.mxu0 0
      %6682 = vmatpush1.bf16.msra.mxu0 0
      %6683 = vmatprep.subr.bf16.mxu0 0
      %6684 = vmatpush1.bf16.msra.mxu0 0
      %6685 = vmatprep.subr.bf16.mxu0 0
      %6686 = vmatpush1.bf16.msra.mxu0 0
      %6687 = vmatprep.subr.bf16.mxu0 0
      %6688 = vmatpush1.bf16.msra.mxu0 0
      %6689 = vmatprep.subr.bf16.mxu0 0
      %6690 = vmatpush1.bf16.msra.mxu0 0
      %6691 = vmatprep.subr.bf16.mxu0 0
      %6692 = vmatpush1.bf16.msra.mxu0 0
      %6693 = vmatprep.subr.bf16.mxu0 0
      %6694 = vmatpush1.bf16.msra.mxu0 0
      %6695 = vmatprep.subr.bf16.mxu0 0
      %6696 = vmatpush1.bf16.msra.mxu0 0
      %6697 = vmatprep.subr.bf16.mxu0 0
      %6698 = vmatpush1.bf16.msra.mxu0 0
      %6699 = vmatprep.subr.bf16.mxu0 0
      %6700 = vmatpush1.bf16.msra.mxu0 0
      %6701 = vmatprep.subr.bf16.mxu0 0
      %6702 = vmatpush1.bf16.msra.mxu0 0
      %6703 = vmatprep.subr.bf16.mxu0 0
      %6704 = vmatpush1.bf16.msra.mxu0 0
      %6705 = vmatprep.mubr.bf16.mxu0 0
      %6706 = vmatmul.mubr.bf16.gmra.mrb[0].mxu0 %v6671
      %v6707 = vpop.f32.mrb[0].mxu0
      %v6708 = vadd.f32 0.0, %v6707
      %v6709 = vpop.f32.mrb[0].mxu0
      %v6710 = vpop.f32.mrb[0].mxu0
      %v6711 = vpop.f32.mrb[0].mxu0
      %6712 = vdwg.mxu0
      %v6713 = vadd.f32 %v6652, %v6708
      %6714 = vst [vmem:[%s170 + $0x12] sm:$0x3f] %v6713
      %v6715 = vld [vmem:[%s1502] sm:$0xf]
      %v6716 = vld [vmem:[%s1502 + $0x4] sm:$0x1]
      %v6717 = vld [vmem:[%s1] sm:$0xf]
      %v6718 = vld [vmem:[%s1 + $0x4] sm:$0xf]
      %v6719 = vld [vmem:[%s1 + $0x8] sm:$0xf]
      %v6720 = vld [vmem:[%s1 + $0xc] sm:$0xf]
      %v6725 = vunpack.c.l.b16 %v6717
      %v6726 = vunpack.c.l.b16 %v6718
      %v6727 = vunpack.c.l.b16 %v6719
      %v6728 = vunpack.c.l.b16 %v6720
      %v6729 = vpack.c.b16 %v6726, %v6725
      %v6730 = vpack.c.b16 %v6728, %v6727
      %v6734 = vsel %vm197, %v6715, 0
      %6736 = vmatprep.subr.bf16.mxu0 0
      %6737 = vmatpush1.bf16.msra.mxu0 %v6729
      %6738 = vmatprep.subr.bf16.mxu0 0
      %6739 = vmatpush1.bf16.msra.mxu0 %v6730
      %6740 = vmatprep.subr.bf16.mxu0 0
      %6741 = vmatpush1.bf16.msra.mxu0 0
      %6742 = vmatprep.subr.bf16.mxu0 0
      %6743 = vmatpush1.bf16.msra.mxu0 0
      %6744 = vmatprep.subr.bf16.mxu0 0
      %6745 = vmatpush1.bf16.msra.mxu0 0
      %6746 = vmatprep.subr.bf16.mxu0 0
      %6747 = vmatpush1.bf16.msra.mxu0 0
      %6748 = vmatprep.subr.bf16.mxu0 0
      %6749 = vmatpush1.bf16.msra.mxu0 0
      %6750 = vmatprep.subr.bf16.mxu0 0
      %6751 = vmatpush1.bf16.msra.mxu0 0
      %6752 = vmatprep.subr.bf16.mxu0 0
      %6753 = vmatpush1.bf16.msra.mxu0 0
      %6754 = vmatprep.subr.bf16.mxu0 0
      %6755 = vmatpush1.bf16.msra.mxu0 0
      %6756 = vmatprep.subr.bf16.mxu0 0
      %6757 = vmatpush1.bf16.msra.mxu0 0
      %6758 = vmatprep.subr.bf16.mxu0 0
      %6759 = vmatpush1.bf16.msra.mxu0 0
      %6760 = vmatprep.subr.bf16.mxu0 0
      %6761 = vmatpush1.bf16.msra.mxu0 0
      %6762 = vmatprep.subr.bf16.mxu0 0
      %6763 = vmatpush1.bf16.msra.mxu0 0
      %6764 = vmatprep.subr.bf16.mxu0 0
      %6765 = vmatpush1.bf16.msra.mxu0 0
      %6766 = vmatprep.subr.bf16.mxu0 0
      %6767 = vmatpush1.bf16.msra.mxu0 0
      %6768 = vmatprep.mubr.bf16.mxu0 0
      %6769 = vmatmul.mubr.bf16.gmra.mrb[0].mxu0 %v6734
      %v6770 = vpop.f32.mrb[0].mxu0
      %v6771 = vadd.f32 0.0, %v6770
      %v6772 = vpop.f32.mrb[0].mxu0
      %v6773 = vpop.f32.mrb[0].mxu0
      %v6774 = vpop.f32.mrb[0].mxu0
      %6775 = vdwg.mxu0
      %v6776 = vadd.f32 %v177, %v6771
      %v6777 = vld [vmem:[%s242] sm:$0xf]
      %v6778 = vld [vmem:[%s242 + $0x4] sm:$0xf]
      %v6779 = vld [vmem:[%s242 + $0x8] sm:$0xf]
      %v6780 = vld [vmem:[%s242 + $0xc] sm:$0xf]
      %v6782 = vunpack.c.l.b16 %v6715
      %v6783 = vpack.c.b16 %v6782, %v6782
      %v6785 = vshrl.u32 %v6783, 16
      %v6787 = vshll.u32 %v6783, 16
      %v6789 = vrot.slane %v6787, 1
      %v6790 = vor.u32 %v6785, %v6789
      %v6795 = vunpack.c.l.b16 %v6777
      %v6796 = vunpack.c.l.b16 %v6778
      %v6797 = vunpack.c.l.b16 %v6779
      %v6798 = vunpack.c.l.b16 %v6780
      %v6799 = vpack.c.b16 %v6796, %v6795
      %v6800 = vpack.c.b16 %v6798, %v6797
      %v6804 = vsel %vm197, %v6790, 0
      %6806 = vmatprep.subr.bf16.mxu0 0
      %6807 = vmatpush1.bf16.msra.mxu0 %v6799
      %6808 = vmatprep.subr.bf16.mxu0 0
      %6809 = vmatpush1.bf16.msra.mxu0 %v6800
      %6810 = vmatprep.subr.bf16.mxu0 0
      %6811 = vmatpush1.bf16.msra.mxu0 0
      %6812 = vmatprep.subr.bf16.mxu0 0
      %6813 = vmatpush1.bf16.msra.mxu0 0
      %6814 = vmatprep.subr.bf16.mxu0 0
      %6815 = vmatpush1.bf16.msra.mxu0 0
      %6816 = vmatprep.subr.bf16.mxu0 0
      %6817 = vmatpush1.bf16.msra.mxu0 0
      %6818 = vmatprep.subr.bf16.mxu0 0
      %6819 = vmatpush1.bf16.msra.mxu0 0
      %6820 = vmatprep.subr.bf16.mxu0 0
      %6821 = vmatpush1.bf16.msra.mxu0 0
      %6822 = vmatprep.subr.bf16.mxu0 0
      %6823 = vmatpush1.bf16.msra.mxu0 0
      %6824 = vmatprep.subr.bf16.mxu0 0
      %6825 = vmatpush1.bf16.msra.mxu0 0
      %6826 = vmatprep.subr.bf16.mxu0 0
      %6827 = vmatpush1.bf16.msra.mxu0 0
      %6828 = vmatprep.subr.bf16.mxu0 0
      %6829 = vmatpush1.bf16.msra.mxu0 0
      %6830 = vmatprep.subr.bf16.mxu0 0
      %6831 = vmatpush1.bf16.msra.mxu0 0
      %6832 = vmatprep.subr.bf16.mxu0 0
      %6833 = vmatpush1.bf16.msra.mxu0 0
      %6834 = vmatprep.subr.bf16.mxu0 0
      %6835 = vmatpush1.bf16.msra.mxu0 0
      %6836 = vmatprep.subr.bf16.mxu0 0
      %6837 = vmatpush1.bf16.msra.mxu0 0
      %6838 = vmatprep.mubr.bf16.mxu0 0
      %6839 = vmatmul.mubr.bf16.gmra.mrb[0].mxu0 %v6804
      %v6840 = vpop.f32.mrb[0].mxu0
      %v6841 = vadd.f32 0.0, %v6840
      %v6842 = vpop.f32.mrb[0].mxu0
      %v6843 = vpop.f32.mrb[0].mxu0
      %v6844 = vpop.f32.mrb[0].mxu0
      %6845 = vdwg.mxu0
      %v6846 = vadd.f32 %v6776, %v6841
      %v6847 = vld [vmem:[%s313] sm:$0xf]
      %v6848 = vld [vmem:[%s313 + $0x4] sm:$0xf]
      %v6849 = vld [vmem:[%s313 + $0x8] sm:$0xf]
      %v6850 = vld [vmem:[%s313 + $0xc] sm:$0xf]
      %v6851 = vrot.slane %v6783, 1
      %v6856 = vunpack.c.l.b16 %v6847
      %v6857 = vunpack.c.l.b16 %v6848
      %v6858 = vunpack.c.l.b16 %v6849
      %v6859 = vunpack.c.l.b16 %v6850
      %v6860 = vpack.c.b16 %v6857, %v6856
      %v6861 = vpack.c.b16 %v6859, %v6858
      %v6865 = vsel %vm197, %v6851, 0
      %6867 = vmatprep.subr.bf16.mxu0 0
      %6868 = vmatpush1.bf16.msra.mxu0 %v6860
      %6869 = vmatprep.subr.bf16.mxu0 0
      %6870 = vmatpush1.bf16.msra.mxu0 %v6861
      %6871 = vmatprep.subr.bf16.mxu0 0
      %6872 = vmatpush1.bf16.msra.mxu0 0
      %6873 = vmatprep.subr.bf16.mxu0 0
      %6874 = vmatpush1.bf16.msra.mxu0 0
      %6875 = vmatprep.subr.bf16.mxu0 0
      %6876 = vmatpush1.bf16.msra.mxu0 0
      %6877 = vmatprep.subr.bf16.mxu0 0
      %6878 = vmatpush1.bf16.msra.mxu0 0
      %6879 = vmatprep.subr.bf16.mxu0 0
      %6880 = vmatpush1.bf16.msra.mxu0 0
      %6881 = vmatprep.subr.bf16.mxu0 0
      %6882 = vmatpush1.bf16.msra.mxu0 0
      %6883 = vmatprep.subr.bf16.mxu0 0
      %6884 = vmatpush1.bf16.msra.mxu0 0
      %6885 = vmatprep.subr.bf16.mxu0 0
      %6886 = vmatpush1.bf16.msra.mxu0 0
      %6887 = vmatprep.subr.bf16.mxu0 0
      %6888 = vmatpush1.bf16.msra.mxu0 0
      %6889 = vmatprep.subr.bf16.mxu0 0
      %6890 = vmatpush1.bf16.msra.mxu0 0
      %6891 = vmatprep.subr.bf16.mxu0 0
      %6892 = vmatpush1.bf16.msra.mxu0 0
      %6893 = vmatprep.subr.bf16.mxu0 0
      %6894 = vmatpush1.bf16.msra.mxu0 0
      %6895 = vmatprep.subr.bf16.mxu0 0
      %6896 = vmatpush1.bf16.msra.mxu0 0
      %6897 = vmatprep.subr.bf16.mxu0 0
      %6898 = vmatpush1.bf16.msra.mxu0 0
      %6899 = vmatprep.mubr.bf16.mxu0 0
      %6900 = vmatmul.mubr.bf16.gmra.mrb[0].mxu0 %v6865
      %v6901 = vpop.f32.mrb[0].mxu0
      %v6902 = vadd.f32 0.0, %v6901
      %v6903 = vpop.f32.mrb[0].mxu0
      %v6904 = vpop.f32.mrb[0].mxu0
      %v6905 = vpop.f32.mrb[0].mxu0
      %6906 = vdwg.mxu0
      %v6907 = vadd.f32 %v6846, %v6902
      %v6908 = vld [vmem:[%s375] sm:$0xf]
      %v6909 = vld [vmem:[%s375 + $0x4] sm:$0xf]
      %v6910 = vld [vmem:[%s375 + $0x8] sm:$0xf]
      %v6911 = vld [vmem:[%s375 + $0xc] sm:$0xf]
      %v6913 = vunpack.c.l.b16 %v6716
      %v6914 = vpack.c.b16 %v6913, %v6782
      %v6916 = vshrl.u32 %v6914, 16
      %v6918 = vrot.slane %v6916, 1
      %v6919 = vshll.u32 %v6914, 16
      %v6921 = vrot.slane %v6919, 2
      %v6922 = vor.u32 %v6918, %v6921
      %v6927 = vunpack.c.l.b16 %v6908
      %v6928 = vunpack.c.l.b16 %v6909
      %v6929 = vunpack.c.l.b16 %v6910
      %v6930 = vunpack.c.l.b16 %v6911
      %v6931 = vpack.c.b16 %v6928, %v6927
      %v6932 = vpack.c.b16 %v6930, %v6929
      %v6936 = vsel %vm197, %v6922, 0
      %6938 = vmatprep.subr.bf16.mxu0 0
      %6939 = vmatpush1.bf16.msra.mxu0 %v6931
      %6940 = vmatprep.subr.bf16.mxu0 0
      %6941 = vmatpush1.bf16.msra.mxu0 %v6932
      %6942 = vmatprep.subr.bf16.mxu0 0
      %6943 = vmatpush1.bf16.msra.mxu0 0
      %6944 = vmatprep.subr.bf16.mxu0 0
      %6945 = vmatpush1.bf16.msra.mxu0 0
      %6946 = vmatprep.subr.bf16.mxu0 0
      %6947 = vmatpush1.bf16.msra.mxu0 0
      %6948 = vmatprep.subr.bf16.mxu0 0
      %6949 = vmatpush1.bf16.msra.mxu0 0
      %6950 = vmatprep.subr.bf16.mxu0 0
      %6951 = vmatpush1.bf16.msra.mxu0 0
      %6952 = vmatprep.subr.bf16.mxu0 0
      %6953 = vmatpush1.bf16.msra.mxu0 0
      %6954 = vmatprep.subr.bf16.mxu0 0
      %6955 = vmatpush1.bf16.msra.mxu0 0
      %6956 = vmatprep.subr.bf16.mxu0 0
      %6957 = vmatpush1.bf16.msra.mxu0 0
      %6958 = vmatprep.subr.bf16.mxu0 0
      %6959 = vmatpush1.bf16.msra.mxu0 0
      %6960 = vmatprep.subr.bf16.mxu0 0
      %6961 = vmatpush1.bf16.msra.mxu0 0
      %6962 = vmatprep.subr.bf16.mxu0 0
      %6963 = vmatpush1.bf16.msra.mxu0 0
      %6964 = vmatprep.subr.bf16.mxu0 0
      %6965 = vmatpush1.bf16.msra.mxu0 0
      %6966 = vmatprep.subr.bf16.mxu0 0
      %6967 = vmatpush1.bf16.msra.mxu0 0
      %6968 = vmatprep.subr.bf16.mxu0 0
      %6969 = vmatpush1.bf16.msra.mxu0 0
      %6970 = vmatprep.mubr.bf16.mxu0 0
      %6971 = vmatmul.mubr.bf16.gmra.mrb[0].mxu0 %v6936
      %v6972 = vpop.f32.mrb[0].mxu0
      %v6973 = vadd.f32 0.0, %v6972
      %v6974 = vpop.f32.mrb[0].mxu0
      %v6975 = vpop.f32.mrb[0].mxu0
      %v6976 = vpop.f32.mrb[0].mxu0
      %6977 = vdwg.mxu0
      %v6978 = vadd.f32 %v6907, %v6973
      %v6979 = vld [vmem:[%s447] sm:$0xf]
      %v6980 = vld [vmem:[%s447 + $0x4] sm:$0xf]
      %v6981 = vld [vmem:[%s447 + $0x8] sm:$0xf]
      %v6982 = vld [vmem:[%s447 + $0xc] sm:$0xf]
      %v6983 = vrot.slane %v6914, 2
      %v6988 = vunpack.c.l.b16 %v6979
      %v6989 = vunpack.c.l.b16 %v6980
      %v6990 = vunpack.c.l.b16 %v6981
      %v6991 = vunpack.c.l.b16 %v6982
      %v6992 = vpack.c.b16 %v6989, %v6988
      %v6993 = vpack.c.b16 %v6991, %v6990
      %v6997 = vsel %vm197, %v6983, 0
      %6999 = vmatprep.subr.bf16.mxu0 0
      %7000 = vmatpush1.bf16.msra.mxu0 %v6992
      %7001 = vmatprep.subr.bf16.mxu0 0
      %7002 = vmatpush1.bf16.msra.mxu0 %v6993
      %7003 = vmatprep.subr.bf16.mxu0 0
      %7004 = vmatpush1.bf16.msra.mxu0 0
      %7005 = vmatprep.subr.bf16.mxu0 0
      %7006 = vmatpush1.bf16.msra.mxu0 0
      %7007 = vmatprep.subr.bf16.mxu0 0
      %7008 = vmatpush1.bf16.msra.mxu0 0
      %7009 = vmatprep.subr.bf16.mxu0 0
      %7010 = vmatpush1.bf16.msra.mxu0 0
      %7011 = vmatprep.subr.bf16.mxu0 0
      %7012 = vmatpush1.bf16.msra.mxu0 0
      %7013 = vmatprep.subr.bf16.mxu0 0
      %7014 = vmatpush1.bf16.msra.mxu0 0
      %7015 = vmatprep.subr.bf16.mxu0 0
      %7016 = vmatpush1.bf16.msra.mxu0 0
      %7017 = vmatprep.subr.bf16.mxu0 0
      %7018 = vmatpush1.bf16.msra.mxu0 0
      %7019 = vmatprep.subr.bf16.mxu0 0
      %7020 = vmatpush1.bf16.msra.mxu0 0
      %7021 = vmatprep.subr.bf16.mxu0 0
      %7022 = vmatpush1.bf16.msra.mxu0 0
      %7023 = vmatprep.subr.bf16.mxu0 0
      %7024 = vmatpush1.bf16.msra.mxu0 0
      %7025 = vmatprep.subr.bf16.mxu0 0
      %7026 = vmatpush1.bf16.msra.mxu0 0
      %7027 = vmatprep.subr.bf16.mxu0 0
      %7028 = vmatpush1.bf16.msra.mxu0 0
      %7029 = vmatprep.subr.bf16.mxu0 0
      %7030 = vmatpush1.bf16.msra.mxu0 0
      %7031 = vmatprep.mubr.bf16.mxu0 0
      %7032 = vmatmul.mubr.bf16.gmra.mrb[0].mxu0 %v6997
      %v7033 = vpop.f32.mrb[0].mxu0
      %v7034 = vadd.f32 0.0, %v7033
      %v7035 = vpop.f32.mrb[0].mxu0
      %v7036 = vpop.f32.mrb[0].mxu0
      %v7037 = vpop.f32.mrb[0].mxu0
      %7038 = vdwg.mxu0
      %v7039 = vadd.f32 %v6978, %v7034
      %v7040 = vld [vmem:[%s3134] sm:$0xf]
      %v7041 = vld [vmem:[%s3134 + $0x4] sm:$0x1]
      %v7042 = vld [vmem:[%s512] sm:$0xf]
      %v7043 = vld [vmem:[%s512 + $0x4] sm:$0xf]
      %v7044 = vld [vmem:[%s512 + $0x8] sm:$0xf]
      %v7045 = vld [vmem:[%s512 + $0xc] sm:$0xf]
      %v7050 = vunpack.c.l.b16 %v7042
      %v7051 = vunpack.c.l.b16 %v7043
      %v7052 = vunpack.c.l.b16 %v7044
      %v7053 = vunpack.c.l.b16 %v7045
      %v7054 = vpack.c.b16 %v7051, %v7050
      %v7055 = vpack.c.b16 %v7053, %v7052
      %v7059 = vsel %vm197, %v7040, 0
      %7061 = vmatprep.subr.bf16.mxu0 0
      %7062 = vmatpush1.bf16.msra.mxu0 %v7054
      %7063 = vmatprep.subr.bf16.mxu0 0
      %7064 = vmatpush1.bf16.msra.mxu0 %v7055
      %7065 = vmatprep.subr.bf16.mxu0 0
      %7066 = vmatpush1.bf16.msra.mxu0 0
      %7067 = vmatprep.subr.bf16.mxu0 0
      %7068 = vmatpush1.bf16.msra.mxu0 0
      %7069 = vmatprep.subr.bf16.mxu0 0
      %7070 = vmatpush1.bf16.msra.mxu0 0
      %7071 = vmatprep.subr.bf16.mxu0 0
      %7072 = vmatpush1.bf16.msra.mxu0 0
      %7073 = vmatprep.subr.bf16.mxu0 0
      %7074 = vmatpush1.bf16.msra.mxu0 0
      %7075 = vmatprep.subr.bf16.mxu0 0
      %7076 = vmatpush1.bf16.msra.mxu0 0
      %7077 = vmatprep.subr.bf16.mxu0 0
      %7078 = vmatpush1.bf16.msra.mxu0 0
      %7079 = vmatprep.subr.bf16.mxu0 0
      %7080 = vmatpush1.bf16.msra.mxu0 0
      %7081 = vmatprep.subr.bf16.mxu0 0
      %7082 = vmatpush1.bf16.msra.mxu0 0
      %7083 = vmatprep.subr.bf16.mxu0 0
      %7084 = vmatpush1.bf16.msra.mxu0 0
      %7085 = vmatprep.subr.bf16.mxu0 0
      %7086 = vmatpush1.bf16.msra.mxu0 0
      %7087 = vmatprep.subr.bf16.mxu0 0
      %7088 = vmatpush1.bf16.msra.mxu0 0
      %7089 = vmatprep.subr.bf16.mxu0 0
      %7090 = vmatpush1.bf16.msra.mxu0 0
      %7091 = vmatprep.subr.bf16.mxu0 0
      %7092 = vmatpush1.bf16.msra.mxu0 0
      %7093 = vmatprep.mubr.bf16.mxu0 0
      %7094 = vmatmul.mubr.bf16.gmra.mrb[0].mxu0 %v7059
      %v7095 = vpop.f32.mrb[0].mxu0
      %v7096 = vadd.f32 0.0, %v7095
      %v7097 = vpop.f32.mrb[0].mxu0
      %v7098 = vpop.f32.mrb[0].mxu0
      %v7099 = vpop.f32.mrb[0].mxu0
      %7100 = vdwg.mxu0
      %v7101 = vadd.f32 %v7039, %v7096
      %v7102 = vld [vmem:[%s573] sm:$0xf]
      %v7103 = vld [vmem:[%s573 + $0x4] sm:$0xf]
      %v7104 = vld [vmem:[%s573 + $0x8] sm:$0xf]
      %v7105 = vld [vmem:[%s573 + $0xc] sm:$0xf]
      %v7107 = vunpack.c.l.b16 %v7040
      %v7108 = vpack.c.b16 %v7107, %v7107
      %v7110 = vshrl.u32 %v7108, 16
      %v7112 = vshll.u32 %v7108, 16
      %v7114 = vrot.slane %v7112, 1
      %v7115 = vor.u32 %v7110, %v7114
      %v7120 = vunpack.c.l.b16 %v7102
      %v7121 = vunpack.c.l.b16 %v7103
      %v7122 = vunpack.c.l.b16 %v7104
      %v7123 = vunpack.c.l.b16 %v7105
      %v7124 = vpack.c.b16 %v7121, %v7120
      %v7125 = vpack.c.b16 %v7123, %v7122
      %v7129 = vsel %vm197, %v7115, 0
      %7131 = vmatprep.subr.bf16.mxu0 0
      %7132 = vmatpush1.bf16.msra.mxu0 %v7124
      %7133 = vmatprep.subr.bf16.mxu0 0
      %7134 = vmatpush1.bf16.msra.mxu0 %v7125
      %7135 = vmatprep.subr.bf16.mxu0 0
      %7136 = vmatpush1.bf16.msra.mxu0 0
      %7137 = vmatprep.subr.bf16.mxu0 0
      %7138 = vmatpush1.bf16.msra.mxu0 0
      %7139 = vmatprep.subr.bf16.mxu0 0
      %7140 = vmatpush1.bf16.msra.mxu0 0
      %7141 = vmatprep.subr.bf16.mxu0 0
      %7142 = vmatpush1.bf16.msra.mxu0 0
      %7143 = vmatprep.subr.bf16.mxu0 0
      %7144 = vmatpush1.bf16.msra.mxu0 0
      %7145 = vmatprep.subr.bf16.mxu0 0
      %7146 = vmatpush1.bf16.msra.mxu0 0
      %7147 = vmatprep.subr.bf16.mxu0 0
      %7148 = vmatpush1.bf16.msra.mxu0 0
      %7149 = vmatprep.subr.bf16.mxu0 0
      %7150 = vmatpush1.bf16.msra.mxu0 0
      %7151 = vmatprep.subr.bf16.mxu0 0
      %7152 = vmatpush1.bf16.msra.mxu0 0
      %7153 = vmatprep.subr.bf16.mxu0 0
      %7154 = vmatpush1.bf16.msra.mxu0 0
      %7155 = vmatprep.subr.bf16.mxu0 0
      %7156 = vmatpush1.bf16.msra.mxu0 0
      %7157 = vmatprep.subr.bf16.mxu0 0
      %7158 = vmatpush1.bf16.msra.mxu0 0
      %7159 = vmatprep.subr.bf16.mxu0 0
      %7160 = vmatpush1.bf16.msra.mxu0 0
      %7161 = vmatprep.subr.bf16.mxu0 0
      %7162 = vmatpush1.bf16.msra.mxu0 0
      %7163 = vmatprep.mubr.bf16.mxu0 0
      %7164 = vmatmul.mubr.bf16.gmra.mrb[0].mxu0 %v7129
      %v7165 = vpop.f32.mrb[0].mxu0
      %v7166 = vadd.f32 0.0, %v7165
      %v7167 = vpop.f32.mrb[0].mxu0
      %v7168 = vpop.f32.mrb[0].mxu0
      %v7169 = vpop.f32.mrb[0].mxu0
      %7170 = vdwg.mxu0
      %v7171 = vadd.f32 %v7101, %v7166
      %v7172 = vld [vmem:[%s644] sm:$0xf]
      %v7173 = vld [vmem:[%s644 + $0x4] sm:$0xf]
      %v7174 = vld [vmem:[%s644 + $0x8] sm:$0xf]
      %v7175 = vld [vmem:[%s644 + $0xc] sm:$0xf]
      %v7176 = vrot.slane %v7108, 1
      %v7181 = vunpack.c.l.b16 %v7172
      %v7182 = vunpack.c.l.b16 %v7173
      %v7183 = vunpack.c.l.b16 %v7174
      %v7184 = vunpack.c.l.b16 %v7175
      %v7185 = vpack.c.b16 %v7182, %v7181
      %v7186 = vpack.c.b16 %v7184, %v7183
      %v7190 = vsel %vm197, %v7176, 0
      %7192 = vmatprep.subr.bf16.mxu0 0
      %7193 = vmatpush1.bf16.msra.mxu0 %v7185
      %7194 = vmatprep.subr.bf16.mxu0 0
      %7195 = vmatpush1.bf16.msra.mxu0 %v7186
      %7196 = vmatprep.subr.bf16.mxu0 0
      %7197 = vmatpush1.bf16.msra.mxu0 0
      %7198 = vmatprep.subr.bf16.mxu0 0
      %7199 = vmatpush1.bf16.msra.mxu0 0
      %7200 = vmatprep.subr.bf16.mxu0 0
      %7201 = vmatpush1.bf16.msra.mxu0 0
      %7202 = vmatprep.subr.bf16.mxu0 0
      %7203 = vmatpush1.bf16.msra.mxu0 0
      %7204 = vmatprep.subr.bf16.mxu0 0
      %7205 = vmatpush1.bf16.msra.mxu0 0
      %7206 = vmatprep.subr.bf16.mxu0 0
      %7207 = vmatpush1.bf16.msra.mxu0 0
      %7208 = vmatprep.subr.bf16.mxu0 0
      %7209 = vmatpush1.bf16.msra.mxu0 0
      %7210 = vmatprep.subr.bf16.mxu0 0
      %7211 = vmatpush1.bf16.msra.mxu0 0
      %7212 = vmatprep.subr.bf16.mxu0 0
      %7213 = vmatpush1.bf16.msra.mxu0 0
      %7214 = vmatprep.subr.bf16.mxu0 0
      %7215 = vmatpush1.bf16.msra.mxu0 0
      %7216 = vmatprep.subr.bf16.mxu0 0
      %7217 = vmatpush1.bf16.msra.mxu0 0
      %7218 = vmatprep.subr.bf16.mxu0 0
      %7219 = vmatpush1.bf16.msra.mxu0 0
      %7220 = vmatprep.subr.bf16.mxu0 0
      %7221 = vmatpush1.bf16.msra.mxu0 0
      %7222 = vmatprep.subr.bf16.mxu0 0
      %7223 = vmatpush1.bf16.msra.mxu0 0
      %7224 = vmatprep.mubr.bf16.mxu0 0
      %7225 = vmatmul.mubr.bf16.gmra.mrb[0].mxu0 %v7190
      %v7226 = vpop.f32.mrb[0].mxu0
      %v7227 = vadd.f32 0.0, %v7226
      %v7228 = vpop.f32.mrb[0].mxu0
      %v7229 = vpop.f32.mrb[0].mxu0
      %v7230 = vpop.f32.mrb[0].mxu0
      %7231 = vdwg.mxu0
      %v7232 = vadd.f32 %v7171, %v7227
      %v7233 = vld [vmem:[%s706] sm:$0xf]
      %v7234 = vld [vmem:[%s706 + $0x4] sm:$0xf]
      %v7235 = vld [vmem:[%s706 + $0x8] sm:$0xf]
      %v7236 = vld [vmem:[%s706 + $0xc] sm:$0xf]
      %v7238 = vunpack.c.l.b16 %v7041
      %v7239 = vpack.c.b16 %v7238, %v7107
      %v7241 = vshrl.u32 %v7239, 16
      %v7243 = vrot.slane %v7241, 1
      %v7244 = vshll.u32 %v7239, 16
      %v7246 = vrot.slane %v7244, 2
      %v7247 = vor.u32 %v7243, %v7246
      %v7252 = vunpack.c.l.b16 %v7233
      %v7253 = vunpack.c.l.b16 %v7234
      %v7254 = vunpack.c.l.b16 %v7235
      %v7255 = vunpack.c.l.b16 %v7236
      %v7256 = vpack.c.b16 %v7253, %v7252
      %v7257 = vpack.c.b16 %v7255, %v7254
      %v7261 = vsel %vm197, %v7247, 0
      %7263 = vmatprep.subr.bf16.mxu0 0
      %7264 = vmatpush1.bf16.msra.mxu0 %v7256
      %7265 = vmatprep.subr.bf16.mxu0 0
      %7266 = vmatpush1.bf16.msra.mxu0 %v7257
      %7267 = vmatprep.subr.bf16.mxu0 0
      %7268 = vmatpush1.bf16.msra.mxu0 0
      %7269 = vmatprep.subr.bf16.mxu0 0
      %7270 = vmatpush1.bf16.msra.mxu0 0
      %7271 = vmatprep.subr.bf16.mxu0 0
      %7272 = vmatpush1.bf16.msra.mxu0 0
      %7273 = vmatprep.subr.bf16.mxu0 0
      %7274 = vmatpush1.bf16.msra.mxu0 0
      %7275 = vmatprep.subr.bf16.mxu0 0
      %7276 = vmatpush1.bf16.msra.mxu0 0
      %7277 = vmatprep.subr.bf16.mxu0 0
      %7278 = vmatpush1.bf16.msra.mxu0 0
      %7279 = vmatprep.subr.bf16.mxu0 0
      %7280 = vmatpush1.bf16.msra.mxu0 0
      %7281 = vmatprep.subr.bf16.mxu0 0
      %7282 = vmatpush1.bf16.msra.mxu0 0
      %7283 = vmatprep.subr.bf16.mxu0 0
      %7284 = vmatpush1.bf16.msra.mxu0 0
      %7285 = vmatprep.subr.bf16.mxu0 0
      %7286 = vmatpush1.bf16.msra.mxu0 0
      %7287 = vmatprep.subr.bf16.mxu0 0
      %7288 = vmatpush1.bf16.msra.mxu0 0
      %7289 = vmatprep.subr.bf16.mxu0 0
      %7290 = vmatpush1.bf16.msra.mxu0 0
      %7291 = vmatprep.subr.bf16.mxu0 0
      %7292 = vmatpush1.bf16.msra.mxu0 0
      %7293 = vmatprep.subr.bf16.mxu0 0
      %7294 = vmatpush1.bf16.msra.mxu0 0
      %7295 = vmatprep.mubr.bf16.mxu0 0
      %7296 = vmatmul.mubr.bf16.gmra.mrb[0].mxu0 %v7261
      %v7297 = vpop.f32.mrb[0].mxu0
      %v7298 = vadd.f32 0.0, %v7297
      %v7299 = vpop.f32.mrb[0].mxu0
      %v7300 = vpop.f32.mrb[0].mxu0
      %v7301 = vpop.f32.mrb[0].mxu0
      %7302 = vdwg.mxu0
      %v7303 = vadd.f32 %v7232, %v7298
      %v7304 = vld [vmem:[%s778] sm:$0xf]
      %v7305 = vld [vmem:[%s778 + $0x4] sm:$0xf]
      %v7306 = vld [vmem:[%s778 + $0x8] sm:$0xf]
      %v7307 = vld [vmem:[%s778 + $0xc] sm:$0xf]
      %v7308 = vrot.slane %v7239, 2
      %v7313 = vunpack.c.l.b16 %v7304
      %v7314 = vunpack.c.l.b16 %v7305
      %v7315 = vunpack.c.l.b16 %v7306
      %v7316 = vunpack.c.l.b16 %v7307
      %v7317 = vpack.c.b16 %v7314, %v7313
      %v7318 = vpack.c.b16 %v7316, %v7315
      %v7322 = vsel %vm197, %v7308, 0
      %7324 = vmatprep.subr.bf16.mxu0 0
      %7325 = vmatpush1.bf16.msra.mxu0 %v7317
      %7326 = vmatprep.subr.bf16.mxu0 0
      %7327 = vmatpush1.bf16.msra.mxu0 %v7318
      %7328 = vmatprep.subr.bf16.mxu0 0
      %7329 = vmatpush1.bf16.msra.mxu0 0
      %7330 = vmatprep.subr.bf16.mxu0 0
      %7331 = vmatpush1.bf16.msra.mxu0 0
      %7332 = vmatprep.subr.bf16.mxu0 0
      %7333 = vmatpush1.bf16.msra.mxu0 0
      %7334 = vmatprep.subr.bf16.mxu0 0
      %7335 = vmatpush1.bf16.msra.mxu0 0
      %7336 = vmatprep.subr.bf16.mxu0 0
      %7337 = vmatpush1.bf16.msra.mxu0 0
      %7338 = vmatprep.subr.bf16.mxu0 0
      %7339 = vmatpush1.bf16.msra.mxu0 0
      %7340 = vmatprep.subr.bf16.mxu0 0
      %7341 = vmatpush1.bf16.msra.mxu0 0
      %7342 = vmatprep.subr.bf16.mxu0 0
      %7343 = vmatpush1.bf16.msra.mxu0 0
      %7344 = vmatprep.subr.bf16.mxu0 0
      %7345 = vmatpush1.bf16.msra.mxu0 0
      %7346 = vmatprep.subr.bf16.mxu0 0
      %7347 = vmatpush1.bf16.msra.mxu0 0
      %7348 = vmatprep.subr.bf16.mxu0 0
      %7349 = vmatpush1.bf16.msra.mxu0 0
      %7350 = vmatprep.subr.bf16.mxu0 0
      %7351 = vmatpush1.bf16.msra.mxu0 0
      %7352 = vmatprep.subr.bf16.mxu0 0
      %7353 = vmatpush1.bf16.msra.mxu0 0
      %7354 = vmatprep.subr.bf16.mxu0 0
      %7355 = vmatpush1.bf16.msra.mxu0 0
      %7356 = vmatprep.mubr.bf16.mxu0 0
      %7357 = vmatmul.mubr.bf16.gmra.mrb[0].mxu0 %v7322
      %v7358 = vpop.f32.mrb[0].mxu0
      %v7359 = vadd.f32 0.0, %v7358
      %v7360 = vpop.f32.mrb[0].mxu0
      %v7361 = vpop.f32.mrb[0].mxu0
      %v7362 = vpop.f32.mrb[0].mxu0
      %7363 = vdwg.mxu0
      %v7364 = vadd.f32 %v7303, %v7359
      %v7365 = vld [vmem:[%s4761] sm:$0xf]
      %v7366 = vld [vmem:[%s4761 + $0x4] sm:$0x1]
      %v7367 = vld [vmem:[%s843] sm:$0xf]
      %v7368 = vld [vmem:[%s843 + $0x4] sm:$0xf]
      %v7369 = vld [vmem:[%s843 + $0x8] sm:$0xf]
      %v7370 = vld [vmem:[%s843 + $0xc] sm:$0xf]
      %v7375 = vunpack.c.l.b16 %v7367
      %v7376 = vunpack.c.l.b16 %v7368
      %v7377 = vunpack.c.l.b16 %v7369
      %v7378 = vunpack.c.l.b16 %v7370
      %v7379 = vpack.c.b16 %v7376, %v7375
      %v7380 = vpack.c.b16 %v7378, %v7377
      %v7384 = vsel %vm197, %v7365, 0
      %7386 = vmatprep.subr.bf16.mxu0 0
      %7387 = vmatpush1.bf16.msra.mxu0 %v7379
      %7388 = vmatprep.subr.bf16.mxu0 0
      %7389 = vmatpush1.bf16.msra.mxu0 %v7380
      %7390 = vmatprep.subr.bf16.mxu0 0
      %7391 = vmatpush1.bf16.msra.mxu0 0
      %7392 = vmatprep.subr.bf16.mxu0 0
      %7393 = vmatpush1.bf16.msra.mxu0 0
      %7394 = vmatprep.subr.bf16.mxu0 0
      %7395 = vmatpush1.bf16.msra.mxu0 0
      %7396 = vmatprep.subr.bf16.mxu0 0
      %7397 = vmatpush1.bf16.msra.mxu0 0
      %7398 = vmatprep.subr.bf16.mxu0 0
      %7399 = vmatpush1.bf16.msra.mxu0 0
      %7400 = vmatprep.subr.bf16.mxu0 0
      %7401 = vmatpush1.bf16.msra.mxu0 0
      %7402 = vmatprep.subr.bf16.mxu0 0
      %7403 = vmatpush1.bf16.msra.mxu0 0
      %7404 = vmatprep.subr.bf16.mxu0 0
      %7405 = vmatpush1.bf16.msra.mxu0 0
      %7406 = vmatprep.subr.bf16.mxu0 0
      %7407 = vmatpush1.bf16.msra.mxu0 0
      %7408 = vmatprep.subr.bf16.mxu0 0
      %7409 = vmatpush1.bf16.msra.mxu0 0
      %7410 = vmatprep.subr.bf16.mxu0 0
      %7411 = vmatpush1.bf16.msra.mxu0 0
      %7412 = vmatprep.subr.bf16.mxu0 0
      %7413 = vmatpush1.bf16.msra.mxu0 0
      %7414 = vmatprep.subr.bf16.mxu0 0
      %7415 = vmatpush1.bf16.msra.mxu0 0
      %7416 = vmatprep.subr.bf16.mxu0 0
      %7417 = vmatpush1.bf16.msra.mxu0 0
      %7418 = vmatprep.mubr.bf16.mxu0 0
      %7419 = vmatmul.mubr.bf16.gmra.mrb[0].mxu0 %v7384
      %v7420 = vpop.f32.mrb[0].mxu0
      %v7421 = vadd.f32 0.0, %v7420
      %v7422 = vpop.f32.mrb[0].mxu0
      %v7423 = vpop.f32.mrb[0].mxu0
      %v7424 = vpop.f32.mrb[0].mxu0
      %7425 = vdwg.mxu0
      %v7426 = vadd.f32 %v7364, %v7421
      %v7427 = vld [vmem:[%s904] sm:$0xf]
      %v7428 = vld [vmem:[%s904 + $0x4] sm:$0xf]
      %v7429 = vld [vmem:[%s904 + $0x8] sm:$0xf]
      %v7430 = vld [vmem:[%s904 + $0xc] sm:$0xf]
      %v7432 = vunpack.c.l.b16 %v7365
      %v7433 = vpack.c.b16 %v7432, %v7432
      %v7435 = vshrl.u32 %v7433, 16
      %v7437 = vshll.u32 %v7433, 16
      %v7439 = vrot.slane %v7437, 1
      %v7440 = vor.u32 %v7435, %v7439
      %v7445 = vunpack.c.l.b16 %v7427
      %v7446 = vunpack.c.l.b16 %v7428
      %v7447 = vunpack.c.l.b16 %v7429
      %v7448 = vunpack.c.l.b16 %v7430
      %v7449 = vpack.c.b16 %v7446, %v7445
      %v7450 = vpack.c.b16 %v7448, %v7447
      %v7454 = vsel %vm197, %v7440, 0
      %7456 = vmatprep.subr.bf16.mxu0 0
      %7457 = vmatpush1.bf16.msra.mxu0 %v7449
      %7458 = vmatprep.subr.bf16.mxu0 0
      %7459 = vmatpush1.bf16.msra.mxu0 %v7450
      %7460 = vmatprep.subr.bf16.mxu0 0
      %7461 = vmatpush1.bf16.msra.mxu0 0
      %7462 = vmatprep.subr.bf16.mxu0 0
      %7463 = vmatpush1.bf16.msra.mxu0 0
      %7464 = vmatprep.subr.bf16.mxu0 0
      %7465 = vmatpush1.bf16.msra.mxu0 0
      %7466 = vmatprep.subr.bf16.mxu0 0
      %7467 = vmatpush1.bf16.msra.mxu0 0
      %7468 = vmatprep.subr.bf16.mxu0 0
      %7469 = vmatpush1.bf16.msra.mxu0 0
      %7470 = vmatprep.subr.bf16.mxu0 0
      %7471 = vmatpush1.bf16.msra.mxu0 0
      %7472 = vmatprep.subr.bf16.mxu0 0
      %7473 = vmatpush1.bf16.msra.mxu0 0
      %7474 = vmatprep.subr.bf16.mxu0 0
      %7475 = vmatpush1.bf16.msra.mxu0 0
      %7476 = vmatprep.subr.bf16.mxu0 0
      %7477 = vmatpush1.bf16.msra.mxu0 0
      %7478 = vmatprep.subr.bf16.mxu0 0
      %7479 = vmatpush1.bf16.msra.mxu0 0
      %7480 = vmatprep.subr.bf16.mxu0 0
      %7481 = vmatpush1.bf16.msra.mxu0 0
      %7482 = vmatprep.subr.bf16.mxu0 0
      %7483 = vmatpush1.bf16.msra.mxu0 0
      %7484 = vmatprep.subr.bf16.mxu0 0
      %7485 = vmatpush1.bf16.msra.mxu0 0
      %7486 = vmatprep.subr.bf16.mxu0 0
      %7487 = vmatpush1.bf16.msra.mxu0 0
      %7488 = vmatprep.mubr.bf16.mxu0 0
      %7489 = vmatmul.mubr.bf16.gmra.mrb[0].mxu0 %v7454
      %v7490 = vpop.f32.mrb[0].mxu0
      %v7491 = vadd.f32 0.0, %v7490
      %v7492 = vpop.f32.mrb[0].mxu0
      %v7493 = vpop.f32.mrb[0].mxu0
      %v7494 = vpop.f32.mrb[0].mxu0
      %7495 = vdwg.mxu0
      %v7496 = vadd.f32 %v7426, %v7491
      %v7497 = vld [vmem:[%s975] sm:$0xf]
      %v7498 = vld [vmem:[%s975 + $0x4] sm:$0xf]
      %v7499 = vld [vmem:[%s975 + $0x8] sm:$0xf]
      %v7500 = vld [vmem:[%s975 + $0xc] sm:$0xf]
      %v7501 = vrot.slane %v7433, 1
      %v7506 = vunpack.c.l.b16 %v7497
      %v7507 = vunpack.c.l.b16 %v7498
      %v7508 = vunpack.c.l.b16 %v7499
      %v7509 = vunpack.c.l.b16 %v7500
      %v7510 = vpack.c.b16 %v7507, %v7506
      %v7511 = vpack.c.b16 %v7509, %v7508
      %v7515 = vsel %vm197, %v7501, 0
      %7517 = vmatprep.subr.bf16.mxu0 0
      %7518 = vmatpush1.bf16.msra.mxu0 %v7510
      %7519 = vmatprep.subr.bf16.mxu0 0
      %7520 = vmatpush1.bf16.msra.mxu0 %v7511
      %7521 = vmatprep.subr.bf16.mxu0 0
      %7522 = vmatpush1.bf16.msra.mxu0 0
      %7523 = vmatprep.subr.bf16.mxu0 0
      %7524 = vmatpush1.bf16.msra.mxu0 0
      %7525 = vmatprep.subr.bf16.mxu0 0
      %7526 = vmatpush1.bf16.msra.mxu0 0
      %7527 = vmatprep.subr.bf16.mxu0 0
      %7528 = vmatpush1.bf16.msra.mxu0 0
      %7529 = vmatprep.subr.bf16.mxu0 0
      %7530 = vmatpush1.bf16.msra.mxu0 0
      %7531 = vmatprep.subr.bf16.mxu0 0
      %7532 = vmatpush1.bf16.msra.mxu0 0
      %7533 = vmatprep.subr.bf16.mxu0 0
      %7534 = vmatpush1.bf16.msra.mxu0 0
      %7535 = vmatprep.subr.bf16.mxu0 0
      %7536 = vmatpush1.bf16.msra.mxu0 0
      %7537 = vmatprep.subr.bf16.mxu0 0
      %7538 = vmatpush1.bf16.msra.mxu0 0
      %7539 = vmatprep.subr.bf16.mxu0 0
      %7540 = vmatpush1.bf16.msra.mxu0 0
      %7541 = vmatprep.subr.bf16.mxu0 0
      %7542 = vmatpush1.bf16.msra.mxu0 0
      %7543 = vmatprep.subr.bf16.mxu0 0
      %7544 = vmatpush1.bf16.msra.mxu0 0
      %7545 = vmatprep.subr.bf16.mxu0 0
      %7546 = vmatpush1.bf16.msra.mxu0 0
      %7547 = vmatprep.subr.bf16.mxu0 0
      %7548 = vmatpush1.bf16.msra.mxu0 0
      %7549 = vmatprep.mubr.bf16.mxu0 0
      %7550 = vmatmul.mubr.bf16.gmra.mrb[0].mxu0 %v7515
      %v7551 = vpop.f32.mrb[0].mxu0
      %v7552 = vadd.f32 0.0, %v7551
      %v7553 = vpop.f32.mrb[0].mxu0
      %v7554 = vpop.f32.mrb[0].mxu0
      %v7555 = vpop.f32.mrb[0].mxu0
      %7556 = vdwg.mxu0
      %v7557 = vadd.f32 %v7496, %v7552
      %v7558 = vld [vmem:[%s1037] sm:$0xf]
      %v7559 = vld [vmem:[%s1037 + $0x4] sm:$0xf]
      %v7560 = vld [vmem:[%s1037 + $0x8] sm:$0xf]
      %v7561 = vld [vmem:[%s1037 + $0xc] sm:$0xf]
      %v7563 = vunpack.c.l.b16 %v7366
      %v7564 = vpack.c.b16 %v7563, %v7432
      %v7566 = vshrl.u32 %v7564, 16
      %v7568 = vrot.slane %v7566, 1
      %v7569 = vshll.u32 %v7564, 16
      %v7571 = vrot.slane %v7569, 2
      %v7572 = vor.u32 %v7568, %v7571
      %v7577 = vunpack.c.l.b16 %v7558
      %v7578 = vunpack.c.l.b16 %v7559
      %v7579 = vunpack.c.l.b16 %v7560
      %v7580 = vunpack.c.l.b16 %v7561
      %v7581 = vpack.c.b16 %v7578, %v7577
      %v7582 = vpack.c.b16 %v7580, %v7579
      %v7586 = vsel %vm197, %v7572, 0
      %7588 = vmatprep.subr.bf16.mxu0 0
      %7589 = vmatpush1.bf16.msra.mxu0 %v7581
      %7590 = vmatprep.subr.bf16.mxu0 0
      %7591 = vmatpush1.bf16.msra.mxu0 %v7582
      %7592 = vmatprep.subr.bf16.mxu0 0
      %7593 = vmatpush1.bf16.msra.mxu0 0
      %7594 = vmatprep.subr.bf16.mxu0 0
      %7595 = vmatpush1.bf16.msra.mxu0 0
      %7596 = vmatprep.subr.bf16.mxu0 0
      %7597 = vmatpush1.bf16.msra.mxu0 0
      %7598 = vmatprep.subr.bf16.mxu0 0
      %7599 = vmatpush1.bf16.msra.mxu0 0
      %7600 = vmatprep.subr.bf16.mxu0 0
      %7601 = vmatpush1.bf16.msra.mxu0 0
      %7602 = vmatprep.subr.bf16.mxu0 0
      %7603 = vmatpush1.bf16.msra.mxu0 0
      %7604 = vmatprep.subr.bf16.mxu0 0
      %7605 = vmatpush1.bf16.msra.mxu0 0
      %7606 = vmatprep.subr.bf16.mxu0 0
      %7607 = vmatpush1.bf16.msra.mxu0 0
      %7608 = vmatprep.subr.bf16.mxu0 0
      %7609 = vmatpush1.bf16.msra.mxu0 0
      %7610 = vmatprep.subr.bf16.mxu0 0
      %7611 = vmatpush1.bf16.msra.mxu0 0
      %7612 = vmatprep.subr.bf16.mxu0 0
      %7613 = vmatpush1.bf16.msra.mxu0 0
      %7614 = vmatprep.subr.bf16.mxu0 0
      %7615 = vmatpush1.bf16.msra.mxu0 0
      %7616 = vmatprep.subr.bf16.mxu0 0
      %7617 = vmatpush1.bf16.msra.mxu0 0
      %7618 = vmatprep.subr.bf16.mxu0 0
      %7619 = vmatpush1.bf16.msra.mxu0 0
      %7620 = vmatprep.mubr.bf16.mxu0 0
      %7621 = vmatmul.mubr.bf16.gmra.mrb[0].mxu0 %v7586
      %v7622 = vpop.f32.mrb[0].mxu0
      %v7623 = vadd.f32 0.0, %v7622
      %v7624 = vpop.f32.mrb[0].mxu0
      %v7625 = vpop.f32.mrb[0].mxu0
      %v7626 = vpop.f32.mrb[0].mxu0
      %7627 = vdwg.mxu0
      %v7628 = vadd.f32 %v7557, %v7623
      %v7629 = vld [vmem:[%s1109] sm:$0xf]
      %v7630 = vld [vmem:[%s1109 + $0x4] sm:$0xf]
      %v7631 = vld [vmem:[%s1109 + $0x8] sm:$0xf]
      %v7632 = vld [vmem:[%s1109 + $0xc] sm:$0xf]
      %v7633 = vrot.slane %v7564, 2
      %v7638 = vunpack.c.l.b16 %v7629
      %v7639 = vunpack.c.l.b16 %v7630
      %v7640 = vunpack.c.l.b16 %v7631
      %v7641 = vunpack.c.l.b16 %v7632
      %v7642 = vpack.c.b16 %v7639, %v7638
      %v7643 = vpack.c.b16 %v7641, %v7640
      %v7647 = vsel %vm197, %v7633, 0
      %7649 = vmatprep.subr.bf16.mxu0 0
      %7650 = vmatpush1.bf16.msra.mxu0 %v7642
      %7651 = vmatprep.subr.bf16.mxu0 0
      %7652 = vmatpush1.bf16.msra.mxu0 %v7643
      %7653 = vmatprep.subr.bf16.mxu0 0
      %7654 = vmatpush1.bf16.msra.mxu0 0
      %7655 = vmatprep.subr.bf16.mxu0 0
      %7656 = vmatpush1.bf16.msra.mxu0 0
      %7657 = vmatprep.subr.bf16.mxu0 0
      %7658 = vmatpush1.bf16.msra.mxu0 0
      %7659 = vmatprep.subr.bf16.mxu0 0
      %7660 = vmatpush1.bf16.msra.mxu0 0
      %7661 = vmatprep.subr.bf16.mxu0 0
      %7662 = vmatpush1.bf16.msra.mxu0 0
      %7663 = vmatprep.subr.bf16.mxu0 0
      %7664 = vmatpush1.bf16.msra.mxu0 0
      %7665 = vmatprep.subr.bf16.mxu0 0
      %7666 = vmatpush1.bf16.msra.mxu0 0
      %7667 = vmatprep.subr.bf16.mxu0 0
      %7668 = vmatpush1.bf16.msra.mxu0 0
      %7669 = vmatprep.subr.bf16.mxu0 0
      %7670 = vmatpush1.bf16.msra.mxu0 0
      %7671 = vmatprep.subr.bf16.mxu0 0
      %7672 = vmatpush1.bf16.msra.mxu0 0
      %7673 = vmatprep.subr.bf16.mxu0 0
      %7674 = vmatpush1.bf16.msra.mxu0 0
      %7675 = vmatprep.subr.bf16.mxu0 0
      %7676 = vmatpush1.bf16.msra.mxu0 0
      %7677 = vmatprep.subr.bf16.mxu0 0
      %7678 = vmatpush1.bf16.msra.mxu0 0
      %7679 = vmatprep.subr.bf16.mxu0 0
      %7680 = vmatpush1.bf16.msra.mxu0 0
      %7681 = vmatprep.mubr.bf16.mxu0 0
      %7682 = vmatmul.mubr.bf16.gmra.mrb[0].mxu0 %v7647
      %v7683 = vpop.f32.mrb[0].mxu0
      %v7684 = vadd.f32 0.0, %v7683
      %v7685 = vpop.f32.mrb[0].mxu0
      %v7686 = vpop.f32.mrb[0].mxu0
      %v7687 = vpop.f32.mrb[0].mxu0
      %7688 = vdwg.mxu0
      %v7689 = vadd.f32 %v7628, %v7684
      %v7690 = vld [vmem:[%s6388] sm:$0xf]
      %v7691 = vld [vmem:[%s6388 + $0x4] sm:$0x1]
      %v7692 = vld [vmem:[%s1174] sm:$0xf]
      %v7693 = vld [vmem:[%s1174 + $0x4] sm:$0xf]
      %v7694 = vld [vmem:[%s1174 + $0x8] sm:$0xf]
      %v7695 = vld [vmem:[%s1174 + $0xc] sm:$0xf]
      %v7700 = vunpack.c.l.b16 %v7692
      %v7701 = vunpack.c.l.b16 %v7693
      %v7702 = vunpack.c.l.b16 %v7694
      %v7703 = vunpack.c.l.b16 %v7695
      %v7704 = vpack.c.b16 %v7701, %v7700
      %v7705 = vpack.c.b16 %v7703, %v7702
      %v7709 = vsel %vm197, %v7690, 0
      %7711 = vmatprep.subr.bf16.mxu0 0
      %7712 = vmatpush1.bf16.msra.mxu0 %v7704
      %7713 = vmatprep.subr.bf16.mxu0 0
      %7714 = vmatpush1.bf16.msra.mxu0 %v7705
      %7715 = vmatprep.subr.bf16.mxu0 0
      %7716 = vmatpush1.bf16.msra.mxu0 0
      %7717 = vmatprep.subr.bf16.mxu0 0
      %7718 = vmatpush1.bf16.msra.mxu0 0
      %7719 = vmatprep.subr.bf16.mxu0 0
      %7720 = vmatpush1.bf16.msra.mxu0 0
      %7721 = vmatprep.subr.bf16.mxu0 0
      %7722 = vmatpush1.bf16.msra.mxu0 0
      %7723 = vmatprep.subr.bf16.mxu0 0
      %7724 = vmatpush1.bf16.msra.mxu0 0
      %7725 = vmatprep.subr.bf16.mxu0 0
      %7726 = vmatpush1.bf16.msra.mxu0 0
      %7727 = vmatprep.subr.bf16.mxu0 0
      %7728 = vmatpush1.bf16.msra.mxu0 0
      %7729 = vmatprep.subr.bf16.mxu0 0
      %7730 = vmatpush1.bf16.msra.mxu0 0
      %7731 = vmatprep.subr.bf16.mxu0 0
      %7732 = vmatpush1.bf16.msra.mxu0 0
      %7733 = vmatprep.subr.bf16.mxu0 0
      %7734 = vmatpush1.bf16.msra.mxu0 0
      %7735 = vmatprep.subr.bf16.mxu0 0
      %7736 = vmatpush1.bf16.msra.mxu0 0
      %7737 = vmatprep.subr.bf16.mxu0 0
      %7738 = vmatpush1.bf16.msra.mxu0 0
      %7739 = vmatprep.subr.bf16.mxu0 0
      %7740 = vmatpush1.bf16.msra.mxu0 0
      %7741 = vmatprep.subr.bf16.mxu0 0
      %7742 = vmatpush1.bf16.msra.mxu0 0
      %7743 = vmatprep.mubr.bf16.mxu0 0
      %7744 = vmatmul.mubr.bf16.gmra.mrb[0].mxu0 %v7709
      %v7745 = vpop.f32.mrb[0].mxu0
      %v7746 = vadd.f32 0.0, %v7745
      %v7747 = vpop.f32.mrb[0].mxu0
      %v7748 = vpop.f32.mrb[0].mxu0
      %v7749 = vpop.f32.mrb[0].mxu0
      %7750 = vdwg.mxu0
      %v7751 = vadd.f32 %v7689, %v7746
      %v7752 = vld [vmem:[%s1235] sm:$0xf]
      %v7753 = vld [vmem:[%s1235 + $0x4] sm:$0xf]
      %v7754 = vld [vmem:[%s1235 + $0x8] sm:$0xf]
      %v7755 = vld [vmem:[%s1235 + $0xc] sm:$0xf]
      %v7757 = vunpack.c.l.b16 %v7690
      %v7758 = vpack.c.b16 %v7757, %v7757
      %v7760 = vshrl.u32 %v7758, 16
      %v7762 = vshll.u32 %v7758, 16
      %v7764 = vrot.slane %v7762, 1
      %v7765 = vor.u32 %v7760, %v7764
      %v7770 = vunpack.c.l.b16 %v7752
      %v7771 = vunpack.c.l.b16 %v7753
      %v7772 = vunpack.c.l.b16 %v7754
      %v7773 = vunpack.c.l.b16 %v7755
      %v7774 = vpack.c.b16 %v7771, %v7770
      %v7775 = vpack.c.b16 %v7773, %v7772
      %v7779 = vsel %vm197, %v7765, 0
      %7781 = vmatprep.subr.bf16.mxu0 0
      %7782 = vmatpush1.bf16.msra.mxu0 %v7774
      %7783 = vmatprep.subr.bf16.mxu0 0
      %7784 = vmatpush1.bf16.msra.mxu0 %v7775
      %7785 = vmatprep.subr.bf16.mxu0 0
      %7786 = vmatpush1.bf16.msra.mxu0 0
      %7787 = vmatprep.subr.bf16.mxu0 0
      %7788 = vmatpush1.bf16.msra.mxu0 0
      %7789 = vmatprep.subr.bf16.mxu0 0
      %7790 = vmatpush1.bf16.msra.mxu0 0
      %7791 = vmatprep.subr.bf16.mxu0 0
      %7792 = vmatpush1.bf16.msra.mxu0 0
      %7793 = vmatprep.subr.bf16.mxu0 0
      %7794 = vmatpush1.bf16.msra.mxu0 0
      %7795 = vmatprep.subr.bf16.mxu0 0
      %7796 = vmatpush1.bf16.msra.mxu0 0
      %7797 = vmatprep.subr.bf16.mxu0 0
      %7798 = vmatpush1.bf16.msra.mxu0 0
      %7799 = vmatprep.subr.bf16.mxu0 0
      %7800 = vmatpush1.bf16.msra.mxu0 0
      %7801 = vmatprep.subr.bf16.mxu0 0
      %7802 = vmatpush1.bf16.msra.mxu0 0
      %7803 = vmatprep.subr.bf16.mxu0 0
      %7804 = vmatpush1.bf16.msra.mxu0 0
      %7805 = vmatprep.subr.bf16.mxu0 0
      %7806 = vmatpush1.bf16.msra.mxu0 0
      %7807 = vmatprep.subr.bf16.mxu0 0
      %7808 = vmatpush1.bf16.msra.mxu0 0
      %7809 = vmatprep.subr.bf16.mxu0 0
      %7810 = vmatpush1.bf16.msra.mxu0 0
      %7811 = vmatprep.subr.bf16.mxu0 0
      %7812 = vmatpush1.bf16.msra.mxu0 0
      %7813 = vmatprep.mubr.bf16.mxu0 0
      %7814 = vmatmul.mubr.bf16.gmra.mrb[0].mxu0 %v7779
      %v7815 = vpop.f32.mrb[0].mxu0
      %v7816 = vadd.f32 0.0, %v7815
      %v7817 = vpop.f32.mrb[0].mxu0
      %v7818 = vpop.f32.mrb[0].mxu0
      %v7819 = vpop.f32.mrb[0].mxu0
      %7820 = vdwg.mxu0
      %v7821 = vadd.f32 %v7751, %v7816
      %v7822 = vld [vmem:[%s1306] sm:$0xf]
      %v7823 = vld [vmem:[%s1306 + $0x4] sm:$0xf]
      %v7824 = vld [vmem:[%s1306 + $0x8] sm:$0xf]
      %v7825 = vld [vmem:[%s1306 + $0xc] sm:$0xf]
      %v7826 = vrot.slane %v7758, 1
      %v7831 = vunpack.c.l.b16 %v7822
      %v7832 = vunpack.c.l.b16 %v7823
      %v7833 = vunpack.c.l.b16 %v7824
      %v7834 = vunpack.c.l.b16 %v7825
      %v7835 = vpack.c.b16 %v7832, %v7831
      %v7836 = vpack.c.b16 %v7834, %v7833
      %v7840 = vsel %vm197, %v7826, 0
      %7842 = vmatprep.subr.bf16.mxu0 0
      %7843 = vmatpush1.bf16.msra.mxu0 %v7835
      %7844 = vmatprep.subr.bf16.mxu0 0
      %7845 = vmatpush1.bf16.msra.mxu0 %v7836
      %7846 = vmatprep.subr.bf16.mxu0 0
      %7847 = vmatpush1.bf16.msra.mxu0 0
      %7848 = vmatprep.subr.bf16.mxu0 0
      %7849 = vmatpush1.bf16.msra.mxu0 0
      %7850 = vmatprep.subr.bf16.mxu0 0
      %7851 = vmatpush1.bf16.msra.mxu0 0
      %7852 = vmatprep.subr.bf16.mxu0 0
      %7853 = vmatpush1.bf16.msra.mxu0 0
      %7854 = vmatprep.subr.bf16.mxu0 0
      %7855 = vmatpush1.bf16.msra.mxu0 0
      %7856 = vmatprep.subr.bf16.mxu0 0
      %7857 = vmatpush1.bf16.msra.mxu0 0
      %7858 = vmatprep.subr.bf16.mxu0 0
      %7859 = vmatpush1.bf16.msra.mxu0 0
      %7860 = vmatprep.subr.bf16.mxu0 0
      %7861 = vmatpush1.bf16.msra.mxu0 0
      %7862 = vmatprep.subr.bf16.mxu0 0
      %7863 = vmatpush1.bf16.msra.mxu0 0
      %7864 = vmatprep.subr.bf16.mxu0 0
      %7865 = vmatpush1.bf16.msra.mxu0 0
      %7866 = vmatprep.subr.bf16.mxu0 0
      %7867 = vmatpush1.bf16.msra.mxu0 0
      %7868 = vmatprep.subr.bf16.mxu0 0
      %7869 = vmatpush1.bf16.msra.mxu0 0
      %7870 = vmatprep.subr.bf16.mxu0 0
      %7871 = vmatpush1.bf16.msra.mxu0 0
      %7872 = vmatprep.subr.bf16.mxu0 0
      %7873 = vmatpush1.bf16.msra.mxu0 0
      %7874 = vmatprep.mubr.bf16.mxu0 0
      %7875 = vmatmul.mubr.bf16.gmra.mrb[0].mxu0 %v7840
      %v7876 = vpop.f32.mrb[0].mxu0
      %v7877 = vadd.f32 0.0, %v7876
      %v7878 = vpop.f32.mrb[0].mxu0
      %v7879 = vpop.f32.mrb[0].mxu0
      %v7880 = vpop.f32.mrb[0].mxu0
      %7881 = vdwg.mxu0
      %v7882 = vadd.f32 %v7821, %v7877
      %v7883 = vld [vmem:[%s1368] sm:$0xf]
      %v7884 = vld [vmem:[%s1368 + $0x4] sm:$0xf]
      %v7885 = vld [vmem:[%s1368 + $0x8] sm:$0xf]
      %v7886 = vld [vmem:[%s1368 + $0xc] sm:$0xf]
      %v7888 = vunpack.c.l.b16 %v7691
      %v7889 = vpack.c.b16 %v7888, %v7757
      %v7891 = vshrl.u32 %v7889, 16
      %v7893 = vrot.slane %v7891, 1
      %v7894 = vshll.u32 %v7889, 16
      %v7896 = vrot.slane %v7894, 2
      %v7897 = vor.u32 %v7893, %v7896
      %v7902 = vunpack.c.l.b16 %v7883
      %v7903 = vunpack.c.l.b16 %v7884
      %v7904 = vunpack.c.l.b16 %v7885
      %v7905 = vunpack.c.l.b16 %v7886
      %v7906 = vpack.c.b16 %v7903, %v7902
      %v7907 = vpack.c.b16 %v7905, %v7904
      %v7911 = vsel %vm197, %v7897, 0
      %7913 = vmatprep.subr.bf16.mxu0 0
      %7914 = vmatpush1.bf16.msra.mxu0 %v7906
      %7915 = vmatprep.subr.bf16.mxu0 0
      %7916 = vmatpush1.bf16.msra.mxu0 %v7907
      %7917 = vmatprep.subr.bf16.mxu0 0
      %7918 = vmatpush1.bf16.msra.mxu0 0
      %7919 = vmatprep.subr.bf16.mxu0 0
      %7920 = vmatpush1.bf16.msra.mxu0 0
      %7921 = vmatprep.subr.bf16.mxu0 0
      %7922 = vmatpush1.bf16.msra.mxu0 0
      %7923 = vmatprep.subr.bf16.mxu0 0
      %7924 = vmatpush1.bf16.msra.mxu0 0
      %7925 = vmatprep.subr.bf16.mxu0 0
      %7926 = vmatpush1.bf16.msra.mxu0 0
      %7927 = vmatprep.subr.bf16.mxu0 0
      %7928 = vmatpush1.bf16.msra.mxu0 0
      %7929 = vmatprep.subr.bf16.mxu0 0
      %7930 = vmatpush1.bf16.msra.mxu0 0
      %7931 = vmatprep.subr.bf16.mxu0 0
      %7932 = vmatpush1.bf16.msra.mxu0 0
      %7933 = vmatprep.subr.bf16.mxu0 0
      %7934 = vmatpush1.bf16.msra.mxu0 0
      %7935 = vmatprep.subr.bf16.mxu0 0
      %7936 = vmatpush1.bf16.msra.mxu0 0
      %7937 = vmatprep.subr.bf16.mxu0 0
      %7938 = vmatpush1.bf16.msra.mxu0 0
      %7939 = vmatprep.subr.bf16.mxu0 0
      %7940 = vmatpush1.bf16.msra.mxu0 0
      %7941 = vmatprep.subr.bf16.mxu0 0
      %7942 = vmatpush1.bf16.msra.mxu0 0
      %7943 = vmatprep.subr.bf16.mxu0 0
      %7944 = vmatpush1.bf16.msra.mxu0 0
      %7945 = vmatprep.mubr.bf16.mxu0 0
      %7946 = vmatmul.mubr.bf16.gmra.mrb[0].mxu0 %v7911
      %v7947 = vpop.f32.mrb[0].mxu0
      %v7948 = vadd.f32 0.0, %v7947
      %v7949 = vpop.f32.mrb[0].mxu0
      %v7950 = vpop.f32.mrb[0].mxu0
      %v7951 = vpop.f32.mrb[0].mxu0
      %7952 = vdwg.mxu0
      %v7953 = vadd.f32 %v7882, %v7948
      %v7954 = vld [vmem:[%s1440] sm:$0xf]
      %v7955 = vld [vmem:[%s1440 + $0x4] sm:$0xf]
      %v7956 = vld [vmem:[%s1440 + $0x8] sm:$0xf]
      %v7957 = vld [vmem:[%s1440 + $0xc] sm:$0xf]
      %v7958 = vrot.slane %v7889, 2
      %v7963 = vunpack.c.l.b16 %v7954
      %v7964 = vunpack.c.l.b16 %v7955
      %v7965 = vunpack.c.l.b16 %v7956
      %v7966 = vunpack.c.l.b16 %v7957
      %v7967 = vpack.c.b16 %v7964, %v7963
      %v7968 = vpack.c.b16 %v7966, %v7965
      %v7972 = vsel %vm197, %v7958, 0
      %7974 = vmatprep.subr.bf16.mxu0 0
      %7975 = vmatpush1.bf16.msra.mxu0 %v7967
      %7976 = vmatprep.subr.bf16.mxu0 0
      %7977 = vmatpush1.bf16.msra.mxu0 %v7968
      %7978 = vmatprep.subr.bf16.mxu0 0
      %7979 = vmatpush1.bf16.msra.mxu0 0
      %7980 = vmatprep.subr.bf16.mxu0 0
      %7981 = vmatpush1.bf16.msra.mxu0 0
      %7982 = vmatprep.subr.bf16.mxu0 0
      %7983 = vmatpush1.bf16.msra.mxu0 0
      %7984 = vmatprep.subr.bf16.mxu0 0
      %7985 = vmatpush1.bf16.msra.mxu0 0
      %7986 = vmatprep.subr.bf16.mxu0 0
      %7987 = vmatpush1.bf16.msra.mxu0 0
      %7988 = vmatprep.subr.bf16.mxu0 0
      %7989 = vmatpush1.bf16.msra.mxu0 0
      %7990 = vmatprep.subr.bf16.mxu0 0
      %7991 = vmatpush1.bf16.msra.mxu0 0
      %7992 = vmatprep.subr.bf16.mxu0 0
      %7993 = vmatpush1.bf16.msra.mxu0 0
      %7994 = vmatprep.subr.bf16.mxu0 0
      %7995 = vmatpush1.bf16.msra.mxu0 0
      %7996 = vmatprep.subr.bf16.mxu0 0
      %7997 = vmatpush1.bf16.msra.mxu0 0
      %7998 = vmatprep.subr.bf16.mxu0 0
      %7999 = vmatpush1.bf16.msra.mxu0 0
      %8000 = vmatprep.subr.bf16.mxu0 0
      %8001 = vmatpush1.bf16.msra.mxu0 0
      %8002 = vmatprep.subr.bf16.mxu0 0
      %8003 = vmatpush1.bf16.msra.mxu0 0
      %8004 = vmatprep.subr.bf16.mxu0 0
      %8005 = vmatpush1.bf16.msra.mxu0 0
      %8006 = vmatprep.mubr.bf16.mxu0 0
      %8007 = vmatmul.mubr.bf16.gmra.mrb[0].mxu0 %v7972
      %v8008 = vpop.f32.mrb[0].mxu0
      %v8009 = vadd.f32 0.0, %v8008
      %v8010 = vpop.f32.mrb[0].mxu0
      %v8011 = vpop.f32.mrb[0].mxu0
      %v8012 = vpop.f32.mrb[0].mxu0
      %8013 = vdwg.mxu0
      %v8014 = vadd.f32 %v7953, %v8009
      %s8015 = scalar_lea.vmem %s165, 64
      %v8016 = vld [vmem:[%s8015] sm:$0xf]
      %v8017 = vld [vmem:[%s8015 + $0x4] sm:$0x1]
      %v8018 = vld [vmem:[%s1505] sm:$0xf]
      %v8019 = vld [vmem:[%s1505 + $0x4] sm:$0xf]
      %v8020 = vld [vmem:[%s1505 + $0x8] sm:$0xf]
      %v8021 = vld [vmem:[%s1505 + $0xc] sm:$0xf]
      %v8026 = vunpack.c.l.b16 %v8018
      %v8027 = vunpack.c.l.b16 %v8019
      %v8028 = vunpack.c.l.b16 %v8020
      %v8029 = vunpack.c.l.b16 %v8021
      %v8030 = vpack.c.b16 %v8027, %v8026
      %v8031 = vpack.c.b16 %v8029, %v8028
      %v8035 = vsel %vm197, %v8016, 0
      %8037 = vmatprep.subr.bf16.mxu0 0
      %8038 = vmatpush1.bf16.msra.mxu0 %v8030
      %8039 = vmatprep.subr.bf16.mxu0 0
      %8040 = vmatpush1.bf16.msra.mxu0 %v8031
      %8041 = vmatprep.subr.bf16.mxu0 0
      %8042 = vmatpush1.bf16.msra.mxu0 0
      %8043 = vmatprep.subr.bf16.mxu0 0
      %8044 = vmatpush1.bf16.msra.mxu0 0
      %8045 = vmatprep.subr.bf16.mxu0 0
      %8046 = vmatpush1.bf16.msra.mxu0 0
      %8047 = vmatprep.subr.bf16.mxu0 0
      %8048 = vmatpush1.bf16.msra.mxu0 0
      %8049 = vmatprep.subr.bf16.mxu0 0
      %8050 = vmatpush1.bf16.msra.mxu0 0
      %8051 = vmatprep.subr.bf16.mxu0 0
      %8052 = vmatpush1.bf16.msra.mxu0 0
      %8053 = vmatprep.subr.bf16.mxu0 0
      %8054 = vmatpush1.bf16.msra.mxu0 0
      %8055 = vmatprep.subr.bf16.mxu0 0
      %8056 = vmatpush1.bf16.msra.mxu0 0
      %8057 = vmatprep.subr.bf16.mxu0 0
      %8058 = vmatpush1.bf16.msra.mxu0 0
      %8059 = vmatprep.subr.bf16.mxu0 0
      %8060 = vmatpush1.bf16.msra.mxu0 0
      %8061 = vmatprep.subr.bf16.mxu0 0
      %8062 = vmatpush1.bf16.msra.mxu0 0
      %8063 = vmatprep.subr.bf16.mxu0 0
      %8064 = vmatpush1.bf16.msra.mxu0 0
      %8065 = vmatprep.subr.bf16.mxu0 0
      %8066 = vmatpush1.bf16.msra.mxu0 0
      %8067 = vmatprep.subr.bf16.mxu0 0
      %8068 = vmatpush1.bf16.msra.mxu0 0
      %8069 = vmatprep.mubr.bf16.mxu0 0
      %8070 = vmatmul.mubr.bf16.gmra.mrb[0].mxu0 %v8035
      %v8071 = vpop.f32.mrb[0].mxu0
      %v8072 = vadd.f32 0.0, %v8071
      %v8073 = vpop.f32.mrb[0].mxu0
      %v8074 = vpop.f32.mrb[0].mxu0
      %v8075 = vpop.f32.mrb[0].mxu0
      %8076 = vdwg.mxu0
      %v8077 = vadd.f32 %v8014, %v8072
      %v8078 = vld [vmem:[%s1566] sm:$0xf]
      %v8079 = vld [vmem:[%s1566 + $0x4] sm:$0xf]
      %v8080 = vld [vmem:[%s1566 + $0x8] sm:$0xf]
      %v8081 = vld [vmem:[%s1566 + $0xc] sm:$0xf]
      %v8083 = vunpack.c.l.b16 %v8016
      %v8084 = vpack.c.b16 %v8083, %v8083
      %v8086 = vshrl.u32 %v8084, 16
      %v8088 = vshll.u32 %v8084, 16
      %v8090 = vrot.slane %v8088, 1
      %v8091 = vor.u32 %v8086, %v8090
      %v8096 = vunpack.c.l.b16 %v8078
      %v8097 = vunpack.c.l.b16 %v8079
      %v8098 = vunpack.c.l.b16 %v8080
      %v8099 = vunpack.c.l.b16 %v8081
      %v8100 = vpack.c.b16 %v8097, %v8096
      %v8101 = vpack.c.b16 %v8099, %v8098
      %v8105 = vsel %vm197, %v8091, 0
      %8107 = vmatprep.subr.bf16.mxu0 0
      %8108 = vmatpush1.bf16.msra.mxu0 %v8100
      %8109 = vmatprep.subr.bf16.mxu0 0
      %8110 = vmatpush1.bf16.msra.mxu0 %v8101
      %8111 = vmatprep.subr.bf16.mxu0 0
      %8112 = vmatpush1.bf16.msra.mxu0 0
      %8113 = vmatprep.subr.bf16.mxu0 0
      %8114 = vmatpush1.bf16.msra.mxu0 0
      %8115 = vmatprep.subr.bf16.mxu0 0
      %8116 = vmatpush1.bf16.msra.mxu0 0
      %8117 = vmatprep.subr.bf16.mxu0 0
      %8118 = vmatpush1.bf16.msra.mxu0 0
      %8119 = vmatprep.subr.bf16.mxu0 0
      %8120 = vmatpush1.bf16.msra.mxu0 0
      %8121 = vmatprep.subr.bf16.mxu0 0
      %8122 = vmatpush1.bf16.msra.mxu0 0
      %8123 = vmatprep.subr.bf16.mxu0 0
      %8124 = vmatpush1.bf16.msra.mxu0 0
      %8125 = vmatprep.subr.bf16.mxu0 0
      %8126 = vmatpush1.bf16.msra.mxu0 0
      %8127 = vmatprep.subr.bf16.mxu0 0
      %8128 = vmatpush1.bf16.msra.mxu0 0
      %8129 = vmatprep.subr.bf16.mxu0 0
      %8130 = vmatpush1.bf16.msra.mxu0 0
      %8131 = vmatprep.subr.bf16.mxu0 0
      %8132 = vmatpush1.bf16.msra.mxu0 0
      %8133 = vmatprep.subr.bf16.mxu0 0
      %8134 = vmatpush1.bf16.msra.mxu0 0
      %8135 = vmatprep.subr.bf16.mxu0 0
      %8136 = vmatpush1.bf16.msra.mxu0 0
      %8137 = vmatprep.subr.bf16.mxu0 0
      %8138 = vmatpush1.bf16.msra.mxu0 0
      %8139 = vmatprep.mubr.bf16.mxu0 0
      %8140 = vmatmul.mubr.bf16.gmra.mrb[0].mxu0 %v8105
      %v8141 = vpop.f32.mrb[0].mxu0
      %v8142 = vadd.f32 0.0, %v8141
      %v8143 = vpop.f32.mrb[0].mxu0
      %v8144 = vpop.f32.mrb[0].mxu0
      %v8145 = vpop.f32.mrb[0].mxu0
      %8146 = vdwg.mxu0
      %v8147 = vadd.f32 %v8077, %v8142
      %v8148 = vld [vmem:[%s1637] sm:$0xf]
      %v8149 = vld [vmem:[%s1637 + $0x4] sm:$0xf]
      %v8150 = vld [vmem:[%s1637 + $0x8] sm:$0xf]
      %v8151 = vld [vmem:[%s1637 + $0xc] sm:$0xf]
      %v8152 = vrot.slane %v8084, 1
      %v8157 = vunpack.c.l.b16 %v8148
      %v8158 = vunpack.c.l.b16 %v8149
      %v8159 = vunpack.c.l.b16 %v8150
      %v8160 = vunpack.c.l.b16 %v8151
      %v8161 = vpack.c.b16 %v8158, %v8157
      %v8162 = vpack.c.b16 %v8160, %v8159
      %v8166 = vsel %vm197, %v8152, 0
      %8168 = vmatprep.subr.bf16.mxu0 0
      %8169 = vmatpush1.bf16.msra.mxu0 %v8161
      %8170 = vmatprep.subr.bf16.mxu0 0
      %8171 = vmatpush1.bf16.msra.mxu0 %v8162
      %8172 = vmatprep.subr.bf16.mxu0 0
      %8173 = vmatpush1.bf16.msra.mxu0 0
      %8174 = vmatprep.subr.bf16.mxu0 0
      %8175 = vmatpush1.bf16.msra.mxu0 0
      %8176 = vmatprep.subr.bf16.mxu0 0
      %8177 = vmatpush1.bf16.msra.mxu0 0
      %8178 = vmatprep.subr.bf16.mxu0 0
      %8179 = vmatpush1.bf16.msra.mxu0 0
      %8180 = vmatprep.subr.bf16.mxu0 0
      %8181 = vmatpush1.bf16.msra.mxu0 0
      %8182 = vmatprep.subr.bf16.mxu0 0
      %8183 = vmatpush1.bf16.msra.mxu0 0
      %8184 = vmatprep.subr.bf16.mxu0 0
      %8185 = vmatpush1.bf16.msra.mxu0 0
      %8186 = vmatprep.subr.bf16.mxu0 0
      %8187 = vmatpush1.bf16.msra.mxu0 0
      %8188 = vmatprep.subr.bf16.mxu0 0
      %8189 = vmatpush1.bf16.msra.mxu0 0
      %8190 = vmatprep.subr.bf16.mxu0 0
      %8191 = vmatpush1.bf16.msra.mxu0 0
      %8192 = vmatprep.subr.bf16.mxu0 0
      %8193 = vmatpush1.bf16.msra.mxu0 0
      %8194 = vmatprep.subr.bf16.mxu0 0
      %8195 = vmatpush1.bf16.msra.mxu0 0
      %8196 = vmatprep.subr.bf16.mxu0 0
      %8197 = vmatpush1.bf16.msra.mxu0 0
      %8198 = vmatprep.subr.bf16.mxu0 0
      %8199 = vmatpush1.bf16.msra.mxu0 0
      %8200 = vmatprep.mubr.bf16.mxu0 0
      %8201 = vmatmul.mubr.bf16.gmra.mrb[0].mxu0 %v8166
      %v8202 = vpop.f32.mrb[0].mxu0
      %v8203 = vadd.f32 0.0, %v8202
      %v8204 = vpop.f32.mrb[0].mxu0
      %v8205 = vpop.f32.mrb[0].mxu0
      %v8206 = vpop.f32.mrb[0].mxu0
      %8207 = vdwg.mxu0
      %v8208 = vadd.f32 %v8147, %v8203
      %v8209 = vld [vmem:[%s1699] sm:$0xf]
      %v8210 = vld [vmem:[%s1699 + $0x4] sm:$0xf]
      %v8211 = vld [vmem:[%s1699 + $0x8] sm:$0xf]
      %v8212 = vld [vmem:[%s1699 + $0xc] sm:$0xf]
      %v8214 = vunpack.c.l.b16 %v8017
      %v8215 = vpack.c.b16 %v8214, %v8083
      %v8217 = vshrl.u32 %v8215, 16
      %v8219 = vrot.slane %v8217, 1
      %v8220 = vshll.u32 %v8215, 16
      %v8222 = vrot.slane %v8220, 2
      %v8223 = vor.u32 %v8219, %v8222
      %v8228 = vunpack.c.l.b16 %v8209
      %v8229 = vunpack.c.l.b16 %v8210
      %v8230 = vunpack.c.l.b16 %v8211
      %v8231 = vunpack.c.l.b16 %v8212
      %v8232 = vpack.c.b16 %v8229, %v8228
      %v8233 = vpack.c.b16 %v8231, %v8230
      %v8237 = vsel %vm197, %v8223, 0
      %8239 = vmatprep.subr.bf16.mxu0 0
      %8240 = vmatpush1.bf16.msra.mxu0 %v8232
      %8241 = vmatprep.subr.bf16.mxu0 0
      %8242 = vmatpush1.bf16.msra.mxu0 %v8233
      %8243 = vmatprep.subr.bf16.mxu0 0
      %8244 = vmatpush1.bf16.msra.mxu0 0
      %8245 = vmatprep.subr.bf16.mxu0 0
      %8246 = vmatpush1.bf16.msra.mxu0 0
      %8247 = vmatprep.subr.bf16.mxu0 0
      %8248 = vmatpush1.bf16.msra.mxu0 0
      %8249 = vmatprep.subr.bf16.mxu0 0
      %8250 = vmatpush1.bf16.msra.mxu0 0
      %8251 = vmatprep.subr.bf16.mxu0 0
      %8252 = vmatpush1.bf16.msra.mxu0 0
      %8253 = vmatprep.subr.bf16.mxu0 0
      %8254 = vmatpush1.bf16.msra.mxu0 0
      %8255 = vmatprep.subr.bf16.mxu0 0
      %8256 = vmatpush1.bf16.msra.mxu0 0
      %8257 = vmatprep.subr.bf16.mxu0 0
      %8258 = vmatpush1.bf16.msra.mxu0 0
      %8259 = vmatprep.subr.bf16.mxu0 0
      %8260 = vmatpush1.bf16.msra.mxu0 0
      %8261 = vmatprep.subr.bf16.mxu0 0
      %8262 = vmatpush1.bf16.msra.mxu0 0
      %8263 = vmatprep.subr.bf16.mxu0 0
      %8264 = vmatpush1.bf16.msra.mxu0 0
      %8265 = vmatprep.subr.bf16.mxu0 0
      %8266 = vmatpush1.bf16.msra.mxu0 0
      %8267 = vmatprep.subr.bf16.mxu0 0
      %8268 = vmatpush1.bf16.msra.mxu0 0
      %8269 = vmatprep.subr.bf16.mxu0 0
      %8270 = vmatpush1.bf16.msra.mxu0 0
      %8271 = vmatprep.mubr.bf16.mxu0 0
      %8272 = vmatmul.mubr.bf16.gmra.mrb[0].mxu0 %v8237
      %v8273 = vpop.f32.mrb[0].mxu0
      %v8274 = vadd.f32 0.0, %v8273
      %v8275 = vpop.f32.mrb[0].mxu0
      %v8276 = vpop.f32.mrb[0].mxu0
      %v8277 = vpop.f32.mrb[0].mxu0
      %8278 = vdwg.mxu0
      %v8279 = vadd.f32 %v8208, %v8274
      %v8280 = vld [vmem:[%s1771] sm:$0xf]
      %v8281 = vld [vmem:[%s1771 + $0x4] sm:$0xf]
      %v8282 = vld [vmem:[%s1771 + $0x8] sm:$0xf]
      %v8283 = vld [vmem:[%s1771 + $0xc] sm:$0xf]
      %v8284 = vrot.slane %v8215, 2
      %v8289 = vunpack.c.l.b16 %v8280
      %v8290 = vunpack.c.l.b16 %v8281
      %v8291 = vunpack.c.l.b16 %v8282
      %v8292 = vunpack.c.l.b16 %v8283
      %v8293 = vpack.c.b16 %v8290, %v8289
      %v8294 = vpack.c.b16 %v8292, %v8291
      %v8298 = vsel %vm197, %v8284, 0
      %8300 = vmatprep.subr.bf16.mxu0 0
      %8301 = vmatpush1.bf16.msra.mxu0 %v8293
      %8302 = vmatprep.subr.bf16.mxu0 0
      %8303 = vmatpush1.bf16.msra.mxu0 %v8294
      %8304 = vmatprep.subr.bf16.mxu0 0
      %8305 = vmatpush1.bf16.msra.mxu0 0
      %8306 = vmatprep.subr.bf16.mxu0 0
      %8307 = vmatpush1.bf16.msra.mxu0 0
      %8308 = vmatprep.subr.bf16.mxu0 0
      %8309 = vmatpush1.bf16.msra.mxu0 0
      %8310 = vmatprep.subr.bf16.mxu0 0
      %8311 = vmatpush1.bf16.msra.mxu0 0
      %8312 = vmatprep.subr.bf16.mxu0 0
      %8313 = vmatpush1.bf16.msra.mxu0 0
      %8314 = vmatprep.subr.bf16.mxu0 0
      %8315 = vmatpush1.bf16.msra.mxu0 0
      %8316 = vmatprep.subr.bf16.mxu0 0
      %8317 = vmatpush1.bf16.msra.mxu0 0
      %8318 = vmatprep.subr.bf16.mxu0 0
      %8319 = vmatpush1.bf16.msra.mxu0 0
      %8320 = vmatprep.subr.bf16.mxu0 0
      %8321 = vmatpush1.bf16.msra.mxu0 0
      %8322 = vmatprep.subr.bf16.mxu0 0
      %8323 = vmatpush1.bf16.msra.mxu0 0
      %8324 = vmatprep.subr.bf16.mxu0 0
      %8325 = vmatpush1.bf16.msra.mxu0 0
      %8326 = vmatprep.subr.bf16.mxu0 0
      %8327 = vmatpush1.bf16.msra.mxu0 0
      %8328 = vmatprep.subr.bf16.mxu0 0
      %8329 = vmatpush1.bf16.msra.mxu0 0
      %8330 = vmatprep.subr.bf16.mxu0 0
      %8331 = vmatpush1.bf16.msra.mxu0 0
      %8332 = vmatprep.mubr.bf16.mxu0 0
      %8333 = vmatmul.mubr.bf16.gmra.mrb[0].mxu0 %v8298
      %v8334 = vpop.f32.mrb[0].mxu0
      %v8335 = vadd.f32 0.0, %v8334
      %v8336 = vpop.f32.mrb[0].mxu0
      %v8337 = vpop.f32.mrb[0].mxu0
      %v8338 = vpop.f32.mrb[0].mxu0
      %8339 = vdwg.mxu0
      %v8340 = vadd.f32 %v8279, %v8335
      %8341 = vst [vmem:[%s170 + $0x18] sm:$0x3f] %v8340
      %v8342 = vld [vmem:[%s3134] sm:$0xf]
      %v8343 = vld [vmem:[%s3134 + $0x4] sm:$0x1]
      %v8344 = vld [vmem:[%s1] sm:$0xf]
      %v8345 = vld [vmem:[%s1 + $0x4] sm:$0xf]
      %v8346 = vld [vmem:[%s1 + $0x8] sm:$0xf]
      %v8347 = vld [vmem:[%s1 + $0xc] sm:$0xf]
      %v8352 = vunpack.c.l.b16 %v8344
      %v8353 = vunpack.c.l.b16 %v8345
      %v8354 = vunpack.c.l.b16 %v8346
      %v8355 = vunpack.c.l.b16 %v8347
      %v8356 = vpack.c.b16 %v8353, %v8352
      %v8357 = vpack.c.b16 %v8355, %v8354
      %v8361 = vsel %vm197, %v8342, 0
      %8363 = vmatprep.subr.bf16.mxu0 0
      %8364 = vmatpush1.bf16.msra.mxu0 %v8356
      %8365 = vmatprep.subr.bf16.mxu0 0
      %8366 = vmatpush1.bf16.msra.mxu0 %v8357
      %8367 = vmatprep.subr.bf16.mxu0 0
      %8368 = vmatpush1.bf16.msra.mxu0 0
      %8369 = vmatprep.subr.bf16.mxu0 0
      %8370 = vmatpush1.bf16.msra.mxu0 0
      %8371 = vmatprep.subr.bf16.mxu0 0
      %8372 = vmatpush1.bf16.msra.mxu0 0
      %8373 = vmatprep.subr.bf16.mxu0 0
      %8374 = vmatpush1.bf16.msra.mxu0 0
      %8375 = vmatprep.subr.bf16.mxu0 0
      %8376 = vmatpush1.bf16.msra.mxu0 0
      %8377 = vmatprep.subr.bf16.mxu0 0
      %8378 = vmatpush1.bf16.msra.mxu0 0
      %8379 = vmatprep.subr.bf16.mxu0 0
      %8380 = vmatpush1.bf16.msra.mxu0 0
      %8381 = vmatprep.subr.bf16.mxu0 0
      %8382 = vmatpush1.bf16.msra.mxu0 0
      %8383 = vmatprep.subr.bf16.mxu0 0
      %8384 = vmatpush1.bf16.msra.mxu0 0
      %8385 = vmatprep.subr.bf16.mxu0 0
      %8386 = vmatpush1.bf16.msra.mxu0 0
      %8387 = vmatprep.subr.bf16.mxu0 0
      %8388 = vmatpush1.bf16.msra.mxu0 0
      %8389 = vmatprep.subr.bf16.mxu0 0
      %8390 = vmatpush1.bf16.msra.mxu0 0
      %8391 = vmatprep.subr.bf16.mxu0 0
      %8392 = vmatpush1.bf16.msra.mxu0 0
      %8393 = vmatprep.subr.bf16.mxu0 0
      %8394 = vmatpush1.bf16.msra.mxu0 0
      %8395 = vmatprep.mubr.bf16.mxu0 0
      %8396 = vmatmul.mubr.bf16.gmra.mrb[0].mxu0 %v8361
      %v8397 = vpop.f32.mrb[0].mxu0
      %v8398 = vadd.f32 0.0, %v8397
      %v8399 = vpop.f32.mrb[0].mxu0
      %v8400 = vpop.f32.mrb[0].mxu0
      %v8401 = vpop.f32.mrb[0].mxu0
      %8402 = vdwg.mxu0
      %v8403 = vadd.f32 %v177, %v8398
      %v8404 = vld [vmem:[%s242] sm:$0xf]
      %v8405 = vld [vmem:[%s242 + $0x4] sm:$0xf]
      %v8406 = vld [vmem:[%s242 + $0x8] sm:$0xf]
      %v8407 = vld [vmem:[%s242 + $0xc] sm:$0xf]
      %v8409 = vunpack.c.l.b16 %v8342
      %v8410 = vpack.c.b16 %v8409, %v8409
      %v8412 = vshrl.u32 %v8410, 16
      %v8414 = vshll.u32 %v8410, 16
      %v8416 = vrot.slane %v8414, 1
      %v8417 = vor.u32 %v8412, %v8416
      %v8422 = vunpack.c.l.b16 %v8404
      %v8423 = vunpack.c.l.b16 %v8405
      %v8424 = vunpack.c.l.b16 %v8406
      %v8425 = vunpack.c.l.b16 %v8407
      %v8426 = vpack.c.b16 %v8423, %v8422
      %v8427 = vpack.c.b16 %v8425, %v8424
      %v8431 = vsel %vm197, %v8417, 0
      %8433 = vmatprep.subr.bf16.mxu0 0
      %8434 = vmatpush1.bf16.msra.mxu0 %v8426
      %8435 = vmatprep.subr.bf16.mxu0 0
      %8436 = vmatpush1.bf16.msra.mxu0 %v8427
      %8437 = vmatprep.subr.bf16.mxu0 0
      %8438 = vmatpush1.bf16.msra.mxu0 0
      %8439 = vmatprep.subr.bf16.mxu0 0
      %8440 = vmatpush1.bf16.msra.mxu0 0
      %8441 = vmatprep.subr.bf16.mxu0 0
      %8442 = vmatpush1.bf16.msra.mxu0 0
      %8443 = vmatprep.subr.bf16.mxu0 0
      %8444 = vmatpush1.bf16.msra.mxu0 0
      %8445 = vmatprep.subr.bf16.mxu0 0
      %8446 = vmatpush1.bf16.msra.mxu0 0
      %8447 = vmatprep.subr.bf16.mxu0 0
      %8448 = vmatpush1.bf16.msra.mxu0 0
      %8449 = vmatprep.subr.bf16.mxu0 0
      %8450 = vmatpush1.bf16.msra.mxu0 0
      %8451 = vmatprep.subr.bf16.mxu0 0
      %8452 = vmatpush1.bf16.msra.mxu0 0
      %8453 = vmatprep.subr.bf16.mxu0 0
      %8454 = vmatpush1.bf16.msra.mxu0 0
      %8455 = vmatprep.subr.bf16.mxu0 0
      %8456 = vmatpush1.bf16.msra.mxu0 0
      %8457 = vmatprep.subr.bf16.mxu0 0
      %8458 = vmatpush1.bf16.msra.mxu0 0
      %8459 = vmatprep.subr.bf16.mxu0 0
      %8460 = vmatpush1.bf16.msra.mxu0 0
      %8461 = vmatprep.subr.bf16.mxu0 0
      %8462 = vmatpush1.bf16.msra.mxu0 0
      %8463 = vmatprep.subr.bf16.mxu0 0
      %8464 = vmatpush1.bf16.msra.mxu0 0
      %8465 = vmatprep.mubr.bf16.mxu0 0
      %8466 = vmatmul.mubr.bf16.gmra.mrb[0].mxu0 %v8431
      %v8467 = vpop.f32.mrb[0].mxu0
      %v8468 = vadd.f32 0.0, %v8467
      %v8469 = vpop.f32.mrb[0].mxu0
      %v8470 = vpop.f32.mrb[0].mxu0
      %v8471 = vpop.f32.mrb[0].mxu0
      %8472 = vdwg.mxu0
      %v8473 = vadd.f32 %v8403, %v8468
      %v8474 = vld [vmem:[%s313] sm:$0xf]
      %v8475 = vld [vmem:[%s313 + $0x4] sm:$0xf]
      %v8476 = vld [vmem:[%s313 + $0x8] sm:$0xf]
      %v8477 = vld [vmem:[%s313 + $0xc] sm:$0xf]
      %v8478 = vrot.slane %v8410, 1
      %v8483 = vunpack.c.l.b16 %v8474
      %v8484 = vunpack.c.l.b16 %v8475
      %v8485 = vunpack.c.l.b16 %v8476
      %v8486 = vunpack.c.l.b16 %v8477
      %v8487 = vpack.c.b16 %v8484, %v8483
      %v8488 = vpack.c.b16 %v8486, %v8485
      %v8492 = vsel %vm197, %v8478, 0
      %8494 = vmatprep.subr.bf16.mxu0 0
      %8495 = vmatpush1.bf16.msra.mxu0 %v8487
      %8496 = vmatprep.subr.bf16.mxu0 0
      %8497 = vmatpush1.bf16.msra.mxu0 %v8488
      %8498 = vmatprep.subr.bf16.mxu0 0
      %8499 = vmatpush1.bf16.msra.mxu0 0
      %8500 = vmatprep.subr.bf16.mxu0 0
      %8501 = vmatpush1.bf16.msra.mxu0 0
      %8502 = vmatprep.subr.bf16.mxu0 0
      %8503 = vmatpush1.bf16.msra.mxu0 0
      %8504 = vmatprep.subr.bf16.mxu0 0
      %8505 = vmatpush1.bf16.msra.mxu0 0
      %8506 = vmatprep.subr.bf16.mxu0 0
      %8507 = vmatpush1.bf16.msra.mxu0 0
      %8508 = vmatprep.subr.bf16.mxu0 0
      %8509 = vmatpush1.bf16.msra.mxu0 0
      %8510 = vmatprep.subr.bf16.mxu0 0
      %8511 = vmatpush1.bf16.msra.mxu0 0
      %8512 = vmatprep.subr.bf16.mxu0 0
      %8513 = vmatpush1.bf16.msra.mxu0 0
      %8514 = vmatprep.subr.bf16.mxu0 0
      %8515 = vmatpush1.bf16.msra.mxu0 0
      %8516 = vmatprep.subr.bf16.mxu0 0
      %8517 = vmatpush1.bf16.msra.mxu0 0
      %8518 = vmatprep.subr.bf16.mxu0 0
      %8519 = vmatpush1.bf16.msra.mxu0 0
      %8520 = vmatprep.subr.bf16.mxu0 0
      %8521 = vmatpush1.bf16.msra.mxu0 0
      %8522 = vmatprep.subr.bf16.mxu0 0
      %8523 = vmatpush1.bf16.msra.mxu0 0
      %8524 = vmatprep.subr.bf16.mxu0 0
      %8525 = vmatpush1.bf16.msra.mxu0 0
      %8526 = vmatprep.mubr.bf16.mxu0 0
      %8527 = vmatmul.mubr.bf16.gmra.mrb[0].mxu0 %v8492
      %v8528 = vpop.f32.mrb[0].mxu0
      %v8529 = vadd.f32 0.0, %v8528
      %v8530 = vpop.f32.mrb[0].mxu0
      %v8531 = vpop.f32.mrb[0].mxu0
      %v8532 = vpop.f32.mrb[0].mxu0
      %8533 = vdwg.mxu0
      %v8534 = vadd.f32 %v8473, %v8529
      %v8535 = vld [vmem:[%s375] sm:$0xf]
      %v8536 = vld [vmem:[%s375 + $0x4] sm:$0xf]
      %v8537 = vld [vmem:[%s375 + $0x8] sm:$0xf]
      %v8538 = vld [vmem:[%s375 + $0xc] sm:$0xf]
      %v8540 = vunpack.c.l.b16 %v8343
      %v8541 = vpack.c.b16 %v8540, %v8409
      %v8543 = vshrl.u32 %v8541, 16
      %v8545 = vrot.slane %v8543, 1
      %v8546 = vshll.u32 %v8541, 16
      %v8548 = vrot.slane %v8546, 2
      %v8549 = vor.u32 %v8545, %v8548
      %v8554 = vunpack.c.l.b16 %v8535
      %v8555 = vunpack.c.l.b16 %v8536
      %v8556 = vunpack.c.l.b16 %v8537
      %v8557 = vunpack.c.l.b16 %v8538
      %v8558 = vpack.c.b16 %v8555, %v8554
      %v8559 = vpack.c.b16 %v8557, %v8556
      %v8563 = vsel %vm197, %v8549, 0
      %8565 = vmatprep.subr.bf16.mxu0 0
      %8566 = vmatpush1.bf16.msra.mxu0 %v8558
      %8567 = vmatprep.subr.bf16.mxu0 0
      %8568 = vmatpush1.bf16.msra.mxu0 %v8559
      %8569 = vmatprep.subr.bf16.mxu0 0
      %8570 = vmatpush1.bf16.msra.mxu0 0
      %8571 = vmatprep.subr.bf16.mxu0 0
      %8572 = vmatpush1.bf16.msra.mxu0 0
      %8573 = vmatprep.subr.bf16.mxu0 0
      %8574 = vmatpush1.bf16.msra.mxu0 0
      %8575 = vmatprep.subr.bf16.mxu0 0
      %8576 = vmatpush1.bf16.msra.mxu0 0
      %8577 = vmatprep.subr.bf16.mxu0 0
      %8578 = vmatpush1.bf16.msra.mxu0 0
      %8579 = vmatprep.subr.bf16.mxu0 0
      %8580 = vmatpush1.bf16.msra.mxu0 0
      %8581 = vmatprep.subr.bf16.mxu0 0
      %8582 = vmatpush1.bf16.msra.mxu0 0
      %8583 = vmatprep.subr.bf16.mxu0 0
      %8584 = vmatpush1.bf16.msra.mxu0 0
      %8585 = vmatprep.subr.bf16.mxu0 0
      %8586 = vmatpush1.bf16.msra.mxu0 0
      %8587 = vmatprep.subr.bf16.mxu0 0
      %8588 = vmatpush1.bf16.msra.mxu0 0
      %8589 = vmatprep.subr.bf16.mxu0 0
      %8590 = vmatpush1.bf16.msra.mxu0 0
      %8591 = vmatprep.subr.bf16.mxu0 0
      %8592 = vmatpush1.bf16.msra.mxu0 0
      %8593 = vmatprep.subr.bf16.mxu0 0
      %8594 = vmatpush1.bf16.msra.mxu0 0
      %8595 = vmatprep.subr.bf16.mxu0 0
      %8596 = vmatpush1.bf16.msra.mxu0 0
      %8597 = vmatprep.mubr.bf16.mxu0 0
      %8598 = vmatmul.mubr.bf16.gmra.mrb[0].mxu0 %v8563
      %v8599 = vpop.f32.mrb[0].mxu0
      %v8600 = vadd.f32 0.0, %v8599
      %v8601 = vpop.f32.mrb[0].mxu0
      %v8602 = vpop.f32.mrb[0].mxu0
      %v8603 = vpop.f32.mrb[0].mxu0
      %8604 = vdwg.mxu0
      %v8605 = vadd.f32 %v8534, %v8600
      %v8606 = vld [vmem:[%s447] sm:$0xf]
      %v8607 = vld [vmem:[%s447 + $0x4] sm:$0xf]
      %v8608 = vld [vmem:[%s447 + $0x8] sm:$0xf]
      %v8609 = vld [vmem:[%s447 + $0xc] sm:$0xf]
      %v8610 = vrot.slane %v8541, 2
      %v8615 = vunpack.c.l.b16 %v8606
      %v8616 = vunpack.c.l.b16 %v8607
      %v8617 = vunpack.c.l.b16 %v8608
      %v8618 = vunpack.c.l.b16 %v8609
      %v8619 = vpack.c.b16 %v8616, %v8615
      %v8620 = vpack.c.b16 %v8618, %v8617
      %v8624 = vsel %vm197, %v8610, 0
      %8626 = vmatprep.subr.bf16.mxu0 0
      %8627 = vmatpush1.bf16.msra.mxu0 %v8619
      %8628 = vmatprep.subr.bf16.mxu0 0
      %8629 = vmatpush1.bf16.msra.mxu0 %v8620
      %8630 = vmatprep.subr.bf16.mxu0 0
      %8631 = vmatpush1.bf16.msra.mxu0 0
      %8632 = vmatprep.subr.bf16.mxu0 0
      %8633 = vmatpush1.bf16.msra.mxu0 0
      %8634 = vmatprep.subr.bf16.mxu0 0
      %8635 = vmatpush1.bf16.msra.mxu0 0
      %8636 = vmatprep.subr.bf16.mxu0 0
      %8637 = vmatpush1.bf16.msra.mxu0 0
      %8638 = vmatprep.subr.bf16.mxu0 0
      %8639 = vmatpush1.bf16.msra.mxu0 0
      %8640 = vmatprep.subr.bf16.mxu0 0
      %8641 = vmatpush1.bf16.msra.mxu0 0
      %8642 = vmatprep.subr.bf16.mxu0 0
      %8643 = vmatpush1.bf16.msra.mxu0 0
      %8644 = vmatprep.subr.bf16.mxu0 0
      %8645 = vmatpush1.bf16.msra.mxu0 0
      %8646 = vmatprep.subr.bf16.mxu0 0
      %8647 = vmatpush1.bf16.msra.mxu0 0
      %8648 = vmatprep.subr.bf16.mxu0 0
      %8649 = vmatpush1.bf16.msra.mxu0 0
      %8650 = vmatprep.subr.bf16.mxu0 0
      %8651 = vmatpush1.bf16.msra.mxu0 0
      %8652 = vmatprep.subr.bf16.mxu0 0
      %8653 = vmatpush1.bf16.msra.mxu0 0
      %8654 = vmatprep.subr.bf16.mxu0 0
      %8655 = vmatpush1.bf16.msra.mxu0 0
      %8656 = vmatprep.subr.bf16.mxu0 0
      %8657 = vmatpush1.bf16.msra.mxu0 0
      %8658 = vmatprep.mubr.bf16.mxu0 0
      %8659 = vmatmul.mubr.bf16.gmra.mrb[0].mxu0 %v8624
      %v8660 = vpop.f32.mrb[0].mxu0
      %v8661 = vadd.f32 0.0, %v8660
      %v8662 = vpop.f32.mrb[0].mxu0
      %v8663 = vpop.f32.mrb[0].mxu0
      %v8664 = vpop.f32.mrb[0].mxu0
      %8665 = vdwg.mxu0
      %v8666 = vadd.f32 %v8605, %v8661
      %v8667 = vld [vmem:[%s4761] sm:$0xf]
      %v8668 = vld [vmem:[%s4761 + $0x4] sm:$0x1]
      %v8669 = vld [vmem:[%s512] sm:$0xf]
      %v8670 = vld [vmem:[%s512 + $0x4] sm:$0xf]
      %v8671 = vld [vmem:[%s512 + $0x8] sm:$0xf]
      %v8672 = vld [vmem:[%s512 + $0xc] sm:$0xf]
      %v8677 = vunpack.c.l.b16 %v8669
      %v8678 = vunpack.c.l.b16 %v8670
      %v8679 = vunpack.c.l.b16 %v8671
      %v8680 = vunpack.c.l.b16 %v8672
      %v8681 = vpack.c.b16 %v8678, %v8677
      %v8682 = vpack.c.b16 %v8680, %v8679
      %v8686 = vsel %vm197, %v8667, 0
      %8688 = vmatprep.subr.bf16.mxu0 0
      %8689 = vmatpush1.bf16.msra.mxu0 %v8681
      %8690 = vmatprep.subr.bf16.mxu0 0
      %8691 = vmatpush1.bf16.msra.mxu0 %v8682
      %8692 = vmatprep.subr.bf16.mxu0 0
      %8693 = vmatpush1.bf16.msra.mxu0 0
      %8694 = vmatprep.subr.bf16.mxu0 0
      %8695 = vmatpush1.bf16.msra.mxu0 0
      %8696 = vmatprep.subr.bf16.mxu0 0
      %8697 = vmatpush1.bf16.msra.mxu0 0
      %8698 = vmatprep.subr.bf16.mxu0 0
      %8699 = vmatpush1.bf16.msra.mxu0 0
      %8700 = vmatprep.subr.bf16.mxu0 0
      %8701 = vmatpush1.bf16.msra.mxu0 0
      %8702 = vmatprep.subr.bf16.mxu0 0
      %8703 = vmatpush1.bf16.msra.mxu0 0
      %8704 = vmatprep.subr.bf16.mxu0 0
      %8705 = vmatpush1.bf16.msra.mxu0 0
      %8706 = vmatprep.subr.bf16.mxu0 0
      %8707 = vmatpush1.bf16.msra.mxu0 0
      %8708 = vmatprep.subr.bf16.mxu0 0
      %8709 = vmatpush1.bf16.msra.mxu0 0
      %8710 = vmatprep.subr.bf16.mxu0 0
      %8711 = vmatpush1.bf16.msra.mxu0 0
      %8712 = vmatprep.subr.bf16.mxu0 0
      %8713 = vmatpush1.bf16.msra.mxu0 0
      %8714 = vmatprep.subr.bf16.mxu0 0
      %8715 = vmatpush1.bf16.msra.mxu0 0
      %8716 = vmatprep.subr.bf16.mxu0 0
      %8717 = vmatpush1.bf16.msra.mxu0 0
      %8718 = vmatprep.subr.bf16.mxu0 0
      %8719 = vmatpush1.bf16.msra.mxu0 0
      %8720 = vmatprep.mubr.bf16.mxu0 0
      %8721 = vmatmul.mubr.bf16.gmra.mrb[0].mxu0 %v8686
      %v8722 = vpop.f32.mrb[0].mxu0
      %v8723 = vadd.f32 0.0, %v8722
      %v8724 = vpop.f32.mrb[0].mxu0
      %v8725 = vpop.f32.mrb[0].mxu0
      %v8726 = vpop.f32.mrb[0].mxu0
      %8727 = vdwg.mxu0
      %v8728 = vadd.f32 %v8666, %v8723
      %v8729 = vld [vmem:[%s573] sm:$0xf]
      %v8730 = vld [vmem:[%s573 + $0x4] sm:$0xf]
      %v8731 = vld [vmem:[%s573 + $0x8] sm:$0xf]
      %v8732 = vld [vmem:[%s573 + $0xc] sm:$0xf]
      %v8734 = vunpack.c.l.b16 %v8667
      %v8735 = vpack.c.b16 %v8734, %v8734
      %v8737 = vshrl.u32 %v8735, 16
      %v8739 = vshll.u32 %v8735, 16
      %v8741 = vrot.slane %v8739, 1
      %v8742 = vor.u32 %v8737, %v8741
      %v8747 = vunpack.c.l.b16 %v8729
      %v8748 = vunpack.c.l.b16 %v8730
      %v8749 = vunpack.c.l.b16 %v8731
      %v8750 = vunpack.c.l.b16 %v8732
      %v8751 = vpack.c.b16 %v8748, %v8747
      %v8752 = vpack.c.b16 %v8750, %v8749
      %v8756 = vsel %vm197, %v8742, 0
      %8758 = vmatprep.subr.bf16.mxu0 0
      %8759 = vmatpush1.bf16.msra.mxu0 %v8751
      %8760 = vmatprep.subr.bf16.mxu0 0
      %8761 = vmatpush1.bf16.msra.mxu0 %v8752
      %8762 = vmatprep.subr.bf16.mxu0 0
      %8763 = vmatpush1.bf16.msra.mxu0 0
      %8764 = vmatprep.subr.bf16.mxu0 0
      %8765 = vmatpush1.bf16.msra.mxu0 0
      %8766 = vmatprep.subr.bf16.mxu0 0
      %8767 = vmatpush1.bf16.msra.mxu0 0
      %8768 = vmatprep.subr.bf16.mxu0 0
      %8769 = vmatpush1.bf16.msra.mxu0 0
      %8770 = vmatprep.subr.bf16.mxu0 0
      %8771 = vmatpush1.bf16.msra.mxu0 0
      %8772 = vmatprep.subr.bf16.mxu0 0
      %8773 = vmatpush1.bf16.msra.mxu0 0
      %8774 = vmatprep.subr.bf16.mxu0 0
      %8775 = vmatpush1.bf16.msra.mxu0 0
      %8776 = vmatprep.subr.bf16.mxu0 0
      %8777 = vmatpush1.bf16.msra.mxu0 0
      %8778 = vmatprep.subr.bf16.mxu0 0
      %8779 = vmatpush1.bf16.msra.mxu0 0
      %8780 = vmatprep.subr.bf16.mxu0 0
      %8781 = vmatpush1.bf16.msra.mxu0 0
      %8782 = vmatprep.subr.bf16.mxu0 0
      %8783 = vmatpush1.bf16.msra.mxu0 0
      %8784 = vmatprep.subr.bf16.mxu0 0
      %8785 = vmatpush1.bf16.msra.mxu0 0
      %8786 = vmatprep.subr.bf16.mxu0 0
      %8787 = vmatpush1.bf16.msra.mxu0 0
      %8788 = vmatprep.subr.bf16.mxu0 0
      %8789 = vmatpush1.bf16.msra.mxu0 0
      %8790 = vmatprep.mubr.bf16.mxu0 0
      %8791 = vmatmul.mubr.bf16.gmra.mrb[0].mxu0 %v8756
      %v8792 = vpop.f32.mrb[0].mxu0
      %v8793 = vadd.f32 0.0, %v8792
      %v8794 = vpop.f32.mrb[0].mxu0
      %v8795 = vpop.f32.mrb[0].mxu0
      %v8796 = vpop.f32.mrb[0].mxu0
      %8797 = vdwg.mxu0
      %v8798 = vadd.f32 %v8728, %v8793
      %v8799 = vld [vmem:[%s644] sm:$0xf]
      %v8800 = vld [vmem:[%s644 + $0x4] sm:$0xf]
      %v8801 = vld [vmem:[%s644 + $0x8] sm:$0xf]
      %v8802 = vld [vmem:[%s644 + $0xc] sm:$0xf]
      %v8803 = vrot.slane %v8735, 1
      %v8808 = vunpack.c.l.b16 %v8799
      %v8809 = vunpack.c.l.b16 %v8800
      %v8810 = vunpack.c.l.b16 %v8801
      %v8811 = vunpack.c.l.b16 %v8802
      %v8812 = vpack.c.b16 %v8809, %v8808
      %v8813 = vpack.c.b16 %v8811, %v8810
      %v8817 = vsel %vm197, %v8803, 0
      %8819 = vmatprep.subr.bf16.mxu0 0
      %8820 = vmatpush1.bf16.msra.mxu0 %v8812
      %8821 = vmatprep.subr.bf16.mxu0 0
      %8822 = vmatpush1.bf16.msra.mxu0 %v8813
      %8823 = vmatprep.subr.bf16.mxu0 0
      %8824 = vmatpush1.bf16.msra.mxu0 0
      %8825 = vmatprep.subr.bf16.mxu0 0
      %8826 = vmatpush1.bf16.msra.mxu0 0
      %8827 = vmatprep.subr.bf16.mxu0 0
      %8828 = vmatpush1.bf16.msra.mxu0 0
      %8829 = vmatprep.subr.bf16.mxu0 0
      %8830 = vmatpush1.bf16.msra.mxu0 0
      %8831 = vmatprep.subr.bf16.mxu0 0
      %8832 = vmatpush1.bf16.msra.mxu0 0
      %8833 = vmatprep.subr.bf16.mxu0 0
      %8834 = vmatpush1.bf16.msra.mxu0 0
      %8835 = vmatprep.subr.bf16.mxu0 0
      %8836 = vmatpush1.bf16.msra.mxu0 0
      %8837 = vmatprep.subr.bf16.mxu0 0
      %8838 = vmatpush1.bf16.msra.mxu0 0
      %8839 = vmatprep.subr.bf16.mxu0 0
      %8840 = vmatpush1.bf16.msra.mxu0 0
      %8841 = vmatprep.subr.bf16.mxu0 0
      %8842 = vmatpush1.bf16.msra.mxu0 0
      %8843 = vmatprep.subr.bf16.mxu0 0
      %8844 = vmatpush1.bf16.msra.mxu0 0
      %8845 = vmatprep.subr.bf16.mxu0 0
      %8846 = vmatpush1.bf16.msra.mxu0 0
      %8847 = vmatprep.subr.bf16.mxu0 0
      %8848 = vmatpush1.bf16.msra.mxu0 0
      %8849 = vmatprep.subr.bf16.mxu0 0
      %8850 = vmatpush1.bf16.msra.mxu0 0
      %8851 = vmatprep.mubr.bf16.mxu0 0
      %8852 = vmatmul.mubr.bf16.gmra.mrb[0].mxu0 %v8817
      %v8853 = vpop.f32.mrb[0].mxu0
      %v8854 = vadd.f32 0.0, %v8853
      %v8855 = vpop.f32.mrb[0].mxu0
      %v8856 = vpop.f32.mrb[0].mxu0
      %v8857 = vpop.f32.mrb[0].mxu0
      %8858 = vdwg.mxu0
      %v8859 = vadd.f32 %v8798, %v8854
      %v8860 = vld [vmem:[%s706] sm:$0xf]
      %v8861 = vld [vmem:[%s706 + $0x4] sm:$0xf]
      %v8862 = vld [vmem:[%s706 + $0x8] sm:$0xf]
      %v8863 = vld [vmem:[%s706 + $0xc] sm:$0xf]
      %v8865 = vunpack.c.l.b16 %v8668
      %v8866 = vpack.c.b16 %v8865, %v8734
      %v8868 = vshrl.u32 %v8866, 16
      %v8870 = vrot.slane %v8868, 1
      %v8871 = vshll.u32 %v8866, 16
      %v8873 = vrot.slane %v8871, 2
      %v8874 = vor.u32 %v8870, %v8873
      %v8879 = vunpack.c.l.b16 %v8860
      %v8880 = vunpack.c.l.b16 %v8861
      %v8881 = vunpack.c.l.b16 %v8862
      %v8882 = vunpack.c.l.b16 %v8863
      %v8883 = vpack.c.b16 %v8880, %v8879
      %v8884 = vpack.c.b16 %v8882, %v8881
      %v8888 = vsel %vm197, %v8874, 0
      %8890 = vmatprep.subr.bf16.mxu0 0
      %8891 = vmatpush1.bf16.msra.mxu0 %v8883
      %8892 = vmatprep.subr.bf16.mxu0 0
      %8893 = vmatpush1.bf16.msra.mxu0 %v8884
      %8894 = vmatprep.subr.bf16.mxu0 0
      %8895 = vmatpush1.bf16.msra.mxu0 0
      %8896 = vmatprep.subr.bf16.mxu0 0
      %8897 = vmatpush1.bf16.msra.mxu0 0
      %8898 = vmatprep.subr.bf16.mxu0 0
      %8899 = vmatpush1.bf16.msra.mxu0 0
      %8900 = vmatprep.subr.bf16.mxu0 0
      %8901 = vmatpush1.bf16.msra.mxu0 0
      %8902 = vmatprep.subr.bf16.mxu0 0
      %8903 = vmatpush1.bf16.msra.mxu0 0
      %8904 = vmatprep.subr.bf16.mxu0 0
      %8905 = vmatpush1.bf16.msra.mxu0 0
      %8906 = vmatprep.subr.bf16.mxu0 0
      %8907 = vmatpush1.bf16.msra.mxu0 0
      %8908 = vmatprep.subr.bf16.mxu0 0
      %8909 = vmatpush1.bf16.msra.mxu0 0
      %8910 = vmatprep.subr.bf16.mxu0 0
      %8911 = vmatpush1.bf16.msra.mxu0 0
      %8912 = vmatprep.subr.bf16.mxu0 0
      %8913 = vmatpush1.bf16.msra.mxu0 0
      %8914 = vmatprep.subr.bf16.mxu0 0
      %8915 = vmatpush1.bf16.msra.mxu0 0
      %8916 = vmatprep.subr.bf16.mxu0 0
      %8917 = vmatpush1.bf16.msra.mxu0 0
      %8918 = vmatprep.subr.bf16.mxu0 0
      %8919 = vmatpush1.bf16.msra.mxu0 0
      %8920 = vmatprep.subr.bf16.mxu0 0
      %8921 = vmatpush1.bf16.msra.mxu0 0
      %8922 = vmatprep.mubr.bf16.mxu0 0
      %8923 = vmatmul.mubr.bf16.gmra.mrb[0].mxu0 %v8888
      %v8924 = vpop.f32.mrb[0].mxu0
      %v8925 = vadd.f32 0.0, %v8924
      %v8926 = vpop.f32.mrb[0].mxu0
      %v8927 = vpop.f32.mrb[0].mxu0
      %v8928 = vpop.f32.mrb[0].mxu0
      %8929 = vdwg.mxu0
      %v8930 = vadd.f32 %v8859, %v8925
      %v8931 = vld [vmem:[%s778] sm:$0xf]
      %v8932 = vld [vmem:[%s778 + $0x4] sm:$0xf]
      %v8933 = vld [vmem:[%s778 + $0x8] sm:$0xf]
      %v8934 = vld [vmem:[%s778 + $0xc] sm:$0xf]
      %v8935 = vrot.slane %v8866, 2
      %v8940 = vunpack.c.l.b16 %v8931
      %v8941 = vunpack.c.l.b16 %v8932
      %v8942 = vunpack.c.l.b16 %v8933
      %v8943 = vunpack.c.l.b16 %v8934
      %v8944 = vpack.c.b16 %v8941, %v8940
      %v8945 = vpack.c.b16 %v8943, %v8942
      %v8949 = vsel %vm197, %v8935, 0
      %8951 = vmatprep.subr.bf16.mxu0 0
      %8952 = vmatpush1.bf16.msra.mxu0 %v8944
      %8953 = vmatprep.subr.bf16.mxu0 0
      %8954 = vmatpush1.bf16.msra.mxu0 %v8945
      %8955 = vmatprep.subr.bf16.mxu0 0
      %8956 = vmatpush1.bf16.msra.mxu0 0
      %8957 = vmatprep.subr.bf16.mxu0 0
      %8958 = vmatpush1.bf16.msra.mxu0 0
      %8959 = vmatprep.subr.bf16.mxu0 0
      %8960 = vmatpush1.bf16.msra.mxu0 0
      %8961 = vmatprep.subr.bf16.mxu0 0
      %8962 = vmatpush1.bf16.msra.mxu0 0
      %8963 = vmatprep.subr.bf16.mxu0 0
      %8964 = vmatpush1.bf16.msra.mxu0 0
      %8965 = vmatprep.subr.bf16.mxu0 0
      %8966 = vmatpush1.bf16.msra.mxu0 0
      %8967 = vmatprep.subr.bf16.mxu0 0
      %8968 = vmatpush1.bf16.msra.mxu0 0
      %8969 = vmatprep.subr.bf16.mxu0 0
      %8970 = vmatpush1.bf16.msra.mxu0 0
      %8971 = vmatprep.subr.bf16.mxu0 0
      %8972 = vmatpush1.bf16.msra.mxu0 0
      %8973 = vmatprep.subr.bf16.mxu0 0
      %8974 = vmatpush1.bf16.msra.mxu0 0
      %8975 = vmatprep.subr.bf16.mxu0 0
      %8976 = vmatpush1.bf16.msra.mxu0 0
      %8977 = vmatprep.subr.bf16.mxu0 0
      %8978 = vmatpush1.bf16.msra.mxu0 0
      %8979 = vmatprep.subr.bf16.mxu0 0
      %8980 = vmatpush1.bf16.msra.mxu0 0
      %8981 = vmatprep.subr.bf16.mxu0 0
      %8982 = vmatpush1.bf16.msra.mxu0 0
      %8983 = vmatprep.mubr.bf16.mxu0 0
      %8984 = vmatmul.mubr.bf16.gmra.mrb[0].mxu0 %v8949
      %v8985 = vpop.f32.mrb[0].mxu0
      %v8986 = vadd.f32 0.0, %v8985
      %v8987 = vpop.f32.mrb[0].mxu0
      %v8988 = vpop.f32.mrb[0].mxu0
      %v8989 = vpop.f32.mrb[0].mxu0
      %8990 = vdwg.mxu0
      %v8991 = vadd.f32 %v8930, %v8986
      %v8992 = vld [vmem:[%s6388] sm:$0xf]
      %v8993 = vld [vmem:[%s6388 + $0x4] sm:$0x1]
      %v8994 = vld [vmem:[%s843] sm:$0xf]
      %v8995 = vld [vmem:[%s843 + $0x4] sm:$0xf]
      %v8996 = vld [vmem:[%s843 + $0x8] sm:$0xf]
      %v8997 = vld [vmem:[%s843 + $0xc] sm:$0xf]
      %v9002 = vunpack.c.l.b16 %v8994
      %v9003 = vunpack.c.l.b16 %v8995
      %v9004 = vunpack.c.l.b16 %v8996
      %v9005 = vunpack.c.l.b16 %v8997
      %v9006 = vpack.c.b16 %v9003, %v9002
      %v9007 = vpack.c.b16 %v9005, %v9004
      %v9011 = vsel %vm197, %v8992, 0
      %9013 = vmatprep.subr.bf16.mxu0 0
      %9014 = vmatpush1.bf16.msra.mxu0 %v9006
      %9015 = vmatprep.subr.bf16.mxu0 0
      %9016 = vmatpush1.bf16.msra.mxu0 %v9007
      %9017 = vmatprep.subr.bf16.mxu0 0
      %9018 = vmatpush1.bf16.msra.mxu0 0
      %9019 = vmatprep.subr.bf16.mxu0 0
      %9020 = vmatpush1.bf16.msra.mxu0 0
      %9021 = vmatprep.subr.bf16.mxu0 0
      %9022 = vmatpush1.bf16.msra.mxu0 0
      %9023 = vmatprep.subr.bf16.mxu0 0
      %9024 = vmatpush1.bf16.msra.mxu0 0
      %9025 = vmatprep.subr.bf16.mxu0 0
      %9026 = vmatpush1.bf16.msra.mxu0 0
      %9027 = vmatprep.subr.bf16.mxu0 0
      %9028 = vmatpush1.bf16.msra.mxu0 0
      %9029 = vmatprep.subr.bf16.mxu0 0
      %9030 = vmatpush1.bf16.msra.mxu0 0
      %9031 = vmatprep.subr.bf16.mxu0 0
      %9032 = vmatpush1.bf16.msra.mxu0 0
      %9033 = vmatprep.subr.bf16.mxu0 0
      %9034 = vmatpush1.bf16.msra.mxu0 0
      %9035 = vmatprep.subr.bf16.mxu0 0
      %9036 = vmatpush1.bf16.msra.mxu0 0
      %9037 = vmatprep.subr.bf16.mxu0 0
      %9038 = vmatpush1.bf16.msra.mxu0 0
      %9039 = vmatprep.subr.bf16.mxu0 0
      %9040 = vmatpush1.bf16.msra.mxu0 0
      %9041 = vmatprep.subr.bf16.mxu0 0
      %9042 = vmatpush1.bf16.msra.mxu0 0
      %9043 = vmatprep.subr.bf16.mxu0 0
      %9044 = vmatpush1.bf16.msra.mxu0 0
      %9045 = vmatprep.mubr.bf16.mxu0 0
      %9046 = vmatmul.mubr.bf16.gmra.mrb[0].mxu0 %v9011
      %v9047 = vpop.f32.mrb[0].mxu0
      %v9048 = vadd.f32 0.0, %v9047
      %v9049 = vpop.f32.mrb[0].mxu0
      %v9050 = vpop.f32.mrb[0].mxu0
      %v9051 = vpop.f32.mrb[0].mxu0
      %9052 = vdwg.mxu0
      %v9053 = vadd.f32 %v8991, %v9048
      %v9054 = vld [vmem:[%s904] sm:$0xf]
      %v9055 = vld [vmem:[%s904 + $0x4] sm:$0xf]
      %v9056 = vld [vmem:[%s904 + $0x8] sm:$0xf]
      %v9057 = vld [vmem:[%s904 + $0xc] sm:$0xf]
      %v9059 = vunpack.c.l.b16 %v8992
      %v9060 = vpack.c.b16 %v9059, %v9059
      %v9062 = vshrl.u32 %v9060, 16
      %v9064 = vshll.u32 %v9060, 16
      %v9066 = vrot.slane %v9064, 1
      %v9067 = vor.u32 %v9062, %v9066
      %v9072 = vunpack.c.l.b16 %v9054
      %v9073 = vunpack.c.l.b16 %v9055
      %v9074 = vunpack.c.l.b16 %v9056
      %v9075 = vunpack.c.l.b16 %v9057
      %v9076 = vpack.c.b16 %v9073, %v9072
      %v9077 = vpack.c.b16 %v9075, %v9074
      %v9081 = vsel %vm197, %v9067, 0
      %9083 = vmatprep.subr.bf16.mxu0 0
      %9084 = vmatpush1.bf16.msra.mxu0 %v9076
      %9085 = vmatprep.subr.bf16.mxu0 0
      %9086 = vmatpush1.bf16.msra.mxu0 %v9077
      %9087 = vmatprep.subr.bf16.mxu0 0
      %9088 = vmatpush1.bf16.msra.mxu0 0
      %9089 = vmatprep.subr.bf16.mxu0 0
      %9090 = vmatpush1.bf16.msra.mxu0 0
      %9091 = vmatprep.subr.bf16.mxu0 0
      %9092 = vmatpush1.bf16.msra.mxu0 0
      %9093 = vmatprep.subr.bf16.mxu0 0
      %9094 = vmatpush1.bf16.msra.mxu0 0
      %9095 = vmatprep.subr.bf16.mxu0 0
      %9096 = vmatpush1.bf16.msra.mxu0 0
      %9097 = vmatprep.subr.bf16.mxu0 0
      %9098 = vmatpush1.bf16.msra.mxu0 0
      %9099 = vmatprep.subr.bf16.mxu0 0
      %9100 = vmatpush1.bf16.msra.mxu0 0
      %9101 = vmatprep.subr.bf16.mxu0 0
      %9102 = vmatpush1.bf16.msra.mxu0 0
      %9103 = vmatprep.subr.bf16.mxu0 0
      %9104 = vmatpush1.bf16.msra.mxu0 0
      %9105 = vmatprep.subr.bf16.mxu0 0
      %9106 = vmatpush1.bf16.msra.mxu0 0
      %9107 = vmatprep.subr.bf16.mxu0 0
      %9108 = vmatpush1.bf16.msra.mxu0 0
      %9109 = vmatprep.subr.bf16.mxu0 0
      %9110 = vmatpush1.bf16.msra.mxu0 0
      %9111 = vmatprep.subr.bf16.mxu0 0
      %9112 = vmatpush1.bf16.msra.mxu0 0
      %9113 = vmatprep.subr.bf16.mxu0 0
      %9114 = vmatpush1.bf16.msra.mxu0 0
      %9115 = vmatprep.mubr.bf16.mxu0 0
      %9116 = vmatmul.mubr.bf16.gmra.mrb[0].mxu0 %v9081
      %v9117 = vpop.f32.mrb[0].mxu0
      %v9118 = vadd.f32 0.0, %v9117
      %v9119 = vpop.f32.mrb[0].mxu0
      %v9120 = vpop.f32.mrb[0].mxu0
      %v9121 = vpop.f32.mrb[0].mxu0
      %9122 = vdwg.mxu0
      %v9123 = vadd.f32 %v9053, %v9118
      %v9124 = vld [vmem:[%s975] sm:$0xf]
      %v9125 = vld [vmem:[%s975 + $0x4] sm:$0xf]
      %v9126 = vld [vmem:[%s975 + $0x8] sm:$0xf]
      %v9127 = vld [vmem:[%s975 + $0xc] sm:$0xf]
      %v9128 = vrot.slane %v9060, 1
      %v9133 = vunpack.c.l.b16 %v9124
      %v9134 = vunpack.c.l.b16 %v9125
      %v9135 = vunpack.c.l.b16 %v9126
      %v9136 = vunpack.c.l.b16 %v9127
      %v9137 = vpack.c.b16 %v9134, %v9133
      %v9138 = vpack.c.b16 %v9136, %v9135
      %v9142 = vsel %vm197, %v9128, 0
      %9144 = vmatprep.subr.bf16.mxu0 0
      %9145 = vmatpush1.bf16.msra.mxu0 %v9137
      %9146 = vmatprep.subr.bf16.mxu0 0
      %9147 = vmatpush1.bf16.msra.mxu0 %v9138
      %9148 = vmatprep.subr.bf16.mxu0 0
      %9149 = vmatpush1.bf16.msra.mxu0 0
      %9150 = vmatprep.subr.bf16.mxu0 0
      %9151 = vmatpush1.bf16.msra.mxu0 0
      %9152 = vmatprep.subr.bf16.mxu0 0
      %9153 = vmatpush1.bf16.msra.mxu0 0
      %9154 = vmatprep.subr.bf16.mxu0 0
      %9155 = vmatpush1.bf16.msra.mxu0 0
      %9156 = vmatprep.subr.bf16.mxu0 0
      %9157 = vmatpush1.bf16.msra.mxu0 0
      %9158 = vmatprep.subr.bf16.mxu0 0
      %9159 = vmatpush1.bf16.msra.mxu0 0
      %9160 = vmatprep.subr.bf16.mxu0 0
      %9161 = vmatpush1.bf16.msra.mxu0 0
      %9162 = vmatprep.subr.bf16.mxu0 0
      %9163 = vmatpush1.bf16.msra.mxu0 0
      %9164 = vmatprep.subr.bf16.mxu0 0
      %9165 = vmatpush1.bf16.msra.mxu0 0
      %9166 = vmatprep.subr.bf16.mxu0 0
      %9167 = vmatpush1.bf16.msra.mxu0 0
      %9168 = vmatprep.subr.bf16.mxu0 0
      %9169 = vmatpush1.bf16.msra.mxu0 0
      %9170 = vmatprep.subr.bf16.mxu0 0
      %9171 = vmatpush1.bf16.msra.mxu0 0
      %9172 = vmatprep.subr.bf16.mxu0 0
      %9173 = vmatpush1.bf16.msra.mxu0 0
      %9174 = vmatprep.subr.bf16.mxu0 0
      %9175 = vmatpush1.bf16.msra.mxu0 0
      %9176 = vmatprep.mubr.bf16.mxu0 0
      %9177 = vmatmul.mubr.bf16.gmra.mrb[0].mxu0 %v9142
      %v9178 = vpop.f32.mrb[0].mxu0
      %v9179 = vadd.f32 0.0, %v9178
      %v9180 = vpop.f32.mrb[0].mxu0
      %v9181 = vpop.f32.mrb[0].mxu0
      %v9182 = vpop.f32.mrb[0].mxu0
      %9183 = vdwg.mxu0
      %v9184 = vadd.f32 %v9123, %v9179
      %v9185 = vld [vmem:[%s1037] sm:$0xf]
      %v9186 = vld [vmem:[%s1037 + $0x4] sm:$0xf]
      %v9187 = vld [vmem:[%s1037 + $0x8] sm:$0xf]
      %v9188 = vld [vmem:[%s1037 + $0xc] sm:$0xf]
      %v9190 = vunpack.c.l.b16 %v8993
      %v9191 = vpack.c.b16 %v9190, %v9059
      %v9193 = vshrl.u32 %v9191, 16
      %v9195 = vrot.slane %v9193, 1
      %v9196 = vshll.u32 %v9191, 16
      %v9198 = vrot.slane %v9196, 2
      %v9199 = vor.u32 %v9195, %v9198
      %v9204 = vunpack.c.l.b16 %v9185
      %v9205 = vunpack.c.l.b16 %v9186
      %v9206 = vunpack.c.l.b16 %v9187
      %v9207 = vunpack.c.l.b16 %v9188
      %v9208 = vpack.c.b16 %v9205, %v9204
      %v9209 = vpack.c.b16 %v9207, %v9206
      %v9213 = vsel %vm197, %v9199, 0
      %9215 = vmatprep.subr.bf16.mxu0 0
      %9216 = vmatpush1.bf16.msra.mxu0 %v9208
      %9217 = vmatprep.subr.bf16.mxu0 0
      %9218 = vmatpush1.bf16.msra.mxu0 %v9209
      %9219 = vmatprep.subr.bf16.mxu0 0
      %9220 = vmatpush1.bf16.msra.mxu0 0
      %9221 = vmatprep.subr.bf16.mxu0 0
      %9222 = vmatpush1.bf16.msra.mxu0 0
      %9223 = vmatprep.subr.bf16.mxu0 0
      %9224 = vmatpush1.bf16.msra.mxu0 0
      %9225 = vmatprep.subr.bf16.mxu0 0
      %9226 = vmatpush1.bf16.msra.mxu0 0
      %9227 = vmatprep.subr.bf16.mxu0 0
      %9228 = vmatpush1.bf16.msra.mxu0 0
      %9229 = vmatprep.subr.bf16.mxu0 0
      %9230 = vmatpush1.bf16.msra.mxu0 0
      %9231 = vmatprep.subr.bf16.mxu0 0
      %9232 = vmatpush1.bf16.msra.mxu0 0
      %9233 = vmatprep.subr.bf16.mxu0 0
      %9234 = vmatpush1.bf16.msra.mxu0 0
      %9235 = vmatprep.subr.bf16.mxu0 0
      %9236 = vmatpush1.bf16.msra.mxu0 0
      %9237 = vmatprep.subr.bf16.mxu0 0
      %9238 = vmatpush1.bf16.msra.mxu0 0
      %9239 = vmatprep.subr.bf16.mxu0 0
      %9240 = vmatpush1.bf16.msra.mxu0 0
      %9241 = vmatprep.subr.bf16.mxu0 0
      %9242 = vmatpush1.bf16.msra.mxu0 0
      %9243 = vmatprep.subr.bf16.mxu0 0
      %9244 = vmatpush1.bf16.msra.mxu0 0
      %9245 = vmatprep.subr.bf16.mxu0 0
      %9246 = vmatpush1.bf16.msra.mxu0 0
      %9247 = vmatprep.mubr.bf16.mxu0 0
      %9248 = vmatmul.mubr.bf16.gmra.mrb[0].mxu0 %v9213
      %v9249 = vpop.f32.mrb[0].mxu0
      %v9250 = vadd.f32 0.0, %v9249
      %v9251 = vpop.f32.mrb[0].mxu0
      %v9252 = vpop.f32.mrb[0].mxu0
      %v9253 = vpop.f32.mrb[0].mxu0
      %9254 = vdwg.mxu0
      %v9255 = vadd.f32 %v9184, %v9250
      %v9256 = vld [vmem:[%s1109] sm:$0xf]
      %v9257 = vld [vmem:[%s1109 + $0x4] sm:$0xf]
      %v9258 = vld [vmem:[%s1109 + $0x8] sm:$0xf]
      %v9259 = vld [vmem:[%s1109 + $0xc] sm:$0xf]
      %v9260 = vrot.slane %v9191, 2
      %v9265 = vunpack.c.l.b16 %v9256
      %v9266 = vunpack.c.l.b16 %v9257
      %v9267 = vunpack.c.l.b16 %v9258
      %v9268 = vunpack.c.l.b16 %v9259
      %v9269 = vpack.c.b16 %v9266, %v9265
      %v9270 = vpack.c.b16 %v9268, %v9267
      %v9274 = vsel %vm197, %v9260, 0
      %9276 = vmatprep.subr.bf16.mxu0 0
      %9277 = vmatpush1.bf16.msra.mxu0 %v9269
      %9278 = vmatprep.subr.bf16.mxu0 0
      %9279 = vmatpush1.bf16.msra.mxu0 %v9270
      %9280 = vmatprep.subr.bf16.mxu0 0
      %9281 = vmatpush1.bf16.msra.mxu0 0
      %9282 = vmatprep.subr.bf16.mxu0 0
      %9283 = vmatpush1.bf16.msra.mxu0 0
      %9284 = vmatprep.subr.bf16.mxu0 0
      %9285 = vmatpush1.bf16.msra.mxu0 0
      %9286 = vmatprep.subr.bf16.mxu0 0
      %9287 = vmatpush1.bf16.msra.mxu0 0
      %9288 = vmatprep.subr.bf16.mxu0 0
      %9289 = vmatpush1.bf16.msra.mxu0 0
      %9290 = vmatprep.subr.bf16.mxu0 0
      %9291 = vmatpush1.bf16.msra.mxu0 0
      %9292 = vmatprep.subr.bf16.mxu0 0
      %9293 = vmatpush1.bf16.msra.mxu0 0
      %9294 = vmatprep.subr.bf16.mxu0 0
      %9295 = vmatpush1.bf16.msra.mxu0 0
      %9296 = vmatprep.subr.bf16.mxu0 0
      %9297 = vmatpush1.bf16.msra.mxu0 0
      %9298 = vmatprep.subr.bf16.mxu0 0
      %9299 = vmatpush1.bf16.msra.mxu0 0
      %9300 = vmatprep.subr.bf16.mxu0 0
      %9301 = vmatpush1.bf16.msra.mxu0 0
      %9302 = vmatprep.subr.bf16.mxu0 0
      %9303 = vmatpush1.bf16.msra.mxu0 0
      %9304 = vmatprep.subr.bf16.mxu0 0
      %9305 = vmatpush1.bf16.msra.mxu0 0
      %9306 = vmatprep.subr.bf16.mxu0 0
      %9307 = vmatpush1.bf16.msra.mxu0 0
      %9308 = vmatprep.mubr.bf16.mxu0 0
      %9309 = vmatmul.mubr.bf16.gmra.mrb[0].mxu0 %v9274
      %v9310 = vpop.f32.mrb[0].mxu0
      %v9311 = vadd.f32 0.0, %v9310
      %v9312 = vpop.f32.mrb[0].mxu0
      %v9313 = vpop.f32.mrb[0].mxu0
      %v9314 = vpop.f32.mrb[0].mxu0
      %9315 = vdwg.mxu0
      %v9316 = vadd.f32 %v9255, %v9311
      %v9317 = vld [vmem:[%s8015] sm:$0xf]
      %v9318 = vld [vmem:[%s8015 + $0x4] sm:$0x1]
      %v9319 = vld [vmem:[%s1174] sm:$0xf]
      %v9320 = vld [vmem:[%s1174 + $0x4] sm:$0xf]
      %v9321 = vld [vmem:[%s1174 + $0x8] sm:$0xf]
      %v9322 = vld [vmem:[%s1174 + $0xc] sm:$0xf]
      %v9327 = vunpack.c.l.b16 %v9319
      %v9328 = vunpack.c.l.b16 %v9320
      %v9329 = vunpack.c.l.b16 %v9321
      %v9330 = vunpack.c.l.b16 %v9322
      %v9331 = vpack.c.b16 %v9328, %v9327
      %v9332 = vpack.c.b16 %v9330, %v9329
      %v9336 = vsel %vm197, %v9317, 0
      %9338 = vmatprep.subr.bf16.mxu0 0
      %9339 = vmatpush1.bf16.msra.mxu0 %v9331
      %9340 = vmatprep.subr.bf16.mxu0 0
      %9341 = vmatpush1.bf16.msra.mxu0 %v9332
      %9342 = vmatprep.subr.bf16.mxu0 0
      %9343 = vmatpush1.bf16.msra.mxu0 0
      %9344 = vmatprep.subr.bf16.mxu0 0
      %9345 = vmatpush1.bf16.msra.mxu0 0
      %9346 = vmatprep.subr.bf16.mxu0 0
      %9347 = vmatpush1.bf16.msra.mxu0 0
      %9348 = vmatprep.subr.bf16.mxu0 0
      %9349 = vmatpush1.bf16.msra.mxu0 0
      %9350 = vmatprep.subr.bf16.mxu0 0
      %9351 = vmatpush1.bf16.msra.mxu0 0
      %9352 = vmatprep.subr.bf16.mxu0 0
      %9353 = vmatpush1.bf16.msra.mxu0 0
      %9354 = vmatprep.subr.bf16.mxu0 0
      %9355 = vmatpush1.bf16.msra.mxu0 0
      %9356 = vmatprep.subr.bf16.mxu0 0
      %9357 = vmatpush1.bf16.msra.mxu0 0
      %9358 = vmatprep.subr.bf16.mxu0 0
      %9359 = vmatpush1.bf16.msra.mxu0 0
      %9360 = vmatprep.subr.bf16.mxu0 0
      %9361 = vmatpush1.bf16.msra.mxu0 0
      %9362 = vmatprep.subr.bf16.mxu0 0
      %9363 = vmatpush1.bf16.msra.mxu0 0
      %9364 = vmatprep.subr.bf16.mxu0 0
      %9365 = vmatpush1.bf16.msra.mxu0 0
      %9366 = vmatprep.subr.bf16.mxu0 0
      %9367 = vmatpush1.bf16.msra.mxu0 0
      %9368 = vmatprep.subr.bf16.mxu0 0
      %9369 = vmatpush1.bf16.msra.mxu0 0
      %9370 = vmatprep.mubr.bf16.mxu0 0
      %9371 = vmatmul.mubr.bf16.gmra.mrb[0].mxu0 %v9336
      %v9372 = vpop.f32.mrb[0].mxu0
      %v9373 = vadd.f32 0.0, %v9372
      %v9374 = vpop.f32.mrb[0].mxu0
      %v9375 = vpop.f32.mrb[0].mxu0
      %v9376 = vpop.f32.mrb[0].mxu0
      %9377 = vdwg.mxu0
      %v9378 = vadd.f32 %v9316, %v9373
      %v9379 = vld [vmem:[%s1235] sm:$0xf]
      %v9380 = vld [vmem:[%s1235 + $0x4] sm:$0xf]
      %v9381 = vld [vmem:[%s1235 + $0x8] sm:$0xf]
      %v9382 = vld [vmem:[%s1235 + $0xc] sm:$0xf]
      %v9384 = vunpack.c.l.b16 %v9317
      %v9385 = vpack.c.b16 %v9384, %v9384
      %v9387 = vshrl.u32 %v9385, 16
      %v9389 = vshll.u32 %v9385, 16
      %v9391 = vrot.slane %v9389, 1
      %v9392 = vor.u32 %v9387, %v9391
      %v9397 = vunpack.c.l.b16 %v9379
      %v9398 = vunpack.c.l.b16 %v9380
      %v9399 = vunpack.c.l.b16 %v9381
      %v9400 = vunpack.c.l.b16 %v9382
      %v9401 = vpack.c.b16 %v9398, %v9397
      %v9402 = vpack.c.b16 %v9400, %v9399
      %v9406 = vsel %vm197, %v9392, 0
      %9408 = vmatprep.subr.bf16.mxu0 0
      %9409 = vmatpush1.bf16.msra.mxu0 %v9401
      %9410 = vmatprep.subr.bf16.mxu0 0
      %9411 = vmatpush1.bf16.msra.mxu0 %v9402
      %9412 = vmatprep.subr.bf16.mxu0 0
      %9413 = vmatpush1.bf16.msra.mxu0 0
      %9414 = vmatprep.subr.bf16.mxu0 0
      %9415 = vmatpush1.bf16.msra.mxu0 0
      %9416 = vmatprep.subr.bf16.mxu0 0
      %9417 = vmatpush1.bf16.msra.mxu0 0
      %9418 = vmatprep.subr.bf16.mxu0 0
      %9419 = vmatpush1.bf16.msra.mxu0 0
      %9420 = vmatprep.subr.bf16.mxu0 0
      %9421 = vmatpush1.bf16.msra.mxu0 0
      %9422 = vmatprep.subr.bf16.mxu0 0
      %9423 = vmatpush1.bf16.msra.mxu0 0
      %9424 = vmatprep.subr.bf16.mxu0 0
      %9425 = vmatpush1.bf16.msra.mxu0 0
      %9426 = vmatprep.subr.bf16.mxu0 0
      %9427 = vmatpush1.bf16.msra.mxu0 0
      %9428 = vmatprep.subr.bf16.mxu0 0
      %9429 = vmatpush1.bf16.msra.mxu0 0
      %9430 = vmatprep.subr.bf16.mxu0 0
      %9431 = vmatpush1.bf16.msra.mxu0 0
      %9432 = vmatprep.subr.bf16.mxu0 0
      %9433 = vmatpush1.bf16.msra.mxu0 0
      %9434 = vmatprep.subr.bf16.mxu0 0
      %9435 = vmatpush1.bf16.msra.mxu0 0
      %9436 = vmatprep.subr.bf16.mxu0 0
      %9437 = vmatpush1.bf16.msra.mxu0 0
      %9438 = vmatprep.subr.bf16.mxu0 0
      %9439 = vmatpush1.bf16.msra.mxu0 0
      %9440 = vmatprep.mubr.bf16.mxu0 0
      %9441 = vmatmul.mubr.bf16.gmra.mrb[0].mxu0 %v9406
      %v9442 = vpop.f32.mrb[0].mxu0
      %v9443 = vadd.f32 0.0, %v9442
      %v9444 = vpop.f32.mrb[0].mxu0
      %v9445 = vpop.f32.mrb[0].mxu0
      %v9446 = vpop.f32.mrb[0].mxu0
      %9447 = vdwg.mxu0
      %v9448 = vadd.f32 %v9378, %v9443
      %v9449 = vld [vmem:[%s1306] sm:$0xf]
      %v9450 = vld [vmem:[%s1306 + $0x4] sm:$0xf]
      %v9451 = vld [vmem:[%s1306 + $0x8] sm:$0xf]
      %v9452 = vld [vmem:[%s1306 + $0xc] sm:$0xf]
      %v9453 = vrot.slane %v9385, 1
      %v9458 = vunpack.c.l.b16 %v9449
      %v9459 = vunpack.c.l.b16 %v9450
      %v9460 = vunpack.c.l.b16 %v9451
      %v9461 = vunpack.c.l.b16 %v9452
      %v9462 = vpack.c.b16 %v9459, %v9458
      %v9463 = vpack.c.b16 %v9461, %v9460
      %v9467 = vsel %vm197, %v9453, 0
      %9469 = vmatprep.subr.bf16.mxu0 0
      %9470 = vmatpush1.bf16.msra.mxu0 %v9462
      %9471 = vmatprep.subr.bf16.mxu0 0
      %9472 = vmatpush1.bf16.msra.mxu0 %v9463
      %9473 = vmatprep.subr.bf16.mxu0 0
      %9474 = vmatpush1.bf16.msra.mxu0 0
      %9475 = vmatprep.subr.bf16.mxu0 0
      %9476 = vmatpush1.bf16.msra.mxu0 0
      %9477 = vmatprep.subr.bf16.mxu0 0
      %9478 = vmatpush1.bf16.msra.mxu0 0
      %9479 = vmatprep.subr.bf16.mxu0 0
      %9480 = vmatpush1.bf16.msra.mxu0 0
      %9481 = vmatprep.subr.bf16.mxu0 0
      %9482 = vmatpush1.bf16.msra.mxu0 0
      %9483 = vmatprep.subr.bf16.mxu0 0
      %9484 = vmatpush1.bf16.msra.mxu0 0
      %9485 = vmatprep.subr.bf16.mxu0 0
      %9486 = vmatpush1.bf16.msra.mxu0 0
      %9487 = vmatprep.subr.bf16.mxu0 0
      %9488 = vmatpush1.bf16.msra.mxu0 0
      %9489 = vmatprep.subr.bf16.mxu0 0
      %9490 = vmatpush1.bf16.msra.mxu0 0
      %9491 = vmatprep.subr.bf16.mxu0 0
      %9492 = vmatpush1.bf16.msra.mxu0 0
      %9493 = vmatprep.subr.bf16.mxu0 0
      %9494 = vmatpush1.bf16.msra.mxu0 0
      %9495 = vmatprep.subr.bf16.mxu0 0
      %9496 = vmatpush1.bf16.msra.mxu0 0
      %9497 = vmatprep.subr.bf16.mxu0 0
      %9498 = vmatpush1.bf16.msra.mxu0 0
      %9499 = vmatprep.subr.bf16.mxu0 0
      %9500 = vmatpush1.bf16.msra.mxu0 0
      %9501 = vmatprep.mubr.bf16.mxu0 0
      %9502 = vmatmul.mubr.bf16.gmra.mrb[0].mxu0 %v9467
      %v9503 = vpop.f32.mrb[0].mxu0
      %v9504 = vadd.f32 0.0, %v9503
      %v9505 = vpop.f32.mrb[0].mxu0
      %v9506 = vpop.f32.mrb[0].mxu0
      %v9507 = vpop.f32.mrb[0].mxu0
      %9508 = vdwg.mxu0
      %v9509 = vadd.f32 %v9448, %v9504
      %v9510 = vld [vmem:[%s1368] sm:$0xf]
      %v9511 = vld [vmem:[%s1368 + $0x4] sm:$0xf]
      %v9512 = vld [vmem:[%s1368 + $0x8] sm:$0xf]
      %v9513 = vld [vmem:[%s1368 + $0xc] sm:$0xf]
      %v9515 = vunpack.c.l.b16 %v9318
      %v9516 = vpack.c.b16 %v9515, %v9384
      %v9518 = vshrl.u32 %v9516, 16
      %v9520 = vrot.slane %v9518, 1
      %v9521 = vshll.u32 %v9516, 16
      %v9523 = vrot.slane %v9521, 2
      %v9524 = vor.u32 %v9520, %v9523
      %v9529 = vunpack.c.l.b16 %v9510
      %v9530 = vunpack.c.l.b16 %v9511
      %v9531 = vunpack.c.l.b16 %v9512
      %v9532 = vunpack.c.l.b16 %v9513
      %v9533 = vpack.c.b16 %v9530, %v9529
      %v9534 = vpack.c.b16 %v9532, %v9531
      %v9538 = vsel %vm197, %v9524, 0
      %9540 = vmatprep.subr.bf16.mxu0 0
      %9541 = vmatpush1.bf16.msra.mxu0 %v9533
      %9542 = vmatprep.subr.bf16.mxu0 0
      %9543 = vmatpush1.bf16.msra.mxu0 %v9534
      %9544 = vmatprep.subr.bf16.mxu0 0
      %9545 = vmatpush1.bf16.msra.mxu0 0
      %9546 = vmatprep.subr.bf16.mxu0 0
      %9547 = vmatpush1.bf16.msra.mxu0 0
      %9548 = vmatprep.subr.bf16.mxu0 0
      %9549 = vmatpush1.bf16.msra.mxu0 0
      %9550 = vmatprep.subr.bf16.mxu0 0
      %9551 = vmatpush1.bf16.msra.mxu0 0
      %9552 = vmatprep.subr.bf16.mxu0 0
      %9553 = vmatpush1.bf16.msra.mxu0 0
      %9554 = vmatprep.subr.bf16.mxu0 0
      %9555 = vmatpush1.bf16.msra.mxu0 0
      %9556 = vmatprep.subr.bf16.mxu0 0
      %9557 = vmatpush1.bf16.msra.mxu0 0
      %9558 = vmatprep.subr.bf16.mxu0 0
      %9559 = vmatpush1.bf16.msra.mxu0 0
      %9560 = vmatprep.subr.bf16.mxu0 0
      %9561 = vmatpush1.bf16.msra.mxu0 0
      %9562 = vmatprep.subr.bf16.mxu0 0
      %9563 = vmatpush1.bf16.msra.mxu0 0
      %9564 = vmatprep.subr.bf16.mxu0 0
      %9565 = vmatpush1.bf16.msra.mxu0 0
      %9566 = vmatprep.subr.bf16.mxu0 0
      %9567 = vmatpush1.bf16.msra.mxu0 0
      %9568 = vmatprep.subr.bf16.mxu0 0
      %9569 = vmatpush1.bf16.msra.mxu0 0
      %9570 = vmatprep.subr.bf16.mxu0 0
      %9571 = vmatpush1.bf16.msra.mxu0 0
      %9572 = vmatprep.mubr.bf16.mxu0 0
      %9573 = vmatmul.mubr.bf16.gmra.mrb[0].mxu0 %v9538
      %v9574 = vpop.f32.mrb[0].mxu0
      %v9575 = vadd.f32 0.0, %v9574
      %v9576 = vpop.f32.mrb[0].mxu0
      %v9577 = vpop.f32.mrb[0].mxu0
      %v9578 = vpop.f32.mrb[0].mxu0
      %9579 = vdwg.mxu0
      %v9580 = vadd.f32 %v9509, %v9575
      %v9581 = vld [vmem:[%s1440] sm:$0xf]
      %v9582 = vld [vmem:[%s1440 + $0x4] sm:$0xf]
      %v9583 = vld [vmem:[%s1440 + $0x8] sm:$0xf]
      %v9584 = vld [vmem:[%s1440 + $0xc] sm:$0xf]
      %v9585 = vrot.slane %v9516, 2
      %v9590 = vunpack.c.l.b16 %v9581
      %v9591 = vunpack.c.l.b16 %v9582
      %v9592 = vunpack.c.l.b16 %v9583
      %v9593 = vunpack.c.l.b16 %v9584
      %v9594 = vpack.c.b16 %v9591, %v9590
      %v9595 = vpack.c.b16 %v9593, %v9592
      %v9599 = vsel %vm197, %v9585, 0
      %9601 = vmatprep.subr.bf16.mxu0 0
      %9602 = vmatpush1.bf16.msra.mxu0 %v9594
      %9603 = vmatprep.subr.bf16.mxu0 0
      %9604 = vmatpush1.bf16.msra.mxu0 %v9595
      %9605 = vmatprep.subr.bf16.mxu0 0
      %9606 = vmatpush1.bf16.msra.mxu0 0
      %9607 = vmatprep.subr.bf16.mxu0 0
      %9608 = vmatpush1.bf16.msra.mxu0 0
      %9609 = vmatprep.subr.bf16.mxu0 0
      %9610 = vmatpush1.bf16.msra.mxu0 0
      %9611 = vmatprep.subr.bf16.mxu0 0
      %9612 = vmatpush1.bf16.msra.mxu0 0
      %9613 = vmatprep.subr.bf16.mxu0 0
      %9614 = vmatpush1.bf16.msra.mxu0 0
      %9615 = vmatprep.subr.bf16.mxu0 0
      %9616 = vmatpush1.bf16.msra.mxu0 0
      %9617 = vmatprep.subr.bf16.mxu0 0
      %9618 = vmatpush1.bf16.msra.mxu0 0
      %9619 = vmatprep.subr.bf16.mxu0 0
      %9620 = vmatpush1.bf16.msra.mxu0 0
      %9621 = vmatprep.subr.bf16.mxu0 0
      %9622 = vmatpush1.bf16.msra.mxu0 0
      %9623 = vmatprep.subr.bf16.mxu0 0
      %9624 = vmatpush1.bf16.msra.mxu0 0
      %9625 = vmatprep.subr.bf16.mxu0 0
      %9626 = vmatpush1.bf16.msra.mxu0 0
      %9627 = vmatprep.subr.bf16.mxu0 0
      %9628 = vmatpush1.bf16.msra.mxu0 0
      %9629 = vmatprep.subr.bf16.mxu0 0
      %9630 = vmatpush1.bf16.msra.mxu0 0
      %9631 = vmatprep.subr.bf16.mxu0 0
      %9632 = vmatpush1.bf16.msra.mxu0 0
      %9633 = vmatprep.mubr.bf16.mxu0 0
      %9634 = vmatmul.mubr.bf16.gmra.mrb[0].mxu0 %v9599
      %v9635 = vpop.f32.mrb[0].mxu0
      %v9636 = vadd.f32 0.0, %v9635
      %v9637 = vpop.f32.mrb[0].mxu0
      %v9638 = vpop.f32.mrb[0].mxu0
      %v9639 = vpop.f32.mrb[0].mxu0
      %9640 = vdwg.mxu0
      %v9641 = vadd.f32 %v9580, %v9636
      %s9642 = scalar_lea.vmem %s165, 72
      %v9643 = vld [vmem:[%s9642] sm:$0xf]
      %v9644 = vld [vmem:[%s9642 + $0x4] sm:$0x1]
      %v9645 = vld [vmem:[%s1505] sm:$0xf]
      %v9646 = vld [vmem:[%s1505 + $0x4] sm:$0xf]
      %v9647 = vld [vmem:[%s1505 + $0x8] sm:$0xf]
      %v9648 = vld [vmem:[%s1505 + $0xc] sm:$0xf]
      %v9653 = vunpack.c.l.b16 %v9645
      %v9654 = vunpack.c.l.b16 %v9646
      %v9655 = vunpack.c.l.b16 %v9647
      %v9656 = vunpack.c.l.b16 %v9648
      %v9657 = vpack.c.b16 %v9654, %v9653
      %v9658 = vpack.c.b16 %v9656, %v9655
      %v9662 = vsel %vm197, %v9643, 0
      %9664 = vmatprep.subr.bf16.mxu0 0
      %9665 = vmatpush1.bf16.msra.mxu0 %v9657
      %9666 = vmatprep.subr.bf16.mxu0 0
      %9667 = vmatpush1.bf16.msra.mxu0 %v9658
      %9668 = vmatprep.subr.bf16.mxu0 0
      %9669 = vmatpush1.bf16.msra.mxu0 0
      %9670 = vmatprep.subr.bf16.mxu0 0
      %9671 = vmatpush1.bf16.msra.mxu0 0
      %9672 = vmatprep.subr.bf16.mxu0 0
      %9673 = vmatpush1.bf16.msra.mxu0 0
      %9674 = vmatprep.subr.bf16.mxu0 0
      %9675 = vmatpush1.bf16.msra.mxu0 0
      %9676 = vmatprep.subr.bf16.mxu0 0
      %9677 = vmatpush1.bf16.msra.mxu0 0
      %9678 = vmatprep.subr.bf16.mxu0 0
      %9679 = vmatpush1.bf16.msra.mxu0 0
      %9680 = vmatprep.subr.bf16.mxu0 0
      %9681 = vmatpush1.bf16.msra.mxu0 0
      %9682 = vmatprep.subr.bf16.mxu0 0
      %9683 = vmatpush1.bf16.msra.mxu0 0
      %9684 = vmatprep.subr.bf16.mxu0 0
      %9685 = vmatpush1.bf16.msra.mxu0 0
      %9686 = vmatprep.subr.bf16.mxu0 0
      %9687 = vmatpush1.bf16.msra.mxu0 0
      %9688 = vmatprep.subr.bf16.mxu0 0
      %9689 = vmatpush1.bf16.msra.mxu0 0
      %9690 = vmatprep.subr.bf16.mxu0 0
      %9691 = vmatpush1.bf16.msra.mxu0 0
      %9692 = vmatprep.subr.bf16.mxu0 0
      %9693 = vmatpush1.bf16.msra.mxu0 0
      %9694 = vmatprep.subr.bf16.mxu0 0
      %9695 = vmatpush1.bf16.msra.mxu0 0
      %9696 = vmatprep.mubr.bf16.mxu0 0
      %9697 = vmatmul.mubr.bf16.gmra.mrb[0].mxu0 %v9662
      %v9698 = vpop.f32.mrb[0].mxu0
      %v9699 = vadd.f32 0.0, %v9698
      %v9700 = vpop.f32.mrb[0].mxu0
      %v9701 = vpop.f32.mrb[0].mxu0
      %v9702 = vpop.f32.mrb[0].mxu0
      %9703 = vdwg.mxu0
      %v9704 = vadd.f32 %v9641, %v9699
      %v9705 = vld [vmem:[%s1566] sm:$0xf]
      %v9706 = vld [vmem:[%s1566 + $0x4] sm:$0xf]
      %v9707 = vld [vmem:[%s1566 + $0x8] sm:$0xf]
      %v9708 = vld [vmem:[%s1566 + $0xc] sm:$0xf]
      %v9710 = vunpack.c.l.b16 %v9643
      %v9711 = vpack.c.b16 %v9710, %v9710
      %v9713 = vshrl.u32 %v9711, 16
      %v9715 = vshll.u32 %v9711, 16
      %v9717 = vrot.slane %v9715, 1
      %v9718 = vor.u32 %v9713, %v9717
      %v9723 = vunpack.c.l.b16 %v9705
      %v9724 = vunpack.c.l.b16 %v9706
      %v9725 = vunpack.c.l.b16 %v9707
      %v9726 = vunpack.c.l.b16 %v9708
      %v9727 = vpack.c.b16 %v9724, %v9723
      %v9728 = vpack.c.b16 %v9726, %v9725
      %v9732 = vsel %vm197, %v9718, 0
      %9734 = vmatprep.subr.bf16.mxu0 0
      %9735 = vmatpush1.bf16.msra.mxu0 %v9727
      %9736 = vmatprep.subr.bf16.mxu0 0
      %9737 = vmatpush1.bf16.msra.mxu0 %v9728
      %9738 = vmatprep.subr.bf16.mxu0 0
      %9739 = vmatpush1.bf16.msra.mxu0 0
      %9740 = vmatprep.subr.bf16.mxu0 0
      %9741 = vmatpush1.bf16.msra.mxu0 0
      %9742 = vmatprep.subr.bf16.mxu0 0
      %9743 = vmatpush1.bf16.msra.mxu0 0
      %9744 = vmatprep.subr.bf16.mxu0 0
      %9745 = vmatpush1.bf16.msra.mxu0 0
      %9746 = vmatprep.subr.bf16.mxu0 0
      %9747 = vmatpush1.bf16.msra.mxu0 0
      %9748 = vmatprep.subr.bf16.mxu0 0
      %9749 = vmatpush1.bf16.msra.mxu0 0
      %9750 = vmatprep.subr.bf16.mxu0 0
      %9751 = vmatpush1.bf16.msra.mxu0 0
      %9752 = vmatprep.subr.bf16.mxu0 0
      %9753 = vmatpush1.bf16.msra.mxu0 0
      %9754 = vmatprep.subr.bf16.mxu0 0
      %9755 = vmatpush1.bf16.msra.mxu0 0
      %9756 = vmatprep.subr.bf16.mxu0 0
      %9757 = vmatpush1.bf16.msra.mxu0 0
      %9758 = vmatprep.subr.bf16.mxu0 0
      %9759 = vmatpush1.bf16.msra.mxu0 0
      %9760 = vmatprep.subr.bf16.mxu0 0
      %9761 = vmatpush1.bf16.msra.mxu0 0
      %9762 = vmatprep.subr.bf16.mxu0 0
      %9763 = vmatpush1.bf16.msra.mxu0 0
      %9764 = vmatprep.subr.bf16.mxu0 0
      %9765 = vmatpush1.bf16.msra.mxu0 0
      %9766 = vmatprep.mubr.bf16.mxu0 0
      %9767 = vmatmul.mubr.bf16.gmra.mrb[0].mxu0 %v9732
      %v9768 = vpop.f32.mrb[0].mxu0
      %v9769 = vadd.f32 0.0, %v9768
      %v9770 = vpop.f32.mrb[0].mxu0
      %v9771 = vpop.f32.mrb[0].mxu0
      %v9772 = vpop.f32.mrb[0].mxu0
      %9773 = vdwg.mxu0
      %v9774 = vadd.f32 %v9704, %v9769
      %v9775 = vld [vmem:[%s1637] sm:$0xf]
      %v9776 = vld [vmem:[%s1637 + $0x4] sm:$0xf]
      %v9777 = vld [vmem:[%s1637 + $0x8] sm:$0xf]
      %v9778 = vld [vmem:[%s1637 + $0xc] sm:$0xf]
      %v9779 = vrot.slane %v9711, 1
      %v9784 = vunpack.c.l.b16 %v9775
      %v9785 = vunpack.c.l.b16 %v9776
      %v9786 = vunpack.c.l.b16 %v9777
      %v9787 = vunpack.c.l.b16 %v9778
      %v9788 = vpack.c.b16 %v9785, %v9784
      %v9789 = vpack.c.b16 %v9787, %v9786
      %v9793 = vsel %vm197, %v9779, 0
      %9795 = vmatprep.subr.bf16.mxu0 0
      %9796 = vmatpush1.bf16.msra.mxu0 %v9788
      %9797 = vmatprep.subr.bf16.mxu0 0
      %9798 = vmatpush1.bf16.msra.mxu0 %v9789
      %9799 = vmatprep.subr.bf16.mxu0 0
      %9800 = vmatpush1.bf16.msra.mxu0 0
      %9801 = vmatprep.subr.bf16.mxu0 0
      %9802 = vmatpush1.bf16.msra.mxu0 0
      %9803 = vmatprep.subr.bf16.mxu0 0
      %9804 = vmatpush1.bf16.msra.mxu0 0
      %9805 = vmatprep.subr.bf16.mxu0 0
      %9806 = vmatpush1.bf16.msra.mxu0 0
      %9807 = vmatprep.subr.bf16.mxu0 0
      %9808 = vmatpush1.bf16.msra.mxu0 0
      %9809 = vmatprep.subr.bf16.mxu0 0
      %9810 = vmatpush1.bf16.msra.mxu0 0
      %9811 = vmatprep.subr.bf16.mxu0 0
      %9812 = vmatpush1.bf16.msra.mxu0 0
      %9813 = vmatprep.subr.bf16.mxu0 0
      %9814 = vmatpush1.bf16.msra.mxu0 0
      %9815 = vmatprep.subr.bf16.mxu0 0
      %9816 = vmatpush1.bf16.msra.mxu0 0
      %9817 = vmatprep.subr.bf16.mxu0 0
      %9818 = vmatpush1.bf16.msra.mxu0 0
      %9819 = vmatprep.subr.bf16.mxu0 0
      %9820 = vmatpush1.bf16.msra.mxu0 0
      %9821 = vmatprep.subr.bf16.mxu0 0
      %9822 = vmatpush1.bf16.msra.mxu0 0
      %9823 = vmatprep.subr.bf16.mxu0 0
      %9824 = vmatpush1.bf16.msra.mxu0 0
      %9825 = vmatprep.subr.bf16.mxu0 0
      %9826 = vmatpush1.bf16.msra.mxu0 0
      %9827 = vmatprep.mubr.bf16.mxu0 0
      %9828 = vmatmul.mubr.bf16.gmra.mrb[0].mxu0 %v9793
      %v9829 = vpop.f32.mrb[0].mxu0
      %v9830 = vadd.f32 0.0, %v9829
      %v9831 = vpop.f32.mrb[0].mxu0
      %v9832 = vpop.f32.mrb[0].mxu0
      %v9833 = vpop.f32.mrb[0].mxu0
      %9834 = vdwg.mxu0
      %v9835 = vadd.f32 %v9774, %v9830
      %v9836 = vld [vmem:[%s1699] sm:$0xf]
      %v9837 = vld [vmem:[%s1699 + $0x4] sm:$0xf]
      %v9838 = vld [vmem:[%s1699 + $0x8] sm:$0xf]
      %v9839 = vld [vmem:[%s1699 + $0xc] sm:$0xf]
      %v9841 = vunpack.c.l.b16 %v9644
      %v9842 = vpack.c.b16 %v9841, %v9710
      %v9844 = vshrl.u32 %v9842, 16
      %v9846 = vrot.slane %v9844, 1
      %v9847 = vshll.u32 %v9842, 16
      %v9849 = vrot.slane %v9847, 2
      %v9850 = vor.u32 %v9846, %v9849
      %v9855 = vunpack.c.l.b16 %v9836
      %v9856 = vunpack.c.l.b16 %v9837
      %v9857 = vunpack.c.l.b16 %v9838
      %v9858 = vunpack.c.l.b16 %v9839
      %v9859 = vpack.c.b16 %v9856, %v9855
      %v9860 = vpack.c.b16 %v9858, %v9857
      %v9864 = vsel %vm197, %v9850, 0
      %9866 = vmatprep.subr.bf16.mxu0 0
      %9867 = vmatpush1.bf16.msra.mxu0 %v9859
      %9868 = vmatprep.subr.bf16.mxu0 0
      %9869 = vmatpush1.bf16.msra.mxu0 %v9860
      %9870 = vmatprep.subr.bf16.mxu0 0
      %9871 = vmatpush1.bf16.msra.mxu0 0
      %9872 = vmatprep.subr.bf16.mxu0 0
      %9873 = vmatpush1.bf16.msra.mxu0 0
      %9874 = vmatprep.subr.bf16.mxu0 0
      %9875 = vmatpush1.bf16.msra.mxu0 0
      %9876 = vmatprep.subr.bf16.mxu0 0
      %9877 = vmatpush1.bf16.msra.mxu0 0
      %9878 = vmatprep.subr.bf16.mxu0 0
      %9879 = vmatpush1.bf16.msra.mxu0 0
      %9880 = vmatprep.subr.bf16.mxu0 0
      %9881 = vmatpush1.bf16.msra.mxu0 0
      %9882 = vmatprep.subr.bf16.mxu0 0
      %9883 = vmatpush1.bf16.msra.mxu0 0
      %9884 = vmatprep.subr.bf16.mxu0 0
      %9885 = vmatpush1.bf16.msra.mxu0 0
      %9886 = vmatprep.subr.bf16.mxu0 0
      %9887 = vmatpush1.bf16.msra.mxu0 0
      %9888 = vmatprep.subr.bf16.mxu0 0
      %9889 = vmatpush1.bf16.msra.mxu0 0
      %9890 = vmatprep.subr.bf16.mxu0 0
      %9891 = vmatpush1.bf16.msra.mxu0 0
      %9892 = vmatprep.subr.bf16.mxu0 0
      %9893 = vmatpush1.bf16.msra.mxu0 0
      %9894 = vmatprep.subr.bf16.mxu0 0
      %9895 = vmatpush1.bf16.msra.mxu0 0
      %9896 = vmatprep.subr.bf16.mxu0 0
      %9897 = vmatpush1.bf16.msra.mxu0 0
      %9898 = vmatprep.mubr.bf16.mxu0 0
      %9899 = vmatmul.mubr.bf16.gmra.mrb[0].mxu0 %v9864
      %v9900 = vpop.f32.mrb[0].mxu0
      %v9901 = vadd.f32 0.0, %v9900
      %v9902 = vpop.f32.mrb[0].mxu0
      %v9903 = vpop.f32.mrb[0].mxu0
      %v9904 = vpop.f32.mrb[0].mxu0
      %9905 = vdwg.mxu0
      %v9906 = vadd.f32 %v9835, %v9901
      %v9907 = vld [vmem:[%s1771] sm:$0xf]
      %v9908 = vld [vmem:[%s1771 + $0x4] sm:$0xf]
      %v9909 = vld [vmem:[%s1771 + $0x8] sm:$0xf]
      %v9910 = vld [vmem:[%s1771 + $0xc] sm:$0xf]
      %v9911 = vrot.slane %v9842, 2
      %v9916 = vunpack.c.l.b16 %v9907
      %v9917 = vunpack.c.l.b16 %v9908
      %v9918 = vunpack.c.l.b16 %v9909
      %v9919 = vunpack.c.l.b16 %v9910
      %v9920 = vpack.c.b16 %v9917, %v9916
      %v9921 = vpack.c.b16 %v9919, %v9918
      %v9925 = vsel %vm197, %v9911, 0
      %9927 = vmatprep.subr.bf16.mxu0 0
      %9928 = vmatpush1.bf16.msra.mxu0 %v9920
      %9929 = vmatprep.subr.bf16.mxu0 0
      %9930 = vmatpush1.bf16.msra.mxu0 %v9921
      %9931 = vmatprep.subr.bf16.mxu0 0
      %9932 = vmatpush1.bf16.msra.mxu0 0
      %9933 = vmatprep.subr.bf16.mxu0 0
      %9934 = vmatpush1.bf16.msra.mxu0 0
      %9935 = vmatprep.subr.bf16.mxu0 0
      %9936 = vmatpush1.bf16.msra.mxu0 0
      %9937 = vmatprep.subr.bf16.mxu0 0
      %9938 = vmatpush1.bf16.msra.mxu0 0
      %9939 = vmatprep.subr.bf16.mxu0 0
      %9940 = vmatpush1.bf16.msra.mxu0 0
      %9941 = vmatprep.subr.bf16.mxu0 0
      %9942 = vmatpush1.bf16.msra.mxu0 0
      %9943 = vmatprep.subr.bf16.mxu0 0
      %9944 = vmatpush1.bf16.msra.mxu0 0
      %9945 = vmatprep.subr.bf16.mxu0 0
      %9946 = vmatpush1.bf16.msra.mxu0 0
      %9947 = vmatprep.subr.bf16.mxu0 0
      %9948 = vmatpush1.bf16.msra.mxu0 0
      %9949 = vmatprep.subr.bf16.mxu0 0
      %9950 = vmatpush1.bf16.msra.mxu0 0
      %9951 = vmatprep.subr.bf16.mxu0 0
      %9952 = vmatpush1.bf16.msra.mxu0 0
      %9953 = vmatprep.subr.bf16.mxu0 0
      %9954 = vmatpush1.bf16.msra.mxu0 0
      %9955 = vmatprep.subr.bf16.mxu0 0
      %9956 = vmatpush1.bf16.msra.mxu0 0
      %9957 = vmatprep.subr.bf16.mxu0 0
      %9958 = vmatpush1.bf16.msra.mxu0 0
      %9959 = vmatprep.mubr.bf16.mxu0 0
      %9960 = vmatmul.mubr.bf16.gmra.mrb[0].mxu0 %v9925
      %v9961 = vpop.f32.mrb[0].mxu0
      %v9962 = vadd.f32 0.0, %v9961
      %v9963 = vpop.f32.mrb[0].mxu0
      %v9964 = vpop.f32.mrb[0].mxu0
      %v9965 = vpop.f32.mrb[0].mxu0
      %9966 = vdwg.mxu0
      %v9967 = vadd.f32 %v9906, %v9962
      %9968 = vst [vmem:[%s170 + $0x1e] sm:$0x3f] %v9967
      %p9969 = scmp.lt.s32.totalorder %s14, 1
      %s9970 = scalar_select %p9969, %s14, 1
      %s9971 = smul.addr %s9970, 5
      %s9972 = smul.addr %s9971, 8
      %s9973 = scalar_lea.vmem %s3, %s9972
      // Predicated region
      $region33: #{patch_embed_event_forward.1} parent=31 // pred_check
        %p9974 = pneg %p100
      $region34: #{patch_embed_event_forward.1} parent=31 // pred_check_branch
        %9976 = sbr.rel (%p9974) target = $region36
      $region35: #{patch_embed_event_forward.1} parent=31 // pred_region
        _
      $region36: #{patch_embed_event_forward.1} parent=31 // pred_fallthru
        _
    $region32: #{patch_embed_event_forward.1} parent=5 // pred_fallthru
      _
    %p9977 = scmp.le.s32.totalorder 2, %s9
    // Predicated region
    $region37: #{patch_embed_event_forward.1} parent=5 // pred_check
      %p9978 = pneg %p9977
    $region38: #{patch_embed_event_forward.1} parent=5 // pred_check_branch
      %9980 = sbr.rel (%p9978) target = $region40
    $region39: #{patch_embed_event_forward.1} parent=5 // pred_region
      %s9981 = ssub.s32 %s9, 2
      // Predicated region
      $region41: #{patch_embed_event_forward.1} parent=39 // pred_check
        %p9982 = pneg %p106
      $region42: #{patch_embed_event_forward.1} parent=39 // pred_check_branch
        %9984 = sbr.rel (%p9982) target = $region44
      $region43: #{patch_embed_event_forward.1} parent=39 // pred_region
        %p9985 = scmp.lt.s32.totalorder %s15, 1
        %s9986 = scalar_select %p9985, %s15, 1
        %s9987 = smul.addr %s9986, 5
        %s9988 = smul.addr %s9987, 8
        %s9989 = scalar_lea.vmem %s3, %s9988
      $region44: #{patch_embed_event_forward.1} parent=39 // pred_fallthru
        _
    $region40: #{patch_embed_event_forward.1} parent=5 // pred_fallthru
      _
  $region6: #{patch_embed_event_forward.1} parent=0 // loop_footer
    %s13 = sadd.s32 1, %s9
  $region7: #{patch_embed_event_forward.1} parent=0 // loop_footer_branch
    %8 = sbr.rel target = $region3
  $region8: #{patch_embed_event_forward.1} parent=0 // loop_exit
    _

</llo_original>
